<compile_context>
chip_gen: v6e
topology: v6e:2x2x1
jax: 0.10.0
libtpu: 0.0.40
codegen_flags: <defaults>
</compile_context>

<pallas_src>
import functools

import jax
import jax.numpy as jnp
import numpy as np
from jax.experimental import pallas as pl
from jax.experimental.pallas import tpu as pltpu

EPS = 1e-5
LANE = 128          # channel padding target (lane width)
TILE_M = 512        # row tile for the final elementwise kernel


def _round_up(x, m):
    return (x + m - 1) // m * m


# ---------------------------------------------------------------------------
# Generation-aware VMEM limit
# ---------------------------------------------------------------------------
def _vmem_limit_bytes():
    try:
        cap = int(pltpu.get_tpu_info().vmem_capacity_bytes)
    except Exception:
        cap = 64 * 1024 * 1024      # conservative (v7x per-core) fallback
    return int(cap * 0.7)


_VMEM_LIMIT = _vmem_limit_bytes()


# ---------------------------------------------------------------------------
# pltpu.roll convention probe (run once, on the real hardware)
# ---------------------------------------------------------------------------
def _roll_probe_kernel(x_ref, o_ref):
    o_ref[...] = pltpu.roll(x_ref[...], 1, 0)


def _detect_roll_mode():
    try:
        x = np.tile(np.arange(8, dtype=np.float32)[:, None], (1, 128))
        y = np.asarray(jax.block_until_ready(pl.pallas_call(
            _roll_probe_kernel,
            out_shape=jax.ShapeDtypeStruct((8, 128), jnp.float32))(jnp.asarray(x))))
        if np.array_equal(y, np.roll(x, 1, axis=0)):
            return "jnp"        # pltpu.roll matches jnp.roll semantics
        if np.array_equal(y, np.roll(x, -1, axis=0)):
            return "neg"        # opposite sign convention
    except Exception:
        pass
    return "fallback"           # TODO(synk): concat-based jnp.roll fallback


_ROLL_MODE = _detect_roll_mode()


def _shift_up(x, k):
    """Cyclic row shift: y[f] = x[(f + k) % M] along axis 0 (k static int)."""
    m = x.shape[0]
    k = k % m
    if k == 0:
        return x
    if _ROLL_MODE == "jnp":
        return pltpu.roll(x, m - k, 0)
    if _ROLL_MODE == "neg":
        return pltpu.roll(x, k, 0)
    return jnp.roll(x, -k, axis=0)


# ---------------------------------------------------------------------------
# In-kernel helpers
# ---------------------------------------------------------------------------
def _partial_stats(t):
    """Per-channel (sum, sum_sq) of an (ho, wo, C) f32 tile -> (1, 2, C)."""
    s = jnp.sum(t, axis=(0, 1), keepdims=True)
    ss = jnp.sum(t * t, axis=(0, 1), keepdims=True)
    return jnp.concatenate([s, ss], axis=1)


def _conv3x3_from_phases(xp_ref, w_ref, ho, wph, stride):
    """3x3 conv (padding=1, given stride) of one image from its phase planes.

    xp_ref: (1, stride*stride, hph, wph, Cin) bf16 (space-to-depth phases of
            the zero-extended, halo-padded input).  Returns the band-domain
            f32 accumulator of shape (ho*wph, Cout); column `wo:` is garbage.
    """
    cin = xp_ref.shape[-1]
    cout = w_ref.shape[-1]
    mm = ho * wph
    bands = {}

    def band(p, ry):
        if (p, ry) not in bands:
            bands[(p, ry)] = xp_ref[0, p, ry:ry + ho, :, :].reshape(mm, cin)
        return bands[(p, ry)]

    acc = jnp.zeros((mm, cout), jnp.float32)
    for rx in range(2 // stride + 1):                 # distinct output shifts
        part = jnp.zeros((mm, cout), jnp.float32)
        for dy in range(3):
            for dx in range(3):
                if dx // stride != rx:
                    continue
                p = (dy % stride) * stride + (dx % stride)
                ry = dy // stride
                part = part + jnp.dot(band(p, ry), w_ref[dy * 3 + dx],
                                      preferred_element_type=jnp.float32)
        acc = acc + _shift_up(part, rx)
    return acc


# ---------------------------------------------------------------------------
# Kernels
# ---------------------------------------------------------------------------
def _conv1_id_kernel(xp_ref, w1_ref, y1_ref, st1_ref, *, ho, wo, wph, stride):
    cout = w1_ref.shape[-1]
    acc = _conv3x3_from_phases(xp_ref, w1_ref, ho, wph, stride)
    out = acc.reshape(ho, wph, cout)[:, :wo, :]
    y1_ref[...] = out[None].astype(y1_ref.dtype)
    st1_ref[...] = _partial_stats(out)


def _conv1_proj_kernel(xp_ref, w1_ref, wsc_ref, y1_ref, ysc_ref, st1_ref,
                       stsc_ref, *, ho, wo, wph, stride):
    cout = w1_ref.shape[-1]
    acc = _conv3x3_from_phases(xp_ref, w1_ref, ho, wph, stride)
    out = acc.reshape(ho, wph, cout)[:, :wo, :]
    y1_ref[...] = out[None].astype(y1_ref.dtype)
    st1_ref[...] = _partial_stats(out)
    # 1x1 projection shortcut (the stride is absorbed by the phase layout).
    cin = xp_ref.shape[-1]
    mm = ho * wph
    p = (1 % stride) * stride + (1 % stride)
    r = 1 // stride
    band = xp_ref[0, p, r:r + ho, :, :].reshape(mm, cin)
    accs = _shift_up(jnp.dot(band, wsc_ref[...],
                             preferred_element_type=jnp.float32), r)
    outs = accs.reshape(ho, wph, cout)[:, :wo, :]
    ysc_ref[...] = outs[None].astype(ysc_ref.dtype)
    stsc_ref[...] = _partial_stats(outs)


def _bn1_relu_conv2_kernel(y1_ref, w2_ref, sc1_ref, b1_ref, y2_ref, st2_ref,
                           hbuf, *, ho, wo, wph):
    # Fused: BN1 (scale/bias) + ReLU on conv1 output, then conv2 (3x3, s=1)
    # via band matmuls over a zero-haloed VMEM scratch + BN2 partial stats.
    cout = w2_ref.shape[-1]
    h = jnp.maximum(y1_ref[0].astype(jnp.float32) * sc1_ref[...] + b1_ref[...],
                    0.0)
    # hbuf persists across grid steps but each core only refreshes the halo:
    # zeroing it just once under pid==0 would leave the other megacore's
    # scratch uninitialized when the batch axis is sharded "parallel".
    hbuf[0, :, :] = jnp.zeros((wph, cout), hbuf.dtype)
    hbuf[1 + ho, :, :] = jnp.zeros((wph, cout), hbuf.dtype)
    hbuf[1:1 + ho, wo:, :] = jnp.zeros((ho, wph - wo, cout), hbuf.dtype)
    hbuf[1:1 + ho, :wo, :] = h.astype(hbuf.dtype)

    mm = ho * wph
    bands = [hbuf[dy:dy + ho, :, :].reshape(mm, cout) for dy in range(3)]
    acc = jnp.zeros((mm, cout), jnp.float32)
    for dx in range(3):
        part = jnp.zeros((mm, cout), jnp.float32)
        for dy in range(3):
            part = part + jnp.dot(bands[dy], w2_ref[dy * 3 + dx],
                                  preferred_element_type=jnp.float32)
        acc = acc + _shift_up(part, dx - 1)
    out = acc.reshape(ho, wph, cout)[:, :wo, :]
    y2_ref[...] = out[None].astype(y2_ref.dtype)
    st2_ref[...] = _partial_stats(out)


def _bn2_add_relu_proj_kernel(y2_ref, ysc_ref, sc2_ref, b2_ref, scs_ref,
                              bs_ref, o_ref):
    y = y2_ref[...].astype(jnp.float32) * sc2_ref[...] + b2_ref[...]
    s = ysc_ref[...].astype(jnp.float32) * scs_ref[...] + bs_ref[...]
    o_ref[...] = jnp.maximum(y + s, 0.0)


def _bn2_add_relu_id_kernel(y2_ref, xres_ref, sc2_ref, b2_ref, o_ref):
    y = y2_ref[...].astype(jnp.float32) * sc2_ref[...] + b2_ref[...]
    o_ref[...] = jnp.maximum(y + xres_ref[...].astype(jnp.float32), 0.0)


# ---------------------------------------------------------------------------
# JAX-side glue (layout only: padding, weight repacking, BN stat finalize)
# ---------------------------------------------------------------------------
def _prep_w3x3(w, cinp, coutp):
    cout, cin, kh, kw = w.shape
    wt = jnp.transpose(w, (2, 3, 1, 0))                       # (3, 3, Cin, Cout)
    wt = jnp.pad(wt, ((0, 0), (0, 0), (0, cinp - cin), (0, coutp - cout)))
    return wt.reshape(kh * kw, cinp, coutp).astype(jnp.bfloat16)


def _prep_w1x1(w, cinp, coutp):
    cout, cin = w.shape[0], w.shape[1]
    wm = jnp.transpose(w.reshape(cout, cin), (1, 0))          # (Cin, Cout)
    wm = jnp.pad(wm, ((0, cinp - cin), (0, coutp - cout)))
    return wm.astype(jnp.bfloat16)


def _pad_vec(v, cp, fill):
    return jnp.pad(v, (0, cp - v.shape[0]),
                   constant_values=fill).astype(jnp.float32)


def _bn_scale_bias(partial_stats, gamma, beta, count):
    """Finalize training-mode BN (biased var) from per-image partial sums."""
    s = jnp.sum(partial_stats, axis=0)                        # (2, Cp)
    mean = s[0] / count
    var = jnp.maximum(s[1] / count - mean * mean, 0.0)
    scale = gamma * jax.lax.rsqrt(var + EPS)
    bias = beta - mean * scale
    return scale.reshape(1, -1), bias.reshape(1, -1)


# ---------------------------------------------------------------------------
# ResidualBlock forward
# ---------------------------------------------------------------------------
def init_residual_block(key, in_channels, out_channels, stride=1):
    k1, k2, k3 = jax.random.split(key, 3)
    params = {
        "w1": 0.1 * jax.random.normal(k1, (out_channels, in_channels, 3, 3), jnp.float32),
        "g1": jnp.ones((out_channels,), jnp.float32),
        "b1": jnp.zeros((out_channels,), jnp.float32),
        "w2": 0.1 * jax.random.normal(k2, (out_channels, out_channels, 3, 3), jnp.float32),
        "g2": jnp.ones((out_channels,), jnp.float32),
        "b2": jnp.zeros((out_channels,), jnp.float32),
    }
    if stride != 1 or in_channels != out_channels:
        params["wsc"] = 0.1 * jax.random.normal(k3, (out_channels, in_channels, 1, 1), jnp.float32)
        params["gsc"] = jnp.ones((out_channels,), jnp.float32)
        params["bsc"] = jnp.zeros((out_channels,), jnp.float32)
    return params


@functools.partial(jax.jit, static_argnames=("stride",))
def residual_block_forward(x_nchw, params, stride=1):
    w1 = params["w1"]
    cout, cin = w1.shape[0], w1.shape[1]
    projection = "wsc" in params

    n, _, h, w = x_nchw.shape
    s = stride
    ho = (h - 1) // s + 1
    wo = (w - 1) // s + 1
    m = n * ho * wo
    cinp = _round_up(cin, LANE)
    coutp = _round_up(cout, LANE)
    hph = ho + 2                       # band rows (incl. halo)
    wph = _round_up(wo + 2, 8)         # band width, 8-aligned for free reshapes

    # NHWC; channel-pad to lane multiples.
    x_nhwc = jnp.transpose(x_nchw, (0, 2, 3, 1)).astype(jnp.float32)
    x_cp = jnp.pad(x_nhwc, ((0, 0), (0, 0), (0, 0), (0, cinp - cin)))

    # 1-px conv halo + zero extension, then space-to-depth phase planes: a
    # strided 3x3 conv becomes 9 dense, tile-aligned band matmuls in-kernel.
    x_ext = jnp.pad(x_cp.astype(jnp.bfloat16),
                    ((0, 0), (1, s * hph - h - 1), (1, s * wph - w - 1), (0, 0)))
    phases = (x_ext.reshape(n, hph, s, wph, s, cinp)
                   .transpose(0, 2, 4, 1, 3, 5)
                   .reshape(n, s * s, hph, wph, cinp))

    w1p = _prep_w3x3(w1, cinp, coutp)
    w2p = _prep_w3x3(params["w2"], coutp, coutp)
    g1 = _pad_vec(params["g1"], coutp, 1.0)
    b1 = _pad_vec(params["b1"], coutp, 0.0)
    g2 = _pad_vec(params["g2"], coutp, 1.0)
    b2 = _pad_vec(params["b2"], coutp, 0.0)

    cparams = pltpu.CompilerParams(dimension_semantics=("parallel",),
                                   vmem_limit_bytes=_VMEM_LIMIT)

    phases_spec = pl.BlockSpec((1, s * s, hph, wph, cinp),
                               lambda i: (i, 0, 0, 0, 0))
    w3_spec1 = pl.BlockSpec((9, cinp, coutp), lambda i: (0, 0, 0))
    w3_spec2 = pl.BlockSpec((9, coutp, coutp), lambda i: (0, 0, 0))
    wsc_spec = pl.BlockSpec((cinp, coutp), lambda i: (0, 0))
    vec_spec = pl.BlockSpec((1, coutp), lambda i: (0, 0))
    y_spec = pl.BlockSpec((1, ho, wo, coutp), lambda i: (i, 0, 0, 0))
    st_spec = pl.BlockSpec((1, 2, coutp), lambda i: (i, 0, 0))
    y_shape = jax.ShapeDtypeStruct((n, ho, wo, coutp), jnp.bfloat16)
    st_shape = jax.ShapeDtypeStruct((n, 2, coutp), jnp.float32)

    # ---- stage 1: conv1 (+ 1x1 projection conv) + BN partial stats ----------
    flops1 = 2 * n * ho * wph * 9 * cinp * coutp \
        + (2 * n * ho * wph * cinp * coutp if projection else 0)
    bytes1 = (phases.size * 2 + w1p.size * 2
              + n * ho * wo * coutp * 2 * (2 if projection else 1))
    cost1 = pl.CostEstimate(flops=flops1, transcendentals=0, bytes_accessed=bytes1)

    if projection:
        wscp = _prep_w1x1(params["wsc"], cinp, coutp)
        gsc = _pad_vec(params["gsc"], coutp, 1.0)
        bsc = _pad_vec(params["bsc"], coutp, 0.0)
        y1, ysc, st1, stsc = pl.pallas_call(
            functools.partial(_conv1_proj_kernel, ho=ho, wo=wo, wph=wph, stride=s),
            grid=(n,),
            in_specs=[phases_spec, w3_spec1, wsc_spec],
            out_specs=(y_spec, y_spec, st_spec, st_spec),
            out_shape=(y_shape, y_shape, st_shape, st_shape),
            compiler_params=cparams,
            cost_estimate=cost1,
        )(phases, w1p, wscp)
    else:
        y1, st1 = pl.pallas_call(
            functools.partial(_conv1_id_kernel, ho=ho, wo=wo, wph=wph, stride=s),
            grid=(n,),
            in_specs=[phases_spec, w3_spec1],
            out_specs=(y_spec, st_spec),
            out_shape=(y_shape, st_shape),
            compiler_params=cparams,
            cost_estimate=cost1,
        )(phases, w1p)

    # ---- stage 2: fused BN1 + ReLU + conv2 + BN2 partial stats ---------------
    sc1, bi1 = _bn_scale_bias(st1, g1, b1, m)
    flops2 = 2 * n * ho * wph * 9 * coutp * coutp
    bytes2 = 2 * (n * ho * wo * coutp * 2) + w2p.size * 2
    y2, st2 = pl.pallas_call(
        functools.partial(_bn1_relu_conv2_kernel, ho=ho, wo=wo, wph=wph),
        grid=(n,),
        in_specs=[y_spec, w3_spec2, vec_spec, vec_spec],
        out_specs=(y_spec, st_spec),
        out_shape=(y_shape, st_shape),
        scratch_shapes=[pltpu.VMEM((hph, wph, coutp), jnp.bfloat16)],
        compiler_params=cparams,
        cost_estimate=pl.CostEstimate(flops=flops2, transcendentals=0,
                                      bytes_accessed=bytes2),
    )(y1, w2p, sc1, bi1)

    # ---- stage 3: BN2 + shortcut + residual add + ReLU (tiled over M) --------
    sc2, bi2 = _bn_scale_bias(st2, g2, b2, m)

    tile_m = min(TILE_M, _round_up(m, 8))
    mp = _round_up(m, tile_m)

    def _flat(a):
        a = a.reshape(m, coutp)
        return a if mp == m else jnp.pad(a, ((0, mp - m), (0, 0)))

    row_spec = pl.BlockSpec((tile_m, coutp), lambda i: (i, 0))
    out_shape3 = jax.ShapeDtypeStruct((mp, coutp), jnp.float32)

    if projection:
        scs, bis = _bn_scale_bias(stsc, gsc, bsc, m)
        outf = pl.pallas_call(
            _bn2_add_relu_proj_kernel,
            grid=(mp // tile_m,),
            in_specs=[row_spec, row_spec, vec_spec, vec_spec, vec_spec, vec_spec],
            out_specs=row_spec,
            out_shape=out_shape3,
            compiler_params=cparams,
        )(_flat(y2), _flat(ysc), sc2, bi2, scs, bis)
    else:
        # identity shortcut: stride == 1 and cin == cout by construction.
        outf = pl.pallas_call(
            _bn2_add_relu_id_kernel,
            grid=(mp // tile_m,),
            in_specs=[row_spec, row_spec, vec_spec, vec_spec],
            out_specs=row_spec,
            out_shape=out_shape3,
            compiler_params=cparams,
        )(_flat(y2), _flat(x_cp.astype(jnp.bfloat16)), sc2, bi2)

    out = outf[:m, :cout].reshape(n, ho, wo, cout)
    # TODO(synk): keep activations NHWC/channel-padded across blocks in a full
    # network to avoid this per-block layout round trip.
    return jnp.transpose(out, (0, 3, 1, 2))                   # back to NCHW


# ---------------------------------------------------------------------------
# Pure-JAX reference (correctness check only)
# ---------------------------------------------------------------------------
def _ref_forward(x, params, stride):
    def conv(x, w, s, p):
        return jax.lax.conv_general_dilated(
            x, w, (s, s), [(p, p), (p, p)],
            dimension_numbers=("NCHW", "OIHW", "NCHW"))

    def bn(y, g, b):
        mean = y.mean(axis=(0, 2, 3), keepdims=True)
        var = y.var(axis=(0, 2, 3), keepdims=True)
        return ((y - mean) / jnp.sqrt(var + EPS) * g.reshape(1, -1, 1, 1)
                + b.reshape(1, -1, 1, 1))

    out = jax.nn.relu(bn(conv(x, params["w1"], stride, 1), params["g1"], params["b1"]))
    out = bn(conv(out, params["w2"], 1, 1), params["g2"], params["b2"])
    if "wsc" in params:
        sc = bn(conv(x, params["wsc"], stride, 0), params["gsc"], params["bsc"])
    else:
        sc = x
    return jax.nn.relu(out + sc)


if __name__ == "__main__":
    key = jax.random.PRNGKey(0)
    kx1, kp1, kx2, kp2, kx3, kp3 = jax.random.split(key, 6)

    # Case 1: projection shortcut (channel change), stride 1.
    N, CIN, COUT, H, W = 2, 4, 8, 16, 16
    x1 = jax.random.normal(kx1, (N, CIN, H, W), jnp.float32)
    p1 = init_residual_block(kp1, CIN, COUT, stride=1)
    out1 = jax.block_until_ready(residual_block_forward(x1, p1, stride=1))
    ref1 = _ref_forward(x1, p1, 1)
    assert out1.shape == ref1.shape, (out1.shape, ref1.shape)
    np.testing.assert_allclose(np.asarray(out1), np.asarray(ref1),
                               rtol=5e-2, atol=5e-2)

    # Case 2: identity shortcut (cin == cout), stride 1.
    C = 8
    x2 = jax.random.normal(kx2, (N, C, H, W), jnp.float32)
    p2 = init_residual_block(kp2, C, C, stride=1)
    out2 = jax.block_until_ready(residual_block_forward(x2, p2, stride=1))
    ref2 = _ref_forward(x2, p2, 1)
    assert out2.shape == ref2.shape, (out2.shape, ref2.shape)
    np.testing.assert_allclose(np.asarray(out2), np.asarray(ref2),
                               rtol=5e-2, atol=5e-2)

    # Case 3: projection shortcut with stride 2 (downsampling block).
    x3 = jax.random.normal(kx3, (N, CIN, H, W), jnp.float32)
    p3 = init_residual_block(kp3, CIN, COUT, stride=2)
    out3 = jax.block_until_ready(residual_block_forward(x3, p3, stride=2))
    ref3 = _ref_forward(x3, p3, 2)
    assert out3.shape == ref3.shape, (out3.shape, ref3.shape)
    np.testing.assert_allclose(np.asarray(out3), np.asarray(ref3),
                               rtol=5e-2, atol=5e-2)

    print("KERNEL_OK")
</pallas_src>

<mosaic_0001>
module attributes {stable_mosaic.version = 11 : i64} {
  func.func @_roll_probe_kernel(%arg0: memref<8x128xf32, #tpu.memory_space<vmem>>, %arg1: memref<8x128xf32, #tpu.memory_space<vmem>>) attributes {dimension_semantics = [], scalar_prefetch = 0 : i64, scratch_operands = 0 : i64, tpu.core_type = #tpu.core_type<tc>} {
    %c0 = arith.constant 0 : index
    %c0_0 = arith.constant 0 : index
    %0 = vector.load %arg0[%c0, %c0_0] : memref<8x128xf32, #tpu.memory_space<vmem>>, vector<8x128xf32>
    %c1_i32 = arith.constant 1 : i32
    %1 = tpu.dynamic_rotate %0 by %c1_i32 dim 0 : vector<8x128xf32>, i32 -> vector<8x128xf32>
    %c0_1 = arith.constant 0 : index
    %c0_2 = arith.constant 0 : index
    %2 = vector.load %arg1[%c0_1, %c0_2] : memref<8x128xf32, #tpu.memory_space<vmem>>, vector<8x128xf32>
    tpu.vector_store %arg1[%c0_1, %c0_2], %1 {strides = array<i32>} : memref<8x128xf32, #tpu.memory_space<vmem>>, vector<8x128xf32>,
    return
  }
}

module attributes {stable_mosaic.version = 11 : i64} {
  func.func @_conv1_proj_kernel(%arg0: i32, %arg1: memref<1x1x18x24x128xbf16, #tpu.memory_space<vmem>>, %arg2: memref<9x128x128xbf16, #tpu.memory_space<vmem>>, %arg3: memref<128x128xbf16, #tpu.memory_space<vmem>>, %arg4: memref<1x16x16x128xbf16, #tpu.memory_space<vmem>>, %arg5: memref<1x16x16x128xbf16, #tpu.memory_space<vmem>>, %arg6: memref<1x2x128xf32, #tpu.memory_space<vmem>>, %arg7: memref<1x2x128xf32, #tpu.memory_space<vmem>>) attributes {dimension_semantics = [#tpu.dimension_semantics<parallel>], iteration_bounds = array<i64: 2>, scalar_prefetch = 0 : i64, scratch_operands = 0 : i64, tpu.core_type = #tpu.core_type<tc>, window_params = [{transform_indices = @transform_0, window_bounds = array<i64: 1, 1, 18, 24, 128>}, {pipeline_mode = #tpu.pipeline_mode<synchronous>, transform_indices = @transform_1, window_bounds = array<i64: 9, 128, 128>}, {pipeline_mode = #tpu.pipeline_mode<synchronous>, transform_indices = @transform_2, window_bounds = array<i64: 128, 128>}, {transform_indices = @transform_3, window_bounds = array<i64: 1, 16, 16, 128>}, {transform_indices = @transform_4, window_bounds = array<i64: 1, 16, 16, 128>}, {transform_indices = @transform_5, window_bounds = array<i64: 1, 2, 128>}, {transform_indices = @transform_6, window_bounds = array<i64: 1, 2, 128>}]} {
    %cst = arith.constant 0.000000e+00 : f32
    %0 = vector.broadcast %cst : f32 to vector<384x128xf32>
    %cst_0 = arith.constant 0.000000e+00 : f32
    %1 = vector.broadcast %cst_0 : f32 to vector<384x128xf32>
    %c0 = arith.constant 0 : index
    %c0_1 = arith.constant 0 : index
    %c0_2 = arith.constant 0 : index
    %c0_3 = arith.constant 0 : index
    %c0_4 = arith.constant 0 : index
    %2 = vector.load %arg1[%c0, %c0_1, %c0_2, %c0_3, %c0_4] : memref<1x1x18x24x128xbf16, #tpu.memory_space<vmem>>, vector<1x1x16x24x128xbf16>
    %3 = vector.shape_cast %2 : vector<1x1x16x24x128xbf16> to vector<16x24x128xbf16>
    %4 = vector.shape_cast %3 : vector<16x24x128xbf16> to vector<384x128xbf16>
    %c0_5 = arith.constant 0 : index
    %c0_6 = arith.constant 0 : index
    %c0_7 = arith.constant 0 : index
    %5 = vector.load %arg2[%c0_5, %c0_6, %c0_7] : memref<9x128x128xbf16, #tpu.memory_space<vmem>>, vector<1x128x128xbf16>
    %6 = vector.shape_cast %5 : vector<1x128x128xbf16> to vector<128x128xbf16>
    %cst_8 = arith.constant dense<0.000000e+00> : vector<384x128xf32>
    %7 = tpu.matmul %4, %6, %cst_8 {dimension_numbers = #tpu.dot_dimension_numbers<[1], [0], [0], [1], [0, 0, 1, 1], [], []>} : vector<384x128xbf16>, vector<128x128xbf16>, vector<384x128xf32> -> vector<384x128xf32>
    %8 = arith.addf %1, %7 : vector<384x128xf32>
    %c0_9 = arith.constant 0 : index
    %c0_10 = arith.constant 0 : index
    %c1 = arith.constant 1 : index
    %c0_11 = arith.constant 0 : index
    %c0_12 = arith.constant 0 : index
    %9 = vector.load %arg1[%c0_9, %c0_10, %c1, %c0_11, %c0_12] : memref<1x1x18x24x128xbf16, #tpu.memory_space<vmem>>, vector<1x1x16x24x128xbf16>
    %10 = vector.shape_cast %9 : vector<1x1x16x24x128xbf16> to vector<16x24x128xbf16>
    %11 = vector.shape_cast %10 : vector<16x24x128xbf16> to vector<384x128xbf16>
    %c3 = arith.constant 3 : index
    %c0_13 = arith.constant 0 : index
    %c0_14 = arith.constant 0 : index
    %12 = vector.load %arg2[%c3, %c0_13, %c0_14] : memref<9x128x128xbf16, #tpu.memory_space<vmem>>, vector<1x128x128xbf16>
    %13 = vector.shape_cast %12 : vector<1x128x128xbf16> to vector<128x128xbf16>
    %cst_15 = arith.constant dense<0.000000e+00> : vector<384x128xf32>
    %14 = tpu.matmul %11, %13, %cst_15 {dimension_numbers = #tpu.dot_dimension_numbers<[1], [0], [0], [1], [0, 0, 1, 1], [], []>} : vector<384x128xbf16>, vector<128x128xbf16>, vector<384x128xf32> -> vector<384x128xf32>
    %15 = arith.addf %8, %14 : vector<384x128xf32>
    %c0_16 = arith.constant 0 : index
    %c0_17 = arith.constant 0 : index
    %c2 = arith.constant 2 : index
    %c0_18 = arith.constant 0 : index
    %c0_19 = arith.constant 0 : index
    %16 = vector.load %arg1[%c0_16, %c0_17, %c2, %c0_18, %c0_19] : memref<1x1x18x24x128xbf16, #tpu.memory_space<vmem>>, vector<1x1x16x24x128xbf16>
    %17 = vector.shape_cast %16 : vector<1x1x16x24x128xbf16> to vector<16x24x128xbf16>
    %18 = vector.shape_cast %17 : vector<16x24x128xbf16> to vector<384x128xbf16>
    %c6 = arith.constant 6 : index
    %c0_20 = arith.constant 0 : index
    %c0_21 = arith.constant 0 : index
    %19 = vector.load %arg2[%c6, %c0_20, %c0_21] : memref<9x128x128xbf16, #tpu.memory_space<vmem>>, vector<1x128x128xbf16>
    %20 = vector.shape_cast %19 : vector<1x128x128xbf16> to vector<128x128xbf16>
    %cst_22 = arith.constant dense<0.000000e+00> : vector<384x128xf32>
    %21 = tpu.matmul %18, %20, %cst_22 {dimension_numbers = #tpu.dot_dimension_numbers<[1], [0], [0], [1], [0, 0, 1, 1], [], []>} : vector<384x128xbf16>, vector<128x128xbf16>, vector<384x128xf32> -> vector<384x128xf32>
    %22 = arith.addf %15, %21 : vector<384x128xf32>
    %23 = arith.addf %0, %22 : vector<384x128xf32>
    %cst_23 = arith.constant 0.000000e+00 : f32
    %24 = vector.broadcast %cst_23 : f32 to vector<384x128xf32>
    %c1_24 = arith.constant 1 : index
    %c0_25 = arith.constant 0 : index
    %c0_26 = arith.constant 0 : index
    %25 = vector.load %arg2[%c1_24, %c0_25, %c0_26] : memref<9x128x128xbf16, #tpu.memory_space<vmem>>, vector<1x128x128xbf16>
    %26 = vector.shape_cast %25 : vector<1x128x128xbf16> to vector<128x128xbf16>
    %cst_27 = arith.constant dense<0.000000e+00> : vector<384x128xf32>
    %27 = tpu.matmul %4, %26, %cst_27 {dimension_numbers = #tpu.dot_dimension_numbers<[1], [0], [0], [1], [0, 0, 1, 1], [], []>} : vector<384x128xbf16>, vector<128x128xbf16>, vector<384x128xf32> -> vector<384x128xf32>
    %28 = arith.addf %24, %27 : vector<384x128xf32>
    %c4 = arith.constant 4 : index
    %c0_28 = arith.constant 0 : index
    %c0_29 = arith.constant 0 : index
    %29 = vector.load %arg2[%c4, %c0_28, %c0_29] : memref<9x128x128xbf16, #tpu.memory_space<vmem>>, vector<1x128x128xbf16>
    %30 = vector.shape_cast %29 : vector<1x128x128xbf16> to vector<128x128xbf16>
    %cst_30 = arith.constant dense<0.000000e+00> : vector<384x128xf32>
    %31 = tpu.matmul %11, %30, %cst_30 {dimension_numbers = #tpu.dot_dimension_numbers<[1], [0], [0], [1], [0, 0, 1, 1], [], []>} : vector<384x128xbf16>, vector<128x128xbf16>, vector<384x128xf32> -> vector<384x128xf32>
    %32 = arith.addf %28, %31 : vector<384x128xf32>
    %c7 = arith.constant 7 : index
    %c0_31 = arith.constant 0 : index
    %c0_32 = arith.constant 0 : index
    %33 = vector.load %arg2[%c7, %c0_31, %c0_32] : memref<9x128x128xbf16, #tpu.memory_space<vmem>>, vector<1x128x128xbf16>
    %34 = vector.shape_cast %33 : vector<1x128x128xbf16> to vector<128x128xbf16>
    %cst_33 = arith.constant dense<0.000000e+00> : vector<384x128xf32>
    %35 = tpu.matmul %18, %34, %cst_33 {dimension_numbers = #tpu.dot_dimension_numbers<[1], [0], [0], [1], [0, 0, 1, 1], [], []>} : vector<384x128xbf16>, vector<128x128xbf16>, vector<384x128xf32> -> vector<384x128xf32>
    %36 = arith.addf %32, %35 : vector<384x128xf32>
    %37 = vector.extract_strided_slice %36 {offsets = [1, 0], sizes = [383, 128], strides = [1, 1]} : vector<384x128xf32> to vector<383x128xf32>
    %38 = vector.extract_strided_slice %36 {offsets = [0, 0], sizes = [1, 128], strides = [1, 1]} : vector<384x128xf32> to vector<1x128xf32>
    %39 = tpu.concatenate %37, %38 in 0 : vector<383x128xf32>, vector<1x128xf32> -> vector<384x128xf32>
    %40 = arith.addf %23, %39 : vector<384x128xf32>
    %cst_34 = arith.constant 0.000000e+00 : f32
    %41 = vector.broadcast %cst_34 : f32 to vector<384x128xf32>
    %c2_35 = arith.constant 2 : index
    %c0_36 = arith.constant 0 : index
    %c0_37 = arith.constant 0 : index
    %42 = vector.load %arg2[%c2_35, %c0_36, %c0_37] : memref<9x128x128xbf16, #tpu.memory_space<vmem>>, vector<1x128x128xbf16>
    %43 = vector.shape_cast %42 : vector<1x128x128xbf16> to vector<128x128xbf16>
    %cst_38 = arith.constant dense<0.000000e+00> : vector<384x128xf32>
    %44 = tpu.matmul %4, %43, %cst_38 {dimension_numbers = #tpu.dot_dimension_numbers<[1], [0], [0], [1], [0, 0, 1, 1], [], []>} : vector<384x128xbf16>, vector<128x128xbf16>, vector<384x128xf32> -> vector<384x128xf32>
    %45 = arith.addf %41, %44 : vector<384x128xf32>
    %c5 = arith.constant 5 : index
    %c0_39 = arith.constant 0 : index
    %c0_40 = arith.constant 0 : index
    %46 = vector.load %arg2[%c5, %c0_39, %c0_40] : memref<9x128x128xbf16, #tpu.memory_space<vmem>>, vector<1x128x128xbf16>
    %47 = vector.shape_cast %46 : vector<1x128x128xbf16> to vector<128x128xbf16>
    %cst_41 = arith.constant dense<0.000000e+00> : vector<384x128xf32>
    %48 = tpu.matmul %11, %47, %cst_41 {dimension_numbers = #tpu.dot_dimension_numbers<[1], [0], [0], [1], [0, 0, 1, 1], [], []>} : vector<384x128xbf16>, vector<128x128xbf16>, vector<384x128xf32> -> vector<384x128xf32>
    %49 = arith.addf %45, %48 : vector<384x128xf32>
    %c8 = arith.constant 8 : index
    %c0_42 = arith.constant 0 : index
    %c0_43 = arith.constant 0 : index
    %50 = vector.load %arg2[%c8, %c0_42, %c0_43] : memref<9x128x128xbf16, #tpu.memory_space<vmem>>, vector<1x128x128xbf16>
    %51 = vector.shape_cast %50 : vector<1x128x128xbf16> to vector<128x128xbf16>
    %cst_44 = arith.constant dense<0.000000e+00> : vector<384x128xf32>
    %52 = tpu.matmul %18, %51, %cst_44 {dimension_numbers = #tpu.dot_dimension_numbers<[1], [0], [0], [1], [0, 0, 1, 1], [], []>} : vector<384x128xbf16>, vector<128x128xbf16>, vector<384x128xf32> -> vector<384x128xf32>
    %53 = arith.addf %49, %52 : vector<384x128xf32>
    %54 = vector.extract_strided_slice %53 {offsets = [2, 0], sizes = [382, 128], strides = [1, 1]} : vector<384x128xf32> to vector<382x128xf32>
    %55 = vector.extract_strided_slice %53 {offsets = [0, 0], sizes = [2, 128], strides = [1, 1]} : vector<384x128xf32> to vector<2x128xf32>
    %56 = tpu.concatenate %54, %55 in 0 : vector<382x128xf32>, vector<2x128xf32> -> vector<384x128xf32>
    %57 = arith.addf %40, %56 : vector<384x128xf32>
    %58 = vector.shape_cast %57 : vector<384x128xf32> to vector<16x24x128xf32>
    %59 = vector.extract_strided_slice %58 {offsets = [0, 0, 0], sizes = [16, 16, 128], strides = [1, 1, 1]} : vector<16x24x128xf32> to vector<16x16x128xf32>
    %60 = vector.shape_cast %59 : vector<16x16x128xf32> to vector<1x16x16x128xf32>
    %61 = arith.truncf %60 : vector<1x16x16x128xf32> to vector<1x16x16x128xbf16>
    %c0_45 = arith.constant 0 : index
    %c0_46 = arith.constant 0 : index
    %c0_47 = arith.constant 0 : index
    %c0_48 = arith.constant 0 : index
    %62 = vector.load %arg4[%c0_45, %c0_46, %c0_47, %c0_48] : memref<1x16x16x128xbf16, #tpu.memory_space<vmem>>, vector<1x16x16x128xbf16>
    tpu.vector_store %arg4[%c0_45, %c0_46, %c0_47, %c0_48], %61 {strides = array<i32>} : memref<1x16x16x128xbf16, #tpu.memory_space<vmem>>, vector<1x16x16x128xbf16>,
    %cst_49 = arith.constant dense<0.000000e+00> : vector<128xf32>
    %63 = vector.multi_reduction <add>, %59, %cst_49 [0, 1] : vector<16x16x128xf32> to vector<128xf32>
    %64 = vector.shape_cast %63 : vector<128xf32> to vector<1x1x128xf32>
    %65 = arith.mulf %59, %59 : vector<16x16x128xf32>
    %cst_50 = arith.constant dense<0.000000e+00> : vector<128xf32>
    %66 = vector.multi_reduction <add>, %65, %cst_50 [0, 1] : vector<16x16x128xf32> to vector<128xf32>
    %67 = vector.shape_cast %66 : vector<128xf32> to vector<1x1x128xf32>
    %68 = tpu.concatenate %64, %67 in 1 : vector<1x1x128xf32>, vector<1x1x128xf32> -> vector<1x2x128xf32>
    %c0_51 = arith.constant 0 : index
    %c0_52 = arith.constant 0 : index
    %c0_53 = arith.constant 0 : index
    %69 = vector.load %arg6[%c0_51, %c0_52, %c0_53] : memref<1x2x128xf32, #tpu.memory_space<vmem>>, vector<1x2x128xf32>
    tpu.vector_store %arg6[%c0_51, %c0_52, %c0_53], %68 {strides = array<i32>} : memref<1x2x128xf32, #tpu.memory_space<vmem>>, vector<1x2x128xf32>,
    %c0_54 = arith.constant 0 : index
    %c0_55 = arith.constant 0 : index
    %c1_56 = arith.constant 1 : index
    %c0_57 = arith.constant 0 : index
    %c0_58 = arith.constant 0 : index
    %70 = vector.load %arg1[%c0_54, %c0_55, %c1_56, %c0_57, %c0_58] : memref<1x1x18x24x128xbf16, #tpu.memory_space<vmem>>, vector<1x1x16x24x128xbf16>
    %71 = vector.shape_cast %70 : vector<1x1x16x24x128xbf16> to vector<16x24x128xbf16>
    %72 = vector.shape_cast %71 : vector<16x24x128xbf16> to vector<384x128xbf16>
    %c0_59 = arith.constant 0 : index
    %c0_60 = arith.constant 0 : index
    %73 = vector.load %arg3[%c0_59, %c0_60] : memref<128x128xbf16, #tpu.memory_space<vmem>>, vector<128x128xbf16>
    %cst_61 = arith.constant dense<0.000000e+00> : vector<384x128xf32>
    %74 = tpu.matmul %72, %73, %cst_61 {dimension_numbers = #tpu.dot_dimension_numbers<[1], [0], [0], [1], [0, 0, 1, 1], [], []>} : vector<384x128xbf16>, vector<128x128xbf16>, vector<384x128xf32> -> vector<384x128xf32>
    %75 = vector.extract_strided_slice %74 {offsets = [1, 0], sizes = [383, 128], strides = [1, 1]} : vector<384x128xf32> to vector<383x128xf32>
    %76 = vector.extract_strided_slice %74 {offsets = [0, 0], sizes = [1, 128], strides = [1, 1]} : vector<384x128xf32> to vector<1x128xf32>
    %77 = tpu.concatenate %75, %76 in 0 : vector<383x128xf32>, vector<1x128xf32> -> vector<384x128xf32>
    %78 = vector.shape_cast %77 : vector<384x128xf32> to vector<16x24x128xf32>
    %79 = vector.extract_strided_slice %78 {offsets = [0, 0, 0], sizes = [16, 16, 128], strides = [1, 1, 1]} : vector<16x24x128xf32> to vector<16x16x128xf32>
    %80 = vector.shape_cast %79 : vector<16x16x128xf32> to vector<1x16x16x128xf32>
    %81 = arith.truncf %80 : vector<1x16x16x128xf32> to vector<1x16x16x128xbf16>
    %c0_62 = arith.constant 0 : index
    %c0_63 = arith.constant 0 : index
    %c0_64 = arith.constant 0 : index
    %c0_65 = arith.constant 0 : index
    %82 = vector.load %arg5[%c0_62, %c0_63, %c0_64, %c0_65] : memref<1x16x16x128xbf16, #tpu.memory_space<vmem>>, vector<1x16x16x128xbf16>
    tpu.vector_store %arg5[%c0_62, %c0_63, %c0_64, %c0_65], %81 {strides = array<i32>} : memref<1x16x16x128xbf16, #tpu.memory_space<vmem>>, vector<1x16x16x128xbf16>,
    %cst_66 = arith.constant dense<0.000000e+00> : vector<128xf32>
    %83 = vector.multi_reduction <add>, %79, %cst_66 [0, 1] : vector<16x16x128xf32> to vector<128xf32>
    %84 = vector.shape_cast %83 : vector<128xf32> to vector<1x1x128xf32>
    %85 = arith.mulf %79, %79 : vector<16x16x128xf32>
    %cst_67 = arith.constant dense<0.000000e+00> : vector<128xf32>
    %86 = vector.multi_reduction <add>, %85, %cst_67 [0, 1] : vector<16x16x128xf32> to vector<128xf32>
    %87 = vector.shape_cast %86 : vector<128xf32> to vector<1x1x128xf32>
    %88 = tpu.concatenate %84, %87 in 1 : vector<1x1x128xf32>, vector<1x1x128xf32> -> vector<1x2x128xf32>
    %c0_68 = arith.constant 0 : index
    %c0_69 = arith.constant 0 : index
    %c0_70 = arith.constant 0 : index
    %89 = vector.load %arg7[%c0_68, %c0_69, %c0_70] : memref<1x2x128xf32, #tpu.memory_space<vmem>>, vector<1x2x128xf32>
    tpu.vector_store %arg7[%c0_68, %c0_69, %c0_70], %88 {strides = array<i32>} : memref<1x2x128xf32, #tpu.memory_space<vmem>>, vector<1x2x128xf32>,
    return
  }
  func.func @transform_0(%arg0: i32) -> (i32, i32, i32, i32, i32) {
    %c0_i32 = arith.constant 0 : i32
    %c0_i32_0 = arith.constant 0 : i32
    %c0_i32_1 = arith.constant 0 : i32
    %c0_i32_2 = arith.constant 0 : i32
    %c0_i32_3 = arith.constant 0 : i32
    return %arg0, %c0_i32, %c0_i32_0, %c0_i32_1, %c0_i32_2 : i32, i32, i32, i32, i32
  }
  func.func @transform_1(%arg0: i32) -> (i32, i32, i32) {
    %c0_i32 = arith.constant 0 : i32
    %c0_i32_0 = arith.constant 0 : i32
    %c0_i32_1 = arith.constant 0 : i32
    %c0_i32_2 = arith.constant 0 : i32
    return %c0_i32, %c0_i32_0, %c0_i32_1 : i32, i32, i32
  }
  func.func @transform_2(%arg0: i32) -> (i32, i32) {
    %c0_i32 = arith.constant 0 : i32
    %c0_i32_0 = arith.constant 0 : i32
    %c0_i32_1 = arith.constant 0 : i32
    return %c0_i32, %c0_i32_0 : i32, i32
  }
  func.func @transform_3(%arg0: i32) -> (i32, i32, i32, i32) {
    %c0_i32 = arith.constant 0 : i32
    %c0_i32_0 = arith.constant 0 : i32
    %c0_i32_1 = arith.constant 0 : i32
    %c0_i32_2 = arith.constant 0 : i32
    return %arg0, %c0_i32, %c0_i32_0, %c0_i32_1 : i32, i32, i32, i32
  }
  func.func @transform_4(%arg0: i32) -> (i32, i32, i32, i32) {
    %c0_i32 = arith.constant 0 : i32
    %c0_i32_0 = arith.constant 0 : i32
    %c0_i32_1 = arith.constant 0 : i32
    %c0_i32_2 = arith.constant 0 : i32
    return %arg0, %c0_i32, %c0_i32_0, %c0_i32_1 : i32, i32, i32, i32
  }
  func.func @transform_5(%arg0: i32) -> (i32, i32, i32) {
    %c0_i32 = arith.constant 0 : i32
    %c0_i32_0 = arith.constant 0 : i32
    %c0_i32_1 = arith.constant 0 : i32
    return %arg0, %c0_i32, %c0_i32_0 : i32, i32, i32
  }
  func.func @transform_6(%arg0: i32) -> (i32, i32, i32) {
    %c0_i32 = arith.constant 0 : i32
    %c0_i32_0 = arith.constant 0 : i32
    %c0_i32_1 = arith.constant 0 : i32
    return %arg0, %c0_i32, %c0_i32_0 : i32, i32, i32
  }
}

module attributes {stable_mosaic.version = 11 : i64} {
  func.func @_bn2_add_relu_proj_kernel(%arg0: i32, %arg1: memref<512x128xbf16, #tpu.memory_space<vmem>>, %arg2: memref<512x128xbf16, #tpu.memory_space<vmem>>, %arg3: memref<1x128xf32, #tpu.memory_space<vmem>>, %arg4: memref<1x128xf32, #tpu.memory_space<vmem>>, %arg5: memref<1x128xf32, #tpu.memory_space<vmem>>, %arg6: memref<1x128xf32, #tpu.memory_space<vmem>>, %arg7: memref<512x128xf32, #tpu.memory_space<vmem>>) attributes {dimension_semantics = [#tpu.dimension_semantics<parallel>], iteration_bounds = array<i64: 1>, scalar_prefetch = 0 : i64, scratch_operands = 0 : i64, tpu.core_type = #tpu.core_type<tc>, window_params = [{transform_indices = @transform_0, window_bounds = array<i64: 512, 128>}, {transform_indices = @transform_1, window_bounds = array<i64: 512, 128>}, {pipeline_mode = #tpu.pipeline_mode<synchronous>, transform_indices = @transform_2, window_bounds = array<i64: 1, 128>}, {pipeline_mode = #tpu.pipeline_mode<synchronous>, transform_indices = @transform_3, window_bounds = array<i64: 1, 128>}, {pipeline_mode = #tpu.pipeline_mode<synchronous>, transform_indices = @transform_4, window_bounds = array<i64: 1, 128>}, {pipeline_mode = #tpu.pipeline_mode<synchronous>, transform_indices = @transform_5, window_bounds = array<i64: 1, 128>}, {transform_indices = @transform_6, window_bounds = array<i64: 512, 128>}]} {
    %c0 = arith.constant 0 : index
    %c0_0 = arith.constant 0 : index
    %0 = vector.load %arg1[%c0, %c0_0] : memref<512x128xbf16, #tpu.memory_space<vmem>>, vector<512x128xbf16>
    %1 = arith.extf %0 : vector<512x128xbf16> to vector<512x128xf32>
    %c0_1 = arith.constant 0 : index
    %c0_2 = arith.constant 0 : index
    %2 = vector.load %arg3[%c0_1, %c0_2] : memref<1x128xf32, #tpu.memory_space<vmem>>, vector<1x128xf32>
    %3 = vector.broadcast %2 : vector<1x128xf32> to vector<512x128xf32>
    %4 = arith.mulf %1, %3 : vector<512x128xf32>
    %c0_3 = arith.constant 0 : index
    %c0_4 = arith.constant 0 : index
    %5 = vector.load %arg4[%c0_3, %c0_4] : memref<1x128xf32, #tpu.memory_space<vmem>>, vector<1x128xf32>
    %6 = vector.broadcast %5 : vector<1x128xf32> to vector<512x128xf32>
    %7 = arith.addf %4, %6 : vector<512x128xf32>
    %c0_5 = arith.constant 0 : index
    %c0_6 = arith.constant 0 : index
    %8 = vector.load %arg2[%c0_5, %c0_6] : memref<512x128xbf16, #tpu.memory_space<vmem>>, vector<512x128xbf16>
    %9 = arith.extf %8 : vector<512x128xbf16> to vector<512x128xf32>
    %c0_7 = arith.constant 0 : index
    %c0_8 = arith.constant 0 : index
    %10 = vector.load %arg5[%c0_7, %c0_8] : memref<1x128xf32, #tpu.memory_space<vmem>>, vector<1x128xf32>
    %11 = vector.broadcast %10 : vector<1x128xf32> to vector<512x128xf32>
    %12 = arith.mulf %9, %11 : vector<512x128xf32>
    %c0_9 = arith.constant 0 : index
    %c0_10 = arith.constant 0 : index
    %13 = vector.load %arg6[%c0_9, %c0_10] : memref<1x128xf32, #tpu.memory_space<vmem>>, vector<1x128xf32>
    %14 = vector.broadcast %13 : vector<1x128xf32> to vector<512x128xf32>
    %15 = arith.addf %12, %14 : vector<512x128xf32>
    %16 = arith.addf %7, %15 : vector<512x128xf32>
    %cst = arith.constant 0.000000e+00 : f32
    %17 = vector.broadcast %cst : f32 to vector<512x128xf32>
    %18 = arith.maximumf %16, %17 : vector<512x128xf32>
    %c0_11 = arith.constant 0 : index
    %c0_12 = arith.constant 0 : index
    %19 = vector.load %arg7[%c0_11, %c0_12] : memref<512x128xf32, #tpu.memory_space<vmem>>, vector<512x128xf32>
    tpu.vector_store %arg7[%c0_11, %c0_12], %18 {strides = array<i32>} : memref<512x128xf32, #tpu.memory_space<vmem>>, vector<512x128xf32>,
    return
  }
  func.func @transform_0(%arg0: i32) -> (i32, i32) {
    %c0_i32 = arith.constant 0 : i32
    %c0_i32_0 = arith.constant 0 : i32
    return %arg0, %c0_i32 : i32, i32
  }
  func.func @transform_1(%arg0: i32) -> (i32, i32) {
    %c0_i32 = arith.constant 0 : i32
    %c0_i32_0 = arith.constant 0 : i32
    return %arg0, %c0_i32 : i32, i32
  }
  func.func @transform_2(%arg0: i32) -> (i32, i32) {
    %c0_i32 = arith.constant 0 : i32
    %c0_i32_0 = arith.constant 0 : i32
    %c0_i32_1 = arith.constant 0 : i32
    return %c0_i32, %c0_i32_0 : i32, i32
  }
  func.func @transform_3(%arg0: i32) -> (i32, i32) {
    %c0_i32 = arith.constant 0 : i32
    %c0_i32_0 = arith.constant 0 : i32
    %c0_i32_1 = arith.constant 0 : i32
    return %c0_i32, %c0_i32_0 : i32, i32
  }
  func.func @transform_4(%arg0: i32) -> (i32, i32) {
    %c0_i32 = arith.constant 0 : i32
    %c0_i32_0 = arith.constant 0 : i32
    %c0_i32_1 = arith.constant 0 : i32
    return %c0_i32, %c0_i32_0 : i32, i32
  }
  func.func @transform_5(%arg0: i32) -> (i32, i32) {
    %c0_i32 = arith.constant 0 : i32
    %c0_i32_0 = arith.constant 0 : i32
    %c0_i32_1 = arith.constant 0 : i32
    return %c0_i32, %c0_i32_0 : i32, i32
  }
  func.func @transform_6(%arg0: i32) -> (i32, i32) {
    %c0_i32 = arith.constant 0 : i32
    %c0_i32_0 = arith.constant 0 : i32
    return %arg0, %c0_i32 : i32, i32
  }
}

module attributes {stable_mosaic.version = 11 : i64} {
  func.func @_bn1_relu_conv2_kernel(%arg0: i32, %arg1: memref<1x16x16x128xbf16, #tpu.memory_space<vmem>>, %arg2: memref<9x128x128xbf16, #tpu.memory_space<vmem>>, %arg3: memref<1x128xf32, #tpu.memory_space<vmem>>, %arg4: memref<1x128xf32, #tpu.memory_space<vmem>>, %arg5: memref<1x16x16x128xbf16, #tpu.memory_space<vmem>>, %arg6: memref<1x2x128xf32, #tpu.memory_space<vmem>>, %arg7: memref<18x24x128xbf16, #tpu.memory_space<vmem>>) attributes {dimension_semantics = [#tpu.dimension_semantics<parallel>], iteration_bounds = array<i64: 2>, scalar_prefetch = 0 : i64, scratch_operands = 1 : i64, tpu.core_type = #tpu.core_type<tc>, window_params = [{transform_indices = @transform_0, window_bounds = array<i64: 1, 16, 16, 128>}, {pipeline_mode = #tpu.pipeline_mode<synchronous>, transform_indices = @transform_1, window_bounds = array<i64: 9, 128, 128>}, {pipeline_mode = #tpu.pipeline_mode<synchronous>, transform_indices = @transform_2, window_bounds = array<i64: 1, 128>}, {pipeline_mode = #tpu.pipeline_mode<synchronous>, transform_indices = @transform_3, window_bounds = array<i64: 1, 128>}, {transform_indices = @transform_4, window_bounds = array<i64: 1, 16, 16, 128>}, {transform_indices = @transform_5, window_bounds = array<i64: 1, 2, 128>}]} {
    %c0 = arith.constant 0 : index
    %c0_0 = arith.constant 0 : index
    %c0_1 = arith.constant 0 : index
    %c0_2 = arith.constant 0 : index
    %0 = vector.load %arg1[%c0, %c0_0, %c0_1, %c0_2] : memref<1x16x16x128xbf16, #tpu.memory_space<vmem>>, vector<1x16x16x128xbf16>
    %1 = vector.shape_cast %0 : vector<1x16x16x128xbf16> to vector<16x16x128xbf16>
    %2 = arith.extf %1 : vector<16x16x128xbf16> to vector<16x16x128xf32>
    %c0_3 = arith.constant 0 : index
    %c0_4 = arith.constant 0 : index
    %3 = vector.load %arg3[%c0_3, %c0_4] : memref<1x128xf32, #tpu.memory_space<vmem>>, vector<1x128xf32>
    %4 = vector.shape_cast %3 : vector<1x128xf32> to vector<1x1x128xf32>
    %5 = vector.broadcast %4 : vector<1x1x128xf32> to vector<16x16x128xf32>
    %6 = arith.mulf %2, %5 : vector<16x16x128xf32>
    %c0_5 = arith.constant 0 : index
    %c0_6 = arith.constant 0 : index
    %7 = vector.load %arg4[%c0_5, %c0_6] : memref<1x128xf32, #tpu.memory_space<vmem>>, vector<1x128xf32>
    %8 = vector.shape_cast %7 : vector<1x128xf32> to vector<1x1x128xf32>
    %9 = vector.broadcast %8 : vector<1x1x128xf32> to vector<16x16x128xf32>
    %10 = arith.addf %6, %9 : vector<16x16x128xf32>
    %cst = arith.constant 0.000000e+00 : f32
    %11 = vector.broadcast %cst : f32 to vector<16x16x128xf32>
    %12 = arith.maximumf %10, %11 : vector<16x16x128xf32>
    %cst_7 = arith.constant 0.000000e+00 : bf16
    %13 = vector.broadcast %cst_7 : bf16 to vector<24x128xbf16>
    %c0_8 = arith.constant 0 : index
    %c0_9 = arith.constant 0 : index
    %c0_10 = arith.constant 0 : index
    %14 = vector.load %arg7[%c0_8, %c0_9, %c0_10] : memref<18x24x128xbf16, #tpu.memory_space<vmem>>, vector<1x24x128xbf16>
    %15 = vector.shape_cast %14 : vector<1x24x128xbf16> to vector<24x128xbf16>
    %16 = vector.shape_cast %13 : vector<24x128xbf16> to vector<1x24x128xbf16>
    tpu.vector_store %arg7[%c0_8, %c0_9, %c0_10], %16 {strides = array<i32>} : memref<18x24x128xbf16, #tpu.memory_space<vmem>>, vector<1x24x128xbf16>,
    %cst_11 = arith.constant 0.000000e+00 : bf16
    %17 = vector.broadcast %cst_11 : bf16 to vector<24x128xbf16>
    %c17 = arith.constant 17 : index
    %c0_12 = arith.constant 0 : index
    %c0_13 = arith.constant 0 : index
    %18 = vector.load %arg7[%c17, %c0_12, %c0_13] : memref<18x24x128xbf16, #tpu.memory_space<vmem>>, vector<1x24x128xbf16>
    %19 = vector.shape_cast %18 : vector<1x24x128xbf16> to vector<24x128xbf16>
    %20 = vector.shape_cast %17 : vector<24x128xbf16> to vector<1x24x128xbf16>
    tpu.vector_store %arg7[%c17, %c0_12, %c0_13], %20 {strides = array<i32>} : memref<18x24x128xbf16, #tpu.memory_space<vmem>>, vector<1x24x128xbf16>,
    %cst_14 = arith.constant 0.000000e+00 : bf16
    %21 = vector.broadcast %cst_14 : bf16 to vector<16x8x128xbf16>
    %c1 = arith.constant 1 : index
    %c16 = arith.constant 16 : index
    %c0_15 = arith.constant 0 : index
    %22 = vector.load %arg7[%c1, %c16, %c0_15] : memref<18x24x128xbf16, #tpu.memory_space<vmem>>, vector<16x8x128xbf16>
    tpu.vector_store %arg7[%c1, %c16, %c0_15], %21 {strides = array<i32>} : memref<18x24x128xbf16, #tpu.memory_space<vmem>>, vector<16x8x128xbf16>,
    %23 = arith.truncf %12 : vector<16x16x128xf32> to vector<16x16x128xbf16>
    %c1_16 = arith.constant 1 : index
    %c0_17 = arith.constant 0 : index
    %c0_18 = arith.constant 0 : index
    %24 = vector.load %arg7[%c1_16, %c0_17, %c0_18] : memref<18x24x128xbf16, #tpu.memory_space<vmem>>, vector<16x16x128xbf16>
    tpu.vector_store %arg7[%c1_16, %c0_17, %c0_18], %23 {strides = array<i32>} : memref<18x24x128xbf16, #tpu.memory_space<vmem>>, vector<16x16x128xbf16>,
    %c0_19 = arith.constant 0 : index
    %c0_20 = arith.constant 0 : index
    %c0_21 = arith.constant 0 : index
    %25 = vector.load %arg7[%c0_19, %c0_20, %c0_21] : memref<18x24x128xbf16, #tpu.memory_space<vmem>>, vector<16x24x128xbf16>
    %26 = vector.shape_cast %25 : vector<16x24x128xbf16> to vector<384x128xbf16>
    %c1_22 = arith.constant 1 : index
    %c0_23 = arith.constant 0 : index
    %c0_24 = arith.constant 0 : index
    %27 = vector.load %arg7[%c1_22, %c0_23, %c0_24] : memref<18x24x128xbf16, #tpu.memory_space<vmem>>, vector<16x24x128xbf16>
    %28 = vector.shape_cast %27 : vector<16x24x128xbf16> to vector<384x128xbf16>
    %c2 = arith.constant 2 : index
    %c0_25 = arith.constant 0 : index
    %c0_26 = arith.constant 0 : index
    %29 = vector.load %arg7[%c2, %c0_25, %c0_26] : memref<18x24x128xbf16, #tpu.memory_space<vmem>>, vector<16x24x128xbf16>
    %30 = vector.shape_cast %29 : vector<16x24x128xbf16> to vector<384x128xbf16>
    %cst_27 = arith.constant 0.000000e+00 : f32
    %31 = vector.broadcast %cst_27 : f32 to vector<384x128xf32>
    %cst_28 = arith.constant 0.000000e+00 : f32
    %32 = vector.broadcast %cst_28 : f32 to vector<384x128xf32>
    %c0_29 = arith.constant 0 : index
    %c0_30 = arith.constant 0 : index
    %c0_31 = arith.constant 0 : index
    %33 = vector.load %arg2[%c0_29, %c0_30, %c0_31] : memref<9x128x128xbf16, #tpu.memory_space<vmem>>, vector<1x128x128xbf16>
    %34 = vector.shape_cast %33 : vector<1x128x128xbf16> to vector<128x128xbf16>
    %cst_32 = arith.constant dense<0.000000e+00> : vector<384x128xf32>
    %35 = tpu.matmul %26, %34, %cst_32 {dimension_numbers = #tpu.dot_dimension_numbers<[1], [0], [0], [1], [0, 0, 1, 1], [], []>} : vector<384x128xbf16>, vector<128x128xbf16>, vector<384x128xf32> -> vector<384x128xf32>
    %36 = arith.addf %32, %35 : vector<384x128xf32>
    %c3 = arith.constant 3 : index
    %c0_33 = arith.constant 0 : index
    %c0_34 = arith.constant 0 : index
    %37 = vector.load %arg2[%c3, %c0_33, %c0_34] : memref<9x128x128xbf16, #tpu.memory_space<vmem>>, vector<1x128x128xbf16>
    %38 = vector.shape_cast %37 : vector<1x128x128xbf16> to vector<128x128xbf16>
    %cst_35 = arith.constant dense<0.000000e+00> : vector<384x128xf32>
    %39 = tpu.matmul %28, %38, %cst_35 {dimension_numbers = #tpu.dot_dimension_numbers<[1], [0], [0], [1], [0, 0, 1, 1], [], []>} : vector<384x128xbf16>, vector<128x128xbf16>, vector<384x128xf32> -> vector<384x128xf32>
    %40 = arith.addf %36, %39 : vector<384x128xf32>
    %c6 = arith.constant 6 : index
    %c0_36 = arith.constant 0 : index
    %c0_37 = arith.constant 0 : index
    %41 = vector.load %arg2[%c6, %c0_36, %c0_37] : memref<9x128x128xbf16, #tpu.memory_space<vmem>>, vector<1x128x128xbf16>
    %42 = vector.shape_cast %41 : vector<1x128x128xbf16> to vector<128x128xbf16>
    %cst_38 = arith.constant dense<0.000000e+00> : vector<384x128xf32>
    %43 = tpu.matmul %30, %42, %cst_38 {dimension_numbers = #tpu.dot_dimension_numbers<[1], [0], [0], [1], [0, 0, 1, 1], [], []>} : vector<384x128xbf16>, vector<128x128xbf16>, vector<384x128xf32> -> vector<384x128xf32>
    %44 = arith.addf %40, %43 : vector<384x128xf32>
    %45 = vector.extract_strided_slice %44 {offsets = [383, 0], sizes = [1, 128], strides = [1, 1]} : vector<384x128xf32> to vector<1x128xf32>
    %46 = vector.extract_strided_slice %44 {offsets = [0, 0], sizes = [383, 128], strides = [1, 1]} : vector<384x128xf32> to vector<383x128xf32>
    %47 = tpu.concatenate %45, %46 in 0 : vector<1x128xf32>, vector<383x128xf32> -> vector<384x128xf32>
    %48 = arith.addf %31, %47 : vector<384x128xf32>
    %cst_39 = arith.constant 0.000000e+00 : f32
    %49 = vector.broadcast %cst_39 : f32 to vector<384x128xf32>
    %c1_40 = arith.constant 1 : index
    %c0_41 = arith.constant 0 : index
    %c0_42 = arith.constant 0 : index
    %50 = vector.load %arg2[%c1_40, %c0_41, %c0_42] : memref<9x128x128xbf16, #tpu.memory_space<vmem>>, vector<1x128x128xbf16>
    %51 = vector.shape_cast %50 : vector<1x128x128xbf16> to vector<128x128xbf16>
    %cst_43 = arith.constant dense<0.000000e+00> : vector<384x128xf32>
    %52 = tpu.matmul %26, %51, %cst_43 {dimension_numbers = #tpu.dot_dimension_numbers<[1], [0], [0], [1], [0, 0, 1, 1], [], []>} : vector<384x128xbf16>, vector<128x128xbf16>, vector<384x128xf32> -> vector<384x128xf32>
    %53 = arith.addf %49, %52 : vector<384x128xf32>
    %c4 = arith.constant 4 : index
    %c0_44 = arith.constant 0 : index
    %c0_45 = arith.constant 0 : index
    %54 = vector.load %arg2[%c4, %c0_44, %c0_45] : memref<9x128x128xbf16, #tpu.memory_space<vmem>>, vector<1x128x128xbf16>
    %55 = vector.shape_cast %54 : vector<1x128x128xbf16> to vector<128x128xbf16>
    %cst_46 = arith.constant dense<0.000000e+00> : vector<384x128xf32>
    %56 = tpu.matmul %28, %55, %cst_46 {dimension_numbers = #tpu.dot_dimension_numbers<[1], [0], [0], [1], [0, 0, 1, 1], [], []>} : vector<384x128xbf16>, vector<128x128xbf16>, vector<384x128xf32> -> vector<384x128xf32>
    %57 = arith.addf %53, %56 : vector<384x128xf32>
    %c7 = arith.constant 7 : index
    %c0_47 = arith.constant 0 : index
    %c0_48 = arith.constant 0 : index
    %58 = vector.load %arg2[%c7, %c0_47, %c0_48] : memref<9x128x128xbf16, #tpu.memory_space<vmem>>, vector<1x128x128xbf16>
    %59 = vector.shape_cast %58 : vector<1x128x128xbf16> to vector<128x128xbf16>
    %cst_49 = arith.constant dense<0.000000e+00> : vector<384x128xf32>
    %60 = tpu.matmul %30, %59, %cst_49 {dimension_numbers = #tpu.dot_dimension_numbers<[1], [0], [0], [1], [0, 0, 1, 1], [], []>} : vector<384x128xbf16>, vector<128x128xbf16>, vector<384x128xf32> -> vector<384x128xf32>
    %61 = arith.addf %57, %60 : vector<384x128xf32>
    %62 = arith.addf %48, %61 : vector<384x128xf32>
    %cst_50 = arith.constant 0.000000e+00 : f32
    %63 = vector.broadcast %cst_50 : f32 to vector<384x128xf32>
    %c2_51 = arith.constant 2 : index
    %c0_52 = arith.constant 0 : index
    %c0_53 = arith.constant 0 : index
    %64 = vector.load %arg2[%c2_51, %c0_52, %c0_53] : memref<9x128x128xbf16, #tpu.memory_space<vmem>>, vector<1x128x128xbf16>
    %65 = vector.shape_cast %64 : vector<1x128x128xbf16> to vector<128x128xbf16>
    %cst_54 = arith.constant dense<0.000000e+00> : vector<384x128xf32>
    %66 = tpu.matmul %26, %65, %cst_54 {dimension_numbers = #tpu.dot_dimension_numbers<[1], [0], [0], [1], [0, 0, 1, 1], [], []>} : vector<384x128xbf16>, vector<128x128xbf16>, vector<384x128xf32> -> vector<384x128xf32>
    %67 = arith.addf %63, %66 : vector<384x128xf32>
    %c5 = arith.constant 5 : index
    %c0_55 = arith.constant 0 : index
    %c0_56 = arith.constant 0 : index
    %68 = vector.load %arg2[%c5, %c0_55, %c0_56] : memref<9x128x128xbf16, #tpu.memory_space<vmem>>, vector<1x128x128xbf16>
    %69 = vector.shape_cast %68 : vector<1x128x128xbf16> to vector<128x128xbf16>
    %cst_57 = arith.constant dense<0.000000e+00> : vector<384x128xf32>
    %70 = tpu.matmul %28, %69, %cst_57 {dimension_numbers = #tpu.dot_dimension_numbers<[1], [0], [0], [1], [0, 0, 1, 1], [], []>} : vector<384x128xbf16>, vector<128x128xbf16>, vector<384x128xf32> -> vector<384x128xf32>
    %71 = arith.addf %67, %70 : vector<384x128xf32>
    %c8 = arith.constant 8 : index
    %c0_58 = arith.constant 0 : index
    %c0_59 = arith.constant 0 : index
    %72 = vector.load %arg2[%c8, %c0_58, %c0_59] : memref<9x128x128xbf16, #tpu.memory_space<vmem>>, vector<1x128x128xbf16>
    %73 = vector.shape_cast %72 : vector<1x128x128xbf16> to vector<128x128xbf16>
    %cst_60 = arith.constant dense<0.000000e+00> : vector<384x128xf32>
    %74 = tpu.matmul %30, %73, %cst_60 {dimension_numbers = #tpu.dot_dimension_numbers<[1], [0], [0], [1], [0, 0, 1, 1], [], []>} : vector<384x128xbf16>, vector<128x128xbf16>, vector<384x128xf32> -> vector<384x128xf32>
    %75 = arith.addf %71, %74 : vector<384x128xf32>
    %76 = vector.extract_strided_slice %75 {offsets = [1, 0], sizes = [383, 128], strides = [1, 1]} : vector<384x128xf32> to vector<383x128xf32>
    %77 = vector.extract_strided_slice %75 {offsets = [0, 0], sizes = [1, 128], strides = [1, 1]} : vector<384x128xf32> to vector<1x128xf32>
    %78 = tpu.concatenate %76, %77 in 0 : vector<383x128xf32>, vector<1x128xf32> -> vector<384x128xf32>
    %79 = arith.addf %62, %78 : vector<384x128xf32>
    %80 = vector.shape_cast %79 : vector<384x128xf32> to vector<16x24x128xf32>
    %81 = vector.extract_strided_slice %80 {offsets = [0, 0, 0], sizes = [16, 16, 128], strides = [1, 1, 1]} : vector<16x24x128xf32> to vector<16x16x128xf32>
    %82 = vector.shape_cast %81 : vector<16x16x128xf32> to vector<1x16x16x128xf32>
    %83 = arith.truncf %82 : vector<1x16x16x128xf32> to vector<1x16x16x128xbf16>
    %c0_61 = arith.constant 0 : index
    %c0_62 = arith.constant 0 : index
    %c0_63 = arith.constant 0 : index
    %c0_64 = arith.constant 0 : index
    %84 = vector.load %arg5[%c0_61, %c0_62, %c0_63, %c0_64] : memref<1x16x16x128xbf16, #tpu.memory_space<vmem>>, vector<1x16x16x128xbf16>
    tpu.vector_store %arg5[%c0_61, %c0_62, %c0_63, %c0_64], %83 {strides = array<i32>} : memref<1x16x16x128xbf16, #tpu.memory_space<vmem>>, vector<1x16x16x128xbf16>,
    %cst_65 = arith.constant dense<0.000000e+00> : vector<128xf32>
    %85 = vector.multi_reduction <add>, %81, %cst_65 [0, 1] : vector<16x16x128xf32> to vector<128xf32>
    %86 = vector.shape_cast %85 : vector<128xf32> to vector<1x1x128xf32>
    %87 = arith.mulf %81, %81 : vector<16x16x128xf32>
    %cst_66 = arith.constant dense<0.000000e+00> : vector<128xf32>
    %88 = vector.multi_reduction <add>, %87, %cst_66 [0, 1] : vector<16x16x128xf32> to vector<128xf32>
    %89 = vector.shape_cast %88 : vector<128xf32> to vector<1x1x128xf32>
    %90 = tpu.concatenate %86, %89 in 1 : vector<1x1x128xf32>, vector<1x1x128xf32> -> vector<1x2x128xf32>
    %c0_67 = arith.constant 0 : index
    %c0_68 = arith.constant 0 : index
    %c0_69 = arith.constant 0 : index
    %91 = vector.load %arg6[%c0_67, %c0_68, %c0_69] : memref<1x2x128xf32, #tpu.memory_space<vmem>>, vector<1x2x128xf32>
    tpu.vector_store %arg6[%c0_67, %c0_68, %c0_69], %90 {strides = array<i32>} : memref<1x2x128xf32, #tpu.memory_space<vmem>>, vector<1x2x128xf32>,
    return
  }
  func.func @transform_0(%arg0: i32) -> (i32, i32, i32, i32) {
    %c0_i32 = arith.constant 0 : i32
    %c0_i32_0 = arith.constant 0 : i32
    %c0_i32_1 = arith.constant 0 : i32
    %c0_i32_2 = arith.constant 0 : i32
    return %arg0, %c0_i32, %c0_i32_0, %c0_i32_1 : i32, i32, i32, i32
  }
  func.func @transform_1(%arg0: i32) -> (i32, i32, i32) {
    %c0_i32 = arith.constant 0 : i32
    %c0_i32_0 = arith.constant 0 : i32
    %c0_i32_1 = arith.constant 0 : i32
    %c0_i32_2 = arith.constant 0 : i32
    return %c0_i32, %c0_i32_0, %c0_i32_1 : i32, i32, i32
  }
  func.func @transform_2(%arg0: i32) -> (i32, i32) {
    %c0_i32 = arith.constant 0 : i32
    %c0_i32_0 = arith.constant 0 : i32
    %c0_i32_1 = arith.constant 0 : i32
    return %c0_i32, %c0_i32_0 : i32, i32
  }
  func.func @transform_3(%arg0: i32) -> (i32, i32) {
    %c0_i32 = arith.constant 0 : i32
    %c0_i32_0 = arith.constant 0 : i32
    %c0_i32_1 = arith.constant 0 : i32
    return %c0_i32, %c0_i32_0 : i32, i32
  }
  func.func @transform_4(%arg0: i32) -> (i32, i32, i32, i32) {
    %c0_i32 = arith.constant 0 : i32
    %c0_i32_0 = arith.constant 0 : i32
    %c0_i32_1 = arith.constant 0 : i32
    %c0_i32_2 = arith.constant 0 : i32
    return %arg0, %c0_i32, %c0_i32_0, %c0_i32_1 : i32, i32, i32, i32
  }
  func.func @transform_5(%arg0: i32) -> (i32, i32, i32) {
    %c0_i32 = arith.constant 0 : i32
    %c0_i32_0 = arith.constant 0 : i32
    %c0_i32_1 = arith.constant 0 : i32
    return %arg0, %c0_i32, %c0_i32_0 : i32, i32, i32
  }
}

</mosaic_0001>

<llo_original>
// kernel: tpu_custom_call.1
$region0: #{tpu_custom_call.1}
  #allocation0 [shape = 'u32[]', space=smem, size = 0x4, offset = 0x4, fixed_abs, tag = 'smem constant byte address 0x4 - core index']
  #allocation1 [shape = 'u32[144,128]{1,0:T(1,128)}', space=vmem, size = 0x12000, scoped, tag = 'internal scratch']
  %s0 = inlined_call_operand.hbm [shape: f32[8,128], index: 0, kind: input, shape index: {}]
  %s1 = inlined_call_operand.hbm [shape: f32[8,128], index: 1, kind: output, shape index: {}]
  %s2 = sld [smem:[#allocation0]]
  $region18: #{tpu_custom_call.1} parent=0
    _
  %s4 = ssub.s32 1, %s2
  %s5 = scalar_select 0, %s4, %s2
  $region1: #{tpu_custom_call.1} parent=0
    #allocation2 [shape = 'u8[4096]{0}', space=vmem, size = 0x1000, scoped, tag = 'input window, operand 0, single buffered']
    #allocation3 [shape = 's32[1]{0}', space=sflag, size = 0x4, scoped, tag = 'scoped memory for tpu_custom_call.1']
    #allocation4 [shape = 's32[1]{0}', space=sflag, size = 0x4, scoped, tag = 'scoped memory for tpu_custom_call.1']
    #allocation5 [shape = 'u8[4096]{0}', space=vmem, size = 0x1000, scoped, tag = 'output window, operand 0, single buffered']
    %6 = vsyncpa [#allocation3], 0
    %7 = vsyncpa [#allocation4], 0
    // Predicated region
    $region2: #{tpu_custom_call.1} parent=1 // pred_check
      _
    $region3: #{tpu_custom_call.1} parent=1 // pred_check_branch
      %9 = sbr.rel (0) target = $region5
    $region4: #{tpu_custom_call.1} parent=1 // pred_region
      %s11 = ssub.s32 128, 128
      %12 = vsyncadd [#allocation3], %s11
      %s14 = sshll.u32 [#allocation2], 4
      %s15 = int_to_ptr.vmem [resolvable:$true] %s14
      %17 = dma.hbm_to_vmem [thread:$0]  %s0, 128, %s15, [#allocation3]
    $region5: #{tpu_custom_call.1} parent=1 // pred_fallthru
      _
    // Predicated region
    $region6: #{tpu_custom_call.1} parent=1 // pred_check
      _
    $region7: #{tpu_custom_call.1} parent=1 // pred_check_branch
      %19 = sbr.rel (0) target = $region9
    $region8: #{tpu_custom_call.1} parent=1 // pred_region
      %20 = dma.done [#allocation3], 128
    $region9: #{tpu_custom_call.1} parent=1 // pred_fallthru
      _
    %v21 = vld [vmem:[#allocation2] sm:$0xff]
    %v22 = vrot.slane %v21, 7
    %23 = vst [vmem:[#allocation5] sm:$0xff] %v22
    // Predicated region
    $region10: #{tpu_custom_call.1} parent=1 // pred_check
      _
    $region11: #{tpu_custom_call.1} parent=1 // pred_check_branch
      %25 = sbr.rel (0) target = $region13
    $region12: #{tpu_custom_call.1} parent=1 // pred_region
      %s27 = ssub.s32 128, 128
      %28 = vsyncadd [#allocation4], %s27
      %s30 = sshll.u32 [#allocation5], 4
      %s31 = int_to_ptr.vmem [resolvable:$true] %s30
      %33 = dma.vmem_to_hbm [thread:$0]  %s31, 128, %s1, [#allocation4]
    $region13: #{tpu_custom_call.1} parent=1 // pred_fallthru
      _
    // Predicated region
    $region14: #{tpu_custom_call.1} parent=1 // pred_check
      _
    $region15: #{tpu_custom_call.1} parent=1 // pred_check_branch
      %35 = sbr.rel (0) target = $region17
    $region16: #{tpu_custom_call.1} parent=1 // pred_region
      %36 = dma.done [#allocation4], 128
    $region17: #{tpu_custom_call.1} parent=1 // pred_fallthru
      _
    %37 = vsyncpa [#allocation3], 1
    %38 = vsyncpa [#allocation4], 1

// kernel: residual_block_forward.5
$region0: #{residual_block_forward.5}
  #allocation0 [shape = 'u32[]', space=smem, size = 0x4, offset = 0x4, fixed_abs, tag = 'smem constant byte address 0x4 - core index']
  #allocation1 [shape = 'u32[144,128]{1,0:T(1,128)}', space=vmem, size = 0x12000, scoped, tag = 'internal scratch']
  %s0 = inlined_call_operand.vmem [shape: bf16[512,128], index: 0, kind: input, shape index: {}]
  %s1 = inlined_call_operand.vmem [shape: bf16[512,128], index: 1, kind: input, shape index: {}]
  %s2 = inlined_call_operand.vmem [shape: f32[1,128], index: 2, kind: input, shape index: {}]
  %s3 = inlined_call_operand.vmem [shape: f32[1,128], index: 3, kind: input, shape index: {}]
  %s4 = inlined_call_operand.vmem [shape: f32[1,128], index: 4, kind: input, shape index: {}]
  %s5 = inlined_call_operand.vmem [shape: f32[1,128], index: 5, kind: input, shape index: {}]
  %s6 = inlined_call_operand.vmem [shape: f32[512,128], index: 6, kind: output, shape index: {}]
  %s7 = sld [smem:[#allocation0]]
  $region34: #{residual_block_forward.5} parent=0
    _
  %s9 = ssub.s32 1, %s7
  %s10 = scalar_select 0, %s9, %s7
  // Predicated region
  $region2: #{residual_block_forward.5} parent=0 // pred_check
    _
  $region3: #{residual_block_forward.5} parent=0 // pred_check_branch
    %12 = sbr.rel (0) target = $region5
  $region4: #{residual_block_forward.5} parent=0 // pred_region
    _
  $region5: #{residual_block_forward.5} parent=0 // pred_fallthru
    _
  // Predicated region
  $region6: #{residual_block_forward.5} parent=0 // pred_check
    _
  $region7: #{residual_block_forward.5} parent=0 // pred_check_branch
    %14 = sbr.rel (0) target = $region9
  $region8: #{residual_block_forward.5} parent=0 // pred_region
    _
  $region9: #{residual_block_forward.5} parent=0 // pred_fallthru
    _
  // Predicated region
  $region10: #{residual_block_forward.5} parent=0 // pred_check
    _
  $region11: #{residual_block_forward.5} parent=0 // pred_check_branch
    %16 = sbr.rel (0) target = $region13
  $region12: #{residual_block_forward.5} parent=0 // pred_region
    _
  $region13: #{residual_block_forward.5} parent=0 // pred_fallthru
    _
  // Predicated region
  $region14: #{residual_block_forward.5} parent=0 // pred_check
    _
  $region15: #{residual_block_forward.5} parent=0 // pred_check_branch
    %18 = sbr.rel (0) target = $region17
  $region16: #{residual_block_forward.5} parent=0 // pred_region
    _
  $region17: #{residual_block_forward.5} parent=0 // pred_fallthru
    _
  // Predicated region
  $region18: #{residual_block_forward.5} parent=0 // pred_check
    _
  $region19: #{residual_block_forward.5} parent=0 // pred_check_branch
    %20 = sbr.rel (0) target = $region21
  $region20: #{residual_block_forward.5} parent=0 // pred_region
    _
  $region21: #{residual_block_forward.5} parent=0 // pred_fallthru
    _
  // Predicated region
  $region22: #{residual_block_forward.5} parent=0 // pred_check
    _
  $region23: #{residual_block_forward.5} parent=0 // pred_check_branch
    %22 = sbr.rel (0) target = $region25
  $region24: #{residual_block_forward.5} parent=0 // pred_region
    _
  $region25: #{residual_block_forward.5} parent=0 // pred_fallthru
    _
  %v23 = vld [vmem:[%s0] sm:$0xf]
  %v24 = vld [vmem:[%s0 + $0x4] sm:$0xf]
  %v25 = vld [vmem:[%s0 + $0x8] sm:$0xf]
  %v26 = vld [vmem:[%s0 + $0xc] sm:$0xf]
  %v27 = vld [vmem:[%s0 + $0x10] sm:$0xf]
  %v28 = vld [vmem:[%s0 + $0x14] sm:$0xf]
  %v29 = vld [vmem:[%s0 + $0x18] sm:$0xf]
  %v30 = vld [vmem:[%s0 + $0x1c] sm:$0xf]
  %v31 = vld [vmem:[%s0 + $0x20] sm:$0xf]
  %v32 = vld [vmem:[%s0 + $0x24] sm:$0xf]
  %v33 = vld [vmem:[%s0 + $0x28] sm:$0xf]
  %v34 = vld [vmem:[%s0 + $0x2c] sm:$0xf]
  %v35 = vld [vmem:[%s0 + $0x30] sm:$0xf]
  %v36 = vld [vmem:[%s0 + $0x34] sm:$0xf]
  %v37 = vld [vmem:[%s0 + $0x38] sm:$0xf]
  %v38 = vld [vmem:[%s0 + $0x3c] sm:$0xf]
  %v39 = vld [vmem:[%s0 + $0x40] sm:$0xf]
  %v40 = vld [vmem:[%s0 + $0x44] sm:$0xf]
  %v41 = vld [vmem:[%s0 + $0x48] sm:$0xf]
  %v42 = vld [vmem:[%s0 + $0x4c] sm:$0xf]
  %v43 = vld [vmem:[%s0 + $0x50] sm:$0xf]
  %v44 = vld [vmem:[%s0 + $0x54] sm:$0xf]
  %v45 = vld [vmem:[%s0 + $0x58] sm:$0xf]
  %v46 = vld [vmem:[%s0 + $0x5c] sm:$0xf]
  %v47 = vld [vmem:[%s0 + $0x60] sm:$0xf]
  %v48 = vld [vmem:[%s0 + $0x64] sm:$0xf]
  %v49 = vld [vmem:[%s0 + $0x68] sm:$0xf]
  %v50 = vld [vmem:[%s0 + $0x6c] sm:$0xf]
  %v51 = vld [vmem:[%s0 + $0x70] sm:$0xf]
  %v52 = vld [vmem:[%s0 + $0x74] sm:$0xf]
  %v53 = vld [vmem:[%s0 + $0x78] sm:$0xf]
  %v54 = vld [vmem:[%s0 + $0x7c] sm:$0xf]
  %v55 = vld [vmem:[%s0 + $0x80] sm:$0xf]
  %v56 = vld [vmem:[%s0 + $0x84] sm:$0xf]
  %v57 = vld [vmem:[%s0 + $0x88] sm:$0xf]
  %v58 = vld [vmem:[%s0 + $0x8c] sm:$0xf]
  %v59 = vld [vmem:[%s0 + $0x90] sm:$0xf]
  %v60 = vld [vmem:[%s0 + $0x94] sm:$0xf]
  %v61 = vld [vmem:[%s0 + $0x98] sm:$0xf]
  %v62 = vld [vmem:[%s0 + $0x9c] sm:$0xf]
  %v63 = vld [vmem:[%s0 + $0xa0] sm:$0xf]
  %v64 = vld [vmem:[%s0 + $0xa4] sm:$0xf]
  %v65 = vld [vmem:[%s0 + $0xa8] sm:$0xf]
  %v66 = vld [vmem:[%s0 + $0xac] sm:$0xf]
  %v67 = vld [vmem:[%s0 + $0xb0] sm:$0xf]
  %v68 = vld [vmem:[%s0 + $0xb4] sm:$0xf]
  %v69 = vld [vmem:[%s0 + $0xb8] sm:$0xf]
  %v70 = vld [vmem:[%s0 + $0xbc] sm:$0xf]
  %v71 = vld [vmem:[%s0 + $0xc0] sm:$0xf]
  %v72 = vld [vmem:[%s0 + $0xc4] sm:$0xf]
  %v73 = vld [vmem:[%s0 + $0xc8] sm:$0xf]
  %v74 = vld [vmem:[%s0 + $0xcc] sm:$0xf]
  %v75 = vld [vmem:[%s0 + $0xd0] sm:$0xf]
  %v76 = vld [vmem:[%s0 + $0xd4] sm:$0xf]
  %v77 = vld [vmem:[%s0 + $0xd8] sm:$0xf]
  %v78 = vld [vmem:[%s0 + $0xdc] sm:$0xf]
  %v79 = vld [vmem:[%s0 + $0xe0] sm:$0xf]
  %v80 = vld [vmem:[%s0 + $0xe4] sm:$0xf]
  %v81 = vld [vmem:[%s0 + $0xe8] sm:$0xf]
  %v82 = vld [vmem:[%s0 + $0xec] sm:$0xf]
  %v83 = vld [vmem:[%s0 + $0xf0] sm:$0xf]
  %v84 = vld [vmem:[%s0 + $0xf4] sm:$0xf]
  %v85 = vld [vmem:[%s0 + $0xf8] sm:$0xf]
  %v86 = vld [vmem:[%s0 + $0xfc] sm:$0xf]
  %v87 = vunpack.c.l.bf16 %v23
  %v88 = vunpack.c.l.bf16 %v24
  %v89 = vunpack.c.l.bf16 %v25
  %v90 = vunpack.c.l.bf16 %v26
  %v91 = vunpack.c.l.bf16 %v27
  %v92 = vunpack.c.l.bf16 %v28
  %v93 = vunpack.c.l.bf16 %v29
  %v94 = vunpack.c.l.bf16 %v30
  %v95 = vunpack.c.l.bf16 %v31
  %v96 = vunpack.c.l.bf16 %v32
  %v97 = vunpack.c.l.bf16 %v33
  %v98 = vunpack.c.l.bf16 %v34
  %v99 = vunpack.c.l.bf16 %v35
  %v100 = vunpack.c.l.bf16 %v36
  %v101 = vunpack.c.l.bf16 %v37
  %v102 = vunpack.c.l.bf16 %v38
  %v103 = vunpack.c.l.bf16 %v39
  %v104 = vunpack.c.l.bf16 %v40
  %v105 = vunpack.c.l.bf16 %v41
  %v106 = vunpack.c.l.bf16 %v42
  %v107 = vunpack.c.l.bf16 %v43
  %v108 = vunpack.c.l.bf16 %v44
  %v109 = vunpack.c.l.bf16 %v45
  %v110 = vunpack.c.l.bf16 %v46
  %v111 = vunpack.c.l.bf16 %v47
  %v112 = vunpack.c.l.bf16 %v48
  %v113 = vunpack.c.l.bf16 %v49
  %v114 = vunpack.c.l.bf16 %v50
  %v115 = vunpack.c.l.bf16 %v51
  %v116 = vunpack.c.l.bf16 %v52
  %v117 = vunpack.c.l.bf16 %v53
  %v118 = vunpack.c.l.bf16 %v54
  %v119 = vunpack.c.l.bf16 %v55
  %v120 = vunpack.c.l.bf16 %v56
  %v121 = vunpack.c.l.bf16 %v57
  %v122 = vunpack.c.l.bf16 %v58
  %v123 = vunpack.c.l.bf16 %v59
  %v124 = vunpack.c.l.bf16 %v60
  %v125 = vunpack.c.l.bf16 %v61
  %v126 = vunpack.c.l.bf16 %v62
  %v127 = vunpack.c.l.bf16 %v63
  %v128 = vunpack.c.l.bf16 %v64
  %v129 = vunpack.c.l.bf16 %v65
  %v130 = vunpack.c.l.bf16 %v66
  %v131 = vunpack.c.l.bf16 %v67
  %v132 = vunpack.c.l.bf16 %v68
  %v133 = vunpack.c.l.bf16 %v69
  %v134 = vunpack.c.l.bf16 %v70
  %v135 = vunpack.c.l.bf16 %v71
  %v136 = vunpack.c.l.bf16 %v72
  %v137 = vunpack.c.l.bf16 %v73
  %v138 = vunpack.c.l.bf16 %v74
  %v139 = vunpack.c.l.bf16 %v75
  %v140 = vunpack.c.l.bf16 %v76
  %v141 = vunpack.c.l.bf16 %v77
  %v142 = vunpack.c.l.bf16 %v78
  %v143 = vunpack.c.l.bf16 %v79
  %v144 = vunpack.c.l.bf16 %v80
  %v145 = vunpack.c.l.bf16 %v81
  %v146 = vunpack.c.l.bf16 %v82
  %v147 = vunpack.c.l.bf16 %v83
  %v148 = vunpack.c.l.bf16 %v84
  %v149 = vunpack.c.l.bf16 %v85
  %v150 = vunpack.c.l.bf16 %v86
  %v151 = vld [vmem:[%s2] sm:$0x1]
  %v153 = vlaneseq
  %v154 = vshrl.u32 %v153, 7
  %v155 = vsub.s32 0, %v154
  %v156 = vrot.slane %v151, %v155
  %v158 = vmul.f32 %v87, %v156
  %v159 = vmul.f32 %v88, %v156
  %v160 = vmul.f32 %v89, %v156
  %v161 = vmul.f32 %v90, %v156
  %v162 = vmul.f32 %v91, %v156
  %v163 = vmul.f32 %v92, %v156
  %v164 = vmul.f32 %v93, %v156
  %v165 = vmul.f32 %v94, %v156
  %v166 = vmul.f32 %v95, %v156
  %v167 = vmul.f32 %v96, %v156
  %v168 = vmul.f32 %v97, %v156
  %v169 = vmul.f32 %v98, %v156
  %v170 = vmul.f32 %v99, %v156
  %v171 = vmul.f32 %v100, %v156
  %v172 = vmul.f32 %v101, %v156
  %v173 = vmul.f32 %v102, %v156
  %v174 = vmul.f32 %v103, %v156
  %v175 = vmul.f32 %v104, %v156
  %v176 = vmul.f32 %v105, %v156
  %v177 = vmul.f32 %v106, %v156
  %v178 = vmul.f32 %v107, %v156
  %v179 = vmul.f32 %v108, %v156
  %v180 = vmul.f32 %v109, %v156
  %v181 = vmul.f32 %v110, %v156
  %v182 = vmul.f32 %v111, %v156
  %v183 = vmul.f32 %v112, %v156
  %v184 = vmul.f32 %v113, %v156
  %v185 = vmul.f32 %v114, %v156
  %v186 = vmul.f32 %v115, %v156
  %v187 = vmul.f32 %v116, %v156
  %v188 = vmul.f32 %v117, %v156
  %v189 = vmul.f32 %v118, %v156
  %v190 = vmul.f32 %v119, %v156
  %v191 = vmul.f32 %v120, %v156
  %v192 = vmul.f32 %v121, %v156
  %v193 = vmul.f32 %v122, %v156
  %v194 = vmul.f32 %v123, %v156
  %v195 = vmul.f32 %v124, %v156
  %v196 = vmul.f32 %v125, %v156
  %v197 = vmul.f32 %v126, %v156
  %v198 = vmul.f32 %v127, %v156
  %v199 = vmul.f32 %v128, %v156
  %v200 = vmul.f32 %v129, %v156
  %v201 = vmul.f32 %v130, %v156
  %v202 = vmul.f32 %v131, %v156
  %v203 = vmul.f32 %v132, %v156
  %v204 = vmul.f32 %v133, %v156
  %v205 = vmul.f32 %v134, %v156
  %v206 = vmul.f32 %v135, %v156
  %v207 = vmul.f32 %v136, %v156
  %v208 = vmul.f32 %v137, %v156
  %v209 = vmul.f32 %v138, %v156
  %v210 = vmul.f32 %v139, %v156
  %v211 = vmul.f32 %v140, %v156
  %v212 = vmul.f32 %v141, %v156
  %v213 = vmul.f32 %v142, %v156
  %v214 = vmul.f32 %v143, %v156
  %v215 = vmul.f32 %v144, %v156
  %v216 = vmul.f32 %v145, %v156
  %v217 = vmul.f32 %v146, %v156
  %v218 = vmul.f32 %v147, %v156
  %v219 = vmul.f32 %v148, %v156
  %v220 = vmul.f32 %v149, %v156
  %v221 = vmul.f32 %v150, %v156
  %v222 = vld [vmem:[%s3] sm:$0x1]
  %v224 = vlaneseq
  %v225 = vshrl.u32 %v224, 7
  %v226 = vsub.s32 0, %v225
  %v227 = vrot.slane %v222, %v226
  %v229 = vadd.f32 %v158, %v227
  %v230 = vadd.f32 %v159, %v227
  %v231 = vadd.f32 %v160, %v227
  %v232 = vadd.f32 %v161, %v227
  %v233 = vadd.f32 %v162, %v227
  %v234 = vadd.f32 %v163, %v227
  %v235 = vadd.f32 %v164, %v227
  %v236 = vadd.f32 %v165, %v227
  %v237 = vadd.f32 %v166, %v227
  %v238 = vadd.f32 %v167, %v227
  %v239 = vadd.f32 %v168, %v227
  %v240 = vadd.f32 %v169, %v227
  %v241 = vadd.f32 %v170, %v227
  %v242 = vadd.f32 %v171, %v227
  %v243 = vadd.f32 %v172, %v227
  %v244 = vadd.f32 %v173, %v227
  %v245 = vadd.f32 %v174, %v227
  %v246 = vadd.f32 %v175, %v227
  %v247 = vadd.f32 %v176, %v227
  %v248 = vadd.f32 %v177, %v227
  %v249 = vadd.f32 %v178, %v227
  %v250 = vadd.f32 %v179, %v227
  %v251 = vadd.f32 %v180, %v227
  %v252 = vadd.f32 %v181, %v227
  %v253 = vadd.f32 %v182, %v227
  %v254 = vadd.f32 %v183, %v227
  %v255 = vadd.f32 %v184, %v227
  %v256 = vadd.f32 %v185, %v227
  %v257 = vadd.f32 %v186, %v227
  %v258 = vadd.f32 %v187, %v227
  %v259 = vadd.f32 %v188, %v227
  %v260 = vadd.f32 %v189, %v227
  %v261 = vadd.f32 %v190, %v227
  %v262 = vadd.f32 %v191, %v227
  %v263 = vadd.f32 %v192, %v227
  %v264 = vadd.f32 %v193, %v227
  %v265 = vadd.f32 %v194, %v227
  %v266 = vadd.f32 %v195, %v227
  %v267 = vadd.f32 %v196, %v227
  %v268 = vadd.f32 %v197, %v227
  %v269 = vadd.f32 %v198, %v227
  %v270 = vadd.f32 %v199, %v227
  %v271 = vadd.f32 %v200, %v227
  %v272 = vadd.f32 %v201, %v227
  %v273 = vadd.f32 %v202, %v227
  %v274 = vadd.f32 %v203, %v227
  %v275 = vadd.f32 %v204, %v227
  %v276 = vadd.f32 %v205, %v227
  %v277 = vadd.f32 %v206, %v227
  %v278 = vadd.f32 %v207, %v227
  %v279 = vadd.f32 %v208, %v227
  %v280 = vadd.f32 %v209, %v227
  %v281 = vadd.f32 %v210, %v227
  %v282 = vadd.f32 %v211, %v227
  %v283 = vadd.f32 %v212, %v227
  %v284 = vadd.f32 %v213, %v227
  %v285 = vadd.f32 %v214, %v227
  %v286 = vadd.f32 %v215, %v227
  %v287 = vadd.f32 %v216, %v227
  %v288 = vadd.f32 %v217, %v227
  %v289 = vadd.f32 %v218, %v227
  %v290 = vadd.f32 %v219, %v227
  %v291 = vadd.f32 %v220, %v227
  %v292 = vadd.f32 %v221, %v227
  %v293 = vld [vmem:[%s1] sm:$0xf]
  %v294 = vld [vmem:[%s1 + $0x4] sm:$0xf]
  %v295 = vld [vmem:[%s1 + $0x8] sm:$0xf]
  %v296 = vld [vmem:[%s1 + $0xc] sm:$0xf]
  %v297 = vld [vmem:[%s1 + $0x10] sm:$0xf]
  %v298 = vld [vmem:[%s1 + $0x14] sm:$0xf]
  %v299 = vld [vmem:[%s1 + $0x18] sm:$0xf]
  %v300 = vld [vmem:[%s1 + $0x1c] sm:$0xf]
  %v301 = vld [vmem:[%s1 + $0x20] sm:$0xf]
  %v302 = vld [vmem:[%s1 + $0x24] sm:$0xf]
  %v303 = vld [vmem:[%s1 + $0x28] sm:$0xf]
  %v304 = vld [vmem:[%s1 + $0x2c] sm:$0xf]
  %v305 = vld [vmem:[%s1 + $0x30] sm:$0xf]
  %v306 = vld [vmem:[%s1 + $0x34] sm:$0xf]
  %v307 = vld [vmem:[%s1 + $0x38] sm:$0xf]
  %v308 = vld [vmem:[%s1 + $0x3c] sm:$0xf]
  %v309 = vld [vmem:[%s1 + $0x40] sm:$0xf]
  %v310 = vld [vmem:[%s1 + $0x44] sm:$0xf]
  %v311 = vld [vmem:[%s1 + $0x48] sm:$0xf]
  %v312 = vld [vmem:[%s1 + $0x4c] sm:$0xf]
  %v313 = vld [vmem:[%s1 + $0x50] sm:$0xf]
  %v314 = vld [vmem:[%s1 + $0x54] sm:$0xf]
  %v315 = vld [vmem:[%s1 + $0x58] sm:$0xf]
  %v316 = vld [vmem:[%s1 + $0x5c] sm:$0xf]
  %v317 = vld [vmem:[%s1 + $0x60] sm:$0xf]
  %v318 = vld [vmem:[%s1 + $0x64] sm:$0xf]
  %v319 = vld [vmem:[%s1 + $0x68] sm:$0xf]
  %v320 = vld [vmem:[%s1 + $0x6c] sm:$0xf]
  %v321 = vld [vmem:[%s1 + $0x70] sm:$0xf]
  %v322 = vld [vmem:[%s1 + $0x74] sm:$0xf]
  %v323 = vld [vmem:[%s1 + $0x78] sm:$0xf]
  %v324 = vld [vmem:[%s1 + $0x7c] sm:$0xf]
  %v325 = vld [vmem:[%s1 + $0x80] sm:$0xf]
  %v326 = vld [vmem:[%s1 + $0x84] sm:$0xf]
  %v327 = vld [vmem:[%s1 + $0x88] sm:$0xf]
  %v328 = vld [vmem:[%s1 + $0x8c] sm:$0xf]
  %v329 = vld [vmem:[%s1 + $0x90] sm:$0xf]
  %v330 = vld [vmem:[%s1 + $0x94] sm:$0xf]
  %v331 = vld [vmem:[%s1 + $0x98] sm:$0xf]
  %v332 = vld [vmem:[%s1 + $0x9c] sm:$0xf]
  %v333 = vld [vmem:[%s1 + $0xa0] sm:$0xf]
  %v334 = vld [vmem:[%s1 + $0xa4] sm:$0xf]
  %v335 = vld [vmem:[%s1 + $0xa8] sm:$0xf]
  %v336 = vld [vmem:[%s1 + $0xac] sm:$0xf]
  %v337 = vld [vmem:[%s1 + $0xb0] sm:$0xf]
  %v338 = vld [vmem:[%s1 + $0xb4] sm:$0xf]
  %v339 = vld [vmem:[%s1 + $0xb8] sm:$0xf]
  %v340 = vld [vmem:[%s1 + $0xbc] sm:$0xf]
  %v341 = vld [vmem:[%s1 + $0xc0] sm:$0xf]
  %v342 = vld [vmem:[%s1 + $0xc4] sm:$0xf]
  %v343 = vld [vmem:[%s1 + $0xc8] sm:$0xf]
  %v344 = vld [vmem:[%s1 + $0xcc] sm:$0xf]
  %v345 = vld [vmem:[%s1 + $0xd0] sm:$0xf]
  %v346 = vld [vmem:[%s1 + $0xd4] sm:$0xf]
  %v347 = vld [vmem:[%s1 + $0xd8] sm:$0xf]
  %v348 = vld [vmem:[%s1 + $0xdc] sm:$0xf]
  %v349 = vld [vmem:[%s1 + $0xe0] sm:$0xf]
  %v350 = vld [vmem:[%s1 + $0xe4] sm:$0xf]
  %v351 = vld [vmem:[%s1 + $0xe8] sm:$0xf]
  %v352 = vld [vmem:[%s1 + $0xec] sm:$0xf]
  %v353 = vld [vmem:[%s1 + $0xf0] sm:$0xf]
  %v354 = vld [vmem:[%s1 + $0xf4] sm:$0xf]
  %v355 = vld [vmem:[%s1 + $0xf8] sm:$0xf]
  %v356 = vld [vmem:[%s1 + $0xfc] sm:$0xf]
  %v357 = vunpack.c.l.bf16 %v293
  %v358 = vunpack.c.l.bf16 %v294
  %v359 = vunpack.c.l.bf16 %v295
  %v360 = vunpack.c.l.bf16 %v296
  %v361 = vunpack.c.l.bf16 %v297
  %v362 = vunpack.c.l.bf16 %v298
  %v363 = vunpack.c.l.bf16 %v299
  %v364 = vunpack.c.l.bf16 %v300
  %v365 = vunpack.c.l.bf16 %v301
  %v366 = vunpack.c.l.bf16 %v302
  %v367 = vunpack.c.l.bf16 %v303
  %v368 = vunpack.c.l.bf16 %v304
  %v369 = vunpack.c.l.bf16 %v305
  %v370 = vunpack.c.l.bf16 %v306
  %v371 = vunpack.c.l.bf16 %v307
  %v372 = vunpack.c.l.bf16 %v308
  %v373 = vunpack.c.l.bf16 %v309
  %v374 = vunpack.c.l.bf16 %v310
  %v375 = vunpack.c.l.bf16 %v311
  %v376 = vunpack.c.l.bf16 %v312
  %v377 = vunpack.c.l.bf16 %v313
  %v378 = vunpack.c.l.bf16 %v314
  %v379 = vunpack.c.l.bf16 %v315
  %v380 = vunpack.c.l.bf16 %v316
  %v381 = vunpack.c.l.bf16 %v317
  %v382 = vunpack.c.l.bf16 %v318
  %v383 = vunpack.c.l.bf16 %v319
  %v384 = vunpack.c.l.bf16 %v320
  %v385 = vunpack.c.l.bf16 %v321
  %v386 = vunpack.c.l.bf16 %v322
  %v387 = vunpack.c.l.bf16 %v323
  %v388 = vunpack.c.l.bf16 %v324
  %v389 = vunpack.c.l.bf16 %v325
  %v390 = vunpack.c.l.bf16 %v326
  %v391 = vunpack.c.l.bf16 %v327
  %v392 = vunpack.c.l.bf16 %v328
  %v393 = vunpack.c.l.bf16 %v329
  %v394 = vunpack.c.l.bf16 %v330
  %v395 = vunpack.c.l.bf16 %v331
  %v396 = vunpack.c.l.bf16 %v332
  %v397 = vunpack.c.l.bf16 %v333
  %v398 = vunpack.c.l.bf16 %v334
  %v399 = vunpack.c.l.bf16 %v335
  %v400 = vunpack.c.l.bf16 %v336
  %v401 = vunpack.c.l.bf16 %v337
  %v402 = vunpack.c.l.bf16 %v338
  %v403 = vunpack.c.l.bf16 %v339
  %v404 = vunpack.c.l.bf16 %v340
  %v405 = vunpack.c.l.bf16 %v341
  %v406 = vunpack.c.l.bf16 %v342
  %v407 = vunpack.c.l.bf16 %v343
  %v408 = vunpack.c.l.bf16 %v344
  %v409 = vunpack.c.l.bf16 %v345
  %v410 = vunpack.c.l.bf16 %v346
  %v411 = vunpack.c.l.bf16 %v347
  %v412 = vunpack.c.l.bf16 %v348
  %v413 = vunpack.c.l.bf16 %v349
  %v414 = vunpack.c.l.bf16 %v350
  %v415 = vunpack.c.l.bf16 %v351
  %v416 = vunpack.c.l.bf16 %v352
  %v417 = vunpack.c.l.bf16 %v353
  %v418 = vunpack.c.l.bf16 %v354
  %v419 = vunpack.c.l.bf16 %v355
  %v420 = vunpack.c.l.bf16 %v356
  %v421 = vld [vmem:[%s4] sm:$0x1]
  %v423 = vlaneseq
  %v424 = vshrl.u32 %v423, 7
  %v425 = vsub.s32 0, %v424
  %v426 = vrot.slane %v421, %v425
  %v428 = vmul.f32 %v357, %v426
  %v429 = vmul.f32 %v358, %v426
  %v430 = vmul.f32 %v359, %v426
  %v431 = vmul.f32 %v360, %v426
  %v432 = vmul.f32 %v361, %v426
  %v433 = vmul.f32 %v362, %v426
  %v434 = vmul.f32 %v363, %v426
  %v435 = vmul.f32 %v364, %v426
  %v436 = vmul.f32 %v365, %v426
  %v437 = vmul.f32 %v366, %v426
  %v438 = vmul.f32 %v367, %v426
  %v439 = vmul.f32 %v368, %v426
  %v440 = vmul.f32 %v369, %v426
  %v441 = vmul.f32 %v370, %v426
  %v442 = vmul.f32 %v371, %v426
  %v443 = vmul.f32 %v372, %v426
  %v444 = vmul.f32 %v373, %v426
  %v445 = vmul.f32 %v374, %v426
  %v446 = vmul.f32 %v375, %v426
  %v447 = vmul.f32 %v376, %v426
  %v448 = vmul.f32 %v377, %v426
  %v449 = vmul.f32 %v378, %v426
  %v450 = vmul.f32 %v379, %v426
  %v451 = vmul.f32 %v380, %v426
  %v452 = vmul.f32 %v381, %v426
  %v453 = vmul.f32 %v382, %v426
  %v454 = vmul.f32 %v383, %v426
  %v455 = vmul.f32 %v384, %v426
  %v456 = vmul.f32 %v385, %v426
  %v457 = vmul.f32 %v386, %v426
  %v458 = vmul.f32 %v387, %v426
  %v459 = vmul.f32 %v388, %v426
  %v460 = vmul.f32 %v389, %v426
  %v461 = vmul.f32 %v390, %v426
  %v462 = vmul.f32 %v391, %v426
  %v463 = vmul.f32 %v392, %v426
  %v464 = vmul.f32 %v393, %v426
  %v465 = vmul.f32 %v394, %v426
  %v466 = vmul.f32 %v395, %v426
  %v467 = vmul.f32 %v396, %v426
  %v468 = vmul.f32 %v397, %v426
  %v469 = vmul.f32 %v398, %v426
  %v470 = vmul.f32 %v399, %v426
  %v471 = vmul.f32 %v400, %v426
  %v472 = vmul.f32 %v401, %v426
  %v473 = vmul.f32 %v402, %v426
  %v474 = vmul.f32 %v403, %v426
  %v475 = vmul.f32 %v404, %v426
  %v476 = vmul.f32 %v405, %v426
  %v477 = vmul.f32 %v406, %v426
  %v478 = vmul.f32 %v407, %v426
  %v479 = vmul.f32 %v408, %v426
  %v480 = vmul.f32 %v409, %v426
  %v481 = vmul.f32 %v410, %v426
  %v482 = vmul.f32 %v411, %v426
  %v483 = vmul.f32 %v412, %v426
  %v484 = vmul.f32 %v413, %v426
  %v485 = vmul.f32 %v414, %v426
  %v486 = vmul.f32 %v415, %v426
  %v487 = vmul.f32 %v416, %v426
  %v488 = vmul.f32 %v417, %v426
  %v489 = vmul.f32 %v418, %v426
  %v490 = vmul.f32 %v419, %v426
  %v491 = vmul.f32 %v420, %v426
  %v492 = vld [vmem:[%s5] sm:$0x1]
  %v494 = vlaneseq
  %v495 = vshrl.u32 %v494, 7
  %v496 = vsub.s32 0, %v495
  %v497 = vrot.slane %v492, %v496
  %v499 = vadd.f32 %v428, %v497
  %v500 = vadd.f32 %v429, %v497
  %v501 = vadd.f32 %v430, %v497
  %v502 = vadd.f32 %v431, %v497
  %v503 = vadd.f32 %v432, %v497
  %v504 = vadd.f32 %v433, %v497
  %v505 = vadd.f32 %v434, %v497
  %v506 = vadd.f32 %v435, %v497
  %v507 = vadd.f32 %v436, %v497
  %v508 = vadd.f32 %v437, %v497
  %v509 = vadd.f32 %v438, %v497
  %v510 = vadd.f32 %v439, %v497
  %v511 = vadd.f32 %v440, %v497
  %v512 = vadd.f32 %v441, %v497
  %v513 = vadd.f32 %v442, %v497
  %v514 = vadd.f32 %v443, %v497
  %v515 = vadd.f32 %v444, %v497
  %v516 = vadd.f32 %v445, %v497
  %v517 = vadd.f32 %v446, %v497
  %v518 = vadd.f32 %v447, %v497
  %v519 = vadd.f32 %v448, %v497
  %v520 = vadd.f32 %v449, %v497
  %v521 = vadd.f32 %v450, %v497
  %v522 = vadd.f32 %v451, %v497
  %v523 = vadd.f32 %v452, %v497
  %v524 = vadd.f32 %v453, %v497
  %v525 = vadd.f32 %v454, %v497
  %v526 = vadd.f32 %v455, %v497
  %v527 = vadd.f32 %v456, %v497
  %v528 = vadd.f32 %v457, %v497
  %v529 = vadd.f32 %v458, %v497
  %v530 = vadd.f32 %v459, %v497
  %v531 = vadd.f32 %v460, %v497
  %v532 = vadd.f32 %v461, %v497
  %v533 = vadd.f32 %v462, %v497
  %v534 = vadd.f32 %v463, %v497
  %v535 = vadd.f32 %v464, %v497
  %v536 = vadd.f32 %v465, %v497
  %v537 = vadd.f32 %v466, %v497
  %v538 = vadd.f32 %v467, %v497
  %v539 = vadd.f32 %v468, %v497
  %v540 = vadd.f32 %v469, %v497
  %v541 = vadd.f32 %v470, %v497
  %v542 = vadd.f32 %v471, %v497
  %v543 = vadd.f32 %v472, %v497
  %v544 = vadd.f32 %v473, %v497
  %v545 = vadd.f32 %v474, %v497
  %v546 = vadd.f32 %v475, %v497
  %v547 = vadd.f32 %v476, %v497
  %v548 = vadd.f32 %v477, %v497
  %v549 = vadd.f32 %v478, %v497
  %v550 = vadd.f32 %v479, %v497
  %v551 = vadd.f32 %v480, %v497
  %v552 = vadd.f32 %v481, %v497
  %v553 = vadd.f32 %v482, %v497
  %v554 = vadd.f32 %v483, %v497
  %v555 = vadd.f32 %v484, %v497
  %v556 = vadd.f32 %v485, %v497
  %v557 = vadd.f32 %v486, %v497
  %v558 = vadd.f32 %v487, %v497
  %v559 = vadd.f32 %v488, %v497
  %v560 = vadd.f32 %v489, %v497
  %v561 = vadd.f32 %v490, %v497
  %v562 = vadd.f32 %v491, %v497
  %v563 = vadd.f32 %v229, %v499
  %v564 = vadd.f32 %v230, %v500
  %v565 = vadd.f32 %v231, %v501
  %v566 = vadd.f32 %v232, %v502
  %v567 = vadd.f32 %v233, %v503
  %v568 = vadd.f32 %v234, %v504
  %v569 = vadd.f32 %v235, %v505
  %v570 = vadd.f32 %v236, %v506
  %v571 = vadd.f32 %v237, %v507
  %v572 = vadd.f32 %v238, %v508
  %v573 = vadd.f32 %v239, %v509
  %v574 = vadd.f32 %v240, %v510
  %v575 = vadd.f32 %v241, %v511
  %v576 = vadd.f32 %v242, %v512
  %v577 = vadd.f32 %v243, %v513
  %v578 = vadd.f32 %v244, %v514
  %v579 = vadd.f32 %v245, %v515
  %v580 = vadd.f32 %v246, %v516
  %v581 = vadd.f32 %v247, %v517
  %v582 = vadd.f32 %v248, %v518
  %v583 = vadd.f32 %v249, %v519
  %v584 = vadd.f32 %v250, %v520
  %v585 = vadd.f32 %v251, %v521
  %v586 = vadd.f32 %v252, %v522
  %v587 = vadd.f32 %v253, %v523
  %v588 = vadd.f32 %v254, %v524
  %v589 = vadd.f32 %v255, %v525
  %v590 = vadd.f32 %v256, %v526
  %v591 = vadd.f32 %v257, %v527
  %v592 = vadd.f32 %v258, %v528
  %v593 = vadd.f32 %v259, %v529
  %v594 = vadd.f32 %v260, %v530
  %v595 = vadd.f32 %v261, %v531
  %v596 = vadd.f32 %v262, %v532
  %v597 = vadd.f32 %v263, %v533
  %v598 = vadd.f32 %v264, %v534
  %v599 = vadd.f32 %v265, %v535
  %v600 = vadd.f32 %v266, %v536
  %v601 = vadd.f32 %v267, %v537
  %v602 = vadd.f32 %v268, %v538
  %v603 = vadd.f32 %v269, %v539
  %v604 = vadd.f32 %v270, %v540
  %v605 = vadd.f32 %v271, %v541
  %v606 = vadd.f32 %v272, %v542
  %v607 = vadd.f32 %v273, %v543
  %v608 = vadd.f32 %v274, %v544
  %v609 = vadd.f32 %v275, %v545
  %v610 = vadd.f32 %v276, %v546
  %v611 = vadd.f32 %v277, %v547
  %v612 = vadd.f32 %v278, %v548
  %v613 = vadd.f32 %v279, %v549
  %v614 = vadd.f32 %v280, %v550
  %v615 = vadd.f32 %v281, %v551
  %v616 = vadd.f32 %v282, %v552
  %v617 = vadd.f32 %v283, %v553
  %v618 = vadd.f32 %v284, %v554
  %v619 = vadd.f32 %v285, %v555
  %v620 = vadd.f32 %v286, %v556
  %v621 = vadd.f32 %v287, %v557
  %v622 = vadd.f32 %v288, %v558
  %v623 = vadd.f32 %v289, %v559
  %v624 = vadd.f32 %v290, %v560
  %v625 = vadd.f32 %v291, %v561
  %v626 = vadd.f32 %v292, %v562
  %v627 = vmax.f32 %v563, 0.0
  %v628 = vmax.f32 %v564, 0.0
  %v629 = vmax.f32 %v565, 0.0
  %v630 = vmax.f32 %v566, 0.0
  %v631 = vmax.f32 %v567, 0.0
  %v632 = vmax.f32 %v568, 0.0
  %v633 = vmax.f32 %v569, 0.0
  %v634 = vmax.f32 %v570, 0.0
  %v635 = vmax.f32 %v571, 0.0
  %v636 = vmax.f32 %v572, 0.0
  %v637 = vmax.f32 %v573, 0.0
  %v638 = vmax.f32 %v574, 0.0
  %v639 = vmax.f32 %v575, 0.0
  %v640 = vmax.f32 %v576, 0.0
  %v641 = vmax.f32 %v577, 0.0
  %v642 = vmax.f32 %v578, 0.0
  %v643 = vmax.f32 %v579, 0.0
  %v644 = vmax.f32 %v580, 0.0
  %v645 = vmax.f32 %v581, 0.0
  %v646 = vmax.f32 %v582, 0.0
  %v647 = vmax.f32 %v583, 0.0
  %v648 = vmax.f32 %v584, 0.0
  %v649 = vmax.f32 %v585, 0.0
  %v650 = vmax.f32 %v586, 0.0
  %v651 = vmax.f32 %v587, 0.0
  %v652 = vmax.f32 %v588, 0.0
  %v653 = vmax.f32 %v589, 0.0
  %v654 = vmax.f32 %v590, 0.0
  %v655 = vmax.f32 %v591, 0.0
  %v656 = vmax.f32 %v592, 0.0
  %v657 = vmax.f32 %v593, 0.0
  %v658 = vmax.f32 %v594, 0.0
  %v659 = vmax.f32 %v595, 0.0
  %v660 = vmax.f32 %v596, 0.0
  %v661 = vmax.f32 %v597, 0.0
  %v662 = vmax.f32 %v598, 0.0
  %v663 = vmax.f32 %v599, 0.0
  %v664 = vmax.f32 %v600, 0.0
  %v665 = vmax.f32 %v601, 0.0
  %v666 = vmax.f32 %v602, 0.0
  %v667 = vmax.f32 %v603, 0.0
  %v668 = vmax.f32 %v604, 0.0
  %v669 = vmax.f32 %v605, 0.0
  %v670 = vmax.f32 %v606, 0.0
  %v671 = vmax.f32 %v607, 0.0
  %v672 = vmax.f32 %v608, 0.0
  %v673 = vmax.f32 %v609, 0.0
  %v674 = vmax.f32 %v610, 0.0
  %v675 = vmax.f32 %v611, 0.0
  %v676 = vmax.f32 %v612, 0.0
  %v677 = vmax.f32 %v613, 0.0
  %v678 = vmax.f32 %v614, 0.0
  %v679 = vmax.f32 %v615, 0.0
  %v680 = vmax.f32 %v616, 0.0
  %v681 = vmax.f32 %v617, 0.0
  %v682 = vmax.f32 %v618, 0.0
  %v683 = vmax.f32 %v619, 0.0
  %v684 = vmax.f32 %v620, 0.0
  %v685 = vmax.f32 %v621, 0.0
  %v686 = vmax.f32 %v622, 0.0
  %v687 = vmax.f32 %v623, 0.0
  %v688 = vmax.f32 %v624, 0.0
  %v689 = vmax.f32 %v625, 0.0
  %v690 = vmax.f32 %v626, 0.0
  %691 = vst [vmem:[%s6] sm:$0xff] %v627
  %692 = vst [vmem:[%s6 + $0x8] sm:$0xff] %v628
  %693 = vst [vmem:[%s6 + $0x10] sm:$0xff] %v629
  %694 = vst [vmem:[%s6 + $0x18] sm:$0xff] %v630
  %695 = vst [vmem:[%s6 + $0x20] sm:$0xff] %v631
  %696 = vst [vmem:[%s6 + $0x28] sm:$0xff] %v632
  %697 = vst [vmem:[%s6 + $0x30] sm:$0xff] %v633
  %698 = vst [vmem:[%s6 + $0x38] sm:$0xff] %v634
  %699 = vst [vmem:[%s6 + $0x40] sm:$0xff] %v635
  %700 = vst [vmem:[%s6 + $0x48] sm:$0xff] %v636
  %701 = vst [vmem:[%s6 + $0x50] sm:$0xff] %v637
  %702 = vst [vmem:[%s6 + $0x58] sm:$0xff] %v638
  %703 = vst [vmem:[%s6 + $0x60] sm:$0xff] %v639
  %704 = vst [vmem:[%s6 + $0x68] sm:$0xff] %v640
  %705 = vst [vmem:[%s6 + $0x70] sm:$0xff] %v641
  %706 = vst [vmem:[%s6 + $0x78] sm:$0xff] %v642
  %707 = vst [vmem:[%s6 + $0x80] sm:$0xff] %v643
  %708 = vst [vmem:[%s6 + $0x88] sm:$0xff] %v644
  %709 = vst [vmem:[%s6 + $0x90] sm:$0xff] %v645
  %710 = vst [vmem:[%s6 + $0x98] sm:$0xff] %v646
  %711 = vst [vmem:[%s6 + $0xa0] sm:$0xff] %v647
  %712 = vst [vmem:[%s6 + $0xa8] sm:$0xff] %v648
  %713 = vst [vmem:[%s6 + $0xb0] sm:$0xff] %v649
  %714 = vst [vmem:[%s6 + $0xb8] sm:$0xff] %v650
  %715 = vst [vmem:[%s6 + $0xc0] sm:$0xff] %v651
  %716 = vst [vmem:[%s6 + $0xc8] sm:$0xff] %v652
  %717 = vst [vmem:[%s6 + $0xd0] sm:$0xff] %v653
  %718 = vst [vmem:[%s6 + $0xd8] sm:$0xff] %v654
  %719 = vst [vmem:[%s6 + $0xe0] sm:$0xff] %v655
  %720 = vst [vmem:[%s6 + $0xe8] sm:$0xff] %v656
  %721 = vst [vmem:[%s6 + $0xf0] sm:$0xff] %v657
  %722 = vst [vmem:[%s6 + $0xf8] sm:$0xff] %v658
  %723 = vst [vmem:[%s6 + $0x100] sm:$0xff] %v659
  %724 = vst [vmem:[%s6 + $0x108] sm:$0xff] %v660
  %725 = vst [vmem:[%s6 + $0x110] sm:$0xff] %v661
  %726 = vst [vmem:[%s6 + $0x118] sm:$0xff] %v662
  %727 = vst [vmem:[%s6 + $0x120] sm:$0xff] %v663
  %728 = vst [vmem:[%s6 + $0x128] sm:$0xff] %v664
  %729 = vst [vmem:[%s6 + $0x130] sm:$0xff] %v665
  %730 = vst [vmem:[%s6 + $0x138] sm:$0xff] %v666
  %731 = vst [vmem:[%s6 + $0x140] sm:$0xff] %v667
  %732 = vst [vmem:[%s6 + $0x148] sm:$0xff] %v668
  %733 = vst [vmem:[%s6 + $0x150] sm:$0xff] %v669
  %734 = vst [vmem:[%s6 + $0x158] sm:$0xff] %v670
  %735 = vst [vmem:[%s6 + $0x160] sm:$0xff] %v671
  %736 = vst [vmem:[%s6 + $0x168] sm:$0xff] %v672
  %737 = vst [vmem:[%s6 + $0x170] sm:$0xff] %v673
  %738 = vst [vmem:[%s6 + $0x178] sm:$0xff] %v674
  %739 = vst [vmem:[%s6 + $0x180] sm:$0xff] %v675
  %740 = vst [vmem:[%s6 + $0x188] sm:$0xff] %v676
  %741 = vst [vmem:[%s6 + $0x190] sm:$0xff] %v677
  %742 = vst [vmem:[%s6 + $0x198] sm:$0xff] %v678
  %743 = vst [vmem:[%s6 + $0x1a0] sm:$0xff] %v679
  %744 = vst [vmem:[%s6 + $0x1a8] sm:$0xff] %v680
  %745 = vst [vmem:[%s6 + $0x1b0] sm:$0xff] %v681
  %746 = vst [vmem:[%s6 + $0x1b8] sm:$0xff] %v682
  %747 = vst [vmem:[%s6 + $0x1c0] sm:$0xff] %v683
  %748 = vst [vmem:[%s6 + $0x1c8] sm:$0xff] %v684
  %749 = vst [vmem:[%s6 + $0x1d0] sm:$0xff] %v685
  %750 = vst [vmem:[%s6 + $0x1d8] sm:$0xff] %v686
  %751 = vst [vmem:[%s6 + $0x1e0] sm:$0xff] %v687
  %752 = vst [vmem:[%s6 + $0x1e8] sm:$0xff] %v688
  %753 = vst [vmem:[%s6 + $0x1f0] sm:$0xff] %v689
  %754 = vst [vmem:[%s6 + $0x1f8] sm:$0xff] %v690
  // Predicated region
  $region26: #{residual_block_forward.5} parent=0 // pred_check
    _
  $region27: #{residual_block_forward.5} parent=0 // pred_check_branch
    %756 = sbr.rel (0) target = $region29
  $region28: #{residual_block_forward.5} parent=0 // pred_region
    _
  $region29: #{residual_block_forward.5} parent=0 // pred_fallthru
    _
  // Predicated region
  $region30: #{residual_block_forward.5} parent=0 // pred_check
    _
  $region31: #{residual_block_forward.5} parent=0 // pred_check_branch
    %758 = sbr.rel (0) target = $region33
  $region32: #{residual_block_forward.5} parent=0 // pred_region
    _
  $region33: #{residual_block_forward.5} parent=0 // pred_fallthru
    _

// kernel: residual_block_forward.3
$region0: #{residual_block_forward.3}
  #allocation0 [shape = 'u32[]', space=smem, size = 0x4, offset = 0x4, fixed_abs, tag = 'smem constant byte address 0x4 - core index']
  #allocation1 [shape = 'u32[144,128]{1,0:T(1,128)}', space=vmem, size = 0x12000, scoped, tag = 'internal scratch']
  %s0 = inlined_call_operand.vmem [shape: bf16[2,1,18,24,128], index: 0, kind: input, shape index: {}]
  %s1 = inlined_call_operand.vmem [shape: bf16[9,128,128], index: 1, kind: input, shape index: {}]
  %s2 = inlined_call_operand.vmem [shape: bf16[128,128], index: 2, kind: input, shape index: {}]
  %s3 = inlined_call_operand.vmem [shape: bf16[2,16,16,128], index: 3, kind: output, shape index: {0}]
  %s4 = inlined_call_operand.vmem [shape: bf16[2,16,16,128], index: 4, kind: output, shape index: {1}]
  %s5 = inlined_call_operand.vmem [shape: f32[2,2,128], index: 5, kind: output, shape index: {2}]
  %s6 = inlined_call_operand.vmem [shape: f32[2,2,128], index: 6, kind: output, shape index: {3}]
  %7 = xla_tuple %s3, %s4, %s5, %s6
  %s8 = sld [smem:[#allocation0]]
  $region69: #{residual_block_forward.3} parent=0
    _
  %s10 = ssub.s32 1, %s8
  %s11 = scalar_select 0, %s10, %s8
  loop: start=0, step=1, limit=4
  $region2: #{residual_block_forward.3} parent=0 // loop_pre_header
    _
  $region3: #{residual_block_forward.3} parent=0 // loop_header
    %s13 = sphi 0, %s17
    %p14 = scmp.ge.s32.totalorder %s13, 4
    %s23 = sphi 0, %s25
    %s26 = sphi 0, %s23
    %s27 = sphi 0, %s26
    %s43 = sphi 0, %s27
    %s47 = sphi 0, %s47
    %s49 = sphi 0, %s47
    %s50 = sphi 0, %s49
    %s64 = sphi 0, %s50
    %s68 = sphi 0, %s68
    %s70 = sphi 0, %s68
    %s71 = sphi 0, %s70
    %s85 = sphi 0, %s71
    %s91 = sphi 0, %s93
    %s94 = sphi 0, %s91
    %s95 = sphi 0, %s94
    %s111 = sphi 0, %s95
    %s117 = sphi 0, %s119
    %s120 = sphi 0, %s117
    %s121 = sphi 0, %s120
    %s137 = sphi 0, %s121
    %s143 = sphi 0, %s145
    %s146 = sphi 0, %s143
    %s147 = sphi 0, %s146
    %s163 = sphi 0, %s147
    %s169 = sphi 0, %s171
    %s172 = sphi 0, %s169
    %s173 = sphi 0, %s172
    %s189 = sphi 0, %s173
  $region4: #{residual_block_forward.3} parent=0 // loop_header_branch
    %16 = sbr.rel (%p14) target = $region8
  $region5: #{residual_block_forward.3} parent=0 // loop_body
    %s18 = ssub.s32 %s13, 1
    %s19 = ssub.s32 %s13, 2
    %s20 = sadd.s32 %s13, 1
    %s21 = ssub.s32 %s13, %s20
    %p22 = scmp.eq.s32.totalorder %s21, 0
    %s24 = sadd.s32 %s23, 1
    %s25 = scalar_select %p22, %s23, %s24
    %p28 = pneg %p22
    %p29 = scmp.eq.s32.totalorder %s13, 1
    %p30 = por %p28, %p29
    %p31 = scmp.ne.s32.totalorder %s23, %s26
    %p32 = scmp.eq.s32.totalorder %s13, 0
    %p33 = por %p31, %p32
    %p34 = scmp.ne.s32.totalorder %s23, %s26
    %p35 = scmp.eq.s32.totalorder %s18, 1
    %p36 = por %p34, %p35
    %p37 = scmp.ne.s32.totalorder %s26, %s27
    %p38 = scmp.eq.s32.totalorder %s18, 0
    %p39 = por %p37, %p38
    %p40 = scmp.ne.s32.totalorder %s26, %s27
    %p41 = scmp.eq.s32.totalorder %s19, 1
    %p42 = por %p40, %p41
    %p44 = scmp.ne.s32.totalorder %s27, %s43
    %p45 = scmp.eq.s32.totalorder %s19, 0
    %p46 = por %p44, %p45
    %s48 = sadd.s32 %s47, 1
    %p51 = scmp.eq.s32.totalorder %s13, 1
    %p52 = scmp.ne.s32.totalorder %s47, %s49
    %p53 = scmp.eq.s32.totalorder %s13, 0
    %p54 = por %p52, %p53
    %p55 = scmp.ne.s32.totalorder %s47, %s49
    %p56 = scmp.eq.s32.totalorder %s18, 1
    %p57 = por %p55, %p56
    %p58 = scmp.ne.s32.totalorder %s49, %s50
    %p59 = scmp.eq.s32.totalorder %s18, 0
    %p60 = por %p58, %p59
    %p61 = scmp.ne.s32.totalorder %s49, %s50
    %p62 = scmp.eq.s32.totalorder %s19, 1
    %p63 = por %p61, %p62
    %p65 = scmp.ne.s32.totalorder %s50, %s64
    %p66 = scmp.eq.s32.totalorder %s19, 0
    %p67 = por %p65, %p66
    %s69 = sadd.s32 %s68, 1
    %p72 = scmp.eq.s32.totalorder %s13, 1
    %p73 = scmp.ne.s32.totalorder %s68, %s70
    %p74 = scmp.eq.s32.totalorder %s13, 0
    %p75 = por %p73, %p74
    %p76 = scmp.ne.s32.totalorder %s68, %s70
    %p77 = scmp.eq.s32.totalorder %s18, 1
    %p78 = por %p76, %p77
    %p79 = scmp.ne.s32.totalorder %s70, %s71
    %p80 = scmp.eq.s32.totalorder %s18, 0
    %p81 = por %p79, %p80
    %p82 = scmp.ne.s32.totalorder %s70, %s71
    %p83 = scmp.eq.s32.totalorder %s19, 1
    %p84 = por %p82, %p83
    %p86 = scmp.ne.s32.totalorder %s71, %s85
    %p87 = scmp.eq.s32.totalorder %s19, 0
    %p88 = por %p86, %p87
    %s89 = ssub.s32 %s13, %s20
    %p90 = scmp.eq.s32.totalorder %s89, 0
    %s92 = sadd.s32 %s91, 1
    %s93 = scalar_select %p90, %s91, %s92
    %p96 = pneg %p90
    %p97 = scmp.eq.s32.totalorder %s13, 1
    %p98 = por %p96, %p97
    %p99 = scmp.ne.s32.totalorder %s91, %s94
    %p100 = scmp.eq.s32.totalorder %s13, 0
    %p101 = por %p99, %p100
    %p102 = scmp.ne.s32.totalorder %s91, %s94
    %p103 = scmp.eq.s32.totalorder %s18, 1
    %p104 = por %p102, %p103
    %p105 = scmp.ne.s32.totalorder %s94, %s95
    %p106 = scmp.eq.s32.totalorder %s18, 0
    %p107 = por %p105, %p106
    %p108 = scmp.ne.s32.totalorder %s94, %s95
    %p109 = scmp.eq.s32.totalorder %s19, 1
    %p110 = por %p108, %p109
    %p112 = scmp.ne.s32.totalorder %s95, %s111
    %p113 = scmp.eq.s32.totalorder %s19, 0
    %p114 = por %p112, %p113
    %s115 = ssub.s32 %s13, %s20
    %p116 = scmp.eq.s32.totalorder %s115, 0
    %s118 = sadd.s32 %s117, 1
    %s119 = scalar_select %p116, %s117, %s118
    %p122 = pneg %p116
    %p123 = scmp.eq.s32.totalorder %s13, 1
    %p124 = por %p122, %p123
    %p125 = scmp.ne.s32.totalorder %s117, %s120
    %p126 = scmp.eq.s32.totalorder %s13, 0
    %p127 = por %p125, %p126
    %p128 = scmp.ne.s32.totalorder %s117, %s120
    %p129 = scmp.eq.s32.totalorder %s18, 1
    %p130 = por %p128, %p129
    %p131 = scmp.ne.s32.totalorder %s120, %s121
    %p132 = scmp.eq.s32.totalorder %s18, 0
    %p133 = por %p131, %p132
    %p134 = scmp.ne.s32.totalorder %s120, %s121
    %p135 = scmp.eq.s32.totalorder %s19, 1
    %p136 = por %p134, %p135
    %p138 = scmp.ne.s32.totalorder %s121, %s137
    %p139 = scmp.eq.s32.totalorder %s19, 0
    %p140 = por %p138, %p139
    %s141 = ssub.s32 %s13, %s20
    %p142 = scmp.eq.s32.totalorder %s141, 0
    %s144 = sadd.s32 %s143, 1
    %s145 = scalar_select %p142, %s143, %s144
    %p148 = pneg %p142
    %p149 = scmp.eq.s32.totalorder %s13, 1
    %p150 = por %p148, %p149
    %p151 = scmp.ne.s32.totalorder %s143, %s146
    %p152 = scmp.eq.s32.totalorder %s13, 0
    %p153 = por %p151, %p152
    %p154 = scmp.ne.s32.totalorder %s143, %s146
    %p155 = scmp.eq.s32.totalorder %s18, 1
    %p156 = por %p154, %p155
    %p157 = scmp.ne.s32.totalorder %s146, %s147
    %p158 = scmp.eq.s32.totalorder %s18, 0
    %p159 = por %p157, %p158
    %p160 = scmp.ne.s32.totalorder %s146, %s147
    %p161 = scmp.eq.s32.totalorder %s19, 1
    %p162 = por %p160, %p161
    %p164 = scmp.ne.s32.totalorder %s147, %s163
    %p165 = scmp.eq.s32.totalorder %s19, 0
    %p166 = por %p164, %p165
    %s167 = ssub.s32 %s13, %s20
    %p168 = scmp.eq.s32.totalorder %s167, 0
    %s170 = sadd.s32 %s169, 1
    %s171 = scalar_select %p168, %s169, %s170
    %p174 = pneg %p168
    %p175 = scmp.eq.s32.totalorder %s13, 1
    %p176 = por %p174, %p175
    %p177 = scmp.ne.s32.totalorder %s169, %s172
    %p178 = scmp.eq.s32.totalorder %s13, 0
    %p179 = por %p177, %p178
    %p180 = scmp.ne.s32.totalorder %s169, %s172
    %p181 = scmp.eq.s32.totalorder %s18, 1
    %p182 = por %p180, %p181
    %p183 = scmp.ne.s32.totalorder %s172, %s173
    %p184 = scmp.eq.s32.totalorder %s18, 0
    %p185 = por %p183, %p184
    %p186 = scmp.ne.s32.totalorder %s172, %s173
    %p187 = scmp.eq.s32.totalorder %s19, 1
    %p188 = por %p186, %p187
    %p190 = scmp.ne.s32.totalorder %s173, %s189
    %p191 = scmp.eq.s32.totalorder %s19, 0
    %p192 = por %p190, %p191
    %p193 = scmp.le.s32.totalorder 1, %s13
    %p194 = scmp.lt.s32.totalorder %s13, 3
    %p195 = pnand %p193, %p194
    %p196 = pneg %p195
    // Predicated region
    $region9: #{residual_block_forward.3} parent=5 // pred_check
      _
    $region10: #{residual_block_forward.3} parent=5 // pred_check_branch
      %198 = sbr.rel (%p195) target = $region12
    $region11: #{residual_block_forward.3} parent=5 // pred_region
      %s199 = ssub.s32 %s13, 1
      // Predicated region
      $region13: #{residual_block_forward.3} parent=11 // pred_check
        %p200 = pneg %p60
      $region14: #{residual_block_forward.3} parent=11 // pred_check_branch
        %202 = sbr.rel (%p200) target = $region16
      $region15: #{residual_block_forward.3} parent=11 // pred_region
        _
      $region16: #{residual_block_forward.3} parent=11 // pred_fallthru
        _
      // Predicated region
      $region17: #{residual_block_forward.3} parent=11 // pred_check
        %p203 = pneg %p81
      $region18: #{residual_block_forward.3} parent=11 // pred_check_branch
        %205 = sbr.rel (%p203) target = $region20
      $region19: #{residual_block_forward.3} parent=11 // pred_region
        _
      $region20: #{residual_block_forward.3} parent=11 // pred_fallthru
        _
    $region12: #{residual_block_forward.3} parent=5 // pred_fallthru
      _
    %p206 = scmp.lt.s32.totalorder %s13, 2
    // Predicated region
    $region21: #{residual_block_forward.3} parent=5 // pred_check
      %p207 = pneg %p206
    $region22: #{residual_block_forward.3} parent=5 // pred_check_branch
      %209 = sbr.rel (%p207) target = $region24
    $region23: #{residual_block_forward.3} parent=5 // pred_region
      // Predicated region
      $region25: #{residual_block_forward.3} parent=23 // pred_check
        %p210 = pneg %p33
      $region26: #{residual_block_forward.3} parent=23 // pred_check_branch
        %212 = sbr.rel (%p210) target = $region28
      $region27: #{residual_block_forward.3} parent=23 // pred_region
        %p213 = scmp.lt.s32.totalorder %s13, 1
        %s214 = scalar_select %p213, %s13, 1
        %s215 = smul.addr %s214, 54
        %s216 = smul.addr %s215, 4
        %s217 = scalar_lea.vmem %s0, %s216
      $region28: #{residual_block_forward.3} parent=23 // pred_fallthru
        _
    $region24: #{residual_block_forward.3} parent=5 // pred_fallthru
      _
    %p218 = scmp.le.s32.totalorder 1, %s13
    %p219 = scmp.lt.s32.totalorder %s13, 3
    %p220 = pnand %p218, %p219
    %p221 = pneg %p220
    // Predicated region
    $region29: #{residual_block_forward.3} parent=5 // pred_check
      _
    $region30: #{residual_block_forward.3} parent=5 // pred_check_branch
      %223 = sbr.rel (%p220) target = $region32
    $region31: #{residual_block_forward.3} parent=5 // pred_region
      %s224 = ssub.s32 %s13, 1
      %p225 = scmp.lt.s32.totalorder %s18, 1
      %s226 = scalar_select %p225, %s18, 1
      %s227 = smul.addr %s226, 54
      %s228 = smul.addr %s227, 4
      %s229 = scalar_lea.vmem %s0, %s228
      %p230 = pneg %p39
      %p231 = pneg %p36
      %p232 = pneg %p60
      %p233 = pneg %p57
      %p234 = pneg %p81
      %p235 = pneg %p78
      %p236 = pneg %p107
      %p237 = pneg %p104
      %p238 = scmp.lt.s32.totalorder %s18, 1
      %s239 = scalar_select %p238, %s18, 1
      %s240 = smul.addr %s239, 32
      %s241 = smul.addr %s240, 4
      %s242 = scalar_lea.vmem %s3, %s241
      %p243 = pneg %p133
      %p244 = pneg %p130
      %p245 = scmp.lt.s32.totalorder %s18, 1
      %s246 = scalar_select %p245, %s18, 1
      %s247 = smul.addr %s246, 32
      %s248 = smul.addr %s247, 4
      %s249 = scalar_lea.vmem %s4, %s248
      %p250 = pneg %p159
      %p251 = pneg %p156
      %p252 = scmp.lt.s32.totalorder %s18, 1
      %s253 = scalar_select %p252, %s18, 1
      %s254 = smul.addr %s253, 2
      %s255 = scalar_lea.vmem %s5, %s254
      %p256 = pneg %p185
      %p257 = pneg %p182
      %p258 = scmp.lt.s32.totalorder %s18, 1
      %s259 = scalar_select %p258, %s18, 1
      %s260 = smul.addr %s259, 2
      %s261 = scalar_lea.vmem %s6, %s260
      %p262 = scmp.lt.s32.totalorder %s18, 1
      %s263 = scalar_select %p262, %s18, 1
      %s264 = smul.addr %s263, 54
      %s265 = smul.addr %s264, 4
      %s266 = scalar_lea.vmem %s0, %s265
      %p267 = scmp.lt.s32.totalorder %s18, 1
      %s268 = scalar_select %p267, %s18, 1
      %s269 = smul.addr %s268, 32
      %s270 = smul.addr %s269, 4
      %s271 = scalar_lea.vmem %s3, %s270
      %p272 = scmp.lt.s32.totalorder %s18, 1
      %s273 = scalar_select %p272, %s18, 1
      %s274 = smul.addr %s273, 32
      %s275 = smul.addr %s274, 4
      %s276 = scalar_lea.vmem %s4, %s275
      %p277 = scmp.lt.s32.totalorder %s18, 1
      %s278 = scalar_select %p277, %s18, 1
      %s279 = smul.addr %s278, 2
      %s280 = scalar_lea.vmem %s5, %s279
      %p281 = scmp.lt.s32.totalorder %s18, 1
      %s282 = scalar_select %p281, %s18, 1
      %s283 = smul.addr %s282, 2
      %s284 = scalar_lea.vmem %s6, %s283
      %v286 = vld [vmem:[%s266] sm:$0xf]
      %v287 = vld [vmem:[%s266 + $0x4] sm:$0xf]
      %v288 = vld [vmem:[%s266 + $0x8] sm:$0xf]
      %v289 = vld [vmem:[%s266 + $0xc] sm:$0xf]
      %v290 = vld [vmem:[%s266 + $0x10] sm:$0xf]
      %v291 = vld [vmem:[%s266 + $0x14] sm:$0xf]
      %v292 = vld [vmem:[%s266 + $0x18] sm:$0xf]
      %v293 = vld [vmem:[%s266 + $0x1c] sm:$0xf]
      %v294 = vld [vmem:[%s266 + $0x20] sm:$0xf]
      %v295 = vld [vmem:[%s266 + $0x24] sm:$0xf]
      %v296 = vld [vmem:[%s266 + $0x28] sm:$0xf]
      %v297 = vld [vmem:[%s266 + $0x2c] sm:$0xf]
      %v298 = vld [vmem:[%s266 + $0x30] sm:$0xf]
      %v299 = vld [vmem:[%s266 + $0x34] sm:$0xf]
      %v300 = vld [vmem:[%s266 + $0x38] sm:$0xf]
      %v301 = vld [vmem:[%s266 + $0x3c] sm:$0xf]
      %v302 = vld [vmem:[%s266 + $0x40] sm:$0xf]
      %v303 = vld [vmem:[%s266 + $0x44] sm:$0xf]
      %v304 = vld [vmem:[%s266 + $0x48] sm:$0xf]
      %v305 = vld [vmem:[%s266 + $0x4c] sm:$0xf]
      %v306 = vld [vmem:[%s266 + $0x50] sm:$0xf]
      %v307 = vld [vmem:[%s266 + $0x54] sm:$0xf]
      %v308 = vld [vmem:[%s266 + $0x58] sm:$0xf]
      %v309 = vld [vmem:[%s266 + $0x5c] sm:$0xf]
      %v310 = vld [vmem:[%s266 + $0x60] sm:$0xf]
      %v311 = vld [vmem:[%s266 + $0x64] sm:$0xf]
      %v312 = vld [vmem:[%s266 + $0x68] sm:$0xf]
      %v313 = vld [vmem:[%s266 + $0x6c] sm:$0xf]
      %v314 = vld [vmem:[%s266 + $0x70] sm:$0xf]
      %v315 = vld [vmem:[%s266 + $0x74] sm:$0xf]
      %v316 = vld [vmem:[%s266 + $0x78] sm:$0xf]
      %v317 = vld [vmem:[%s266 + $0x7c] sm:$0xf]
      %v318 = vld [vmem:[%s266 + $0x80] sm:$0xf]
      %v319 = vld [vmem:[%s266 + $0x84] sm:$0xf]
      %v320 = vld [vmem:[%s266 + $0x88] sm:$0xf]
      %v321 = vld [vmem:[%s266 + $0x8c] sm:$0xf]
      %v322 = vld [vmem:[%s266 + $0x90] sm:$0xf]
      %v323 = vld [vmem:[%s266 + $0x94] sm:$0xf]
      %v324 = vld [vmem:[%s266 + $0x98] sm:$0xf]
      %v325 = vld [vmem:[%s266 + $0x9c] sm:$0xf]
      %v326 = vld [vmem:[%s266 + $0xa0] sm:$0xf]
      %v327 = vld [vmem:[%s266 + $0xa4] sm:$0xf]
      %v328 = vld [vmem:[%s266 + $0xa8] sm:$0xf]
      %v329 = vld [vmem:[%s266 + $0xac] sm:$0xf]
      %v330 = vld [vmem:[%s266 + $0xb0] sm:$0xf]
      %v331 = vld [vmem:[%s266 + $0xb4] sm:$0xf]
      %v332 = vld [vmem:[%s266 + $0xb8] sm:$0xf]
      %v333 = vld [vmem:[%s266 + $0xbc] sm:$0xf]
      %v334 = vld [vmem:[%s1] sm:$0xf]
      %v335 = vld [vmem:[%s1 + $0x4] sm:$0xf]
      %v336 = vld [vmem:[%s1 + $0x8] sm:$0xf]
      %v337 = vld [vmem:[%s1 + $0xc] sm:$0xf]
      %v338 = vld [vmem:[%s1 + $0x10] sm:$0xf]
      %v339 = vld [vmem:[%s1 + $0x14] sm:$0xf]
      %v340 = vld [vmem:[%s1 + $0x18] sm:$0xf]
      %v341 = vld [vmem:[%s1 + $0x1c] sm:$0xf]
      %v342 = vld [vmem:[%s1 + $0x20] sm:$0xf]
      %v343 = vld [vmem:[%s1 + $0x24] sm:$0xf]
      %v344 = vld [vmem:[%s1 + $0x28] sm:$0xf]
      %v345 = vld [vmem:[%s1 + $0x2c] sm:$0xf]
      %v346 = vld [vmem:[%s1 + $0x30] sm:$0xf]
      %v347 = vld [vmem:[%s1 + $0x34] sm:$0xf]
      %v348 = vld [vmem:[%s1 + $0x38] sm:$0xf]
      %v349 = vld [vmem:[%s1 + $0x3c] sm:$0xf]
      %s350 = scalar_lea.vmem %s266, 12
      %v351 = vld [vmem:[%s350] sm:$0xf]
      %v352 = vld [vmem:[%s350 + $0x4] sm:$0xf]
      %v353 = vld [vmem:[%s350 + $0x8] sm:$0xf]
      %v354 = vld [vmem:[%s350 + $0xc] sm:$0xf]
      %v355 = vld [vmem:[%s350 + $0x10] sm:$0xf]
      %v356 = vld [vmem:[%s350 + $0x14] sm:$0xf]
      %v357 = vld [vmem:[%s350 + $0x18] sm:$0xf]
      %v358 = vld [vmem:[%s350 + $0x1c] sm:$0xf]
      %v359 = vld [vmem:[%s350 + $0x20] sm:$0xf]
      %v360 = vld [vmem:[%s350 + $0x24] sm:$0xf]
      %v361 = vld [vmem:[%s350 + $0x28] sm:$0xf]
      %v362 = vld [vmem:[%s350 + $0x2c] sm:$0xf]
      %v363 = vld [vmem:[%s350 + $0x30] sm:$0xf]
      %v364 = vld [vmem:[%s350 + $0x34] sm:$0xf]
      %v365 = vld [vmem:[%s350 + $0x38] sm:$0xf]
      %v366 = vld [vmem:[%s350 + $0x3c] sm:$0xf]
      %v367 = vld [vmem:[%s350 + $0x40] sm:$0xf]
      %v368 = vld [vmem:[%s350 + $0x44] sm:$0xf]
      %v369 = vld [vmem:[%s350 + $0x48] sm:$0xf]
      %v370 = vld [vmem:[%s350 + $0x4c] sm:$0xf]
      %v371 = vld [vmem:[%s350 + $0x50] sm:$0xf]
      %v372 = vld [vmem:[%s350 + $0x54] sm:$0xf]
      %v373 = vld [vmem:[%s350 + $0x58] sm:$0xf]
      %v374 = vld [vmem:[%s350 + $0x5c] sm:$0xf]
      %v375 = vld [vmem:[%s350 + $0x60] sm:$0xf]
      %v376 = vld [vmem:[%s350 + $0x64] sm:$0xf]
      %v377 = vld [vmem:[%s350 + $0x68] sm:$0xf]
      %v378 = vld [vmem:[%s350 + $0x6c] sm:$0xf]
      %v379 = vld [vmem:[%s350 + $0x70] sm:$0xf]
      %v380 = vld [vmem:[%s350 + $0x74] sm:$0xf]
      %v381 = vld [vmem:[%s350 + $0x78] sm:$0xf]
      %v382 = vld [vmem:[%s350 + $0x7c] sm:$0xf]
      %v383 = vld [vmem:[%s350 + $0x80] sm:$0xf]
      %v384 = vld [vmem:[%s350 + $0x84] sm:$0xf]
      %v385 = vld [vmem:[%s350 + $0x88] sm:$0xf]
      %v386 = vld [vmem:[%s350 + $0x8c] sm:$0xf]
      %v387 = vld [vmem:[%s350 + $0x90] sm:$0xf]
      %v388 = vld [vmem:[%s350 + $0x94] sm:$0xf]
      %v389 = vld [vmem:[%s350 + $0x98] sm:$0xf]
      %v390 = vld [vmem:[%s350 + $0x9c] sm:$0xf]
      %v391 = vld [vmem:[%s350 + $0xa0] sm:$0xf]
      %v392 = vld [vmem:[%s350 + $0xa4] sm:$0xf]
      %v393 = vld [vmem:[%s350 + $0xa8] sm:$0xf]
      %v394 = vld [vmem:[%s350 + $0xac] sm:$0xf]
      %v395 = vld [vmem:[%s350 + $0xb0] sm:$0xf]
      %v396 = vld [vmem:[%s350 + $0xb4] sm:$0xf]
      %v397 = vld [vmem:[%s350 + $0xb8] sm:$0xf]
      %v398 = vld [vmem:[%s350 + $0xbc] sm:$0xf]
      %s399 = scalar_lea.vmem %s1, 192
      %v400 = vld [vmem:[%s399] sm:$0xf]
      %v401 = vld [vmem:[%s399 + $0x4] sm:$0xf]
      %v402 = vld [vmem:[%s399 + $0x8] sm:$0xf]
      %v403 = vld [vmem:[%s399 + $0xc] sm:$0xf]
      %v404 = vld [vmem:[%s399 + $0x10] sm:$0xf]
      %v405 = vld [vmem:[%s399 + $0x14] sm:$0xf]
      %v406 = vld [vmem:[%s399 + $0x18] sm:$0xf]
      %v407 = vld [vmem:[%s399 + $0x1c] sm:$0xf]
      %v408 = vld [vmem:[%s399 + $0x20] sm:$0xf]
      %v409 = vld [vmem:[%s399 + $0x24] sm:$0xf]
      %v410 = vld [vmem:[%s399 + $0x28] sm:$0xf]
      %v411 = vld [vmem:[%s399 + $0x2c] sm:$0xf]
      %v412 = vld [vmem:[%s399 + $0x30] sm:$0xf]
      %v413 = vld [vmem:[%s399 + $0x34] sm:$0xf]
      %v414 = vld [vmem:[%s399 + $0x38] sm:$0xf]
      %v415 = vld [vmem:[%s399 + $0x3c] sm:$0xf]
      %v464 = vunpack.c.l.b16 %v351
      %v465 = vunpack.c.l.b16 %v352
      %v466 = vunpack.c.l.b16 %v353
      %v467 = vunpack.c.l.b16 %v354
      %v468 = vunpack.c.l.b16 %v355
      %v469 = vunpack.c.l.b16 %v356
      %v470 = vunpack.c.l.b16 %v357
      %v471 = vunpack.c.l.b16 %v358
      %v472 = vunpack.c.l.b16 %v359
      %v473 = vunpack.c.l.b16 %v360
      %v474 = vunpack.c.l.b16 %v361
      %v475 = vunpack.c.l.b16 %v362
      %v476 = vunpack.c.l.b16 %v363
      %v477 = vunpack.c.l.b16 %v364
      %v478 = vunpack.c.l.b16 %v365
      %v479 = vunpack.c.l.b16 %v366
      %v480 = vunpack.c.l.b16 %v367
      %v481 = vunpack.c.l.b16 %v368
      %v482 = vunpack.c.l.b16 %v369
      %v483 = vunpack.c.l.b16 %v370
      %v484 = vunpack.c.l.b16 %v371
      %v485 = vunpack.c.l.b16 %v372
      %v486 = vunpack.c.l.b16 %v373
      %v487 = vunpack.c.l.b16 %v374
      %v488 = vunpack.c.l.b16 %v375
      %v489 = vunpack.c.l.b16 %v376
      %v490 = vunpack.c.l.b16 %v377
      %v491 = vunpack.c.l.b16 %v378
      %v492 = vunpack.c.l.b16 %v379
      %v493 = vunpack.c.l.b16 %v380
      %v494 = vunpack.c.l.b16 %v381
      %v495 = vunpack.c.l.b16 %v382
      %v496 = vunpack.c.l.b16 %v383
      %v497 = vunpack.c.l.b16 %v384
      %v498 = vunpack.c.l.b16 %v385
      %v499 = vunpack.c.l.b16 %v386
      %v500 = vunpack.c.l.b16 %v387
      %v501 = vunpack.c.l.b16 %v388
      %v502 = vunpack.c.l.b16 %v389
      %v503 = vunpack.c.l.b16 %v390
      %v504 = vunpack.c.l.b16 %v391
      %v505 = vunpack.c.l.b16 %v392
      %v506 = vunpack.c.l.b16 %v393
      %v507 = vunpack.c.l.b16 %v394
      %v508 = vunpack.c.l.b16 %v395
      %v509 = vunpack.c.l.b16 %v396
      %v510 = vunpack.c.l.b16 %v397
      %v511 = vunpack.c.l.b16 %v398
      %v512 = vpack.c.b16 %v465, %v464
      %v513 = vpack.c.b16 %v467, %v466
      %v514 = vpack.c.b16 %v469, %v468
      %v515 = vpack.c.b16 %v471, %v470
      %v516 = vpack.c.b16 %v473, %v472
      %v517 = vpack.c.b16 %v475, %v474
      %v518 = vpack.c.b16 %v477, %v476
      %v519 = vpack.c.b16 %v479, %v478
      %v520 = vpack.c.b16 %v481, %v480
      %v521 = vpack.c.b16 %v483, %v482
      %v522 = vpack.c.b16 %v485, %v484
      %v523 = vpack.c.b16 %v487, %v486
      %v524 = vpack.c.b16 %v489, %v488
      %v525 = vpack.c.b16 %v491, %v490
      %v526 = vpack.c.b16 %v493, %v492
      %v527 = vpack.c.b16 %v495, %v494
      %v528 = vpack.c.b16 %v497, %v496
      %v529 = vpack.c.b16 %v499, %v498
      %v530 = vpack.c.b16 %v501, %v500
      %v531 = vpack.c.b16 %v503, %v502
      %v532 = vpack.c.b16 %v505, %v504
      %v533 = vpack.c.b16 %v507, %v506
      %v534 = vpack.c.b16 %v509, %v508
      %v535 = vpack.c.b16 %v511, %v510
      %v576 = vunpack.c.l.b16 %v400
      %v577 = vunpack.c.l.b16 %v401
      %v578 = vunpack.c.l.b16 %v402
      %v579 = vunpack.c.l.b16 %v403
      %v580 = vunpack.c.l.b16 %v404
      %v581 = vunpack.c.l.b16 %v405
      %v582 = vunpack.c.l.b16 %v406
      %v583 = vunpack.c.l.b16 %v407
      %v584 = vunpack.c.l.b16 %v408
      %v585 = vunpack.c.l.b16 %v409
      %v586 = vunpack.c.l.b16 %v410
      %v587 = vunpack.c.l.b16 %v411
      %v588 = vunpack.c.l.b16 %v412
      %v589 = vunpack.c.l.b16 %v413
      %v590 = vunpack.c.l.b16 %v414
      %v591 = vunpack.c.l.b16 %v415
      %v592 = vpack.c.b16 %v577, %v576
      %v593 = vpack.c.b16 %v579, %v578
      %v594 = vpack.c.b16 %v581, %v580
      %v595 = vpack.c.b16 %v583, %v582
      %v596 = vpack.c.b16 %v585, %v584
      %v597 = vpack.c.b16 %v587, %v586
      %v598 = vpack.c.b16 %v589, %v588
      %v599 = vpack.c.b16 %v591, %v590
      %608 = vmatprep.subr.bf16.mxu0 0
      %609 = vmatpush1.bf16.msra.mxu0 %v599
      %610 = vmatprep.subr.bf16.mxu0 0
      %611 = vmatpush1.bf16.msra.mxu0 %v598
      %612 = vmatprep.subr.bf16.mxu0 0
      %613 = vmatpush1.bf16.msra.mxu0 %v597
      %614 = vmatprep.subr.bf16.mxu0 0
      %615 = vmatpush1.bf16.msra.mxu0 %v596
      %616 = vmatprep.subr.bf16.mxu0 0
      %617 = vmatpush1.bf16.msra.mxu0 %v595
      %618 = vmatprep.subr.bf16.mxu0 0
      %619 = vmatpush1.bf16.msra.mxu0 %v594
      %620 = vmatprep.subr.bf16.mxu0 0
      %621 = vmatpush1.bf16.msra.mxu0 %v593
      %622 = vmatprep.subr.bf16.mxu0 0
      %623 = vmatpush1.bf16.msra.mxu0 %v592
      %624 = vmatprep.subr.bf16.mxu0 0
      %625 = vmatpush2.bf16.msra.mxu0 0
      %626 = vmatprep.subr.bf16.mxu0 0
      %627 = vmatpush2.bf16.msra.mxu0 0
      %628 = vmatprep.subr.bf16.mxu0 0
      %629 = vmatpush2.bf16.msra.mxu0 0
      %630 = vmatprep.subr.bf16.mxu0 0
      %631 = vmatpush2.bf16.msra.mxu0 0
      %632 = vmatprep.subr.bf16.mxu0 0
      %633 = vmatpush2.bf16.msra.mxu0 0
      %634 = vmatprep.subr.bf16.mxu0 0
      %635 = vmatpush2.bf16.msra.mxu0 0
      %636 = vmatprep.subr.bf16.mxu0 0
      %637 = vmatpush2.bf16.msra.mxu0 0
      %638 = vmatprep.subr.bf16.mxu0 0
      %639 = vmatpush2.bf16.msra.mxu0 0
      %640 = vmatprep.mubr.bf16.mxu0 0
      %641 = vmatmul.mubr.bf16.gmra.mxu0 %v512
      %v642 = vpop.f32.mrf.mxu0
      %v643 = vadd.f32 0.0, %v642
      %v644 = vpop.f32.mrf.mxu0
      %v645 = vpop.f32.mrf.mxu0
      %v646 = vadd.f32 0.0, %v645
      %v647 = vpop.f32.mrf.mxu0
      %648 = vmatprep.mubr.bf16.mxu0 0
      %649 = vmatmul.mubr.bf16.gmra.mxu0 %v513
      %v650 = vpop.f32.mrf.mxu0
      %v651 = vpop.f32.mrf.mxu0
      %v652 = vpop.f32.mrf.mxu0
      %v653 = vadd.f32 0.0, %v652
      %v654 = vpop.f32.mrf.mxu0
      %655 = vmatprep.mubr.bf16.mxu0 0
      %656 = vmatmul.mubr.bf16.gmra.mxu0 %v514
      %v657 = vpop.f32.mrf.mxu0
      %v658 = vadd.f32 0.0, %v657
      %v659 = vpop.f32.mrf.mxu0
      %v660 = vpop.f32.mrf.mxu0
      %v661 = vpop.f32.mrf.mxu0
      %662 = vmatprep.mubr.bf16.mxu0 0
      %663 = vmatmul.mubr.bf16.gmra.mxu0 %v515
      %v664 = vpop.f32.mrf.mxu0
      %v665 = vadd.f32 0.0, %v664
      %v666 = vpop.f32.mrf.mxu0
      %v667 = vpop.f32.mrf.mxu0
      %v668 = vadd.f32 0.0, %v667
      %v669 = vpop.f32.mrf.mxu0
      %670 = vmatprep.mubr.bf16.mxu0 0
      %671 = vmatmul.mubr.bf16.gmra.mxu0 %v516
      %v672 = vpop.f32.mrf.mxu0
      %v673 = vpop.f32.mrf.mxu0
      %v674 = vpop.f32.mrf.mxu0
      %v675 = vadd.f32 0.0, %v674
      %v676 = vpop.f32.mrf.mxu0
      %677 = vmatprep.mubr.bf16.mxu0 0
      %678 = vmatmul.mubr.bf16.gmra.mxu0 %v517
      %v679 = vpop.f32.mrf.mxu0
      %v680 = vadd.f32 0.0, %v679
      %v681 = vpop.f32.mrf.mxu0
      %v682 = vpop.f32.mrf.mxu0
      %v683 = vpop.f32.mrf.mxu0
      %684 = vmatprep.mubr.bf16.mxu0 0
      %685 = vmatmul.mubr.bf16.gmra.mxu0 %v518
      %v686 = vpop.f32.mrf.mxu0
      %v687 = vadd.f32 0.0, %v686
      %v688 = vpop.f32.mrf.mxu0
      %v689 = vpop.f32.mrf.mxu0
      %v690 = vadd.f32 0.0, %v689
      %v691 = vpop.f32.mrf.mxu0
      %692 = vmatprep.mubr.bf16.mxu0 0
      %693 = vmatmul.mubr.bf16.gmra.mxu0 %v519
      %v694 = vpop.f32.mrf.mxu0
      %v695 = vpop.f32.mrf.mxu0
      %v696 = vpop.f32.mrf.mxu0
      %v697 = vadd.f32 0.0, %v696
      %v698 = vpop.f32.mrf.mxu0
      %699 = vmatprep.mubr.bf16.mxu0 0
      %700 = vmatmul.mubr.bf16.gmra.mxu0 %v520
      %v701 = vpop.f32.mrf.mxu0
      %v702 = vadd.f32 0.0, %v701
      %v703 = vpop.f32.mrf.mxu0
      %v704 = vpop.f32.mrf.mxu0
      %v705 = vpop.f32.mrf.mxu0
      %706 = vmatprep.mubr.bf16.mxu0 0
      %707 = vmatmul.mubr.bf16.gmra.mxu0 %v521
      %v708 = vpop.f32.mrf.mxu0
      %v709 = vadd.f32 0.0, %v708
      %v710 = vpop.f32.mrf.mxu0
      %v711 = vpop.f32.mrf.mxu0
      %v712 = vadd.f32 0.0, %v711
      %v713 = vpop.f32.mrf.mxu0
      %714 = vmatprep.mubr.bf16.mxu0 0
      %715 = vmatmul.mubr.bf16.gmra.mxu0 %v522
      %v716 = vpop.f32.mrf.mxu0
      %v717 = vpop.f32.mrf.mxu0
      %v718 = vpop.f32.mrf.mxu0
      %v719 = vadd.f32 0.0, %v718
      %v720 = vpop.f32.mrf.mxu0
      %721 = vmatprep.mubr.bf16.mxu0 0
      %722 = vmatmul.mubr.bf16.gmra.mxu0 %v523
      %v723 = vpop.f32.mrf.mxu0
      %v724 = vadd.f32 0.0, %v723
      %v725 = vpop.f32.mrf.mxu0
      %v726 = vpop.f32.mrf.mxu0
      %v727 = vpop.f32.mrf.mxu0
      %728 = vmatprep.mubr.bf16.mxu0 0
      %729 = vmatmul.mubr.bf16.gmra.mxu0 %v524
      %v730 = vpop.f32.mrf.mxu0
      %v731 = vadd.f32 0.0, %v730
      %v732 = vpop.f32.mrf.mxu0
      %v733 = vpop.f32.mrf.mxu0
      %v734 = vadd.f32 0.0, %v733
      %v735 = vpop.f32.mrf.mxu0
      %736 = vmatprep.mubr.bf16.mxu0 0
      %737 = vmatmul.mubr.bf16.gmra.mxu0 %v525
      %v738 = vpop.f32.mrf.mxu0
      %v739 = vpop.f32.mrf.mxu0
      %v740 = vpop.f32.mrf.mxu0
      %v741 = vadd.f32 0.0, %v740
      %v742 = vpop.f32.mrf.mxu0
      %743 = vmatprep.mubr.bf16.mxu0 0
      %744 = vmatmul.mubr.bf16.gmra.mxu0 %v526
      %v745 = vpop.f32.mrf.mxu0
      %v746 = vadd.f32 0.0, %v745
      %v747 = vpop.f32.mrf.mxu0
      %v748 = vpop.f32.mrf.mxu0
      %v749 = vpop.f32.mrf.mxu0
      %750 = vmatprep.mubr.bf16.mxu0 0
      %751 = vmatmul.mubr.bf16.gmra.mxu0 %v527
      %v752 = vpop.f32.mrf.mxu0
      %v753 = vadd.f32 0.0, %v752
      %v754 = vpop.f32.mrf.mxu0
      %v755 = vpop.f32.mrf.mxu0
      %v756 = vadd.f32 0.0, %v755
      %v757 = vpop.f32.mrf.mxu0
      %758 = vmatprep.mubr.bf16.mxu0 0
      %759 = vmatmul.mubr.bf16.gmra.mxu0 %v528
      %v760 = vpop.f32.mrf.mxu0
      %v761 = vpop.f32.mrf.mxu0
      %v762 = vpop.f32.mrf.mxu0
      %v763 = vadd.f32 0.0, %v762
      %v764 = vpop.f32.mrf.mxu0
      %765 = vmatprep.mubr.bf16.mxu0 0
      %766 = vmatmul.mubr.bf16.gmra.mxu0 %v529
      %v767 = vpop.f32.mrf.mxu0
      %v768 = vadd.f32 0.0, %v767
      %v769 = vpop.f32.mrf.mxu0
      %v770 = vpop.f32.mrf.mxu0
      %v771 = vpop.f32.mrf.mxu0
      %772 = vmatprep.mubr.bf16.mxu0 0
      %773 = vmatmul.mubr.bf16.gmra.mxu0 %v530
      %v774 = vpop.f32.mrf.mxu0
      %v775 = vadd.f32 0.0, %v774
      %v776 = vpop.f32.mrf.mxu0
      %v777 = vpop.f32.mrf.mxu0
      %v778 = vadd.f32 0.0, %v777
      %v779 = vpop.f32.mrf.mxu0
      %780 = vmatprep.mubr.bf16.mxu0 0
      %781 = vmatmul.mubr.bf16.gmra.mxu0 %v531
      %v782 = vpop.f32.mrf.mxu0
      %v783 = vpop.f32.mrf.mxu0
      %v784 = vpop.f32.mrf.mxu0
      %v785 = vadd.f32 0.0, %v784
      %v786 = vpop.f32.mrf.mxu0
      %787 = vmatprep.mubr.bf16.mxu0 0
      %788 = vmatmul.mubr.bf16.gmra.mxu0 %v532
      %v789 = vpop.f32.mrf.mxu0
      %v790 = vadd.f32 0.0, %v789
      %v791 = vpop.f32.mrf.mxu0
      %v792 = vpop.f32.mrf.mxu0
      %v793 = vpop.f32.mrf.mxu0
      %794 = vmatprep.mubr.bf16.mxu0 0
      %795 = vmatmul.mubr.bf16.gmra.mxu0 %v533
      %v796 = vpop.f32.mrf.mxu0
      %v797 = vadd.f32 0.0, %v796
      %v798 = vpop.f32.mrf.mxu0
      %v799 = vpop.f32.mrf.mxu0
      %v800 = vadd.f32 0.0, %v799
      %v801 = vpop.f32.mrf.mxu0
      %802 = vmatprep.mubr.bf16.mxu0 0
      %803 = vmatmul.mubr.bf16.gmra.mxu0 %v534
      %v804 = vpop.f32.mrf.mxu0
      %v805 = vpop.f32.mrf.mxu0
      %v806 = vpop.f32.mrf.mxu0
      %v807 = vadd.f32 0.0, %v806
      %v808 = vpop.f32.mrf.mxu0
      %809 = vmatprep.mubr.bf16.mxu0 0
      %810 = vmatmul.mubr.bf16.gmra.mxu0 %v535
      %v811 = vpop.f32.mrf.mxu0
      %v812 = vadd.f32 0.0, %v811
      %v813 = vpop.f32.mrf.mxu0
      %v814 = vpop.f32.mrf.mxu0
      %v815 = vpop.f32.mrf.mxu0
      %816 = vdwg.mxu0
      %v865 = vunpack.c.l.b16 %v286
      %v866 = vunpack.c.l.b16 %v287
      %v867 = vunpack.c.l.b16 %v288
      %v868 = vunpack.c.l.b16 %v289
      %v869 = vunpack.c.l.b16 %v290
      %v870 = vunpack.c.l.b16 %v291
      %v871 = vunpack.c.l.b16 %v292
      %v872 = vunpack.c.l.b16 %v293
      %v873 = vunpack.c.l.b16 %v294
      %v874 = vunpack.c.l.b16 %v295
      %v875 = vunpack.c.l.b16 %v296
      %v876 = vunpack.c.l.b16 %v297
      %v877 = vunpack.c.l.b16 %v298
      %v878 = vunpack.c.l.b16 %v299
      %v879 = vunpack.c.l.b16 %v300
      %v880 = vunpack.c.l.b16 %v301
      %v881 = vunpack.c.l.b16 %v302
      %v882 = vunpack.c.l.b16 %v303
      %v883 = vunpack.c.l.b16 %v304
      %v884 = vunpack.c.l.b16 %v305
      %v885 = vunpack.c.l.b16 %v306
      %v886 = vunpack.c.l.b16 %v307
      %v887 = vunpack.c.l.b16 %v308
      %v888 = vunpack.c.l.b16 %v309
      %v889 = vunpack.c.l.b16 %v310
      %v890 = vunpack.c.l.b16 %v311
      %v891 = vunpack.c.l.b16 %v312
      %v892 = vunpack.c.l.b16 %v313
      %v893 = vunpack.c.l.b16 %v314
      %v894 = vunpack.c.l.b16 %v315
      %v895 = vunpack.c.l.b16 %v316
      %v896 = vunpack.c.l.b16 %v317
      %v897 = vunpack.c.l.b16 %v318
      %v898 = vunpack.c.l.b16 %v319
      %v899 = vunpack.c.l.b16 %v320
      %v900 = vunpack.c.l.b16 %v321
      %v901 = vunpack.c.l.b16 %v322
      %v902 = vunpack.c.l.b16 %v323
      %v903 = vunpack.c.l.b16 %v324
      %v904 = vunpack.c.l.b16 %v325
      %v905 = vunpack.c.l.b16 %v326
      %v906 = vunpack.c.l.b16 %v327
      %v907 = vunpack.c.l.b16 %v328
      %v908 = vunpack.c.l.b16 %v329
      %v909 = vunpack.c.l.b16 %v330
      %v910 = vunpack.c.l.b16 %v331
      %v911 = vunpack.c.l.b16 %v332
      %v912 = vunpack.c.l.b16 %v333
      %v913 = vpack.c.b16 %v866, %v865
      %v914 = vpack.c.b16 %v868, %v867
      %v915 = vpack.c.b16 %v870, %v869
      %v916 = vpack.c.b16 %v872, %v871
      %v917 = vpack.c.b16 %v874, %v873
      %v918 = vpack.c.b16 %v876, %v875
      %v919 = vpack.c.b16 %v878, %v877
      %v920 = vpack.c.b16 %v880, %v879
      %v921 = vpack.c.b16 %v882, %v881
      %v922 = vpack.c.b16 %v884, %v883
      %v923 = vpack.c.b16 %v886, %v885
      %v924 = vpack.c.b16 %v888, %v887
      %v925 = vpack.c.b16 %v890, %v889
      %v926 = vpack.c.b16 %v892, %v891
      %v927 = vpack.c.b16 %v894, %v893
      %v928 = vpack.c.b16 %v896, %v895
      %v929 = vpack.c.b16 %v898, %v897
      %v930 = vpack.c.b16 %v900, %v899
      %v931 = vpack.c.b16 %v902, %v901
      %v932 = vpack.c.b16 %v904, %v903
      %v933 = vpack.c.b16 %v906, %v905
      %v934 = vpack.c.b16 %v908, %v907
      %v935 = vpack.c.b16 %v910, %v909
      %v936 = vpack.c.b16 %v912, %v911
      %v977 = vunpack.c.l.b16 %v334
      %v978 = vunpack.c.l.b16 %v335
      %v979 = vunpack.c.l.b16 %v336
      %v980 = vunpack.c.l.b16 %v337
      %v981 = vunpack.c.l.b16 %v338
      %v982 = vunpack.c.l.b16 %v339
      %v983 = vunpack.c.l.b16 %v340
      %v984 = vunpack.c.l.b16 %v341
      %v985 = vunpack.c.l.b16 %v342
      %v986 = vunpack.c.l.b16 %v343
      %v987 = vunpack.c.l.b16 %v344
      %v988 = vunpack.c.l.b16 %v345
      %v989 = vunpack.c.l.b16 %v346
      %v990 = vunpack.c.l.b16 %v347
      %v991 = vunpack.c.l.b16 %v348
      %v992 = vunpack.c.l.b16 %v349
      %v993 = vpack.c.b16 %v978, %v977
      %v994 = vpack.c.b16 %v980, %v979
      %v995 = vpack.c.b16 %v982, %v981
      %v996 = vpack.c.b16 %v984, %v983
      %v997 = vpack.c.b16 %v986, %v985
      %v998 = vpack.c.b16 %v988, %v987
      %v999 = vpack.c.b16 %v990, %v989
      %v1000 = vpack.c.b16 %v992, %v991
      %1009 = vmatprep.subr.bf16.mxu0 0
      %1010 = vmatpush1.bf16.msra.mxu0 %v1000
      %1011 = vmatprep.subr.bf16.mxu0 0
      %1012 = vmatpush1.bf16.msra.mxu0 %v999
      %1013 = vmatprep.subr.bf16.mxu0 0
      %1014 = vmatpush1.bf16.msra.mxu0 %v998
      %1015 = vmatprep.subr.bf16.mxu0 0
      %1016 = vmatpush1.bf16.msra.mxu0 %v997
      %1017 = vmatprep.subr.bf16.mxu0 0
      %1018 = vmatpush1.bf16.msra.mxu0 %v996
      %1019 = vmatprep.subr.bf16.mxu0 0
      %1020 = vmatpush1.bf16.msra.mxu0 %v995
      %1021 = vmatprep.subr.bf16.mxu0 0
      %1022 = vmatpush1.bf16.msra.mxu0 %v994
      %1023 = vmatprep.subr.bf16.mxu0 0
      %1024 = vmatpush1.bf16.msra.mxu0 %v993
      %1025 = vmatprep.subr.bf16.mxu0 0
      %1026 = vmatpush2.bf16.msra.mxu0 0
      %1027 = vmatprep.subr.bf16.mxu0 0
      %1028 = vmatpush2.bf16.msra.mxu0 0
      %1029 = vmatprep.subr.bf16.mxu0 0
      %1030 = vmatpush2.bf16.msra.mxu0 0
      %1031 = vmatprep.subr.bf16.mxu0 0
      %1032 = vmatpush2.bf16.msra.mxu0 0
      %1033 = vmatprep.subr.bf16.mxu0 0
      %1034 = vmatpush2.bf16.msra.mxu0 0
      %1035 = vmatprep.subr.bf16.mxu0 0
      %1036 = vmatpush2.bf16.msra.mxu0 0
      %1037 = vmatprep.subr.bf16.mxu0 0
      %1038 = vmatpush2.bf16.msra.mxu0 0
      %1039 = vmatprep.subr.bf16.mxu0 0
      %1040 = vmatpush2.bf16.msra.mxu0 0
      %1041 = vmatprep.mubr.bf16.mxu0 0
      %1042 = vmatmul.mubr.bf16.gmra.mxu0 %v913
      %v1043 = vpop.f32.mrf.mxu0
      %v1044 = vadd.f32 %v643, %v1043
      %v1045 = vpop.f32.mrf.mxu0
      %v1046 = vpop.f32.mrf.mxu0
      %v1047 = vadd.f32 %v646, %v1046
      %v1048 = vpop.f32.mrf.mxu0
      %1049 = vmatprep.mubr.bf16.mxu0 0
      %1050 = vmatmul.mubr.bf16.gmra.mxu0 %v914
      %v1051 = vpop.f32.mrf.mxu0
      %v1052 = vpop.f32.mrf.mxu0
      %v1053 = vpop.f32.mrf.mxu0
      %v1054 = vadd.f32 %v653, %v1053
      %v1055 = vpop.f32.mrf.mxu0
      %1056 = vmatprep.mubr.bf16.mxu0 0
      %1057 = vmatmul.mubr.bf16.gmra.mxu0 %v915
      %v1058 = vpop.f32.mrf.mxu0
      %v1059 = vadd.f32 %v658, %v1058
      %v1060 = vpop.f32.mrf.mxu0
      %v1061 = vpop.f32.mrf.mxu0
      %v1062 = vpop.f32.mrf.mxu0
      %1063 = vmatprep.mubr.bf16.mxu0 0
      %1064 = vmatmul.mubr.bf16.gmra.mxu0 %v916
      %v1065 = vpop.f32.mrf.mxu0
      %v1066 = vadd.f32 %v665, %v1065
      %v1067 = vpop.f32.mrf.mxu0
      %v1068 = vpop.f32.mrf.mxu0
      %v1069 = vadd.f32 %v668, %v1068
      %v1070 = vpop.f32.mrf.mxu0
      %1071 = vmatprep.mubr.bf16.mxu0 0
      %1072 = vmatmul.mubr.bf16.gmra.mxu0 %v917
      %v1073 = vpop.f32.mrf.mxu0
      %v1074 = vpop.f32.mrf.mxu0
      %v1075 = vpop.f32.mrf.mxu0
      %v1076 = vadd.f32 %v675, %v1075
      %v1077 = vpop.f32.mrf.mxu0
      %1078 = vmatprep.mubr.bf16.mxu0 0
      %1079 = vmatmul.mubr.bf16.gmra.mxu0 %v918
      %v1080 = vpop.f32.mrf.mxu0
      %v1081 = vadd.f32 %v680, %v1080
      %v1082 = vpop.f32.mrf.mxu0
      %v1083 = vpop.f32.mrf.mxu0
      %v1084 = vpop.f32.mrf.mxu0
      %1085 = vmatprep.mubr.bf16.mxu0 0
      %1086 = vmatmul.mubr.bf16.gmra.mxu0 %v919
      %v1087 = vpop.f32.mrf.mxu0
      %v1088 = vadd.f32 %v687, %v1087
      %v1089 = vpop.f32.mrf.mxu0
      %v1090 = vpop.f32.mrf.mxu0
      %v1091 = vadd.f32 %v690, %v1090
      %v1092 = vpop.f32.mrf.mxu0
      %1093 = vmatprep.mubr.bf16.mxu0 0
      %1094 = vmatmul.mubr.bf16.gmra.mxu0 %v920
      %v1095 = vpop.f32.mrf.mxu0
      %v1096 = vpop.f32.mrf.mxu0
      %v1097 = vpop.f32.mrf.mxu0
      %v1098 = vadd.f32 %v697, %v1097
      %v1099 = vpop.f32.mrf.mxu0
      %1100 = vmatprep.mubr.bf16.mxu0 0
      %1101 = vmatmul.mubr.bf16.gmra.mxu0 %v921
      %v1102 = vpop.f32.mrf.mxu0
      %v1103 = vadd.f32 %v702, %v1102
      %v1104 = vpop.f32.mrf.mxu0
      %v1105 = vpop.f32.mrf.mxu0
      %v1106 = vpop.f32.mrf.mxu0
      %1107 = vmatprep.mubr.bf16.mxu0 0
      %1108 = vmatmul.mubr.bf16.gmra.mxu0 %v922
      %v1109 = vpop.f32.mrf.mxu0
      %v1110 = vadd.f32 %v709, %v1109
      %v1111 = vpop.f32.mrf.mxu0
      %v1112 = vpop.f32.mrf.mxu0
      %v1113 = vadd.f32 %v712, %v1112
      %v1114 = vpop.f32.mrf.mxu0
      %1115 = vmatprep.mubr.bf16.mxu0 0
      %1116 = vmatmul.mubr.bf16.gmra.mxu0 %v923
      %v1117 = vpop.f32.mrf.mxu0
      %v1118 = vpop.f32.mrf.mxu0
      %v1119 = vpop.f32.mrf.mxu0
      %v1120 = vadd.f32 %v719, %v1119
      %v1121 = vpop.f32.mrf.mxu0
      %1122 = vmatprep.mubr.bf16.mxu0 0
      %1123 = vmatmul.mubr.bf16.gmra.mxu0 %v924
      %v1124 = vpop.f32.mrf.mxu0
      %v1125 = vadd.f32 %v724, %v1124
      %v1126 = vpop.f32.mrf.mxu0
      %v1127 = vpop.f32.mrf.mxu0
      %v1128 = vpop.f32.mrf.mxu0
      %1129 = vmatprep.mubr.bf16.mxu0 0
      %1130 = vmatmul.mubr.bf16.gmra.mxu0 %v925
      %v1131 = vpop.f32.mrf.mxu0
      %v1132 = vadd.f32 %v731, %v1131
      %v1133 = vpop.f32.mrf.mxu0
      %v1134 = vpop.f32.mrf.mxu0
      %v1135 = vadd.f32 %v734, %v1134
      %v1136 = vpop.f32.mrf.mxu0
      %1137 = vmatprep.mubr.bf16.mxu0 0
      %1138 = vmatmul.mubr.bf16.gmra.mxu0 %v926
      %v1139 = vpop.f32.mrf.mxu0
      %v1140 = vpop.f32.mrf.mxu0
      %v1141 = vpop.f32.mrf.mxu0
      %v1142 = vadd.f32 %v741, %v1141
      %v1143 = vpop.f32.mrf.mxu0
      %1144 = vmatprep.mubr.bf16.mxu0 0
      %1145 = vmatmul.mubr.bf16.gmra.mxu0 %v927
      %v1146 = vpop.f32.mrf.mxu0
      %v1147 = vadd.f32 %v746, %v1146
      %v1148 = vpop.f32.mrf.mxu0
      %v1149 = vpop.f32.mrf.mxu0
      %v1150 = vpop.f32.mrf.mxu0
      %1151 = vmatprep.mubr.bf16.mxu0 0
      %1152 = vmatmul.mubr.bf16.gmra.mxu0 %v928
      %v1153 = vpop.f32.mrf.mxu0
      %v1154 = vadd.f32 %v753, %v1153
      %v1155 = vpop.f32.mrf.mxu0
      %v1156 = vpop.f32.mrf.mxu0
      %v1157 = vadd.f32 %v756, %v1156
      %v1158 = vpop.f32.mrf.mxu0
      %1159 = vmatprep.mubr.bf16.mxu0 0
      %1160 = vmatmul.mubr.bf16.gmra.mxu0 %v929
      %v1161 = vpop.f32.mrf.mxu0
      %v1162 = vpop.f32.mrf.mxu0
      %v1163 = vpop.f32.mrf.mxu0
      %v1164 = vadd.f32 %v763, %v1163
      %v1165 = vpop.f32.mrf.mxu0
      %1166 = vmatprep.mubr.bf16.mxu0 0
      %1167 = vmatmul.mubr.bf16.gmra.mxu0 %v930
      %v1168 = vpop.f32.mrf.mxu0
      %v1169 = vadd.f32 %v768, %v1168
      %v1170 = vpop.f32.mrf.mxu0
      %v1171 = vpop.f32.mrf.mxu0
      %v1172 = vpop.f32.mrf.mxu0
      %1173 = vmatprep.mubr.bf16.mxu0 0
      %1174 = vmatmul.mubr.bf16.gmra.mxu0 %v931
      %v1175 = vpop.f32.mrf.mxu0
      %v1176 = vadd.f32 %v775, %v1175
      %v1177 = vpop.f32.mrf.mxu0
      %v1178 = vpop.f32.mrf.mxu0
      %v1179 = vadd.f32 %v778, %v1178
      %v1180 = vpop.f32.mrf.mxu0
      %1181 = vmatprep.mubr.bf16.mxu0 0
      %1182 = vmatmul.mubr.bf16.gmra.mxu0 %v932
      %v1183 = vpop.f32.mrf.mxu0
      %v1184 = vpop.f32.mrf.mxu0
      %v1185 = vpop.f32.mrf.mxu0
      %v1186 = vadd.f32 %v785, %v1185
      %v1187 = vpop.f32.mrf.mxu0
      %1188 = vmatprep.mubr.bf16.mxu0 0
      %1189 = vmatmul.mubr.bf16.gmra.mxu0 %v933
      %v1190 = vpop.f32.mrf.mxu0
      %v1191 = vadd.f32 %v790, %v1190
      %v1192 = vpop.f32.mrf.mxu0
      %v1193 = vpop.f32.mrf.mxu0
      %v1194 = vpop.f32.mrf.mxu0
      %1195 = vmatprep.mubr.bf16.mxu0 0
      %1196 = vmatmul.mubr.bf16.gmra.mxu0 %v934
      %v1197 = vpop.f32.mrf.mxu0
      %v1198 = vadd.f32 %v797, %v1197
      %v1199 = vpop.f32.mrf.mxu0
      %v1200 = vpop.f32.mrf.mxu0
      %v1201 = vadd.f32 %v800, %v1200
      %v1202 = vpop.f32.mrf.mxu0
      %1203 = vmatprep.mubr.bf16.mxu0 0
      %1204 = vmatmul.mubr.bf16.gmra.mxu0 %v935
      %v1205 = vpop.f32.mrf.mxu0
      %v1206 = vpop.f32.mrf.mxu0
      %v1207 = vpop.f32.mrf.mxu0
      %v1208 = vadd.f32 %v807, %v1207
      %v1209 = vpop.f32.mrf.mxu0
      %1210 = vmatprep.mubr.bf16.mxu0 0
      %1211 = vmatmul.mubr.bf16.gmra.mxu0 %v936
      %v1212 = vpop.f32.mrf.mxu0
      %v1213 = vadd.f32 %v812, %v1212
      %v1214 = vpop.f32.mrf.mxu0
      %v1215 = vpop.f32.mrf.mxu0
      %v1216 = vpop.f32.mrf.mxu0
      %1217 = vdwg.mxu0
      %s1218 = scalar_lea.vmem %s266, 24
      %v1219 = vld [vmem:[%s1218] sm:$0xf]
      %v1220 = vld [vmem:[%s1218 + $0x4] sm:$0xf]
      %v1221 = vld [vmem:[%s1218 + $0x8] sm:$0xf]
      %v1222 = vld [vmem:[%s1218 + $0xc] sm:$0xf]
      %v1223 = vld [vmem:[%s1218 + $0x10] sm:$0xf]
      %v1224 = vld [vmem:[%s1218 + $0x14] sm:$0xf]
      %v1225 = vld [vmem:[%s1218 + $0x18] sm:$0xf]
      %v1226 = vld [vmem:[%s1218 + $0x1c] sm:$0xf]
      %v1227 = vld [vmem:[%s1218 + $0x20] sm:$0xf]
      %v1228 = vld [vmem:[%s1218 + $0x24] sm:$0xf]
      %v1229 = vld [vmem:[%s1218 + $0x28] sm:$0xf]
      %v1230 = vld [vmem:[%s1218 + $0x2c] sm:$0xf]
      %v1231 = vld [vmem:[%s1218 + $0x30] sm:$0xf]
      %v1232 = vld [vmem:[%s1218 + $0x34] sm:$0xf]
      %v1233 = vld [vmem:[%s1218 + $0x38] sm:$0xf]
      %v1234 = vld [vmem:[%s1218 + $0x3c] sm:$0xf]
      %v1235 = vld [vmem:[%s1218 + $0x40] sm:$0xf]
      %v1236 = vld [vmem:[%s1218 + $0x44] sm:$0xf]
      %v1237 = vld [vmem:[%s1218 + $0x48] sm:$0xf]
      %v1238 = vld [vmem:[%s1218 + $0x4c] sm:$0xf]
      %v1239 = vld [vmem:[%s1218 + $0x50] sm:$0xf]
      %v1240 = vld [vmem:[%s1218 + $0x54] sm:$0xf]
      %v1241 = vld [vmem:[%s1218 + $0x58] sm:$0xf]
      %v1242 = vld [vmem:[%s1218 + $0x5c] sm:$0xf]
      %v1243 = vld [vmem:[%s1218 + $0x60] sm:$0xf]
      %v1244 = vld [vmem:[%s1218 + $0x64] sm:$0xf]
      %v1245 = vld [vmem:[%s1218 + $0x68] sm:$0xf]
      %v1246 = vld [vmem:[%s1218 + $0x6c] sm:$0xf]
      %v1247 = vld [vmem:[%s1218 + $0x70] sm:$0xf]
      %v1248 = vld [vmem:[%s1218 + $0x74] sm:$0xf]
      %v1249 = vld [vmem:[%s1218 + $0x78] sm:$0xf]
      %v1250 = vld [vmem:[%s1218 + $0x7c] sm:$0xf]
      %v1251 = vld [vmem:[%s1218 + $0x80] sm:$0xf]
      %v1252 = vld [vmem:[%s1218 + $0x84] sm:$0xf]
      %v1253 = vld [vmem:[%s1218 + $0x88] sm:$0xf]
      %v1254 = vld [vmem:[%s1218 + $0x8c] sm:$0xf]
      %v1255 = vld [vmem:[%s1218 + $0x90] sm:$0xf]
      %v1256 = vld [vmem:[%s1218 + $0x94] sm:$0xf]
      %v1257 = vld [vmem:[%s1218 + $0x98] sm:$0xf]
      %v1258 = vld [vmem:[%s1218 + $0x9c] sm:$0xf]
      %v1259 = vld [vmem:[%s1218 + $0xa0] sm:$0xf]
      %v1260 = vld [vmem:[%s1218 + $0xa4] sm:$0xf]
      %v1261 = vld [vmem:[%s1218 + $0xa8] sm:$0xf]
      %v1262 = vld [vmem:[%s1218 + $0xac] sm:$0xf]
      %v1263 = vld [vmem:[%s1218 + $0xb0] sm:$0xf]
      %v1264 = vld [vmem:[%s1218 + $0xb4] sm:$0xf]
      %v1265 = vld [vmem:[%s1218 + $0xb8] sm:$0xf]
      %v1266 = vld [vmem:[%s1218 + $0xbc] sm:$0xf]
      %s1267 = scalar_lea.vmem %s1, 384
      %v1268 = vld [vmem:[%s1267] sm:$0xf]
      %v1269 = vld [vmem:[%s1267 + $0x4] sm:$0xf]
      %v1270 = vld [vmem:[%s1267 + $0x8] sm:$0xf]
      %v1271 = vld [vmem:[%s1267 + $0xc] sm:$0xf]
      %v1272 = vld [vmem:[%s1267 + $0x10] sm:$0xf]
      %v1273 = vld [vmem:[%s1267 + $0x14] sm:$0xf]
      %v1274 = vld [vmem:[%s1267 + $0x18] sm:$0xf]
      %v1275 = vld [vmem:[%s1267 + $0x1c] sm:$0xf]
      %v1276 = vld [vmem:[%s1267 + $0x20] sm:$0xf]
      %v1277 = vld [vmem:[%s1267 + $0x24] sm:$0xf]
      %v1278 = vld [vmem:[%s1267 + $0x28] sm:$0xf]
      %v1279 = vld [vmem:[%s1267 + $0x2c] sm:$0xf]
      %v1280 = vld [vmem:[%s1267 + $0x30] sm:$0xf]
      %v1281 = vld [vmem:[%s1267 + $0x34] sm:$0xf]
      %v1282 = vld [vmem:[%s1267 + $0x38] sm:$0xf]
      %v1283 = vld [vmem:[%s1267 + $0x3c] sm:$0xf]
      %v1332 = vunpack.c.l.b16 %v1219
      %v1333 = vunpack.c.l.b16 %v1220
      %v1334 = vunpack.c.l.b16 %v1221
      %v1335 = vunpack.c.l.b16 %v1222
      %v1336 = vunpack.c.l.b16 %v1223
      %v1337 = vunpack.c.l.b16 %v1224
      %v1338 = vunpack.c.l.b16 %v1225
      %v1339 = vunpack.c.l.b16 %v1226
      %v1340 = vunpack.c.l.b16 %v1227
      %v1341 = vunpack.c.l.b16 %v1228
      %v1342 = vunpack.c.l.b16 %v1229
      %v1343 = vunpack.c.l.b16 %v1230
      %v1344 = vunpack.c.l.b16 %v1231
      %v1345 = vunpack.c.l.b16 %v1232
      %v1346 = vunpack.c.l.b16 %v1233
      %v1347 = vunpack.c.l.b16 %v1234
      %v1348 = vunpack.c.l.b16 %v1235
      %v1349 = vunpack.c.l.b16 %v1236
      %v1350 = vunpack.c.l.b16 %v1237
      %v1351 = vunpack.c.l.b16 %v1238
      %v1352 = vunpack.c.l.b16 %v1239
      %v1353 = vunpack.c.l.b16 %v1240
      %v1354 = vunpack.c.l.b16 %v1241
      %v1355 = vunpack.c.l.b16 %v1242
      %v1356 = vunpack.c.l.b16 %v1243
      %v1357 = vunpack.c.l.b16 %v1244
      %v1358 = vunpack.c.l.b16 %v1245
      %v1359 = vunpack.c.l.b16 %v1246
      %v1360 = vunpack.c.l.b16 %v1247
      %v1361 = vunpack.c.l.b16 %v1248
      %v1362 = vunpack.c.l.b16 %v1249
      %v1363 = vunpack.c.l.b16 %v1250
      %v1364 = vunpack.c.l.b16 %v1251
      %v1365 = vunpack.c.l.b16 %v1252
      %v1366 = vunpack.c.l.b16 %v1253
      %v1367 = vunpack.c.l.b16 %v1254
      %v1368 = vunpack.c.l.b16 %v1255
      %v1369 = vunpack.c.l.b16 %v1256
      %v1370 = vunpack.c.l.b16 %v1257
      %v1371 = vunpack.c.l.b16 %v1258
      %v1372 = vunpack.c.l.b16 %v1259
      %v1373 = vunpack.c.l.b16 %v1260
      %v1374 = vunpack.c.l.b16 %v1261
      %v1375 = vunpack.c.l.b16 %v1262
      %v1376 = vunpack.c.l.b16 %v1263
      %v1377 = vunpack.c.l.b16 %v1264
      %v1378 = vunpack.c.l.b16 %v1265
      %v1379 = vunpack.c.l.b16 %v1266
      %v1380 = vpack.c.b16 %v1333, %v1332
      %v1381 = vpack.c.b16 %v1335, %v1334
      %v1382 = vpack.c.b16 %v1337, %v1336
      %v1383 = vpack.c.b16 %v1339, %v1338
      %v1384 = vpack.c.b16 %v1341, %v1340
      %v1385 = vpack.c.b16 %v1343, %v1342
      %v1386 = vpack.c.b16 %v1345, %v1344
      %v1387 = vpack.c.b16 %v1347, %v1346
      %v1388 = vpack.c.b16 %v1349, %v1348
      %v1389 = vpack.c.b16 %v1351, %v1350
      %v1390 = vpack.c.b16 %v1353, %v1352
      %v1391 = vpack.c.b16 %v1355, %v1354
      %v1392 = vpack.c.b16 %v1357, %v1356
      %v1393 = vpack.c.b16 %v1359, %v1358
      %v1394 = vpack.c.b16 %v1361, %v1360
      %v1395 = vpack.c.b16 %v1363, %v1362
      %v1396 = vpack.c.b16 %v1365, %v1364
      %v1397 = vpack.c.b16 %v1367, %v1366
      %v1398 = vpack.c.b16 %v1369, %v1368
      %v1399 = vpack.c.b16 %v1371, %v1370
      %v1400 = vpack.c.b16 %v1373, %v1372
      %v1401 = vpack.c.b16 %v1375, %v1374
      %v1402 = vpack.c.b16 %v1377, %v1376
      %v1403 = vpack.c.b16 %v1379, %v1378
      %v1444 = vunpack.c.l.b16 %v1268
      %v1445 = vunpack.c.l.b16 %v1269
      %v1446 = vunpack.c.l.b16 %v1270
      %v1447 = vunpack.c.l.b16 %v1271
      %v1448 = vunpack.c.l.b16 %v1272
      %v1449 = vunpack.c.l.b16 %v1273
      %v1450 = vunpack.c.l.b16 %v1274
      %v1451 = vunpack.c.l.b16 %v1275
      %v1452 = vunpack.c.l.b16 %v1276
      %v1453 = vunpack.c.l.b16 %v1277
      %v1454 = vunpack.c.l.b16 %v1278
      %v1455 = vunpack.c.l.b16 %v1279
      %v1456 = vunpack.c.l.b16 %v1280
      %v1457 = vunpack.c.l.b16 %v1281
      %v1458 = vunpack.c.l.b16 %v1282
      %v1459 = vunpack.c.l.b16 %v1283
      %v1460 = vpack.c.b16 %v1445, %v1444
      %v1461 = vpack.c.b16 %v1447, %v1446
      %v1462 = vpack.c.b16 %v1449, %v1448
      %v1463 = vpack.c.b16 %v1451, %v1450
      %v1464 = vpack.c.b16 %v1453, %v1452
      %v1465 = vpack.c.b16 %v1455, %v1454
      %v1466 = vpack.c.b16 %v1457, %v1456
      %v1467 = vpack.c.b16 %v1459, %v1458
      %1476 = vmatprep.subr.bf16.mxu0 0
      %1477 = vmatpush1.bf16.msra.mxu0 %v1467
      %1478 = vmatprep.subr.bf16.mxu0 0
      %1479 = vmatpush1.bf16.msra.mxu0 %v1466
      %1480 = vmatprep.subr.bf16.mxu0 0
      %1481 = vmatpush1.bf16.msra.mxu0 %v1465
      %1482 = vmatprep.subr.bf16.mxu0 0
      %1483 = vmatpush1.bf16.msra.mxu0 %v1464
      %1484 = vmatprep.subr.bf16.mxu0 0
      %1485 = vmatpush1.bf16.msra.mxu0 %v1463
      %1486 = vmatprep.subr.bf16.mxu0 0
      %1487 = vmatpush1.bf16.msra.mxu0 %v1462
      %1488 = vmatprep.subr.bf16.mxu0 0
      %1489 = vmatpush1.bf16.msra.mxu0 %v1461
      %1490 = vmatprep.subr.bf16.mxu0 0
      %1491 = vmatpush1.bf16.msra.mxu0 %v1460
      %1492 = vmatprep.subr.bf16.mxu0 0
      %1493 = vmatpush2.bf16.msra.mxu0 0
      %1494 = vmatprep.subr.bf16.mxu0 0
      %1495 = vmatpush2.bf16.msra.mxu0 0
      %1496 = vmatprep.subr.bf16.mxu0 0
      %1497 = vmatpush2.bf16.msra.mxu0 0
      %1498 = vmatprep.subr.bf16.mxu0 0
      %1499 = vmatpush2.bf16.msra.mxu0 0
      %1500 = vmatprep.subr.bf16.mxu0 0
      %1501 = vmatpush2.bf16.msra.mxu0 0
      %1502 = vmatprep.subr.bf16.mxu0 0
      %1503 = vmatpush2.bf16.msra.mxu0 0
      %1504 = vmatprep.subr.bf16.mxu0 0
      %1505 = vmatpush2.bf16.msra.mxu0 0
      %1506 = vmatprep.subr.bf16.mxu0 0
      %1507 = vmatpush2.bf16.msra.mxu0 0
      %1508 = vmatprep.mubr.bf16.mxu0 0
      %1509 = vmatmul.mubr.bf16.gmra.mxu0 %v1380
      %v1510 = vpop.f32.mrf.mxu0
      %v1511 = vadd.f32 0.0, %v1510
      %v1512 = vpop.f32.mrf.mxu0
      %v1513 = vpop.f32.mrf.mxu0
      %v1514 = vadd.f32 0.0, %v1513
      %v1515 = vpop.f32.mrf.mxu0
      %1516 = vmatprep.mubr.bf16.mxu0 0
      %1517 = vmatmul.mubr.bf16.gmra.mxu0 %v1381
      %v1518 = vpop.f32.mrf.mxu0
      %v1519 = vpop.f32.mrf.mxu0
      %v1520 = vpop.f32.mrf.mxu0
      %v1521 = vadd.f32 0.0, %v1520
      %v1522 = vpop.f32.mrf.mxu0
      %1523 = vmatprep.mubr.bf16.mxu0 0
      %1524 = vmatmul.mubr.bf16.gmra.mxu0 %v1382
      %v1525 = vpop.f32.mrf.mxu0
      %v1526 = vadd.f32 0.0, %v1525
      %v1527 = vpop.f32.mrf.mxu0
      %v1528 = vpop.f32.mrf.mxu0
      %v1529 = vpop.f32.mrf.mxu0
      %1530 = vmatprep.mubr.bf16.mxu0 0
      %1531 = vmatmul.mubr.bf16.gmra.mxu0 %v1383
      %v1532 = vpop.f32.mrf.mxu0
      %v1533 = vadd.f32 0.0, %v1532
      %v1534 = vpop.f32.mrf.mxu0
      %v1535 = vpop.f32.mrf.mxu0
      %v1536 = vadd.f32 0.0, %v1535
      %v1537 = vpop.f32.mrf.mxu0
      %1538 = vmatprep.mubr.bf16.mxu0 0
      %1539 = vmatmul.mubr.bf16.gmra.mxu0 %v1384
      %v1540 = vpop.f32.mrf.mxu0
      %v1541 = vpop.f32.mrf.mxu0
      %v1542 = vpop.f32.mrf.mxu0
      %v1543 = vadd.f32 0.0, %v1542
      %v1544 = vpop.f32.mrf.mxu0
      %1545 = vmatprep.mubr.bf16.mxu0 0
      %1546 = vmatmul.mubr.bf16.gmra.mxu0 %v1385
      %v1547 = vpop.f32.mrf.mxu0
      %v1548 = vadd.f32 0.0, %v1547
      %v1549 = vpop.f32.mrf.mxu0
      %v1550 = vpop.f32.mrf.mxu0
      %v1551 = vpop.f32.mrf.mxu0
      %1552 = vmatprep.mubr.bf16.mxu0 0
      %1553 = vmatmul.mubr.bf16.gmra.mxu0 %v1386
      %v1554 = vpop.f32.mrf.mxu0
      %v1555 = vadd.f32 0.0, %v1554
      %v1556 = vpop.f32.mrf.mxu0
      %v1557 = vpop.f32.mrf.mxu0
      %v1558 = vadd.f32 0.0, %v1557
      %v1559 = vpop.f32.mrf.mxu0
      %1560 = vmatprep.mubr.bf16.mxu0 0
      %1561 = vmatmul.mubr.bf16.gmra.mxu0 %v1387
      %v1562 = vpop.f32.mrf.mxu0
      %v1563 = vpop.f32.mrf.mxu0
      %v1564 = vpop.f32.mrf.mxu0
      %v1565 = vadd.f32 0.0, %v1564
      %v1566 = vpop.f32.mrf.mxu0
      %1567 = vmatprep.mubr.bf16.mxu0 0
      %1568 = vmatmul.mubr.bf16.gmra.mxu0 %v1388
      %v1569 = vpop.f32.mrf.mxu0
      %v1570 = vadd.f32 0.0, %v1569
      %v1571 = vpop.f32.mrf.mxu0
      %v1572 = vpop.f32.mrf.mxu0
      %v1573 = vpop.f32.mrf.mxu0
      %1574 = vmatprep.mubr.bf16.mxu0 0
      %1575 = vmatmul.mubr.bf16.gmra.mxu0 %v1389
      %v1576 = vpop.f32.mrf.mxu0
      %v1577 = vadd.f32 0.0, %v1576
      %v1578 = vpop.f32.mrf.mxu0
      %v1579 = vpop.f32.mrf.mxu0
      %v1580 = vadd.f32 0.0, %v1579
      %v1581 = vpop.f32.mrf.mxu0
      %1582 = vmatprep.mubr.bf16.mxu0 0
      %1583 = vmatmul.mubr.bf16.gmra.mxu0 %v1390
      %v1584 = vpop.f32.mrf.mxu0
      %v1585 = vpop.f32.mrf.mxu0
      %v1586 = vpop.f32.mrf.mxu0
      %v1587 = vadd.f32 0.0, %v1586
      %v1588 = vpop.f32.mrf.mxu0
      %1589 = vmatprep.mubr.bf16.mxu0 0
      %1590 = vmatmul.mubr.bf16.gmra.mxu0 %v1391
      %v1591 = vpop.f32.mrf.mxu0
      %v1592 = vadd.f32 0.0, %v1591
      %v1593 = vpop.f32.mrf.mxu0
      %v1594 = vpop.f32.mrf.mxu0
      %v1595 = vpop.f32.mrf.mxu0
      %1596 = vmatprep.mubr.bf16.mxu0 0
      %1597 = vmatmul.mubr.bf16.gmra.mxu0 %v1392
      %v1598 = vpop.f32.mrf.mxu0
      %v1599 = vadd.f32 0.0, %v1598
      %v1600 = vpop.f32.mrf.mxu0
      %v1601 = vpop.f32.mrf.mxu0
      %v1602 = vadd.f32 0.0, %v1601
      %v1603 = vpop.f32.mrf.mxu0
      %1604 = vmatprep.mubr.bf16.mxu0 0
      %1605 = vmatmul.mubr.bf16.gmra.mxu0 %v1393
      %v1606 = vpop.f32.mrf.mxu0
      %v1607 = vpop.f32.mrf.mxu0
      %v1608 = vpop.f32.mrf.mxu0
      %v1609 = vadd.f32 0.0, %v1608
      %v1610 = vpop.f32.mrf.mxu0
      %1611 = vmatprep.mubr.bf16.mxu0 0
      %1612 = vmatmul.mubr.bf16.gmra.mxu0 %v1394
      %v1613 = vpop.f32.mrf.mxu0
      %v1614 = vadd.f32 0.0, %v1613
      %v1615 = vpop.f32.mrf.mxu0
      %v1616 = vpop.f32.mrf.mxu0
      %v1617 = vpop.f32.mrf.mxu0
      %1618 = vmatprep.mubr.bf16.mxu0 0
      %1619 = vmatmul.mubr.bf16.gmra.mxu0 %v1395
      %v1620 = vpop.f32.mrf.mxu0
      %v1621 = vadd.f32 0.0, %v1620
      %v1622 = vpop.f32.mrf.mxu0
      %v1623 = vpop.f32.mrf.mxu0
      %v1624 = vadd.f32 0.0, %v1623
      %v1625 = vpop.f32.mrf.mxu0
      %1626 = vmatprep.mubr.bf16.mxu0 0
      %1627 = vmatmul.mubr.bf16.gmra.mxu0 %v1396
      %v1628 = vpop.f32.mrf.mxu0
      %v1629 = vpop.f32.mrf.mxu0
      %v1630 = vpop.f32.mrf.mxu0
      %v1631 = vadd.f32 0.0, %v1630
      %v1632 = vpop.f32.mrf.mxu0
      %1633 = vmatprep.mubr.bf16.mxu0 0
      %1634 = vmatmul.mubr.bf16.gmra.mxu0 %v1397
      %v1635 = vpop.f32.mrf.mxu0
      %v1636 = vadd.f32 0.0, %v1635
      %v1637 = vpop.f32.mrf.mxu0
      %v1638 = vpop.f32.mrf.mxu0
      %v1639 = vpop.f32.mrf.mxu0
      %1640 = vmatprep.mubr.bf16.mxu0 0
      %1641 = vmatmul.mubr.bf16.gmra.mxu0 %v1398
      %v1642 = vpop.f32.mrf.mxu0
      %v1643 = vadd.f32 0.0, %v1642
      %v1644 = vpop.f32.mrf.mxu0
      %v1645 = vpop.f32.mrf.mxu0
      %v1646 = vadd.f32 0.0, %v1645
      %v1647 = vpop.f32.mrf.mxu0
      %1648 = vmatprep.mubr.bf16.mxu0 0
      %1649 = vmatmul.mubr.bf16.gmra.mxu0 %v1399
      %v1650 = vpop.f32.mrf.mxu0
      %v1651 = vpop.f32.mrf.mxu0
      %v1652 = vpop.f32.mrf.mxu0
      %v1653 = vadd.f32 0.0, %v1652
      %v1654 = vpop.f32.mrf.mxu0
      %1655 = vmatprep.mubr.bf16.mxu0 0
      %1656 = vmatmul.mubr.bf16.gmra.mxu0 %v1400
      %v1657 = vpop.f32.mrf.mxu0
      %v1658 = vadd.f32 0.0, %v1657
      %v1659 = vpop.f32.mrf.mxu0
      %v1660 = vpop.f32.mrf.mxu0
      %v1661 = vpop.f32.mrf.mxu0
      %1662 = vmatprep.mubr.bf16.mxu0 0
      %1663 = vmatmul.mubr.bf16.gmra.mxu0 %v1401
      %v1664 = vpop.f32.mrf.mxu0
      %v1665 = vadd.f32 0.0, %v1664
      %v1666 = vpop.f32.mrf.mxu0
      %v1667 = vpop.f32.mrf.mxu0
      %v1668 = vadd.f32 0.0, %v1667
      %v1669 = vpop.f32.mrf.mxu0
      %1670 = vmatprep.mubr.bf16.mxu0 0
      %1671 = vmatmul.mubr.bf16.gmra.mxu0 %v1402
      %v1672 = vpop.f32.mrf.mxu0
      %v1673 = vpop.f32.mrf.mxu0
      %v1674 = vpop.f32.mrf.mxu0
      %v1675 = vadd.f32 0.0, %v1674
      %v1676 = vpop.f32.mrf.mxu0
      %1677 = vmatprep.mubr.bf16.mxu0 0
      %1678 = vmatmul.mubr.bf16.gmra.mxu0 %v1403
      %v1679 = vpop.f32.mrf.mxu0
      %v1680 = vadd.f32 0.0, %v1679
      %v1681 = vpop.f32.mrf.mxu0
      %v1682 = vpop.f32.mrf.mxu0
      %v1683 = vpop.f32.mrf.mxu0
      %1684 = vdwg.mxu0
      %v1685 = vadd.f32 %v1044, %v1511
      %v1686 = vadd.f32 %v1047, %v1514
      %v1687 = vadd.f32 %v1054, %v1521
      %v1688 = vadd.f32 %v1059, %v1526
      %v1689 = vadd.f32 %v1066, %v1533
      %v1690 = vadd.f32 %v1069, %v1536
      %v1691 = vadd.f32 %v1076, %v1543
      %v1692 = vadd.f32 %v1081, %v1548
      %v1693 = vadd.f32 %v1088, %v1555
      %v1694 = vadd.f32 %v1091, %v1558
      %v1695 = vadd.f32 %v1098, %v1565
      %v1696 = vadd.f32 %v1103, %v1570
      %v1697 = vadd.f32 %v1110, %v1577
      %v1698 = vadd.f32 %v1113, %v1580
      %v1699 = vadd.f32 %v1120, %v1587
      %v1700 = vadd.f32 %v1125, %v1592
      %v1701 = vadd.f32 %v1132, %v1599
      %v1702 = vadd.f32 %v1135, %v1602
      %v1703 = vadd.f32 %v1142, %v1609
      %v1704 = vadd.f32 %v1147, %v1614
      %v1705 = vadd.f32 %v1154, %v1621
      %v1706 = vadd.f32 %v1157, %v1624
      %v1707 = vadd.f32 %v1164, %v1631
      %v1708 = vadd.f32 %v1169, %v1636
      %v1709 = vadd.f32 %v1176, %v1643
      %v1710 = vadd.f32 %v1179, %v1646
      %v1711 = vadd.f32 %v1186, %v1653
      %v1712 = vadd.f32 %v1191, %v1658
      %v1713 = vadd.f32 %v1198, %v1665
      %v1714 = vadd.f32 %v1201, %v1668
      %v1715 = vadd.f32 %v1208, %v1675
      %v1716 = vadd.f32 %v1213, %v1680
      %v1717 = vadd.f32 %v1685, 0.0
      %v1718 = vadd.f32 %v1686, 0.0
      %v1719 = vadd.f32 %v1687, 0.0
      %v1720 = vadd.f32 %v1688, 0.0
      %v1721 = vadd.f32 %v1689, 0.0
      %v1722 = vadd.f32 %v1690, 0.0
      %v1723 = vadd.f32 %v1691, 0.0
      %v1724 = vadd.f32 %v1692, 0.0
      %v1725 = vadd.f32 %v1693, 0.0
      %v1726 = vadd.f32 %v1694, 0.0
      %v1727 = vadd.f32 %v1695, 0.0
      %v1728 = vadd.f32 %v1696, 0.0
      %v1729 = vadd.f32 %v1697, 0.0
      %v1730 = vadd.f32 %v1698, 0.0
      %v1731 = vadd.f32 %v1699, 0.0
      %v1732 = vadd.f32 %v1700, 0.0
      %v1733 = vadd.f32 %v1701, 0.0
      %v1734 = vadd.f32 %v1702, 0.0
      %v1735 = vadd.f32 %v1703, 0.0
      %v1736 = vadd.f32 %v1704, 0.0
      %v1737 = vadd.f32 %v1705, 0.0
      %v1738 = vadd.f32 %v1706, 0.0
      %v1739 = vadd.f32 %v1707, 0.0
      %v1740 = vadd.f32 %v1708, 0.0
      %v1741 = vadd.f32 %v1709, 0.0
      %v1742 = vadd.f32 %v1710, 0.0
      %v1743 = vadd.f32 %v1711, 0.0
      %v1744 = vadd.f32 %v1712, 0.0
      %v1745 = vadd.f32 %v1713, 0.0
      %v1746 = vadd.f32 %v1714, 0.0
      %v1747 = vadd.f32 %v1715, 0.0
      %v1748 = vadd.f32 %v1716, 0.0
      %s1749 = scalar_lea.vmem %s1, 64
      %v1750 = vld [vmem:[%s1749] sm:$0xf]
      %v1751 = vld [vmem:[%s1749 + $0x4] sm:$0xf]
      %v1752 = vld [vmem:[%s1749 + $0x8] sm:$0xf]
      %v1753 = vld [vmem:[%s1749 + $0xc] sm:$0xf]
      %v1754 = vld [vmem:[%s1749 + $0x10] sm:$0xf]
      %v1755 = vld [vmem:[%s1749 + $0x14] sm:$0xf]
      %v1756 = vld [vmem:[%s1749 + $0x18] sm:$0xf]
      %v1757 = vld [vmem:[%s1749 + $0x1c] sm:$0xf]
      %v1758 = vld [vmem:[%s1749 + $0x20] sm:$0xf]
      %v1759 = vld [vmem:[%s1749 + $0x24] sm:$0xf]
      %v1760 = vld [vmem:[%s1749 + $0x28] sm:$0xf]
      %v1761 = vld [vmem:[%s1749 + $0x2c] sm:$0xf]
      %v1762 = vld [vmem:[%s1749 + $0x30] sm:$0xf]
      %v1763 = vld [vmem:[%s1749 + $0x34] sm:$0xf]
      %v1764 = vld [vmem:[%s1749 + $0x38] sm:$0xf]
      %v1765 = vld [vmem:[%s1749 + $0x3c] sm:$0xf]
      %s1766 = scalar_lea.vmem %s1, 256
      %v1767 = vld [vmem:[%s1766] sm:$0xf]
      %v1768 = vld [vmem:[%s1766 + $0x4] sm:$0xf]
      %v1769 = vld [vmem:[%s1766 + $0x8] sm:$0xf]
      %v1770 = vld [vmem:[%s1766 + $0xc] sm:$0xf]
      %v1771 = vld [vmem:[%s1766 + $0x10] sm:$0xf]
      %v1772 = vld [vmem:[%s1766 + $0x14] sm:$0xf]
      %v1773 = vld [vmem:[%s1766 + $0x18] sm:$0xf]
      %v1774 = vld [vmem:[%s1766 + $0x1c] sm:$0xf]
      %v1775 = vld [vmem:[%s1766 + $0x20] sm:$0xf]
      %v1776 = vld [vmem:[%s1766 + $0x24] sm:$0xf]
      %v1777 = vld [vmem:[%s1766 + $0x28] sm:$0xf]
      %v1778 = vld [vmem:[%s1766 + $0x2c] sm:$0xf]
      %v1779 = vld [vmem:[%s1766 + $0x30] sm:$0xf]
      %v1780 = vld [vmem:[%s1766 + $0x34] sm:$0xf]
      %v1781 = vld [vmem:[%s1766 + $0x38] sm:$0xf]
      %v1782 = vld [vmem:[%s1766 + $0x3c] sm:$0xf]
      %v1799 = vunpack.c.l.b16 %v1767
      %v1800 = vunpack.c.l.b16 %v1768
      %v1801 = vunpack.c.l.b16 %v1769
      %v1802 = vunpack.c.l.b16 %v1770
      %v1803 = vunpack.c.l.b16 %v1771
      %v1804 = vunpack.c.l.b16 %v1772
      %v1805 = vunpack.c.l.b16 %v1773
      %v1806 = vunpack.c.l.b16 %v1774
      %v1807 = vunpack.c.l.b16 %v1775
      %v1808 = vunpack.c.l.b16 %v1776
      %v1809 = vunpack.c.l.b16 %v1777
      %v1810 = vunpack.c.l.b16 %v1778
      %v1811 = vunpack.c.l.b16 %v1779
      %v1812 = vunpack.c.l.b16 %v1780
      %v1813 = vunpack.c.l.b16 %v1781
      %v1814 = vunpack.c.l.b16 %v1782
      %v1815 = vpack.c.b16 %v1800, %v1799
      %v1816 = vpack.c.b16 %v1802, %v1801
      %v1817 = vpack.c.b16 %v1804, %v1803
      %v1818 = vpack.c.b16 %v1806, %v1805
      %v1819 = vpack.c.b16 %v1808, %v1807
      %v1820 = vpack.c.b16 %v1810, %v1809
      %v1821 = vpack.c.b16 %v1812, %v1811
      %v1822 = vpack.c.b16 %v1814, %v1813
      %1831 = vmatprep.subr.bf16.mxu0 0
      %1832 = vmatpush1.bf16.msra.mxu0 %v1822
      %1833 = vmatprep.subr.bf16.mxu0 0
      %1834 = vmatpush1.bf16.msra.mxu0 %v1821
      %1835 = vmatprep.subr.bf16.mxu0 0
      %1836 = vmatpush1.bf16.msra.mxu0 %v1820
      %1837 = vmatprep.subr.bf16.mxu0 0
      %1838 = vmatpush1.bf16.msra.mxu0 %v1819
      %1839 = vmatprep.subr.bf16.mxu0 0
      %1840 = vmatpush1.bf16.msra.mxu0 %v1818
      %1841 = vmatprep.subr.bf16.mxu0 0
      %1842 = vmatpush1.bf16.msra.mxu0 %v1817
      %1843 = vmatprep.subr.bf16.mxu0 0
      %1844 = vmatpush1.bf16.msra.mxu0 %v1816
      %1845 = vmatprep.subr.bf16.mxu0 0
      %1846 = vmatpush1.bf16.msra.mxu0 %v1815
      %1847 = vmatprep.subr.bf16.mxu0 0
      %1848 = vmatpush2.bf16.msra.mxu0 0
      %1849 = vmatprep.subr.bf16.mxu0 0
      %1850 = vmatpush2.bf16.msra.mxu0 0
      %1851 = vmatprep.subr.bf16.mxu0 0
      %1852 = vmatpush2.bf16.msra.mxu0 0
      %1853 = vmatprep.subr.bf16.mxu0 0
      %1854 = vmatpush2.bf16.msra.mxu0 0
      %1855 = vmatprep.subr.bf16.mxu0 0
      %1856 = vmatpush2.bf16.msra.mxu0 0
      %1857 = vmatprep.subr.bf16.mxu0 0
      %1858 = vmatpush2.bf16.msra.mxu0 0
      %1859 = vmatprep.subr.bf16.mxu0 0
      %1860 = vmatpush2.bf16.msra.mxu0 0
      %1861 = vmatprep.subr.bf16.mxu0 0
      %1862 = vmatpush2.bf16.msra.mxu0 0
      %1863 = vmatprep.mubr.bf16.mxu0 0
      %1864 = vmatmul.mubr.bf16.gmra.mxu0 %v512
      %v1865 = vpop.f32.mrf.mxu0
      %v1866 = vadd.f32 0.0, %v1865
      %v1867 = vpop.f32.mrf.mxu0
      %v1868 = vpop.f32.mrf.mxu0
      %v1869 = vadd.f32 0.0, %v1868
      %v1870 = vpop.f32.mrf.mxu0
      %1871 = vmatprep.mubr.bf16.mxu0 0
      %1872 = vmatmul.mubr.bf16.gmra.mxu0 %v513
      %v1873 = vpop.f32.mrf.mxu0
      %v1874 = vadd.f32 0.0, %v1873
      %v1875 = vpop.f32.mrf.mxu0
      %v1876 = vpop.f32.mrf.mxu0
      %v1877 = vadd.f32 0.0, %v1876
      %v1878 = vpop.f32.mrf.mxu0
      %1879 = vmatprep.mubr.bf16.mxu0 0
      %1880 = vmatmul.mubr.bf16.gmra.mxu0 %v514
      %v1881 = vpop.f32.mrf.mxu0
      %v1882 = vadd.f32 0.0, %v1881
      %v1883 = vpop.f32.mrf.mxu0
      %v1884 = vpop.f32.mrf.mxu0
      %v1885 = vadd.f32 0.0, %v1884
      %v1886 = vpop.f32.mrf.mxu0
      %1887 = vmatprep.mubr.bf16.mxu0 0
      %1888 = vmatmul.mubr.bf16.gmra.mxu0 %v515
      %v1889 = vpop.f32.mrf.mxu0
      %v1890 = vadd.f32 0.0, %v1889
      %v1891 = vpop.f32.mrf.mxu0
      %v1892 = vpop.f32.mrf.mxu0
      %v1893 = vadd.f32 0.0, %v1892
      %v1894 = vpop.f32.mrf.mxu0
      %1895 = vmatprep.mubr.bf16.mxu0 0
      %1896 = vmatmul.mubr.bf16.gmra.mxu0 %v516
      %v1897 = vpop.f32.mrf.mxu0
      %v1898 = vadd.f32 0.0, %v1897
      %v1899 = vpop.f32.mrf.mxu0
      %v1900 = vpop.f32.mrf.mxu0
      %v1901 = vadd.f32 0.0, %v1900
      %v1902 = vpop.f32.mrf.mxu0
      %1903 = vmatprep.mubr.bf16.mxu0 0
      %1904 = vmatmul.mubr.bf16.gmra.mxu0 %v517
      %v1905 = vpop.f32.mrf.mxu0
      %v1906 = vadd.f32 0.0, %v1905
      %v1907 = vpop.f32.mrf.mxu0
      %v1908 = vpop.f32.mrf.mxu0
      %v1909 = vadd.f32 0.0, %v1908
      %v1910 = vpop.f32.mrf.mxu0
      %1911 = vmatprep.mubr.bf16.mxu0 0
      %1912 = vmatmul.mubr.bf16.gmra.mxu0 %v518
      %v1913 = vpop.f32.mrf.mxu0
      %v1914 = vadd.f32 0.0, %v1913
      %v1915 = vpop.f32.mrf.mxu0
      %v1916 = vpop.f32.mrf.mxu0
      %v1917 = vadd.f32 0.0, %v1916
      %v1918 = vpop.f32.mrf.mxu0
      %1919 = vmatprep.mubr.bf16.mxu0 0
      %1920 = vmatmul.mubr.bf16.gmra.mxu0 %v519
      %v1921 = vpop.f32.mrf.mxu0
      %v1922 = vadd.f32 0.0, %v1921
      %v1923 = vpop.f32.mrf.mxu0
      %v1924 = vpop.f32.mrf.mxu0
      %v1925 = vadd.f32 0.0, %v1924
      %v1926 = vpop.f32.mrf.mxu0
      %1927 = vmatprep.mubr.bf16.mxu0 0
      %1928 = vmatmul.mubr.bf16.gmra.mxu0 %v520
      %v1929 = vpop.f32.mrf.mxu0
      %v1930 = vadd.f32 0.0, %v1929
      %v1931 = vpop.f32.mrf.mxu0
      %v1932 = vpop.f32.mrf.mxu0
      %v1933 = vadd.f32 0.0, %v1932
      %v1934 = vpop.f32.mrf.mxu0
      %1935 = vmatprep.mubr.bf16.mxu0 0
      %1936 = vmatmul.mubr.bf16.gmra.mxu0 %v521
      %v1937 = vpop.f32.mrf.mxu0
      %v1938 = vadd.f32 0.0, %v1937
      %v1939 = vpop.f32.mrf.mxu0
      %v1940 = vpop.f32.mrf.mxu0
      %v1941 = vadd.f32 0.0, %v1940
      %v1942 = vpop.f32.mrf.mxu0
      %1943 = vmatprep.mubr.bf16.mxu0 0
      %1944 = vmatmul.mubr.bf16.gmra.mxu0 %v522
      %v1945 = vpop.f32.mrf.mxu0
      %v1946 = vadd.f32 0.0, %v1945
      %v1947 = vpop.f32.mrf.mxu0
      %v1948 = vpop.f32.mrf.mxu0
      %v1949 = vadd.f32 0.0, %v1948
      %v1950 = vpop.f32.mrf.mxu0
      %1951 = vmatprep.mubr.bf16.mxu0 0
      %1952 = vmatmul.mubr.bf16.gmra.mxu0 %v523
      %v1953 = vpop.f32.mrf.mxu0
      %v1954 = vadd.f32 0.0, %v1953
      %v1955 = vpop.f32.mrf.mxu0
      %v1956 = vpop.f32.mrf.mxu0
      %v1957 = vadd.f32 0.0, %v1956
      %v1958 = vpop.f32.mrf.mxu0
      %1959 = vmatprep.mubr.bf16.mxu0 0
      %1960 = vmatmul.mubr.bf16.gmra.mxu0 %v524
      %v1961 = vpop.f32.mrf.mxu0
      %v1962 = vadd.f32 0.0, %v1961
      %v1963 = vpop.f32.mrf.mxu0
      %v1964 = vpop.f32.mrf.mxu0
      %v1965 = vadd.f32 0.0, %v1964
      %v1966 = vpop.f32.mrf.mxu0
      %1967 = vmatprep.mubr.bf16.mxu0 0
      %1968 = vmatmul.mubr.bf16.gmra.mxu0 %v525
      %v1969 = vpop.f32.mrf.mxu0
      %v1970 = vadd.f32 0.0, %v1969
      %v1971 = vpop.f32.mrf.mxu0
      %v1972 = vpop.f32.mrf.mxu0
      %v1973 = vadd.f32 0.0, %v1972
      %v1974 = vpop.f32.mrf.mxu0
      %1975 = vmatprep.mubr.bf16.mxu0 0
      %1976 = vmatmul.mubr.bf16.gmra.mxu0 %v526
      %v1977 = vpop.f32.mrf.mxu0
      %v1978 = vadd.f32 0.0, %v1977
      %v1979 = vpop.f32.mrf.mxu0
      %v1980 = vpop.f32.mrf.mxu0
      %v1981 = vadd.f32 0.0, %v1980
      %v1982 = vpop.f32.mrf.mxu0
      %1983 = vmatprep.mubr.bf16.mxu0 0
      %1984 = vmatmul.mubr.bf16.gmra.mxu0 %v527
      %v1985 = vpop.f32.mrf.mxu0
      %v1986 = vadd.f32 0.0, %v1985
      %v1987 = vpop.f32.mrf.mxu0
      %v1988 = vpop.f32.mrf.mxu0
      %v1989 = vadd.f32 0.0, %v1988
      %v1990 = vpop.f32.mrf.mxu0
      %1991 = vmatprep.mubr.bf16.mxu0 0
      %1992 = vmatmul.mubr.bf16.gmra.mxu0 %v528
      %v1993 = vpop.f32.mrf.mxu0
      %v1994 = vadd.f32 0.0, %v1993
      %v1995 = vpop.f32.mrf.mxu0
      %v1996 = vpop.f32.mrf.mxu0
      %v1997 = vadd.f32 0.0, %v1996
      %v1998 = vpop.f32.mrf.mxu0
      %1999 = vmatprep.mubr.bf16.mxu0 0
      %2000 = vmatmul.mubr.bf16.gmra.mxu0 %v529
      %v2001 = vpop.f32.mrf.mxu0
      %v2002 = vadd.f32 0.0, %v2001
      %v2003 = vpop.f32.mrf.mxu0
      %v2004 = vpop.f32.mrf.mxu0
      %v2005 = vadd.f32 0.0, %v2004
      %v2006 = vpop.f32.mrf.mxu0
      %2007 = vmatprep.mubr.bf16.mxu0 0
      %2008 = vmatmul.mubr.bf16.gmra.mxu0 %v530
      %v2009 = vpop.f32.mrf.mxu0
      %v2010 = vadd.f32 0.0, %v2009
      %v2011 = vpop.f32.mrf.mxu0
      %v2012 = vpop.f32.mrf.mxu0
      %v2013 = vadd.f32 0.0, %v2012
      %v2014 = vpop.f32.mrf.mxu0
      %2015 = vmatprep.mubr.bf16.mxu0 0
      %2016 = vmatmul.mubr.bf16.gmra.mxu0 %v531
      %v2017 = vpop.f32.mrf.mxu0
      %v2018 = vadd.f32 0.0, %v2017
      %v2019 = vpop.f32.mrf.mxu0
      %v2020 = vpop.f32.mrf.mxu0
      %v2021 = vadd.f32 0.0, %v2020
      %v2022 = vpop.f32.mrf.mxu0
      %2023 = vmatprep.mubr.bf16.mxu0 0
      %2024 = vmatmul.mubr.bf16.gmra.mxu0 %v532
      %v2025 = vpop.f32.mrf.mxu0
      %v2026 = vadd.f32 0.0, %v2025
      %v2027 = vpop.f32.mrf.mxu0
      %v2028 = vpop.f32.mrf.mxu0
      %v2029 = vadd.f32 0.0, %v2028
      %v2030 = vpop.f32.mrf.mxu0
      %2031 = vmatprep.mubr.bf16.mxu0 0
      %2032 = vmatmul.mubr.bf16.gmra.mxu0 %v533
      %v2033 = vpop.f32.mrf.mxu0
      %v2034 = vadd.f32 0.0, %v2033
      %v2035 = vpop.f32.mrf.mxu0
      %v2036 = vpop.f32.mrf.mxu0
      %v2037 = vadd.f32 0.0, %v2036
      %v2038 = vpop.f32.mrf.mxu0
      %2039 = vmatprep.mubr.bf16.mxu0 0
      %2040 = vmatmul.mubr.bf16.gmra.mxu0 %v534
      %v2041 = vpop.f32.mrf.mxu0
      %v2042 = vadd.f32 0.0, %v2041
      %v2043 = vpop.f32.mrf.mxu0
      %v2044 = vpop.f32.mrf.mxu0
      %v2045 = vadd.f32 0.0, %v2044
      %v2046 = vpop.f32.mrf.mxu0
      %2047 = vmatprep.mubr.bf16.mxu0 0
      %2048 = vmatmul.mubr.bf16.gmra.mxu0 %v535
      %v2049 = vpop.f32.mrf.mxu0
      %v2050 = vadd.f32 0.0, %v2049
      %v2051 = vpop.f32.mrf.mxu0
      %v2052 = vpop.f32.mrf.mxu0
      %v2053 = vadd.f32 0.0, %v2052
      %v2054 = vpop.f32.mrf.mxu0
      %2055 = vdwg.mxu0
      %v2072 = vunpack.c.l.b16 %v1750
      %v2073 = vunpack.c.l.b16 %v1751
      %v2074 = vunpack.c.l.b16 %v1752
      %v2075 = vunpack.c.l.b16 %v1753
      %v2076 = vunpack.c.l.b16 %v1754
      %v2077 = vunpack.c.l.b16 %v1755
      %v2078 = vunpack.c.l.b16 %v1756
      %v2079 = vunpack.c.l.b16 %v1757
      %v2080 = vunpack.c.l.b16 %v1758
      %v2081 = vunpack.c.l.b16 %v1759
      %v2082 = vunpack.c.l.b16 %v1760
      %v2083 = vunpack.c.l.b16 %v1761
      %v2084 = vunpack.c.l.b16 %v1762
      %v2085 = vunpack.c.l.b16 %v1763
      %v2086 = vunpack.c.l.b16 %v1764
      %v2087 = vunpack.c.l.b16 %v1765
      %v2088 = vpack.c.b16 %v2073, %v2072
      %v2089 = vpack.c.b16 %v2075, %v2074
      %v2090 = vpack.c.b16 %v2077, %v2076
      %v2091 = vpack.c.b16 %v2079, %v2078
      %v2092 = vpack.c.b16 %v2081, %v2080
      %v2093 = vpack.c.b16 %v2083, %v2082
      %v2094 = vpack.c.b16 %v2085, %v2084
      %v2095 = vpack.c.b16 %v2087, %v2086
      %2104 = vmatprep.subr.bf16.mxu0 0
      %2105 = vmatpush1.bf16.msra.mxu0 %v2095
      %2106 = vmatprep.subr.bf16.mxu0 0
      %2107 = vmatpush1.bf16.msra.mxu0 %v2094
      %2108 = vmatprep.subr.bf16.mxu0 0
      %2109 = vmatpush1.bf16.msra.mxu0 %v2093
      %2110 = vmatprep.subr.bf16.mxu0 0
      %2111 = vmatpush1.bf16.msra.mxu0 %v2092
      %2112 = vmatprep.subr.bf16.mxu0 0
      %2113 = vmatpush1.bf16.msra.mxu0 %v2091
      %2114 = vmatprep.subr.bf16.mxu0 0
      %2115 = vmatpush1.bf16.msra.mxu0 %v2090
      %2116 = vmatprep.subr.bf16.mxu0 0
      %2117 = vmatpush1.bf16.msra.mxu0 %v2089
      %2118 = vmatprep.subr.bf16.mxu0 0
      %2119 = vmatpush1.bf16.msra.mxu0 %v2088
      %2120 = vmatprep.subr.bf16.mxu0 0
      %2121 = vmatpush2.bf16.msra.mxu0 0
      %2122 = vmatprep.subr.bf16.mxu0 0
      %2123 = vmatpush2.bf16.msra.mxu0 0
      %2124 = vmatprep.subr.bf16.mxu0 0
      %2125 = vmatpush2.bf16.msra.mxu0 0
      %2126 = vmatprep.subr.bf16.mxu0 0
      %2127 = vmatpush2.bf16.msra.mxu0 0
      %2128 = vmatprep.subr.bf16.mxu0 0
      %2129 = vmatpush2.bf16.msra.mxu0 0
      %2130 = vmatprep.subr.bf16.mxu0 0
      %2131 = vmatpush2.bf16.msra.mxu0 0
      %2132 = vmatprep.subr.bf16.mxu0 0
      %2133 = vmatpush2.bf16.msra.mxu0 0
      %2134 = vmatprep.subr.bf16.mxu0 0
      %2135 = vmatpush2.bf16.msra.mxu0 0
      %2136 = vmatprep.mubr.bf16.mxu0 0
      %2137 = vmatmul.mubr.bf16.gmra.mxu0 %v913
      %v2138 = vpop.f32.mrf.mxu0
      %v2139 = vadd.f32 %v1866, %v2138
      %v2140 = vpop.f32.mrf.mxu0
      %v2141 = vpop.f32.mrf.mxu0
      %v2142 = vadd.f32 %v1869, %v2141
      %v2143 = vpop.f32.mrf.mxu0
      %2144 = vmatprep.mubr.bf16.mxu0 0
      %2145 = vmatmul.mubr.bf16.gmra.mxu0 %v914
      %v2146 = vpop.f32.mrf.mxu0
      %v2147 = vadd.f32 %v1874, %v2146
      %v2148 = vpop.f32.mrf.mxu0
      %v2149 = vpop.f32.mrf.mxu0
      %v2150 = vadd.f32 %v1877, %v2149
      %v2151 = vpop.f32.mrf.mxu0
      %2152 = vmatprep.mubr.bf16.mxu0 0
      %2153 = vmatmul.mubr.bf16.gmra.mxu0 %v915
      %v2154 = vpop.f32.mrf.mxu0
      %v2155 = vadd.f32 %v1882, %v2154
      %v2156 = vpop.f32.mrf.mxu0
      %v2157 = vpop.f32.mrf.mxu0
      %v2158 = vadd.f32 %v1885, %v2157
      %v2159 = vpop.f32.mrf.mxu0
      %2160 = vmatprep.mubr.bf16.mxu0 0
      %2161 = vmatmul.mubr.bf16.gmra.mxu0 %v916
      %v2162 = vpop.f32.mrf.mxu0
      %v2163 = vadd.f32 %v1890, %v2162
      %v2164 = vpop.f32.mrf.mxu0
      %v2165 = vpop.f32.mrf.mxu0
      %v2166 = vadd.f32 %v1893, %v2165
      %v2167 = vpop.f32.mrf.mxu0
      %2168 = vmatprep.mubr.bf16.mxu0 0
      %2169 = vmatmul.mubr.bf16.gmra.mxu0 %v917
      %v2170 = vpop.f32.mrf.mxu0
      %v2171 = vadd.f32 %v1898, %v2170
      %v2172 = vpop.f32.mrf.mxu0
      %v2173 = vpop.f32.mrf.mxu0
      %v2174 = vadd.f32 %v1901, %v2173
      %v2175 = vpop.f32.mrf.mxu0
      %2176 = vmatprep.mubr.bf16.mxu0 0
      %2177 = vmatmul.mubr.bf16.gmra.mxu0 %v918
      %v2178 = vpop.f32.mrf.mxu0
      %v2179 = vadd.f32 %v1906, %v2178
      %v2180 = vpop.f32.mrf.mxu0
      %v2181 = vpop.f32.mrf.mxu0
      %v2182 = vadd.f32 %v1909, %v2181
      %v2183 = vpop.f32.mrf.mxu0
      %2184 = vmatprep.mubr.bf16.mxu0 0
      %2185 = vmatmul.mubr.bf16.gmra.mxu0 %v919
      %v2186 = vpop.f32.mrf.mxu0
      %v2187 = vadd.f32 %v1914, %v2186
      %v2188 = vpop.f32.mrf.mxu0
      %v2189 = vpop.f32.mrf.mxu0
      %v2190 = vadd.f32 %v1917, %v2189
      %v2191 = vpop.f32.mrf.mxu0
      %2192 = vmatprep.mubr.bf16.mxu0 0
      %2193 = vmatmul.mubr.bf16.gmra.mxu0 %v920
      %v2194 = vpop.f32.mrf.mxu0
      %v2195 = vadd.f32 %v1922, %v2194
      %v2196 = vpop.f32.mrf.mxu0
      %v2197 = vpop.f32.mrf.mxu0
      %v2198 = vadd.f32 %v1925, %v2197
      %v2199 = vpop.f32.mrf.mxu0
      %2200 = vmatprep.mubr.bf16.mxu0 0
      %2201 = vmatmul.mubr.bf16.gmra.mxu0 %v921
      %v2202 = vpop.f32.mrf.mxu0
      %v2203 = vadd.f32 %v1930, %v2202
      %v2204 = vpop.f32.mrf.mxu0
      %v2205 = vpop.f32.mrf.mxu0
      %v2206 = vadd.f32 %v1933, %v2205
      %v2207 = vpop.f32.mrf.mxu0
      %2208 = vmatprep.mubr.bf16.mxu0 0
      %2209 = vmatmul.mubr.bf16.gmra.mxu0 %v922
      %v2210 = vpop.f32.mrf.mxu0
      %v2211 = vadd.f32 %v1938, %v2210
      %v2212 = vpop.f32.mrf.mxu0
      %v2213 = vpop.f32.mrf.mxu0
      %v2214 = vadd.f32 %v1941, %v2213
      %v2215 = vpop.f32.mrf.mxu0
      %2216 = vmatprep.mubr.bf16.mxu0 0
      %2217 = vmatmul.mubr.bf16.gmra.mxu0 %v923
      %v2218 = vpop.f32.mrf.mxu0
      %v2219 = vadd.f32 %v1946, %v2218
      %v2220 = vpop.f32.mrf.mxu0
      %v2221 = vpop.f32.mrf.mxu0
      %v2222 = vadd.f32 %v1949, %v2221
      %v2223 = vpop.f32.mrf.mxu0
      %2224 = vmatprep.mubr.bf16.mxu0 0
      %2225 = vmatmul.mubr.bf16.gmra.mxu0 %v924
      %v2226 = vpop.f32.mrf.mxu0
      %v2227 = vadd.f32 %v1954, %v2226
      %v2228 = vpop.f32.mrf.mxu0
      %v2229 = vpop.f32.mrf.mxu0
      %v2230 = vadd.f32 %v1957, %v2229
      %v2231 = vpop.f32.mrf.mxu0
      %2232 = vmatprep.mubr.bf16.mxu0 0
      %2233 = vmatmul.mubr.bf16.gmra.mxu0 %v925
      %v2234 = vpop.f32.mrf.mxu0
      %v2235 = vadd.f32 %v1962, %v2234
      %v2236 = vpop.f32.mrf.mxu0
      %v2237 = vpop.f32.mrf.mxu0
      %v2238 = vadd.f32 %v1965, %v2237
      %v2239 = vpop.f32.mrf.mxu0
      %2240 = vmatprep.mubr.bf16.mxu0 0
      %2241 = vmatmul.mubr.bf16.gmra.mxu0 %v926
      %v2242 = vpop.f32.mrf.mxu0
      %v2243 = vadd.f32 %v1970, %v2242
      %v2244 = vpop.f32.mrf.mxu0
      %v2245 = vpop.f32.mrf.mxu0
      %v2246 = vadd.f32 %v1973, %v2245
      %v2247 = vpop.f32.mrf.mxu0
      %2248 = vmatprep.mubr.bf16.mxu0 0
      %2249 = vmatmul.mubr.bf16.gmra.mxu0 %v927
      %v2250 = vpop.f32.mrf.mxu0
      %v2251 = vadd.f32 %v1978, %v2250
      %v2252 = vpop.f32.mrf.mxu0
      %v2253 = vpop.f32.mrf.mxu0
      %v2254 = vadd.f32 %v1981, %v2253
      %v2255 = vpop.f32.mrf.mxu0
      %2256 = vmatprep.mubr.bf16.mxu0 0
      %2257 = vmatmul.mubr.bf16.gmra.mxu0 %v928
      %v2258 = vpop.f32.mrf.mxu0
      %v2259 = vadd.f32 %v1986, %v2258
      %v2260 = vpop.f32.mrf.mxu0
      %v2261 = vpop.f32.mrf.mxu0
      %v2262 = vadd.f32 %v1989, %v2261
      %v2263 = vpop.f32.mrf.mxu0
      %2264 = vmatprep.mubr.bf16.mxu0 0
      %2265 = vmatmul.mubr.bf16.gmra.mxu0 %v929
      %v2266 = vpop.f32.mrf.mxu0
      %v2267 = vadd.f32 %v1994, %v2266
      %v2268 = vpop.f32.mrf.mxu0
      %v2269 = vpop.f32.mrf.mxu0
      %v2270 = vadd.f32 %v1997, %v2269
      %v2271 = vpop.f32.mrf.mxu0
      %2272 = vmatprep.mubr.bf16.mxu0 0
      %2273 = vmatmul.mubr.bf16.gmra.mxu0 %v930
      %v2274 = vpop.f32.mrf.mxu0
      %v2275 = vadd.f32 %v2002, %v2274
      %v2276 = vpop.f32.mrf.mxu0
      %v2277 = vpop.f32.mrf.mxu0
      %v2278 = vadd.f32 %v2005, %v2277
      %v2279 = vpop.f32.mrf.mxu0
      %2280 = vmatprep.mubr.bf16.mxu0 0
      %2281 = vmatmul.mubr.bf16.gmra.mxu0 %v931
      %v2282 = vpop.f32.mrf.mxu0
      %v2283 = vadd.f32 %v2010, %v2282
      %v2284 = vpop.f32.mrf.mxu0
      %v2285 = vpop.f32.mrf.mxu0
      %v2286 = vadd.f32 %v2013, %v2285
      %v2287 = vpop.f32.mrf.mxu0
      %2288 = vmatprep.mubr.bf16.mxu0 0
      %2289 = vmatmul.mubr.bf16.gmra.mxu0 %v932
      %v2290 = vpop.f32.mrf.mxu0
      %v2291 = vadd.f32 %v2018, %v2290
      %v2292 = vpop.f32.mrf.mxu0
      %v2293 = vpop.f32.mrf.mxu0
      %v2294 = vadd.f32 %v2021, %v2293
      %v2295 = vpop.f32.mrf.mxu0
      %2296 = vmatprep.mubr.bf16.mxu0 0
      %2297 = vmatmul.mubr.bf16.gmra.mxu0 %v933
      %v2298 = vpop.f32.mrf.mxu0
      %v2299 = vadd.f32 %v2026, %v2298
      %v2300 = vpop.f32.mrf.mxu0
      %v2301 = vpop.f32.mrf.mxu0
      %v2302 = vadd.f32 %v2029, %v2301
      %v2303 = vpop.f32.mrf.mxu0
      %2304 = vmatprep.mubr.bf16.mxu0 0
      %2305 = vmatmul.mubr.bf16.gmra.mxu0 %v934
      %v2306 = vpop.f32.mrf.mxu0
      %v2307 = vadd.f32 %v2034, %v2306
      %v2308 = vpop.f32.mrf.mxu0
      %v2309 = vpop.f32.mrf.mxu0
      %v2310 = vadd.f32 %v2037, %v2309
      %v2311 = vpop.f32.mrf.mxu0
      %2312 = vmatprep.mubr.bf16.mxu0 0
      %2313 = vmatmul.mubr.bf16.gmra.mxu0 %v935
      %v2314 = vpop.f32.mrf.mxu0
      %v2315 = vadd.f32 %v2042, %v2314
      %v2316 = vpop.f32.mrf.mxu0
      %v2317 = vpop.f32.mrf.mxu0
      %v2318 = vadd.f32 %v2045, %v2317
      %v2319 = vpop.f32.mrf.mxu0
      %2320 = vmatprep.mubr.bf16.mxu0 0
      %2321 = vmatmul.mubr.bf16.gmra.mxu0 %v936
      %v2322 = vpop.f32.mrf.mxu0
      %v2323 = vadd.f32 %v2050, %v2322
      %v2324 = vpop.f32.mrf.mxu0
      %v2325 = vpop.f32.mrf.mxu0
      %v2326 = vadd.f32 %v2053, %v2325
      %v2327 = vpop.f32.mrf.mxu0
      %2328 = vdwg.mxu0
      %s2329 = scalar_lea.vmem %s1, 448
      %v2330 = vld [vmem:[%s2329] sm:$0xf]
      %v2331 = vld [vmem:[%s2329 + $0x4] sm:$0xf]
      %v2332 = vld [vmem:[%s2329 + $0x8] sm:$0xf]
      %v2333 = vld [vmem:[%s2329 + $0xc] sm:$0xf]
      %v2334 = vld [vmem:[%s2329 + $0x10] sm:$0xf]
      %v2335 = vld [vmem:[%s2329 + $0x14] sm:$0xf]
      %v2336 = vld [vmem:[%s2329 + $0x18] sm:$0xf]
      %v2337 = vld [vmem:[%s2329 + $0x1c] sm:$0xf]
      %v2338 = vld [vmem:[%s2329 + $0x20] sm:$0xf]
      %v2339 = vld [vmem:[%s2329 + $0x24] sm:$0xf]
      %v2340 = vld [vmem:[%s2329 + $0x28] sm:$0xf]
      %v2341 = vld [vmem:[%s2329 + $0x2c] sm:$0xf]
      %v2342 = vld [vmem:[%s2329 + $0x30] sm:$0xf]
      %v2343 = vld [vmem:[%s2329 + $0x34] sm:$0xf]
      %v2344 = vld [vmem:[%s2329 + $0x38] sm:$0xf]
      %v2345 = vld [vmem:[%s2329 + $0x3c] sm:$0xf]
      %v2362 = vunpack.c.l.b16 %v2330
      %v2363 = vunpack.c.l.b16 %v2331
      %v2364 = vunpack.c.l.b16 %v2332
      %v2365 = vunpack.c.l.b16 %v2333
      %v2366 = vunpack.c.l.b16 %v2334
      %v2367 = vunpack.c.l.b16 %v2335
      %v2368 = vunpack.c.l.b16 %v2336
      %v2369 = vunpack.c.l.b16 %v2337
      %v2370 = vunpack.c.l.b16 %v2338
      %v2371 = vunpack.c.l.b16 %v2339
      %v2372 = vunpack.c.l.b16 %v2340
      %v2373 = vunpack.c.l.b16 %v2341
      %v2374 = vunpack.c.l.b16 %v2342
      %v2375 = vunpack.c.l.b16 %v2343
      %v2376 = vunpack.c.l.b16 %v2344
      %v2377 = vunpack.c.l.b16 %v2345
      %v2378 = vpack.c.b16 %v2363, %v2362
      %v2379 = vpack.c.b16 %v2365, %v2364
      %v2380 = vpack.c.b16 %v2367, %v2366
      %v2381 = vpack.c.b16 %v2369, %v2368
      %v2382 = vpack.c.b16 %v2371, %v2370
      %v2383 = vpack.c.b16 %v2373, %v2372
      %v2384 = vpack.c.b16 %v2375, %v2374
      %v2385 = vpack.c.b16 %v2377, %v2376
      %2394 = vmatprep.subr.bf16.mxu0 0
      %2395 = vmatpush1.bf16.msra.mxu0 %v2385
      %2396 = vmatprep.subr.bf16.mxu0 0
      %2397 = vmatpush1.bf16.msra.mxu0 %v2384
      %2398 = vmatprep.subr.bf16.mxu0 0
      %2399 = vmatpush1.bf16.msra.mxu0 %v2383
      %2400 = vmatprep.subr.bf16.mxu0 0
      %2401 = vmatpush1.bf16.msra.mxu0 %v2382
      %2402 = vmatprep.subr.bf16.mxu0 0
      %2403 = vmatpush1.bf16.msra.mxu0 %v2381
      %2404 = vmatprep.subr.bf16.mxu0 0
      %2405 = vmatpush1.bf16.msra.mxu0 %v2380
      %2406 = vmatprep.subr.bf16.mxu0 0
      %2407 = vmatpush1.bf16.msra.mxu0 %v2379
      %2408 = vmatprep.subr.bf16.mxu0 0
      %2409 = vmatpush1.bf16.msra.mxu0 %v2378
      %2410 = vmatprep.subr.bf16.mxu0 0
      %2411 = vmatpush2.bf16.msra.mxu0 0
      %2412 = vmatprep.subr.bf16.mxu0 0
      %2413 = vmatpush2.bf16.msra.mxu0 0
      %2414 = vmatprep.subr.bf16.mxu0 0
      %2415 = vmatpush2.bf16.msra.mxu0 0
      %2416 = vmatprep.subr.bf16.mxu0 0
      %2417 = vmatpush2.bf16.msra.mxu0 0
      %2418 = vmatprep.subr.bf16.mxu0 0
      %2419 = vmatpush2.bf16.msra.mxu0 0
      %2420 = vmatprep.subr.bf16.mxu0 0
      %2421 = vmatpush2.bf16.msra.mxu0 0
      %2422 = vmatprep.subr.bf16.mxu0 0
      %2423 = vmatpush2.bf16.msra.mxu0 0
      %2424 = vmatprep.subr.bf16.mxu0 0
      %2425 = vmatpush2.bf16.msra.mxu0 0
      %2426 = vmatprep.mubr.bf16.mxu0 0
      %2427 = vmatmul.mubr.bf16.gmra.mxu0 %v1380
      %v2428 = vpop.f32.mrf.mxu0
      %v2429 = vadd.f32 0.0, %v2428
      %v2430 = vpop.f32.mrf.mxu0
      %v2431 = vpop.f32.mrf.mxu0
      %v2432 = vadd.f32 0.0, %v2431
      %v2433 = vpop.f32.mrf.mxu0
      %2434 = vmatprep.mubr.bf16.mxu0 0
      %2435 = vmatmul.mubr.bf16.gmra.mxu0 %v1381
      %v2436 = vpop.f32.mrf.mxu0
      %v2437 = vadd.f32 0.0, %v2436
      %v2438 = vpop.f32.mrf.mxu0
      %v2439 = vpop.f32.mrf.mxu0
      %v2440 = vadd.f32 0.0, %v2439
      %v2441 = vpop.f32.mrf.mxu0
      %2442 = vmatprep.mubr.bf16.mxu0 0
      %2443 = vmatmul.mubr.bf16.gmra.mxu0 %v1382
      %v2444 = vpop.f32.mrf.mxu0
      %v2445 = vadd.f32 0.0, %v2444
      %v2446 = vpop.f32.mrf.mxu0
      %v2447 = vpop.f32.mrf.mxu0
      %v2448 = vadd.f32 0.0, %v2447
      %v2449 = vpop.f32.mrf.mxu0
      %2450 = vmatprep.mubr.bf16.mxu0 0
      %2451 = vmatmul.mubr.bf16.gmra.mxu0 %v1383
      %v2452 = vpop.f32.mrf.mxu0
      %v2453 = vadd.f32 0.0, %v2452
      %v2454 = vpop.f32.mrf.mxu0
      %v2455 = vpop.f32.mrf.mxu0
      %v2456 = vadd.f32 0.0, %v2455
      %v2457 = vpop.f32.mrf.mxu0
      %2458 = vmatprep.mubr.bf16.mxu0 0
      %2459 = vmatmul.mubr.bf16.gmra.mxu0 %v1384
      %v2460 = vpop.f32.mrf.mxu0
      %v2461 = vadd.f32 0.0, %v2460
      %v2462 = vpop.f32.mrf.mxu0
      %v2463 = vpop.f32.mrf.mxu0
      %v2464 = vadd.f32 0.0, %v2463
      %v2465 = vpop.f32.mrf.mxu0
      %2466 = vmatprep.mubr.bf16.mxu0 0
      %2467 = vmatmul.mubr.bf16.gmra.mxu0 %v1385
      %v2468 = vpop.f32.mrf.mxu0
      %v2469 = vadd.f32 0.0, %v2468
      %v2470 = vpop.f32.mrf.mxu0
      %v2471 = vpop.f32.mrf.mxu0
      %v2472 = vadd.f32 0.0, %v2471
      %v2473 = vpop.f32.mrf.mxu0
      %2474 = vmatprep.mubr.bf16.mxu0 0
      %2475 = vmatmul.mubr.bf16.gmra.mxu0 %v1386
      %v2476 = vpop.f32.mrf.mxu0
      %v2477 = vadd.f32 0.0, %v2476
      %v2478 = vpop.f32.mrf.mxu0
      %v2479 = vpop.f32.mrf.mxu0
      %v2480 = vadd.f32 0.0, %v2479
      %v2481 = vpop.f32.mrf.mxu0
      %2482 = vmatprep.mubr.bf16.mxu0 0
      %2483 = vmatmul.mubr.bf16.gmra.mxu0 %v1387
      %v2484 = vpop.f32.mrf.mxu0
      %v2485 = vadd.f32 0.0, %v2484
      %v2486 = vpop.f32.mrf.mxu0
      %v2487 = vpop.f32.mrf.mxu0
      %v2488 = vadd.f32 0.0, %v2487
      %v2489 = vpop.f32.mrf.mxu0
      %2490 = vmatprep.mubr.bf16.mxu0 0
      %2491 = vmatmul.mubr.bf16.gmra.mxu0 %v1388
      %v2492 = vpop.f32.mrf.mxu0
      %v2493 = vadd.f32 0.0, %v2492
      %v2494 = vpop.f32.mrf.mxu0
      %v2495 = vpop.f32.mrf.mxu0
      %v2496 = vadd.f32 0.0, %v2495
      %v2497 = vpop.f32.mrf.mxu0
      %2498 = vmatprep.mubr.bf16.mxu0 0
      %2499 = vmatmul.mubr.bf16.gmra.mxu0 %v1389
      %v2500 = vpop.f32.mrf.mxu0
      %v2501 = vadd.f32 0.0, %v2500
      %v2502 = vpop.f32.mrf.mxu0
      %v2503 = vpop.f32.mrf.mxu0
      %v2504 = vadd.f32 0.0, %v2503
      %v2505 = vpop.f32.mrf.mxu0
      %2506 = vmatprep.mubr.bf16.mxu0 0
      %2507 = vmatmul.mubr.bf16.gmra.mxu0 %v1390
      %v2508 = vpop.f32.mrf.mxu0
      %v2509 = vadd.f32 0.0, %v2508
      %v2510 = vpop.f32.mrf.mxu0
      %v2511 = vpop.f32.mrf.mxu0
      %v2512 = vadd.f32 0.0, %v2511
      %v2513 = vpop.f32.mrf.mxu0
      %2514 = vmatprep.mubr.bf16.mxu0 0
      %2515 = vmatmul.mubr.bf16.gmra.mxu0 %v1391
      %v2516 = vpop.f32.mrf.mxu0
      %v2517 = vadd.f32 0.0, %v2516
      %v2518 = vpop.f32.mrf.mxu0
      %v2519 = vpop.f32.mrf.mxu0
      %v2520 = vadd.f32 0.0, %v2519
      %v2521 = vpop.f32.mrf.mxu0
      %2522 = vmatprep.mubr.bf16.mxu0 0
      %2523 = vmatmul.mubr.bf16.gmra.mxu0 %v1392
      %v2524 = vpop.f32.mrf.mxu0
      %v2525 = vadd.f32 0.0, %v2524
      %v2526 = vpop.f32.mrf.mxu0
      %v2527 = vpop.f32.mrf.mxu0
      %v2528 = vadd.f32 0.0, %v2527
      %v2529 = vpop.f32.mrf.mxu0
      %2530 = vmatprep.mubr.bf16.mxu0 0
      %2531 = vmatmul.mubr.bf16.gmra.mxu0 %v1393
      %v2532 = vpop.f32.mrf.mxu0
      %v2533 = vadd.f32 0.0, %v2532
      %v2534 = vpop.f32.mrf.mxu0
      %v2535 = vpop.f32.mrf.mxu0
      %v2536 = vadd.f32 0.0, %v2535
      %v2537 = vpop.f32.mrf.mxu0
      %2538 = vmatprep.mubr.bf16.mxu0 0
      %2539 = vmatmul.mubr.bf16.gmra.mxu0 %v1394
      %v2540 = vpop.f32.mrf.mxu0
      %v2541 = vadd.f32 0.0, %v2540
      %v2542 = vpop.f32.mrf.mxu0
      %v2543 = vpop.f32.mrf.mxu0
      %v2544 = vadd.f32 0.0, %v2543
      %v2545 = vpop.f32.mrf.mxu0
      %2546 = vmatprep.mubr.bf16.mxu0 0
      %2547 = vmatmul.mubr.bf16.gmra.mxu0 %v1395
      %v2548 = vpop.f32.mrf.mxu0
      %v2549 = vadd.f32 0.0, %v2548
      %v2550 = vpop.f32.mrf.mxu0
      %v2551 = vpop.f32.mrf.mxu0
      %v2552 = vadd.f32 0.0, %v2551
      %v2553 = vpop.f32.mrf.mxu0
      %2554 = vmatprep.mubr.bf16.mxu0 0
      %2555 = vmatmul.mubr.bf16.gmra.mxu0 %v1396
      %v2556 = vpop.f32.mrf.mxu0
      %v2557 = vadd.f32 0.0, %v2556
      %v2558 = vpop.f32.mrf.mxu0
      %v2559 = vpop.f32.mrf.mxu0
      %v2560 = vadd.f32 0.0, %v2559
      %v2561 = vpop.f32.mrf.mxu0
      %2562 = vmatprep.mubr.bf16.mxu0 0
      %2563 = vmatmul.mubr.bf16.gmra.mxu0 %v1397
      %v2564 = vpop.f32.mrf.mxu0
      %v2565 = vadd.f32 0.0, %v2564
      %v2566 = vpop.f32.mrf.mxu0
      %v2567 = vpop.f32.mrf.mxu0
      %v2568 = vadd.f32 0.0, %v2567
      %v2569 = vpop.f32.mrf.mxu0
      %2570 = vmatprep.mubr.bf16.mxu0 0
      %2571 = vmatmul.mubr.bf16.gmra.mxu0 %v1398
      %v2572 = vpop.f32.mrf.mxu0
      %v2573 = vadd.f32 0.0, %v2572
      %v2574 = vpop.f32.mrf.mxu0
      %v2575 = vpop.f32.mrf.mxu0
      %v2576 = vadd.f32 0.0, %v2575
      %v2577 = vpop.f32.mrf.mxu0
      %2578 = vmatprep.mubr.bf16.mxu0 0
      %2579 = vmatmul.mubr.bf16.gmra.mxu0 %v1399
      %v2580 = vpop.f32.mrf.mxu0
      %v2581 = vadd.f32 0.0, %v2580
      %v2582 = vpop.f32.mrf.mxu0
      %v2583 = vpop.f32.mrf.mxu0
      %v2584 = vadd.f32 0.0, %v2583
      %v2585 = vpop.f32.mrf.mxu0
      %2586 = vmatprep.mubr.bf16.mxu0 0
      %2587 = vmatmul.mubr.bf16.gmra.mxu0 %v1400
      %v2588 = vpop.f32.mrf.mxu0
      %v2589 = vadd.f32 0.0, %v2588
      %v2590 = vpop.f32.mrf.mxu0
      %v2591 = vpop.f32.mrf.mxu0
      %v2592 = vadd.f32 0.0, %v2591
      %v2593 = vpop.f32.mrf.mxu0
      %2594 = vmatprep.mubr.bf16.mxu0 0
      %2595 = vmatmul.mubr.bf16.gmra.mxu0 %v1401
      %v2596 = vpop.f32.mrf.mxu0
      %v2597 = vadd.f32 0.0, %v2596
      %v2598 = vpop.f32.mrf.mxu0
      %v2599 = vpop.f32.mrf.mxu0
      %v2600 = vadd.f32 0.0, %v2599
      %v2601 = vpop.f32.mrf.mxu0
      %2602 = vmatprep.mubr.bf16.mxu0 0
      %2603 = vmatmul.mubr.bf16.gmra.mxu0 %v1402
      %v2604 = vpop.f32.mrf.mxu0
      %v2605 = vadd.f32 0.0, %v2604
      %v2606 = vpop.f32.mrf.mxu0
      %v2607 = vpop.f32.mrf.mxu0
      %v2608 = vadd.f32 0.0, %v2607
      %v2609 = vpop.f32.mrf.mxu0
      %2610 = vmatprep.mubr.bf16.mxu0 0
      %2611 = vmatmul.mubr.bf16.gmra.mxu0 %v1403
      %v2612 = vpop.f32.mrf.mxu0
      %v2613 = vadd.f32 0.0, %v2612
      %v2614 = vpop.f32.mrf.mxu0
      %v2615 = vpop.f32.mrf.mxu0
      %v2616 = vadd.f32 0.0, %v2615
      %v2617 = vpop.f32.mrf.mxu0
      %2618 = vdwg.mxu0
      %v2619 = vadd.f32 %v2139, %v2429
      %v2620 = vadd.f32 %v2142, %v2432
      %v2621 = vadd.f32 %v2147, %v2437
      %v2622 = vadd.f32 %v2150, %v2440
      %v2623 = vadd.f32 %v2155, %v2445
      %v2624 = vadd.f32 %v2158, %v2448
      %v2625 = vadd.f32 %v2163, %v2453
      %v2626 = vadd.f32 %v2166, %v2456
      %v2627 = vadd.f32 %v2171, %v2461
      %v2628 = vadd.f32 %v2174, %v2464
      %v2629 = vadd.f32 %v2179, %v2469
      %v2630 = vadd.f32 %v2182, %v2472
      %v2631 = vadd.f32 %v2187, %v2477
      %v2632 = vadd.f32 %v2190, %v2480
      %v2633 = vadd.f32 %v2195, %v2485
      %v2634 = vadd.f32 %v2198, %v2488
      %v2635 = vadd.f32 %v2203, %v2493
      %v2636 = vadd.f32 %v2206, %v2496
      %v2637 = vadd.f32 %v2211, %v2501
      %v2638 = vadd.f32 %v2214, %v2504
      %v2639 = vadd.f32 %v2219, %v2509
      %v2640 = vadd.f32 %v2222, %v2512
      %v2641 = vadd.f32 %v2227, %v2517
      %v2642 = vadd.f32 %v2230, %v2520
      %v2643 = vadd.f32 %v2235, %v2525
      %v2644 = vadd.f32 %v2238, %v2528
      %v2645 = vadd.f32 %v2243, %v2533
      %v2646 = vadd.f32 %v2246, %v2536
      %v2647 = vadd.f32 %v2251, %v2541
      %v2648 = vadd.f32 %v2254, %v2544
      %v2649 = vadd.f32 %v2259, %v2549
      %v2650 = vadd.f32 %v2262, %v2552
      %v2651 = vadd.f32 %v2267, %v2557
      %v2652 = vadd.f32 %v2270, %v2560
      %v2653 = vadd.f32 %v2275, %v2565
      %v2654 = vadd.f32 %v2278, %v2568
      %v2655 = vadd.f32 %v2283, %v2573
      %v2656 = vadd.f32 %v2286, %v2576
      %v2657 = vadd.f32 %v2291, %v2581
      %v2658 = vadd.f32 %v2294, %v2584
      %v2659 = vadd.f32 %v2299, %v2589
      %v2660 = vadd.f32 %v2302, %v2592
      %v2661 = vadd.f32 %v2307, %v2597
      %v2662 = vadd.f32 %v2310, %v2600
      %v2663 = vadd.f32 %v2315, %v2605
      %v2664 = vadd.f32 %v2318, %v2608
      %v2665 = vadd.f32 %v2323, %v2613
      %v2666 = vadd.f32 %v2326, %v2616
      %vm2715 = vcmask 1046528
      %v2716 = vrot.slane %v2619, 1
      %v2717 = vrot.slane %v2620, 1
      %v2718 = vsel %vm2715, %v2716, %v2717
      %v2719 = vrot.slane %v2621, 1
      %v2720 = vsel %vm2715, %v2717, %v2719
      %v2721 = vrot.slane %v2622, 1
      %v2722 = vrot.slane %v2623, 1
      %v2723 = vsel %vm2715, %v2721, %v2722
      %v2724 = vrot.slane %v2624, 1
      %v2725 = vsel %vm2715, %v2722, %v2724
      %v2726 = vrot.slane %v2625, 1
      %v2727 = vrot.slane %v2626, 1
      %v2728 = vsel %vm2715, %v2726, %v2727
      %v2729 = vrot.slane %v2627, 1
      %v2730 = vsel %vm2715, %v2727, %v2729
      %v2731 = vrot.slane %v2628, 1
      %v2732 = vrot.slane %v2629, 1
      %v2733 = vsel %vm2715, %v2731, %v2732
      %v2734 = vrot.slane %v2630, 1
      %v2735 = vsel %vm2715, %v2732, %v2734
      %v2736 = vrot.slane %v2631, 1
      %v2737 = vrot.slane %v2632, 1
      %v2738 = vsel %vm2715, %v2736, %v2737
      %v2739 = vrot.slane %v2633, 1
      %v2740 = vsel %vm2715, %v2737, %v2739
      %v2741 = vrot.slane %v2634, 1
      %v2742 = vrot.slane %v2635, 1
      %v2743 = vsel %vm2715, %v2741, %v2742
      %v2744 = vrot.slane %v2636, 1
      %v2745 = vsel %vm2715, %v2742, %v2744
      %v2746 = vrot.slane %v2637, 1
      %v2747 = vrot.slane %v2638, 1
      %v2748 = vsel %vm2715, %v2746, %v2747
      %v2749 = vrot.slane %v2639, 1
      %v2750 = vsel %vm2715, %v2747, %v2749
      %v2751 = vrot.slane %v2640, 1
      %v2752 = vrot.slane %v2641, 1
      %v2753 = vsel %vm2715, %v2751, %v2752
      %v2754 = vrot.slane %v2642, 1
      %v2755 = vsel %vm2715, %v2752, %v2754
      %v2756 = vrot.slane %v2643, 1
      %v2757 = vrot.slane %v2644, 1
      %v2758 = vsel %vm2715, %v2756, %v2757
      %v2759 = vrot.slane %v2645, 1
      %v2760 = vsel %vm2715, %v2757, %v2759
      %v2761 = vrot.slane %v2646, 1
      %v2762 = vrot.slane %v2647, 1
      %v2763 = vsel %vm2715, %v2761, %v2762
      %v2764 = vrot.slane %v2648, 1
      %v2765 = vsel %vm2715, %v2762, %v2764
      %v2766 = vrot.slane %v2649, 1
      %v2767 = vrot.slane %v2650, 1
      %v2768 = vsel %vm2715, %v2766, %v2767
      %v2769 = vrot.slane %v2651, 1
      %v2770 = vsel %vm2715, %v2767, %v2769
      %v2771 = vrot.slane %v2652, 1
      %v2772 = vrot.slane %v2653, 1
      %v2773 = vsel %vm2715, %v2771, %v2772
      %v2774 = vrot.slane %v2654, 1
      %v2775 = vsel %vm2715, %v2772, %v2774
      %v2776 = vrot.slane %v2655, 1
      %v2777 = vrot.slane %v2656, 1
      %v2778 = vsel %vm2715, %v2776, %v2777
      %v2779 = vrot.slane %v2657, 1
      %v2780 = vsel %vm2715, %v2777, %v2779
      %v2781 = vrot.slane %v2658, 1
      %v2782 = vrot.slane %v2659, 1
      %v2783 = vsel %vm2715, %v2781, %v2782
      %v2784 = vrot.slane %v2660, 1
      %v2785 = vsel %vm2715, %v2782, %v2784
      %v2786 = vrot.slane %v2661, 1
      %v2787 = vrot.slane %v2662, 1
      %v2788 = vsel %vm2715, %v2786, %v2787
      %v2789 = vrot.slane %v2663, 1
      %v2790 = vsel %vm2715, %v2787, %v2789
      %v2791 = vrot.slane %v2664, 1
      %v2792 = vrot.slane %v2665, 1
      %v2793 = vsel %vm2715, %v2791, %v2792
      %v2794 = vrot.slane %v2666, 1
      %v2795 = vsel %vm2715, %v2792, %v2794
      %v2828 = vadd.f32 %v1717, %v2718
      %v2829 = vadd.f32 %v1718, %v2720
      %v2830 = vadd.f32 %v1719, %v2723
      %v2831 = vadd.f32 %v1720, %v2725
      %v2832 = vadd.f32 %v1721, %v2728
      %v2833 = vadd.f32 %v1722, %v2730
      %v2834 = vadd.f32 %v1723, %v2733
      %v2835 = vadd.f32 %v1724, %v2735
      %v2836 = vadd.f32 %v1725, %v2738
      %v2837 = vadd.f32 %v1726, %v2740
      %v2838 = vadd.f32 %v1727, %v2743
      %v2839 = vadd.f32 %v1728, %v2745
      %v2840 = vadd.f32 %v1729, %v2748
      %v2841 = vadd.f32 %v1730, %v2750
      %v2842 = vadd.f32 %v1731, %v2753
      %v2843 = vadd.f32 %v1732, %v2755
      %v2844 = vadd.f32 %v1733, %v2758
      %v2845 = vadd.f32 %v1734, %v2760
      %v2846 = vadd.f32 %v1735, %v2763
      %v2847 = vadd.f32 %v1736, %v2765
      %v2848 = vadd.f32 %v1737, %v2768
      %v2849 = vadd.f32 %v1738, %v2770
      %v2850 = vadd.f32 %v1739, %v2773
      %v2851 = vadd.f32 %v1740, %v2775
      %v2852 = vadd.f32 %v1741, %v2778
      %v2853 = vadd.f32 %v1742, %v2780
      %v2854 = vadd.f32 %v1743, %v2783
      %v2855 = vadd.f32 %v1744, %v2785
      %v2856 = vadd.f32 %v1745, %v2788
      %v2857 = vadd.f32 %v1746, %v2790
      %v2858 = vadd.f32 %v1747, %v2793
      %v2859 = vadd.f32 %v1748, %v2795
      %s2860 = scalar_lea.vmem %s1, 128
      %v2861 = vld [vmem:[%s2860] sm:$0xf]
      %v2862 = vld [vmem:[%s2860 + $0x4] sm:$0xf]
      %v2863 = vld [vmem:[%s2860 + $0x8] sm:$0xf]
      %v2864 = vld [vmem:[%s2860 + $0xc] sm:$0xf]
      %v2865 = vld [vmem:[%s2860 + $0x10] sm:$0xf]
      %v2866 = vld [vmem:[%s2860 + $0x14] sm:$0xf]
      %v2867 = vld [vmem:[%s2860 + $0x18] sm:$0xf]
      %v2868 = vld [vmem:[%s2860 + $0x1c] sm:$0xf]
      %v2869 = vld [vmem:[%s2860 + $0x20] sm:$0xf]
      %v2870 = vld [vmem:[%s2860 + $0x24] sm:$0xf]
      %v2871 = vld [vmem:[%s2860 + $0x28] sm:$0xf]
      %v2872 = vld [vmem:[%s2860 + $0x2c] sm:$0xf]
      %v2873 = vld [vmem:[%s2860 + $0x30] sm:$0xf]
      %v2874 = vld [vmem:[%s2860 + $0x34] sm:$0xf]
      %v2875 = vld [vmem:[%s2860 + $0x38] sm:$0xf]
      %v2876 = vld [vmem:[%s2860 + $0x3c] sm:$0xf]
      %s2877 = scalar_lea.vmem %s1, 320
      %v2878 = vld [vmem:[%s2877] sm:$0xf]
      %v2879 = vld [vmem:[%s2877 + $0x4] sm:$0xf]
      %v2880 = vld [vmem:[%s2877 + $0x8] sm:$0xf]
      %v2881 = vld [vmem:[%s2877 + $0xc] sm:$0xf]
      %v2882 = vld [vmem:[%s2877 + $0x10] sm:$0xf]
      %v2883 = vld [vmem:[%s2877 + $0x14] sm:$0xf]
      %v2884 = vld [vmem:[%s2877 + $0x18] sm:$0xf]
      %v2885 = vld [vmem:[%s2877 + $0x1c] sm:$0xf]
      %v2886 = vld [vmem:[%s2877 + $0x20] sm:$0xf]
      %v2887 = vld [vmem:[%s2877 + $0x24] sm:$0xf]
      %v2888 = vld [vmem:[%s2877 + $0x28] sm:$0xf]
      %v2889 = vld [vmem:[%s2877 + $0x2c] sm:$0xf]
      %v2890 = vld [vmem:[%s2877 + $0x30] sm:$0xf]
      %v2891 = vld [vmem:[%s2877 + $0x34] sm:$0xf]
      %v2892 = vld [vmem:[%s2877 + $0x38] sm:$0xf]
      %v2893 = vld [vmem:[%s2877 + $0x3c] sm:$0xf]
      %v2910 = vunpack.c.l.b16 %v2878
      %v2911 = vunpack.c.l.b16 %v2879
      %v2912 = vunpack.c.l.b16 %v2880
      %v2913 = vunpack.c.l.b16 %v2881
      %v2914 = vunpack.c.l.b16 %v2882
      %v2915 = vunpack.c.l.b16 %v2883
      %v2916 = vunpack.c.l.b16 %v2884
      %v2917 = vunpack.c.l.b16 %v2885
      %v2918 = vunpack.c.l.b16 %v2886
      %v2919 = vunpack.c.l.b16 %v2887
      %v2920 = vunpack.c.l.b16 %v2888
      %v2921 = vunpack.c.l.b16 %v2889
      %v2922 = vunpack.c.l.b16 %v2890
      %v2923 = vunpack.c.l.b16 %v2891
      %v2924 = vunpack.c.l.b16 %v2892
      %v2925 = vunpack.c.l.b16 %v2893
      %v2926 = vpack.c.b16 %v2911, %v2910
      %v2927 = vpack.c.b16 %v2913, %v2912
      %v2928 = vpack.c.b16 %v2915, %v2914
      %v2929 = vpack.c.b16 %v2917, %v2916
      %v2930 = vpack.c.b16 %v2919, %v2918
      %v2931 = vpack.c.b16 %v2921, %v2920
      %v2932 = vpack.c.b16 %v2923, %v2922
      %v2933 = vpack.c.b16 %v2925, %v2924
      %2942 = vmatprep.subr.bf16.mxu0 0
      %2943 = vmatpush1.bf16.msra.mxu0 %v2933
      %2944 = vmatprep.subr.bf16.mxu0 0
      %2945 = vmatpush1.bf16.msra.mxu0 %v2932
      %2946 = vmatprep.subr.bf16.mxu0 0
      %2947 = vmatpush1.bf16.msra.mxu0 %v2931
      %2948 = vmatprep.subr.bf16.mxu0 0
      %2949 = vmatpush1.bf16.msra.mxu0 %v2930
      %2950 = vmatprep.subr.bf16.mxu0 0
      %2951 = vmatpush1.bf16.msra.mxu0 %v2929
      %2952 = vmatprep.subr.bf16.mxu0 0
      %2953 = vmatpush1.bf16.msra.mxu0 %v2928
      %2954 = vmatprep.subr.bf16.mxu0 0
      %2955 = vmatpush1.bf16.msra.mxu0 %v2927
      %2956 = vmatprep.subr.bf16.mxu0 0
      %2957 = vmatpush1.bf16.msra.mxu0 %v2926
      %2958 = vmatprep.subr.bf16.mxu0 0
      %2959 = vmatpush2.bf16.msra.mxu0 0
      %2960 = vmatprep.subr.bf16.mxu0 0
      %2961 = vmatpush2.bf16.msra.mxu0 0
      %2962 = vmatprep.subr.bf16.mxu0 0
      %2963 = vmatpush2.bf16.msra.mxu0 0
      %2964 = vmatprep.subr.bf16.mxu0 0
      %2965 = vmatpush2.bf16.msra.mxu0 0
      %2966 = vmatprep.subr.bf16.mxu0 0
      %2967 = vmatpush2.bf16.msra.mxu0 0
      %2968 = vmatprep.subr.bf16.mxu0 0
      %2969 = vmatpush2.bf16.msra.mxu0 0
      %2970 = vmatprep.subr.bf16.mxu0 0
      %2971 = vmatpush2.bf16.msra.mxu0 0
      %2972 = vmatprep.subr.bf16.mxu0 0
      %2973 = vmatpush2.bf16.msra.mxu0 0
      %2974 = vmatprep.mubr.bf16.mxu0 0
      %2975 = vmatmul.mubr.bf16.gmra.mxu0 %v512
      %v2976 = vpop.f32.mrf.mxu0
      %v2977 = vadd.f32 0.0, %v2976
      %v2978 = vpop.f32.mrf.mxu0
      %v2979 = vpop.f32.mrf.mxu0
      %v2980 = vadd.f32 0.0, %v2979
      %v2981 = vpop.f32.mrf.mxu0
      %2982 = vmatprep.mubr.bf16.mxu0 0
      %2983 = vmatmul.mubr.bf16.gmra.mxu0 %v513
      %v2984 = vpop.f32.mrf.mxu0
      %v2985 = vadd.f32 0.0, %v2984
      %v2986 = vpop.f32.mrf.mxu0
      %v2987 = vpop.f32.mrf.mxu0
      %v2988 = vadd.f32 0.0, %v2987
      %v2989 = vpop.f32.mrf.mxu0
      %2990 = vmatprep.mubr.bf16.mxu0 0
      %2991 = vmatmul.mubr.bf16.gmra.mxu0 %v514
      %v2992 = vpop.f32.mrf.mxu0
      %v2993 = vadd.f32 0.0, %v2992
      %v2994 = vpop.f32.mrf.mxu0
      %v2995 = vpop.f32.mrf.mxu0
      %v2996 = vadd.f32 0.0, %v2995
      %v2997 = vpop.f32.mrf.mxu0
      %2998 = vmatprep.mubr.bf16.mxu0 0
      %2999 = vmatmul.mubr.bf16.gmra.mxu0 %v515
      %v3000 = vpop.f32.mrf.mxu0
      %v3001 = vadd.f32 0.0, %v3000
      %v3002 = vpop.f32.mrf.mxu0
      %v3003 = vpop.f32.mrf.mxu0
      %v3004 = vadd.f32 0.0, %v3003
      %v3005 = vpop.f32.mrf.mxu0
      %3006 = vmatprep.mubr.bf16.mxu0 0
      %3007 = vmatmul.mubr.bf16.gmra.mxu0 %v516
      %v3008 = vpop.f32.mrf.mxu0
      %v3009 = vadd.f32 0.0, %v3008
      %v3010 = vpop.f32.mrf.mxu0
      %v3011 = vpop.f32.mrf.mxu0
      %v3012 = vadd.f32 0.0, %v3011
      %v3013 = vpop.f32.mrf.mxu0
      %3014 = vmatprep.mubr.bf16.mxu0 0
      %3015 = vmatmul.mubr.bf16.gmra.mxu0 %v517
      %v3016 = vpop.f32.mrf.mxu0
      %v3017 = vadd.f32 0.0, %v3016
      %v3018 = vpop.f32.mrf.mxu0
      %v3019 = vpop.f32.mrf.mxu0
      %v3020 = vadd.f32 0.0, %v3019
      %v3021 = vpop.f32.mrf.mxu0
      %3022 = vmatprep.mubr.bf16.mxu0 0
      %3023 = vmatmul.mubr.bf16.gmra.mxu0 %v518
      %v3024 = vpop.f32.mrf.mxu0
      %v3025 = vadd.f32 0.0, %v3024
      %v3026 = vpop.f32.mrf.mxu0
      %v3027 = vpop.f32.mrf.mxu0
      %v3028 = vadd.f32 0.0, %v3027
      %v3029 = vpop.f32.mrf.mxu0
      %3030 = vmatprep.mubr.bf16.mxu0 0
      %3031 = vmatmul.mubr.bf16.gmra.mxu0 %v519
      %v3032 = vpop.f32.mrf.mxu0
      %v3033 = vadd.f32 0.0, %v3032
      %v3034 = vpop.f32.mrf.mxu0
      %v3035 = vpop.f32.mrf.mxu0
      %v3036 = vadd.f32 0.0, %v3035
      %v3037 = vpop.f32.mrf.mxu0
      %3038 = vmatprep.mubr.bf16.mxu0 0
      %3039 = vmatmul.mubr.bf16.gmra.mxu0 %v520
      %v3040 = vpop.f32.mrf.mxu0
      %v3041 = vadd.f32 0.0, %v3040
      %v3042 = vpop.f32.mrf.mxu0
      %v3043 = vpop.f32.mrf.mxu0
      %v3044 = vadd.f32 0.0, %v3043
      %v3045 = vpop.f32.mrf.mxu0
      %3046 = vmatprep.mubr.bf16.mxu0 0
      %3047 = vmatmul.mubr.bf16.gmra.mxu0 %v521
      %v3048 = vpop.f32.mrf.mxu0
      %v3049 = vadd.f32 0.0, %v3048
      %v3050 = vpop.f32.mrf.mxu0
      %v3051 = vpop.f32.mrf.mxu0
      %v3052 = vadd.f32 0.0, %v3051
      %v3053 = vpop.f32.mrf.mxu0
      %3054 = vmatprep.mubr.bf16.mxu0 0
      %3055 = vmatmul.mubr.bf16.gmra.mxu0 %v522
      %v3056 = vpop.f32.mrf.mxu0
      %v3057 = vadd.f32 0.0, %v3056
      %v3058 = vpop.f32.mrf.mxu0
      %v3059 = vpop.f32.mrf.mxu0
      %v3060 = vadd.f32 0.0, %v3059
      %v3061 = vpop.f32.mrf.mxu0
      %3062 = vmatprep.mubr.bf16.mxu0 0
      %3063 = vmatmul.mubr.bf16.gmra.mxu0 %v523
      %v3064 = vpop.f32.mrf.mxu0
      %v3065 = vadd.f32 0.0, %v3064
      %v3066 = vpop.f32.mrf.mxu0
      %v3067 = vpop.f32.mrf.mxu0
      %v3068 = vadd.f32 0.0, %v3067
      %v3069 = vpop.f32.mrf.mxu0
      %3070 = vmatprep.mubr.bf16.mxu0 0
      %3071 = vmatmul.mubr.bf16.gmra.mxu0 %v524
      %v3072 = vpop.f32.mrf.mxu0
      %v3073 = vadd.f32 0.0, %v3072
      %v3074 = vpop.f32.mrf.mxu0
      %v3075 = vpop.f32.mrf.mxu0
      %v3076 = vadd.f32 0.0, %v3075
      %v3077 = vpop.f32.mrf.mxu0
      %3078 = vmatprep.mubr.bf16.mxu0 0
      %3079 = vmatmul.mubr.bf16.gmra.mxu0 %v525
      %v3080 = vpop.f32.mrf.mxu0
      %v3081 = vadd.f32 0.0, %v3080
      %v3082 = vpop.f32.mrf.mxu0
      %v3083 = vpop.f32.mrf.mxu0
      %v3084 = vadd.f32 0.0, %v3083
      %v3085 = vpop.f32.mrf.mxu0
      %3086 = vmatprep.mubr.bf16.mxu0 0
      %3087 = vmatmul.mubr.bf16.gmra.mxu0 %v526
      %v3088 = vpop.f32.mrf.mxu0
      %v3089 = vadd.f32 0.0, %v3088
      %v3090 = vpop.f32.mrf.mxu0
      %v3091 = vpop.f32.mrf.mxu0
      %v3092 = vadd.f32 0.0, %v3091
      %v3093 = vpop.f32.mrf.mxu0
      %3094 = vmatprep.mubr.bf16.mxu0 0
      %3095 = vmatmul.mubr.bf16.gmra.mxu0 %v527
      %v3096 = vpop.f32.mrf.mxu0
      %v3097 = vadd.f32 0.0, %v3096
      %v3098 = vpop.f32.mrf.mxu0
      %v3099 = vpop.f32.mrf.mxu0
      %v3100 = vadd.f32 0.0, %v3099
      %v3101 = vpop.f32.mrf.mxu0
      %3102 = vmatprep.mubr.bf16.mxu0 0
      %3103 = vmatmul.mubr.bf16.gmra.mxu0 %v528
      %v3104 = vpop.f32.mrf.mxu0
      %v3105 = vadd.f32 0.0, %v3104
      %v3106 = vpop.f32.mrf.mxu0
      %v3107 = vpop.f32.mrf.mxu0
      %v3108 = vadd.f32 0.0, %v3107
      %v3109 = vpop.f32.mrf.mxu0
      %3110 = vmatprep.mubr.bf16.mxu0 0
      %3111 = vmatmul.mubr.bf16.gmra.mxu0 %v529
      %v3112 = vpop.f32.mrf.mxu0
      %v3113 = vadd.f32 0.0, %v3112
      %v3114 = vpop.f32.mrf.mxu0
      %v3115 = vpop.f32.mrf.mxu0
      %v3116 = vadd.f32 0.0, %v3115
      %v3117 = vpop.f32.mrf.mxu0
      %3118 = vmatprep.mubr.bf16.mxu0 0
      %3119 = vmatmul.mubr.bf16.gmra.mxu0 %v530
      %v3120 = vpop.f32.mrf.mxu0
      %v3121 = vadd.f32 0.0, %v3120
      %v3122 = vpop.f32.mrf.mxu0
      %v3123 = vpop.f32.mrf.mxu0
      %v3124 = vadd.f32 0.0, %v3123
      %v3125 = vpop.f32.mrf.mxu0
      %3126 = vmatprep.mubr.bf16.mxu0 0
      %3127 = vmatmul.mubr.bf16.gmra.mxu0 %v531
      %v3128 = vpop.f32.mrf.mxu0
      %v3129 = vadd.f32 0.0, %v3128
      %v3130 = vpop.f32.mrf.mxu0
      %v3131 = vpop.f32.mrf.mxu0
      %v3132 = vadd.f32 0.0, %v3131
      %v3133 = vpop.f32.mrf.mxu0
      %3134 = vmatprep.mubr.bf16.mxu0 0
      %3135 = vmatmul.mubr.bf16.gmra.mxu0 %v532
      %v3136 = vpop.f32.mrf.mxu0
      %v3137 = vadd.f32 0.0, %v3136
      %v3138 = vpop.f32.mrf.mxu0
      %v3139 = vpop.f32.mrf.mxu0
      %v3140 = vadd.f32 0.0, %v3139
      %v3141 = vpop.f32.mrf.mxu0
      %3142 = vmatprep.mubr.bf16.mxu0 0
      %3143 = vmatmul.mubr.bf16.gmra.mxu0 %v533
      %v3144 = vpop.f32.mrf.mxu0
      %v3145 = vadd.f32 0.0, %v3144
      %v3146 = vpop.f32.mrf.mxu0
      %v3147 = vpop.f32.mrf.mxu0
      %v3148 = vadd.f32 0.0, %v3147
      %v3149 = vpop.f32.mrf.mxu0
      %3150 = vmatprep.mubr.bf16.mxu0 0
      %3151 = vmatmul.mubr.bf16.gmra.mxu0 %v534
      %v3152 = vpop.f32.mrf.mxu0
      %v3153 = vadd.f32 0.0, %v3152
      %v3154 = vpop.f32.mrf.mxu0
      %v3155 = vpop.f32.mrf.mxu0
      %v3156 = vadd.f32 0.0, %v3155
      %v3157 = vpop.f32.mrf.mxu0
      %3158 = vmatprep.mubr.bf16.mxu0 0
      %3159 = vmatmul.mubr.bf16.gmra.mxu0 %v535
      %v3160 = vpop.f32.mrf.mxu0
      %v3161 = vadd.f32 0.0, %v3160
      %v3162 = vpop.f32.mrf.mxu0
      %v3163 = vpop.f32.mrf.mxu0
      %v3164 = vadd.f32 0.0, %v3163
      %v3165 = vpop.f32.mrf.mxu0
      %3166 = vdwg.mxu0
      %v3183 = vunpack.c.l.b16 %v2861
      %v3184 = vunpack.c.l.b16 %v2862
      %v3185 = vunpack.c.l.b16 %v2863
      %v3186 = vunpack.c.l.b16 %v2864
      %v3187 = vunpack.c.l.b16 %v2865
      %v3188 = vunpack.c.l.b16 %v2866
      %v3189 = vunpack.c.l.b16 %v2867
      %v3190 = vunpack.c.l.b16 %v2868
      %v3191 = vunpack.c.l.b16 %v2869
      %v3192 = vunpack.c.l.b16 %v2870
      %v3193 = vunpack.c.l.b16 %v2871
      %v3194 = vunpack.c.l.b16 %v2872
      %v3195 = vunpack.c.l.b16 %v2873
      %v3196 = vunpack.c.l.b16 %v2874
      %v3197 = vunpack.c.l.b16 %v2875
      %v3198 = vunpack.c.l.b16 %v2876
      %v3199 = vpack.c.b16 %v3184, %v3183
      %v3200 = vpack.c.b16 %v3186, %v3185
      %v3201 = vpack.c.b16 %v3188, %v3187
      %v3202 = vpack.c.b16 %v3190, %v3189
      %v3203 = vpack.c.b16 %v3192, %v3191
      %v3204 = vpack.c.b16 %v3194, %v3193
      %v3205 = vpack.c.b16 %v3196, %v3195
      %v3206 = vpack.c.b16 %v3198, %v3197
      %3215 = vmatprep.subr.bf16.mxu0 0
      %3216 = vmatpush1.bf16.msra.mxu0 %v3206
      %3217 = vmatprep.subr.bf16.mxu0 0
      %3218 = vmatpush1.bf16.msra.mxu0 %v3205
      %3219 = vmatprep.subr.bf16.mxu0 0
      %3220 = vmatpush1.bf16.msra.mxu0 %v3204
      %3221 = vmatprep.subr.bf16.mxu0 0
      %3222 = vmatpush1.bf16.msra.mxu0 %v3203
      %3223 = vmatprep.subr.bf16.mxu0 0
      %3224 = vmatpush1.bf16.msra.mxu0 %v3202
      %3225 = vmatprep.subr.bf16.mxu0 0
      %3226 = vmatpush1.bf16.msra.mxu0 %v3201
      %3227 = vmatprep.subr.bf16.mxu0 0
      %3228 = vmatpush1.bf16.msra.mxu0 %v3200
      %3229 = vmatprep.subr.bf16.mxu0 0
      %3230 = vmatpush1.bf16.msra.mxu0 %v3199
      %3231 = vmatprep.subr.bf16.mxu0 0
      %3232 = vmatpush2.bf16.msra.mxu0 0
      %3233 = vmatprep.subr.bf16.mxu0 0
      %3234 = vmatpush2.bf16.msra.mxu0 0
      %3235 = vmatprep.subr.bf16.mxu0 0
      %3236 = vmatpush2.bf16.msra.mxu0 0
      %3237 = vmatprep.subr.bf16.mxu0 0
      %3238 = vmatpush2.bf16.msra.mxu0 0
      %3239 = vmatprep.subr.bf16.mxu0 0
      %3240 = vmatpush2.bf16.msra.mxu0 0
      %3241 = vmatprep.subr.bf16.mxu0 0
      %3242 = vmatpush2.bf16.msra.mxu0 0
      %3243 = vmatprep.subr.bf16.mxu0 0
      %3244 = vmatpush2.bf16.msra.mxu0 0
      %3245 = vmatprep.subr.bf16.mxu0 0
      %3246 = vmatpush2.bf16.msra.mxu0 0
      %3247 = vmatprep.mubr.bf16.mxu0 0
      %3248 = vmatmul.mubr.bf16.gmra.mxu0 %v913
      %v3249 = vpop.f32.mrf.mxu0
      %v3250 = vadd.f32 %v2977, %v3249
      %v3251 = vpop.f32.mrf.mxu0
      %v3252 = vpop.f32.mrf.mxu0
      %v3253 = vadd.f32 %v2980, %v3252
      %v3254 = vpop.f32.mrf.mxu0
      %3255 = vmatprep.mubr.bf16.mxu0 0
      %3256 = vmatmul.mubr.bf16.gmra.mxu0 %v914
      %v3257 = vpop.f32.mrf.mxu0
      %v3258 = vadd.f32 %v2985, %v3257
      %v3259 = vpop.f32.mrf.mxu0
      %v3260 = vpop.f32.mrf.mxu0
      %v3261 = vadd.f32 %v2988, %v3260
      %v3262 = vpop.f32.mrf.mxu0
      %3263 = vmatprep.mubr.bf16.mxu0 0
      %3264 = vmatmul.mubr.bf16.gmra.mxu0 %v915
      %v3265 = vpop.f32.mrf.mxu0
      %v3266 = vadd.f32 %v2993, %v3265
      %v3267 = vpop.f32.mrf.mxu0
      %v3268 = vpop.f32.mrf.mxu0
      %v3269 = vadd.f32 %v2996, %v3268
      %v3270 = vpop.f32.mrf.mxu0
      %3271 = vmatprep.mubr.bf16.mxu0 0
      %3272 = vmatmul.mubr.bf16.gmra.mxu0 %v916
      %v3273 = vpop.f32.mrf.mxu0
      %v3274 = vadd.f32 %v3001, %v3273
      %v3275 = vpop.f32.mrf.mxu0
      %v3276 = vpop.f32.mrf.mxu0
      %v3277 = vadd.f32 %v3004, %v3276
      %v3278 = vpop.f32.mrf.mxu0
      %3279 = vmatprep.mubr.bf16.mxu0 0
      %3280 = vmatmul.mubr.bf16.gmra.mxu0 %v917
      %v3281 = vpop.f32.mrf.mxu0
      %v3282 = vadd.f32 %v3009, %v3281
      %v3283 = vpop.f32.mrf.mxu0
      %v3284 = vpop.f32.mrf.mxu0
      %v3285 = vadd.f32 %v3012, %v3284
      %v3286 = vpop.f32.mrf.mxu0
      %3287 = vmatprep.mubr.bf16.mxu0 0
      %3288 = vmatmul.mubr.bf16.gmra.mxu0 %v918
      %v3289 = vpop.f32.mrf.mxu0
      %v3290 = vadd.f32 %v3017, %v3289
      %v3291 = vpop.f32.mrf.mxu0
      %v3292 = vpop.f32.mrf.mxu0
      %v3293 = vadd.f32 %v3020, %v3292
      %v3294 = vpop.f32.mrf.mxu0
      %3295 = vmatprep.mubr.bf16.mxu0 0
      %3296 = vmatmul.mubr.bf16.gmra.mxu0 %v919
      %v3297 = vpop.f32.mrf.mxu0
      %v3298 = vadd.f32 %v3025, %v3297
      %v3299 = vpop.f32.mrf.mxu0
      %v3300 = vpop.f32.mrf.mxu0
      %v3301 = vadd.f32 %v3028, %v3300
      %v3302 = vpop.f32.mrf.mxu0
      %3303 = vmatprep.mubr.bf16.mxu0 0
      %3304 = vmatmul.mubr.bf16.gmra.mxu0 %v920
      %v3305 = vpop.f32.mrf.mxu0
      %v3306 = vadd.f32 %v3033, %v3305
      %v3307 = vpop.f32.mrf.mxu0
      %v3308 = vpop.f32.mrf.mxu0
      %v3309 = vadd.f32 %v3036, %v3308
      %v3310 = vpop.f32.mrf.mxu0
      %3311 = vmatprep.mubr.bf16.mxu0 0
      %3312 = vmatmul.mubr.bf16.gmra.mxu0 %v921
      %v3313 = vpop.f32.mrf.mxu0
      %v3314 = vadd.f32 %v3041, %v3313
      %v3315 = vpop.f32.mrf.mxu0
      %v3316 = vpop.f32.mrf.mxu0
      %v3317 = vadd.f32 %v3044, %v3316
      %v3318 = vpop.f32.mrf.mxu0
      %3319 = vmatprep.mubr.bf16.mxu0 0
      %3320 = vmatmul.mubr.bf16.gmra.mxu0 %v922
      %v3321 = vpop.f32.mrf.mxu0
      %v3322 = vadd.f32 %v3049, %v3321
      %v3323 = vpop.f32.mrf.mxu0
      %v3324 = vpop.f32.mrf.mxu0
      %v3325 = vadd.f32 %v3052, %v3324
      %v3326 = vpop.f32.mrf.mxu0
      %3327 = vmatprep.mubr.bf16.mxu0 0
      %3328 = vmatmul.mubr.bf16.gmra.mxu0 %v923
      %v3329 = vpop.f32.mrf.mxu0
      %v3330 = vadd.f32 %v3057, %v3329
      %v3331 = vpop.f32.mrf.mxu0
      %v3332 = vpop.f32.mrf.mxu0
      %v3333 = vadd.f32 %v3060, %v3332
      %v3334 = vpop.f32.mrf.mxu0
      %3335 = vmatprep.mubr.bf16.mxu0 0
      %3336 = vmatmul.mubr.bf16.gmra.mxu0 %v924
      %v3337 = vpop.f32.mrf.mxu0
      %v3338 = vadd.f32 %v3065, %v3337
      %v3339 = vpop.f32.mrf.mxu0
      %v3340 = vpop.f32.mrf.mxu0
      %v3341 = vadd.f32 %v3068, %v3340
      %v3342 = vpop.f32.mrf.mxu0
      %3343 = vmatprep.mubr.bf16.mxu0 0
      %3344 = vmatmul.mubr.bf16.gmra.mxu0 %v925
      %v3345 = vpop.f32.mrf.mxu0
      %v3346 = vadd.f32 %v3073, %v3345
      %v3347 = vpop.f32.mrf.mxu0
      %v3348 = vpop.f32.mrf.mxu0
      %v3349 = vadd.f32 %v3076, %v3348
      %v3350 = vpop.f32.mrf.mxu0
      %3351 = vmatprep.mubr.bf16.mxu0 0
      %3352 = vmatmul.mubr.bf16.gmra.mxu0 %v926
      %v3353 = vpop.f32.mrf.mxu0
      %v3354 = vadd.f32 %v3081, %v3353
      %v3355 = vpop.f32.mrf.mxu0
      %v3356 = vpop.f32.mrf.mxu0
      %v3357 = vadd.f32 %v3084, %v3356
      %v3358 = vpop.f32.mrf.mxu0
      %3359 = vmatprep.mubr.bf16.mxu0 0
      %3360 = vmatmul.mubr.bf16.gmra.mxu0 %v927
      %v3361 = vpop.f32.mrf.mxu0
      %v3362 = vadd.f32 %v3089, %v3361
      %v3363 = vpop.f32.mrf.mxu0
      %v3364 = vpop.f32.mrf.mxu0
      %v3365 = vadd.f32 %v3092, %v3364
      %v3366 = vpop.f32.mrf.mxu0
      %3367 = vmatprep.mubr.bf16.mxu0 0
      %3368 = vmatmul.mubr.bf16.gmra.mxu0 %v928
      %v3369 = vpop.f32.mrf.mxu0
      %v3370 = vadd.f32 %v3097, %v3369
      %v3371 = vpop.f32.mrf.mxu0
      %v3372 = vpop.f32.mrf.mxu0
      %v3373 = vadd.f32 %v3100, %v3372
      %v3374 = vpop.f32.mrf.mxu0
      %3375 = vmatprep.mubr.bf16.mxu0 0
      %3376 = vmatmul.mubr.bf16.gmra.mxu0 %v929
      %v3377 = vpop.f32.mrf.mxu0
      %v3378 = vadd.f32 %v3105, %v3377
      %v3379 = vpop.f32.mrf.mxu0
      %v3380 = vpop.f32.mrf.mxu0
      %v3381 = vadd.f32 %v3108, %v3380
      %v3382 = vpop.f32.mrf.mxu0
      %3383 = vmatprep.mubr.bf16.mxu0 0
      %3384 = vmatmul.mubr.bf16.gmra.mxu0 %v930
      %v3385 = vpop.f32.mrf.mxu0
      %v3386 = vadd.f32 %v3113, %v3385
      %v3387 = vpop.f32.mrf.mxu0
      %v3388 = vpop.f32.mrf.mxu0
      %v3389 = vadd.f32 %v3116, %v3388
      %v3390 = vpop.f32.mrf.mxu0
      %3391 = vmatprep.mubr.bf16.mxu0 0
      %3392 = vmatmul.mubr.bf16.gmra.mxu0 %v931
      %v3393 = vpop.f32.mrf.mxu0
      %v3394 = vadd.f32 %v3121, %v3393
      %v3395 = vpop.f32.mrf.mxu0
      %v3396 = vpop.f32.mrf.mxu0
      %v3397 = vadd.f32 %v3124, %v3396
      %v3398 = vpop.f32.mrf.mxu0
      %3399 = vmatprep.mubr.bf16.mxu0 0
      %3400 = vmatmul.mubr.bf16.gmra.mxu0 %v932
      %v3401 = vpop.f32.mrf.mxu0
      %v3402 = vadd.f32 %v3129, %v3401
      %v3403 = vpop.f32.mrf.mxu0
      %v3404 = vpop.f32.mrf.mxu0
      %v3405 = vadd.f32 %v3132, %v3404
      %v3406 = vpop.f32.mrf.mxu0
      %3407 = vmatprep.mubr.bf16.mxu0 0
      %3408 = vmatmul.mubr.bf16.gmra.mxu0 %v933
      %v3409 = vpop.f32.mrf.mxu0
      %v3410 = vadd.f32 %v3137, %v3409
      %v3411 = vpop.f32.mrf.mxu0
      %v3412 = vpop.f32.mrf.mxu0
      %v3413 = vadd.f32 %v3140, %v3412
      %v3414 = vpop.f32.mrf.mxu0
      %3415 = vmatprep.mubr.bf16.mxu0 0
      %3416 = vmatmul.mubr.bf16.gmra.mxu0 %v934
      %v3417 = vpop.f32.mrf.mxu0
      %v3418 = vadd.f32 %v3145, %v3417
      %v3419 = vpop.f32.mrf.mxu0
      %v3420 = vpop.f32.mrf.mxu0
      %v3421 = vadd.f32 %v3148, %v3420
      %v3422 = vpop.f32.mrf.mxu0
      %3423 = vmatprep.mubr.bf16.mxu0 0
      %3424 = vmatmul.mubr.bf16.gmra.mxu0 %v935
      %v3425 = vpop.f32.mrf.mxu0
      %v3426 = vadd.f32 %v3153, %v3425
      %v3427 = vpop.f32.mrf.mxu0
      %v3428 = vpop.f32.mrf.mxu0
      %v3429 = vadd.f32 %v3156, %v3428
      %v3430 = vpop.f32.mrf.mxu0
      %3431 = vmatprep.mubr.bf16.mxu0 0
      %3432 = vmatmul.mubr.bf16.gmra.mxu0 %v936
      %v3433 = vpop.f32.mrf.mxu0
      %v3434 = vadd.f32 %v3161, %v3433
      %v3435 = vpop.f32.mrf.mxu0
      %v3436 = vpop.f32.mrf.mxu0
      %v3437 = vadd.f32 %v3164, %v3436
      %v3438 = vpop.f32.mrf.mxu0
      %3439 = vdwg.mxu0
      %s3440 = scalar_lea.vmem %s1, 512
      %v3441 = vld [vmem:[%s3440] sm:$0xf]
      %v3442 = vld [vmem:[%s3440 + $0x4] sm:$0xf]
      %v3443 = vld [vmem:[%s3440 + $0x8] sm:$0xf]
      %v3444 = vld [vmem:[%s3440 + $0xc] sm:$0xf]
      %v3445 = vld [vmem:[%s3440 + $0x10] sm:$0xf]
      %v3446 = vld [vmem:[%s3440 + $0x14] sm:$0xf]
      %v3447 = vld [vmem:[%s3440 + $0x18] sm:$0xf]
      %v3448 = vld [vmem:[%s3440 + $0x1c] sm:$0xf]
      %v3449 = vld [vmem:[%s3440 + $0x20] sm:$0xf]
      %v3450 = vld [vmem:[%s3440 + $0x24] sm:$0xf]
      %v3451 = vld [vmem:[%s3440 + $0x28] sm:$0xf]
      %v3452 = vld [vmem:[%s3440 + $0x2c] sm:$0xf]
      %v3453 = vld [vmem:[%s3440 + $0x30] sm:$0xf]
      %v3454 = vld [vmem:[%s3440 + $0x34] sm:$0xf]
      %v3455 = vld [vmem:[%s3440 + $0x38] sm:$0xf]
      %v3456 = vld [vmem:[%s3440 + $0x3c] sm:$0xf]
      %v3473 = vunpack.c.l.b16 %v3441
      %v3474 = vunpack.c.l.b16 %v3442
      %v3475 = vunpack.c.l.b16 %v3443
      %v3476 = vunpack.c.l.b16 %v3444
      %v3477 = vunpack.c.l.b16 %v3445
      %v3478 = vunpack.c.l.b16 %v3446
      %v3479 = vunpack.c.l.b16 %v3447
      %v3480 = vunpack.c.l.b16 %v3448
      %v3481 = vunpack.c.l.b16 %v3449
      %v3482 = vunpack.c.l.b16 %v3450
      %v3483 = vunpack.c.l.b16 %v3451
      %v3484 = vunpack.c.l.b16 %v3452
      %v3485 = vunpack.c.l.b16 %v3453
      %v3486 = vunpack.c.l.b16 %v3454
      %v3487 = vunpack.c.l.b16 %v3455
      %v3488 = vunpack.c.l.b16 %v3456
      %v3489 = vpack.c.b16 %v3474, %v3473
      %v3490 = vpack.c.b16 %v3476, %v3475
      %v3491 = vpack.c.b16 %v3478, %v3477
      %v3492 = vpack.c.b16 %v3480, %v3479
      %v3493 = vpack.c.b16 %v3482, %v3481
      %v3494 = vpack.c.b16 %v3484, %v3483
      %v3495 = vpack.c.b16 %v3486, %v3485
      %v3496 = vpack.c.b16 %v3488, %v3487
      %3505 = vmatprep.subr.bf16.mxu0 0
      %3506 = vmatpush1.bf16.msra.mxu0 %v3496
      %3507 = vmatprep.subr.bf16.mxu0 0
      %3508 = vmatpush1.bf16.msra.mxu0 %v3495
      %3509 = vmatprep.subr.bf16.mxu0 0
      %3510 = vmatpush1.bf16.msra.mxu0 %v3494
      %3511 = vmatprep.subr.bf16.mxu0 0
      %3512 = vmatpush1.bf16.msra.mxu0 %v3493
      %3513 = vmatprep.subr.bf16.mxu0 0
      %3514 = vmatpush1.bf16.msra.mxu0 %v3492
      %3515 = vmatprep.subr.bf16.mxu0 0
      %3516 = vmatpush1.bf16.msra.mxu0 %v3491
      %3517 = vmatprep.subr.bf16.mxu0 0
      %3518 = vmatpush1.bf16.msra.mxu0 %v3490
      %3519 = vmatprep.subr.bf16.mxu0 0
      %3520 = vmatpush1.bf16.msra.mxu0 %v3489
      %3521 = vmatprep.subr.bf16.mxu0 0
      %3522 = vmatpush2.bf16.msra.mxu0 0
      %3523 = vmatprep.subr.bf16.mxu0 0
      %3524 = vmatpush2.bf16.msra.mxu0 0
      %3525 = vmatprep.subr.bf16.mxu0 0
      %3526 = vmatpush2.bf16.msra.mxu0 0
      %3527 = vmatprep.subr.bf16.mxu0 0
      %3528 = vmatpush2.bf16.msra.mxu0 0
      %3529 = vmatprep.subr.bf16.mxu0 0
      %3530 = vmatpush2.bf16.msra.mxu0 0
      %3531 = vmatprep.subr.bf16.mxu0 0
      %3532 = vmatpush2.bf16.msra.mxu0 0
      %3533 = vmatprep.subr.bf16.mxu0 0
      %3534 = vmatpush2.bf16.msra.mxu0 0
      %3535 = vmatprep.subr.bf16.mxu0 0
      %3536 = vmatpush2.bf16.msra.mxu0 0
      %3537 = vmatprep.mubr.bf16.mxu0 0
      %3538 = vmatmul.mubr.bf16.gmra.mxu0 %v1380
      %v3539 = vpop.f32.mrf.mxu0
      %v3540 = vadd.f32 0.0, %v3539
      %v3541 = vpop.f32.mrf.mxu0
      %v3542 = vpop.f32.mrf.mxu0
      %v3543 = vadd.f32 0.0, %v3542
      %v3544 = vpop.f32.mrf.mxu0
      %3545 = vmatprep.mubr.bf16.mxu0 0
      %3546 = vmatmul.mubr.bf16.gmra.mxu0 %v1381
      %v3547 = vpop.f32.mrf.mxu0
      %v3548 = vadd.f32 0.0, %v3547
      %v3549 = vpop.f32.mrf.mxu0
      %v3550 = vpop.f32.mrf.mxu0
      %v3551 = vadd.f32 0.0, %v3550
      %v3552 = vpop.f32.mrf.mxu0
      %3553 = vmatprep.mubr.bf16.mxu0 0
      %3554 = vmatmul.mubr.bf16.gmra.mxu0 %v1382
      %v3555 = vpop.f32.mrf.mxu0
      %v3556 = vadd.f32 0.0, %v3555
      %v3557 = vpop.f32.mrf.mxu0
      %v3558 = vpop.f32.mrf.mxu0
      %v3559 = vadd.f32 0.0, %v3558
      %v3560 = vpop.f32.mrf.mxu0
      %3561 = vmatprep.mubr.bf16.mxu0 0
      %3562 = vmatmul.mubr.bf16.gmra.mxu0 %v1383
      %v3563 = vpop.f32.mrf.mxu0
      %v3564 = vadd.f32 0.0, %v3563
      %v3565 = vpop.f32.mrf.mxu0
      %v3566 = vpop.f32.mrf.mxu0
      %v3567 = vadd.f32 0.0, %v3566
      %v3568 = vpop.f32.mrf.mxu0
      %3569 = vmatprep.mubr.bf16.mxu0 0
      %3570 = vmatmul.mubr.bf16.gmra.mxu0 %v1384
      %v3571 = vpop.f32.mrf.mxu0
      %v3572 = vadd.f32 0.0, %v3571
      %v3573 = vpop.f32.mrf.mxu0
      %v3574 = vpop.f32.mrf.mxu0
      %v3575 = vadd.f32 0.0, %v3574
      %v3576 = vpop.f32.mrf.mxu0
      %3577 = vmatprep.mubr.bf16.mxu0 0
      %3578 = vmatmul.mubr.bf16.gmra.mxu0 %v1385
      %v3579 = vpop.f32.mrf.mxu0
      %v3580 = vadd.f32 0.0, %v3579
      %v3581 = vpop.f32.mrf.mxu0
      %v3582 = vpop.f32.mrf.mxu0
      %v3583 = vadd.f32 0.0, %v3582
      %v3584 = vpop.f32.mrf.mxu0
      %3585 = vmatprep.mubr.bf16.mxu0 0
      %3586 = vmatmul.mubr.bf16.gmra.mxu0 %v1386
      %v3587 = vpop.f32.mrf.mxu0
      %v3588 = vadd.f32 0.0, %v3587
      %v3589 = vpop.f32.mrf.mxu0
      %v3590 = vpop.f32.mrf.mxu0
      %v3591 = vadd.f32 0.0, %v3590
      %v3592 = vpop.f32.mrf.mxu0
      %3593 = vmatprep.mubr.bf16.mxu0 0
      %3594 = vmatmul.mubr.bf16.gmra.mxu0 %v1387
      %v3595 = vpop.f32.mrf.mxu0
      %v3596 = vadd.f32 0.0, %v3595
      %v3597 = vpop.f32.mrf.mxu0
      %v3598 = vpop.f32.mrf.mxu0
      %v3599 = vadd.f32 0.0, %v3598
      %v3600 = vpop.f32.mrf.mxu0
      %3601 = vmatprep.mubr.bf16.mxu0 0
      %3602 = vmatmul.mubr.bf16.gmra.mxu0 %v1388
      %v3603 = vpop.f32.mrf.mxu0
      %v3604 = vadd.f32 0.0, %v3603
      %v3605 = vpop.f32.mrf.mxu0
      %v3606 = vpop.f32.mrf.mxu0
      %v3607 = vadd.f32 0.0, %v3606
      %v3608 = vpop.f32.mrf.mxu0
      %3609 = vmatprep.mubr.bf16.mxu0 0
      %3610 = vmatmul.mubr.bf16.gmra.mxu0 %v1389
      %v3611 = vpop.f32.mrf.mxu0
      %v3612 = vadd.f32 0.0, %v3611
      %v3613 = vpop.f32.mrf.mxu0
      %v3614 = vpop.f32.mrf.mxu0
      %v3615 = vadd.f32 0.0, %v3614
      %v3616 = vpop.f32.mrf.mxu0
      %3617 = vmatprep.mubr.bf16.mxu0 0
      %3618 = vmatmul.mubr.bf16.gmra.mxu0 %v1390
      %v3619 = vpop.f32.mrf.mxu0
      %v3620 = vadd.f32 0.0, %v3619
      %v3621 = vpop.f32.mrf.mxu0
      %v3622 = vpop.f32.mrf.mxu0
      %v3623 = vadd.f32 0.0, %v3622
      %v3624 = vpop.f32.mrf.mxu0
      %3625 = vmatprep.mubr.bf16.mxu0 0
      %3626 = vmatmul.mubr.bf16.gmra.mxu0 %v1391
      %v3627 = vpop.f32.mrf.mxu0
      %v3628 = vadd.f32 0.0, %v3627
      %v3629 = vpop.f32.mrf.mxu0
      %v3630 = vpop.f32.mrf.mxu0
      %v3631 = vadd.f32 0.0, %v3630
      %v3632 = vpop.f32.mrf.mxu0
      %3633 = vmatprep.mubr.bf16.mxu0 0
      %3634 = vmatmul.mubr.bf16.gmra.mxu0 %v1392
      %v3635 = vpop.f32.mrf.mxu0
      %v3636 = vadd.f32 0.0, %v3635
      %v3637 = vpop.f32.mrf.mxu0
      %v3638 = vpop.f32.mrf.mxu0
      %v3639 = vadd.f32 0.0, %v3638
      %v3640 = vpop.f32.mrf.mxu0
      %3641 = vmatprep.mubr.bf16.mxu0 0
      %3642 = vmatmul.mubr.bf16.gmra.mxu0 %v1393
      %v3643 = vpop.f32.mrf.mxu0
      %v3644 = vadd.f32 0.0, %v3643
      %v3645 = vpop.f32.mrf.mxu0
      %v3646 = vpop.f32.mrf.mxu0
      %v3647 = vadd.f32 0.0, %v3646
      %v3648 = vpop.f32.mrf.mxu0
      %3649 = vmatprep.mubr.bf16.mxu0 0
      %3650 = vmatmul.mubr.bf16.gmra.mxu0 %v1394
      %v3651 = vpop.f32.mrf.mxu0
      %v3652 = vadd.f32 0.0, %v3651
      %v3653 = vpop.f32.mrf.mxu0
      %v3654 = vpop.f32.mrf.mxu0
      %v3655 = vadd.f32 0.0, %v3654
      %v3656 = vpop.f32.mrf.mxu0
      %3657 = vmatprep.mubr.bf16.mxu0 0
      %3658 = vmatmul.mubr.bf16.gmra.mxu0 %v1395
      %v3659 = vpop.f32.mrf.mxu0
      %v3660 = vadd.f32 0.0, %v3659
      %v3661 = vpop.f32.mrf.mxu0
      %v3662 = vpop.f32.mrf.mxu0
      %v3663 = vadd.f32 0.0, %v3662
      %v3664 = vpop.f32.mrf.mxu0
      %3665 = vmatprep.mubr.bf16.mxu0 0
      %3666 = vmatmul.mubr.bf16.gmra.mxu0 %v1396
      %v3667 = vpop.f32.mrf.mxu0
      %v3668 = vadd.f32 0.0, %v3667
      %v3669 = vpop.f32.mrf.mxu0
      %v3670 = vpop.f32.mrf.mxu0
      %v3671 = vadd.f32 0.0, %v3670
      %v3672 = vpop.f32.mrf.mxu0
      %3673 = vmatprep.mubr.bf16.mxu0 0
      %3674 = vmatmul.mubr.bf16.gmra.mxu0 %v1397
      %v3675 = vpop.f32.mrf.mxu0
      %v3676 = vadd.f32 0.0, %v3675
      %v3677 = vpop.f32.mrf.mxu0
      %v3678 = vpop.f32.mrf.mxu0
      %v3679 = vadd.f32 0.0, %v3678
      %v3680 = vpop.f32.mrf.mxu0
      %3681 = vmatprep.mubr.bf16.mxu0 0
      %3682 = vmatmul.mubr.bf16.gmra.mxu0 %v1398
      %v3683 = vpop.f32.mrf.mxu0
      %v3684 = vadd.f32 0.0, %v3683
      %v3685 = vpop.f32.mrf.mxu0
      %v3686 = vpop.f32.mrf.mxu0
      %v3687 = vadd.f32 0.0, %v3686
      %v3688 = vpop.f32.mrf.mxu0
      %3689 = vmatprep.mubr.bf16.mxu0 0
      %3690 = vmatmul.mubr.bf16.gmra.mxu0 %v1399
      %v3691 = vpop.f32.mrf.mxu0
      %v3692 = vadd.f32 0.0, %v3691
      %v3693 = vpop.f32.mrf.mxu0
      %v3694 = vpop.f32.mrf.mxu0
      %v3695 = vadd.f32 0.0, %v3694
      %v3696 = vpop.f32.mrf.mxu0
      %3697 = vmatprep.mubr.bf16.mxu0 0
      %3698 = vmatmul.mubr.bf16.gmra.mxu0 %v1400
      %v3699 = vpop.f32.mrf.mxu0
      %v3700 = vadd.f32 0.0, %v3699
      %v3701 = vpop.f32.mrf.mxu0
      %v3702 = vpop.f32.mrf.mxu0
      %v3703 = vadd.f32 0.0, %v3702
      %v3704 = vpop.f32.mrf.mxu0
      %3705 = vmatprep.mubr.bf16.mxu0 0
      %3706 = vmatmul.mubr.bf16.gmra.mxu0 %v1401
      %v3707 = vpop.f32.mrf.mxu0
      %v3708 = vadd.f32 0.0, %v3707
      %v3709 = vpop.f32.mrf.mxu0
      %v3710 = vpop.f32.mrf.mxu0
      %v3711 = vadd.f32 0.0, %v3710
      %v3712 = vpop.f32.mrf.mxu0
      %3713 = vmatprep.mubr.bf16.mxu0 0
      %3714 = vmatmul.mubr.bf16.gmra.mxu0 %v1402
      %v3715 = vpop.f32.mrf.mxu0
      %v3716 = vadd.f32 0.0, %v3715
      %v3717 = vpop.f32.mrf.mxu0
      %v3718 = vpop.f32.mrf.mxu0
      %v3719 = vadd.f32 0.0, %v3718
      %v3720 = vpop.f32.mrf.mxu0
      %3721 = vmatprep.mubr.bf16.mxu0 0
      %3722 = vmatmul.mubr.bf16.gmra.mxu0 %v1403
      %v3723 = vpop.f32.mrf.mxu0
      %v3724 = vadd.f32 0.0, %v3723
      %v3725 = vpop.f32.mrf.mxu0
      %v3726 = vpop.f32.mrf.mxu0
      %v3727 = vadd.f32 0.0, %v3726
      %v3728 = vpop.f32.mrf.mxu0
      %3729 = vdwg.mxu0
      %v3730 = vadd.f32 %v3250, %v3540
      %v3731 = vadd.f32 %v3253, %v3543
      %v3732 = vadd.f32 %v3258, %v3548
      %v3733 = vadd.f32 %v3261, %v3551
      %v3734 = vadd.f32 %v3266, %v3556
      %v3735 = vadd.f32 %v3269, %v3559
      %v3736 = vadd.f32 %v3274, %v3564
      %v3737 = vadd.f32 %v3277, %v3567
      %v3738 = vadd.f32 %v3282, %v3572
      %v3739 = vadd.f32 %v3285, %v3575
      %v3740 = vadd.f32 %v3290, %v3580
      %v3741 = vadd.f32 %v3293, %v3583
      %v3742 = vadd.f32 %v3298, %v3588
      %v3743 = vadd.f32 %v3301, %v3591
      %v3744 = vadd.f32 %v3306, %v3596
      %v3745 = vadd.f32 %v3309, %v3599
      %v3746 = vadd.f32 %v3314, %v3604
      %v3747 = vadd.f32 %v3317, %v3607
      %v3748 = vadd.f32 %v3322, %v3612
      %v3749 = vadd.f32 %v3325, %v3615
      %v3750 = vadd.f32 %v3330, %v3620
      %v3751 = vadd.f32 %v3333, %v3623
      %v3752 = vadd.f32 %v3338, %v3628
      %v3753 = vadd.f32 %v3341, %v3631
      %v3754 = vadd.f32 %v3346, %v3636
      %v3755 = vadd.f32 %v3349, %v3639
      %v3756 = vadd.f32 %v3354, %v3644
      %v3757 = vadd.f32 %v3357, %v3647
      %v3758 = vadd.f32 %v3362, %v3652
      %v3759 = vadd.f32 %v3365, %v3655
      %v3760 = vadd.f32 %v3370, %v3660
      %v3761 = vadd.f32 %v3373, %v3663
      %v3762 = vadd.f32 %v3378, %v3668
      %v3763 = vadd.f32 %v3381, %v3671
      %v3764 = vadd.f32 %v3386, %v3676
      %v3765 = vadd.f32 %v3389, %v3679
      %v3766 = vadd.f32 %v3394, %v3684
      %v3767 = vadd.f32 %v3397, %v3687
      %v3768 = vadd.f32 %v3402, %v3692
      %v3769 = vadd.f32 %v3405, %v3695
      %v3770 = vadd.f32 %v3410, %v3700
      %v3771 = vadd.f32 %v3413, %v3703
      %v3772 = vadd.f32 %v3418, %v3708
      %v3773 = vadd.f32 %v3421, %v3711
      %v3774 = vadd.f32 %v3426, %v3716
      %v3775 = vadd.f32 %v3429, %v3719
      %v3776 = vadd.f32 %v3434, %v3724
      %v3777 = vadd.f32 %v3437, %v3727
      %vm3826 = vcmask 1045504
      %v3827 = vrot.slane %v3730, 2
      %v3828 = vrot.slane %v3731, 2
      %v3829 = vsel %vm3826, %v3827, %v3828
      %v3830 = vrot.slane %v3732, 2
      %v3831 = vsel %vm3826, %v3828, %v3830
      %v3832 = vrot.slane %v3733, 2
      %v3833 = vrot.slane %v3734, 2
      %v3834 = vsel %vm3826, %v3832, %v3833
      %v3835 = vrot.slane %v3735, 2
      %v3836 = vsel %vm3826, %v3833, %v3835
      %v3837 = vrot.slane %v3736, 2
      %v3838 = vrot.slane %v3737, 2
      %v3839 = vsel %vm3826, %v3837, %v3838
      %v3840 = vrot.slane %v3738, 2
      %v3841 = vsel %vm3826, %v3838, %v3840
      %v3842 = vrot.slane %v3739, 2
      %v3843 = vrot.slane %v3740, 2
      %v3844 = vsel %vm3826, %v3842, %v3843
      %v3845 = vrot.slane %v3741, 2
      %v3846 = vsel %vm3826, %v3843, %v3845
      %v3847 = vrot.slane %v3742, 2
      %v3848 = vrot.slane %v3743, 2
      %v3849 = vsel %vm3826, %v3847, %v3848
      %v3850 = vrot.slane %v3744, 2
      %v3851 = vsel %vm3826, %v3848, %v3850
      %v3852 = vrot.slane %v3745, 2
      %v3853 = vrot.slane %v3746, 2
      %v3854 = vsel %vm3826, %v3852, %v3853
      %v3855 = vrot.slane %v3747, 2
      %v3856 = vsel %vm3826, %v3853, %v3855
      %v3857 = vrot.slane %v3748, 2
      %v3858 = vrot.slane %v3749, 2
      %v3859 = vsel %vm3826, %v3857, %v3858
      %v3860 = vrot.slane %v3750, 2
      %v3861 = vsel %vm3826, %v3858, %v3860
      %v3862 = vrot.slane %v3751, 2
      %v3863 = vrot.slane %v3752, 2
      %v3864 = vsel %vm3826, %v3862, %v3863
      %v3865 = vrot.slane %v3753, 2
      %v3866 = vsel %vm3826, %v3863, %v3865
      %v3867 = vrot.slane %v3754, 2
      %v3868 = vrot.slane %v3755, 2
      %v3869 = vsel %vm3826, %v3867, %v3868
      %v3870 = vrot.slane %v3756, 2
      %v3871 = vsel %vm3826, %v3868, %v3870
      %v3872 = vrot.slane %v3757, 2
      %v3873 = vrot.slane %v3758, 2
      %v3874 = vsel %vm3826, %v3872, %v3873
      %v3875 = vrot.slane %v3759, 2
      %v3876 = vsel %vm3826, %v3873, %v3875
      %v3877 = vrot.slane %v3760, 2
      %v3878 = vrot.slane %v3761, 2
      %v3879 = vsel %vm3826, %v3877, %v3878
      %v3880 = vrot.slane %v3762, 2
      %v3881 = vsel %vm3826, %v3878, %v3880
      %v3882 = vrot.slane %v3763, 2
      %v3883 = vrot.slane %v3764, 2
      %v3884 = vsel %vm3826, %v3882, %v3883
      %v3885 = vrot.slane %v3765, 2
      %v3886 = vsel %vm3826, %v3883, %v3885
      %v3887 = vrot.slane %v3766, 2
      %v3888 = vrot.slane %v3767, 2
      %v3889 = vsel %vm3826, %v3887, %v3888
      %v3890 = vrot.slane %v3768, 2
      %v3891 = vsel %vm3826, %v3888, %v3890
      %v3892 = vrot.slane %v3769, 2
      %v3893 = vrot.slane %v3770, 2
      %v3894 = vsel %vm3826, %v3892, %v3893
      %v3895 = vrot.slane %v3771, 2
      %v3896 = vsel %vm3826, %v3893, %v3895
      %v3897 = vrot.slane %v3772, 2
      %v3898 = vrot.slane %v3773, 2
      %v3899 = vsel %vm3826, %v3897, %v3898
      %v3900 = vrot.slane %v3774, 2
      %v3901 = vsel %vm3826, %v3898, %v3900
      %v3902 = vrot.slane %v3775, 2
      %v3903 = vrot.slane %v3776, 2
      %v3904 = vsel %vm3826, %v3902, %v3903
      %v3905 = vrot.slane %v3777, 2
      %v3906 = vsel %vm3826, %v3903, %v3905
      %v3939 = vadd.f32 %v2828, %v3829
      %v3940 = vadd.f32 %v2829, %v3831
      %v3941 = vadd.f32 %v2830, %v3834
      %v3942 = vadd.f32 %v2831, %v3836
      %v3943 = vadd.f32 %v2832, %v3839
      %v3944 = vadd.f32 %v2833, %v3841
      %v3945 = vadd.f32 %v2834, %v3844
      %v3946 = vadd.f32 %v2835, %v3846
      %v3947 = vadd.f32 %v2836, %v3849
      %v3948 = vadd.f32 %v2837, %v3851
      %v3949 = vadd.f32 %v2838, %v3854
      %v3950 = vadd.f32 %v2839, %v3856
      %v3951 = vadd.f32 %v2840, %v3859
      %v3952 = vadd.f32 %v2841, %v3861
      %v3953 = vadd.f32 %v2842, %v3864
      %v3954 = vadd.f32 %v2843, %v3866
      %v3955 = vadd.f32 %v2844, %v3869
      %v3956 = vadd.f32 %v2845, %v3871
      %v3957 = vadd.f32 %v2846, %v3874
      %v3958 = vadd.f32 %v2847, %v3876
      %v3959 = vadd.f32 %v2848, %v3879
      %v3960 = vadd.f32 %v2849, %v3881
      %v3961 = vadd.f32 %v2850, %v3884
      %v3962 = vadd.f32 %v2851, %v3886
      %v3963 = vadd.f32 %v2852, %v3889
      %v3964 = vadd.f32 %v2853, %v3891
      %v3965 = vadd.f32 %v2854, %v3894
      %v3966 = vadd.f32 %v2855, %v3896
      %v3967 = vadd.f32 %v2856, %v3899
      %v3968 = vadd.f32 %v2857, %v3901
      %v3969 = vadd.f32 %v2858, %v3904
      %v3970 = vadd.f32 %v2859, %v3906
      %v3971 = vpack.c.bf16 %v3940, %v3939
      %v3972 = vpack.c.bf16 %v3942, %v3941
      %v3973 = vpack.c.bf16 %v3944, %v3943
      %v3974 = vpack.c.bf16 %v3946, %v3945
      %v3975 = vpack.c.bf16 %v3948, %v3947
      %v3976 = vpack.c.bf16 %v3950, %v3949
      %v3977 = vpack.c.bf16 %v3952, %v3951
      %v3978 = vpack.c.bf16 %v3954, %v3953
      %v3979 = vpack.c.bf16 %v3956, %v3955
      %v3980 = vpack.c.bf16 %v3958, %v3957
      %v3981 = vpack.c.bf16 %v3960, %v3959
      %v3982 = vpack.c.bf16 %v3962, %v3961
      %v3983 = vpack.c.bf16 %v3964, %v3963
      %v3984 = vpack.c.bf16 %v3966, %v3965
      %v3985 = vpack.c.bf16 %v3968, %v3967
      %v3986 = vpack.c.bf16 %v3970, %v3969
      %v4003 = vunpack.c.l.b16 %v3971
      %v4004 = vunpack.c.h.b16 %v3971
      %v4005 = vunpack.c.l.b16 %v3972
      %v4006 = vunpack.c.h.b16 %v3972
      %v4007 = vunpack.c.l.b16 %v3973
      %v4008 = vunpack.c.h.b16 %v3973
      %v4009 = vunpack.c.l.b16 %v3974
      %v4010 = vunpack.c.h.b16 %v3974
      %v4011 = vunpack.c.l.b16 %v3975
      %v4012 = vunpack.c.h.b16 %v3975
      %v4013 = vunpack.c.l.b16 %v3976
      %v4014 = vunpack.c.h.b16 %v3976
      %v4015 = vunpack.c.l.b16 %v3977
      %v4016 = vunpack.c.h.b16 %v3977
      %v4017 = vunpack.c.l.b16 %v3978
      %v4018 = vunpack.c.h.b16 %v3978
      %v4019 = vunpack.c.l.b16 %v3979
      %v4020 = vunpack.c.h.b16 %v3979
      %v4021 = vunpack.c.l.b16 %v3980
      %v4022 = vunpack.c.h.b16 %v3980
      %v4023 = vunpack.c.l.b16 %v3981
      %v4024 = vunpack.c.h.b16 %v3981
      %v4025 = vunpack.c.l.b16 %v3982
      %v4026 = vunpack.c.h.b16 %v3982
      %v4027 = vunpack.c.l.b16 %v3983
      %v4028 = vunpack.c.h.b16 %v3983
      %v4029 = vunpack.c.l.b16 %v3984
      %v4030 = vunpack.c.h.b16 %v3984
      %v4031 = vunpack.c.l.b16 %v3985
      %v4032 = vunpack.c.h.b16 %v3985
      %v4033 = vunpack.c.l.b16 %v3986
      %v4034 = vunpack.c.h.b16 %v3986
      %v4035 = vpack.c.b16 %v4003, %v4003
      %v4036 = vpack.c.b16 %v4004, %v4004
      %v4037 = vpack.c.b16 %v4005, %v4005
      %v4038 = vpack.c.b16 %v4006, %v4006
      %v4039 = vpack.c.b16 %v4007, %v4007
      %v4040 = vpack.c.b16 %v4008, %v4008
      %v4041 = vpack.c.b16 %v4009, %v4009
      %v4042 = vpack.c.b16 %v4010, %v4010
      %v4043 = vpack.c.b16 %v4011, %v4011
      %v4044 = vpack.c.b16 %v4012, %v4012
      %v4045 = vpack.c.b16 %v4013, %v4013
      %v4046 = vpack.c.b16 %v4014, %v4014
      %v4047 = vpack.c.b16 %v4015, %v4015
      %v4048 = vpack.c.b16 %v4016, %v4016
      %v4049 = vpack.c.b16 %v4017, %v4017
      %v4050 = vpack.c.b16 %v4018, %v4018
      %v4051 = vpack.c.b16 %v4019, %v4019
      %v4052 = vpack.c.b16 %v4020, %v4020
      %v4053 = vpack.c.b16 %v4021, %v4021
      %v4054 = vpack.c.b16 %v4022, %v4022
      %v4055 = vpack.c.b16 %v4023, %v4023
      %v4056 = vpack.c.b16 %v4024, %v4024
      %v4057 = vpack.c.b16 %v4025, %v4025
      %v4058 = vpack.c.b16 %v4026, %v4026
      %v4059 = vpack.c.b16 %v4027, %v4027
      %v4060 = vpack.c.b16 %v4028, %v4028
      %v4061 = vpack.c.b16 %v4029, %v4029
      %v4062 = vpack.c.b16 %v4030, %v4030
      %v4063 = vpack.c.b16 %v4031, %v4031
      %v4064 = vpack.c.b16 %v4032, %v4032
      %v4065 = vpack.c.b16 %v4033, %v4033
      %v4066 = vpack.c.b16 %v4034, %v4034
      %4099 = vst [vmem:[%s271] sm:$0xf] %v4035
      %4100 = vst [vmem:[%s271 + $0x4] sm:$0xf] %v4036
      %4101 = vst [vmem:[%s271 + $0x8] sm:$0xf] %v4037
      %4102 = vst [vmem:[%s271 + $0xc] sm:$0xf] %v4038
      %4103 = vst [vmem:[%s271 + $0x10] sm:$0xf] %v4039
      %4104 = vst [vmem:[%s271 + $0x14] sm:$0xf] %v4040
      %4105 = vst [vmem:[%s271 + $0x18] sm:$0xf] %v4041
      %4106 = vst [vmem:[%s271 + $0x1c] sm:$0xf] %v4042
      %4107 = vst [vmem:[%s271 + $0x20] sm:$0xf] %v4043
      %4108 = vst [vmem:[%s271 + $0x24] sm:$0xf] %v4044
      %4109 = vst [vmem:[%s271 + $0x28] sm:$0xf] %v4045
      %4110 = vst [vmem:[%s271 + $0x2c] sm:$0xf] %v4046
      %4111 = vst [vmem:[%s271 + $0x30] sm:$0xf] %v4047
      %4112 = vst [vmem:[%s271 + $0x34] sm:$0xf] %v4048
      %4113 = vst [vmem:[%s271 + $0x38] sm:$0xf] %v4049
      %4114 = vst [vmem:[%s271 + $0x3c] sm:$0xf] %v4050
      %4115 = vst [vmem:[%s271 + $0x40] sm:$0xf] %v4051
      %4116 = vst [vmem:[%s271 + $0x44] sm:$0xf] %v4052
      %4117 = vst [vmem:[%s271 + $0x48] sm:$0xf] %v4053
      %4118 = vst [vmem:[%s271 + $0x4c] sm:$0xf] %v4054
      %4119 = vst [vmem:[%s271 + $0x50] sm:$0xf] %v4055
      %4120 = vst [vmem:[%s271 + $0x54] sm:$0xf] %v4056
      %4121 = vst [vmem:[%s271 + $0x58] sm:$0xf] %v4057
      %4122 = vst [vmem:[%s271 + $0x5c] sm:$0xf] %v4058
      %4123 = vst [vmem:[%s271 + $0x60] sm:$0xf] %v4059
      %4124 = vst [vmem:[%s271 + $0x64] sm:$0xf] %v4060
      %4125 = vst [vmem:[%s271 + $0x68] sm:$0xf] %v4061
      %4126 = vst [vmem:[%s271 + $0x6c] sm:$0xf] %v4062
      %4127 = vst [vmem:[%s271 + $0x70] sm:$0xf] %v4063
      %4128 = vst [vmem:[%s271 + $0x74] sm:$0xf] %v4064
      %4129 = vst [vmem:[%s271 + $0x78] sm:$0xf] %v4065
      %4130 = vst [vmem:[%s271 + $0x7c] sm:$0xf] %v4066
      %v4131 = vadd.f32 %v3939, %v3940
      %v4132 = vadd.f32 %v4131, %v3941
      %v4133 = vadd.f32 %v4132, %v3942
      %v4134 = vadd.f32 %v4133, %v3943
      %v4135 = vadd.f32 %v4134, %v3944
      %v4136 = vadd.f32 %v4135, %v3945
      %v4137 = vadd.f32 %v4136, %v3946
      %v4138 = vadd.f32 %v4137, %v3947
      %v4139 = vadd.f32 %v4138, %v3948
      %v4140 = vadd.f32 %v4139, %v3949
      %v4141 = vadd.f32 %v4140, %v3950
      %v4142 = vadd.f32 %v4141, %v3951
      %v4143 = vadd.f32 %v4142, %v3952
      %v4144 = vadd.f32 %v4143, %v3953
      %v4145 = vadd.f32 %v4144, %v3954
      %v4146 = vadd.f32 %v4145, %v3955
      %v4147 = vadd.f32 %v4146, %v3956
      %v4148 = vadd.f32 %v4147, %v3957
      %v4149 = vadd.f32 %v4148, %v3958
      %v4150 = vadd.f32 %v4149, %v3959
      %v4151 = vadd.f32 %v4150, %v3960
      %v4152 = vadd.f32 %v4151, %v3961
      %v4153 = vadd.f32 %v4152, %v3962
      %v4154 = vadd.f32 %v4153, %v3963
      %v4155 = vadd.f32 %v4154, %v3964
      %v4156 = vadd.f32 %v4155, %v3965
      %v4157 = vadd.f32 %v4156, %v3966
      %v4158 = vadd.f32 %v4157, %v3967
      %v4159 = vadd.f32 %v4158, %v3968
      %v4160 = vadd.f32 %v4159, %v3969
      %v4161 = vadd.f32 %v4160, %v3970
      %v4162 = vrot.slane %v4161, 4
      %v4163 = vadd.f32 %v4161, %v4162
      %v4164 = vrot.slane %v4163, 2
      %v4165 = vadd.f32 %v4163, %v4164
      %v4166 = vrot.slane %v4165, 1
      %v4167 = vadd.f32 %v4165, %v4166
      %v4168 = vmul.f32 %v3939, %v3939
      %v4169 = vmul.f32 %v3940, %v3940
      %v4170 = vmul.f32 %v3941, %v3941
      %v4171 = vmul.f32 %v3942, %v3942
      %v4172 = vmul.f32 %v3943, %v3943
      %v4173 = vmul.f32 %v3944, %v3944
      %v4174 = vmul.f32 %v3945, %v3945
      %v4175 = vmul.f32 %v3946, %v3946
      %v4176 = vmul.f32 %v3947, %v3947
      %v4177 = vmul.f32 %v3948, %v3948
      %v4178 = vmul.f32 %v3949, %v3949
      %v4179 = vmul.f32 %v3950, %v3950
      %v4180 = vmul.f32 %v3951, %v3951
      %v4181 = vmul.f32 %v3952, %v3952
      %v4182 = vmul.f32 %v3953, %v3953
      %v4183 = vmul.f32 %v3954, %v3954
      %v4184 = vmul.f32 %v3955, %v3955
      %v4185 = vmul.f32 %v3956, %v3956
      %v4186 = vmul.f32 %v3957, %v3957
      %v4187 = vmul.f32 %v3958, %v3958
      %v4188 = vmul.f32 %v3959, %v3959
      %v4189 = vmul.f32 %v3960, %v3960
      %v4190 = vmul.f32 %v3961, %v3961
      %v4191 = vmul.f32 %v3962, %v3962
      %v4192 = vmul.f32 %v3963, %v3963
      %v4193 = vmul.f32 %v3964, %v3964
      %v4194 = vmul.f32 %v3965, %v3965
      %v4195 = vmul.f32 %v3966, %v3966
      %v4196 = vmul.f32 %v3967, %v3967
      %v4197 = vmul.f32 %v3968, %v3968
      %v4198 = vmul.f32 %v3969, %v3969
      %v4199 = vmul.f32 %v3970, %v3970
      %v4200 = vadd.f32 %v4168, %v4169
      %v4201 = vadd.f32 %v4200, %v4170
      %v4202 = vadd.f32 %v4201, %v4171
      %v4203 = vadd.f32 %v4202, %v4172
      %v4204 = vadd.f32 %v4203, %v4173
      %v4205 = vadd.f32 %v4204, %v4174
      %v4206 = vadd.f32 %v4205, %v4175
      %v4207 = vadd.f32 %v4206, %v4176
      %v4208 = vadd.f32 %v4207, %v4177
      %v4209 = vadd.f32 %v4208, %v4178
      %v4210 = vadd.f32 %v4209, %v4179
      %v4211 = vadd.f32 %v4210, %v4180
      %v4212 = vadd.f32 %v4211, %v4181
      %v4213 = vadd.f32 %v4212, %v4182
      %v4214 = vadd.f32 %v4213, %v4183
      %v4215 = vadd.f32 %v4214, %v4184
      %v4216 = vadd.f32 %v4215, %v4185
      %v4217 = vadd.f32 %v4216, %v4186
      %v4218 = vadd.f32 %v4217, %v4187
      %v4219 = vadd.f32 %v4218, %v4188
      %v4220 = vadd.f32 %v4219, %v4189
      %v4221 = vadd.f32 %v4220, %v4190
      %v4222 = vadd.f32 %v4221, %v4191
      %v4223 = vadd.f32 %v4222, %v4192
      %v4224 = vadd.f32 %v4223, %v4193
      %v4225 = vadd.f32 %v4224, %v4194
      %v4226 = vadd.f32 %v4225, %v4195
      %v4227 = vadd.f32 %v4226, %v4196
      %v4228 = vadd.f32 %v4227, %v4197
      %v4229 = vadd.f32 %v4228, %v4198
      %v4230 = vadd.f32 %v4229, %v4199
      %v4231 = vrot.slane %v4230, 4
      %v4232 = vadd.f32 %v4230, %v4231
      %v4233 = vrot.slane %v4232, 2
      %v4234 = vadd.f32 %v4232, %v4233
      %v4235 = vrot.slane %v4234, 1
      %v4236 = vadd.f32 %v4234, %v4235
      %vm4237 = vcmask 1040384
      %v4238 = vsel %vm4237, %v4167, %v4236
      %4239 = vst [vmem:[%s280] sm:$0x3] %v4238
      %v4240 = vld [vmem:[%s350] sm:$0xf]
      %v4241 = vld [vmem:[%s350 + $0x4] sm:$0xf]
      %v4242 = vld [vmem:[%s350 + $0x8] sm:$0xf]
      %v4243 = vld [vmem:[%s350 + $0xc] sm:$0xf]
      %v4244 = vld [vmem:[%s350 + $0x10] sm:$0xf]
      %v4245 = vld [vmem:[%s350 + $0x14] sm:$0xf]
      %v4246 = vld [vmem:[%s350 + $0x18] sm:$0xf]
      %v4247 = vld [vmem:[%s350 + $0x1c] sm:$0xf]
      %v4248 = vld [vmem:[%s350 + $0x20] sm:$0xf]
      %v4249 = vld [vmem:[%s350 + $0x24] sm:$0xf]
      %v4250 = vld [vmem:[%s350 + $0x28] sm:$0xf]
      %v4251 = vld [vmem:[%s350 + $0x2c] sm:$0xf]
      %v4252 = vld [vmem:[%s350 + $0x30] sm:$0xf]
      %v4253 = vld [vmem:[%s350 + $0x34] sm:$0xf]
      %v4254 = vld [vmem:[%s350 + $0x38] sm:$0xf]
      %v4255 = vld [vmem:[%s350 + $0x3c] sm:$0xf]
      %v4256 = vld [vmem:[%s350 + $0x40] sm:$0xf]
      %v4257 = vld [vmem:[%s350 + $0x44] sm:$0xf]
      %v4258 = vld [vmem:[%s350 + $0x48] sm:$0xf]
      %v4259 = vld [vmem:[%s350 + $0x4c] sm:$0xf]
      %v4260 = vld [vmem:[%s350 + $0x50] sm:$0xf]
      %v4261 = vld [vmem:[%s350 + $0x54] sm:$0xf]
      %v4262 = vld [vmem:[%s350 + $0x58] sm:$0xf]
      %v4263 = vld [vmem:[%s350 + $0x5c] sm:$0xf]
      %v4264 = vld [vmem:[%s350 + $0x60] sm:$0xf]
      %v4265 = vld [vmem:[%s350 + $0x64] sm:$0xf]
      %v4266 = vld [vmem:[%s350 + $0x68] sm:$0xf]
      %v4267 = vld [vmem:[%s350 + $0x6c] sm:$0xf]
      %v4268 = vld [vmem:[%s350 + $0x70] sm:$0xf]
      %v4269 = vld [vmem:[%s350 + $0x74] sm:$0xf]
      %v4270 = vld [vmem:[%s350 + $0x78] sm:$0xf]
      %v4271 = vld [vmem:[%s350 + $0x7c] sm:$0xf]
      %v4272 = vld [vmem:[%s350 + $0x80] sm:$0xf]
      %v4273 = vld [vmem:[%s350 + $0x84] sm:$0xf]
      %v4274 = vld [vmem:[%s350 + $0x88] sm:$0xf]
      %v4275 = vld [vmem:[%s350 + $0x8c] sm:$0xf]
      %v4276 = vld [vmem:[%s350 + $0x90] sm:$0xf]
      %v4277 = vld [vmem:[%s350 + $0x94] sm:$0xf]
      %v4278 = vld [vmem:[%s350 + $0x98] sm:$0xf]
      %v4279 = vld [vmem:[%s350 + $0x9c] sm:$0xf]
      %v4280 = vld [vmem:[%s350 + $0xa0] sm:$0xf]
      %v4281 = vld [vmem:[%s350 + $0xa4] sm:$0xf]
      %v4282 = vld [vmem:[%s350 + $0xa8] sm:$0xf]
      %v4283 = vld [vmem:[%s350 + $0xac] sm:$0xf]
      %v4284 = vld [vmem:[%s350 + $0xb0] sm:$0xf]
      %v4285 = vld [vmem:[%s350 + $0xb4] sm:$0xf]
      %v4286 = vld [vmem:[%s350 + $0xb8] sm:$0xf]
      %v4287 = vld [vmem:[%s350 + $0xbc] sm:$0xf]
      %v4288 = vld [vmem:[%s2] sm:$0xf]
      %v4289 = vld [vmem:[%s2 + $0x4] sm:$0xf]
      %v4290 = vld [vmem:[%s2 + $0x8] sm:$0xf]
      %v4291 = vld [vmem:[%s2 + $0xc] sm:$0xf]
      %v4292 = vld [vmem:[%s2 + $0x10] sm:$0xf]
      %v4293 = vld [vmem:[%s2 + $0x14] sm:$0xf]
      %v4294 = vld [vmem:[%s2 + $0x18] sm:$0xf]
      %v4295 = vld [vmem:[%s2 + $0x1c] sm:$0xf]
      %v4296 = vld [vmem:[%s2 + $0x20] sm:$0xf]
      %v4297 = vld [vmem:[%s2 + $0x24] sm:$0xf]
      %v4298 = vld [vmem:[%s2 + $0x28] sm:$0xf]
      %v4299 = vld [vmem:[%s2 + $0x2c] sm:$0xf]
      %v4300 = vld [vmem:[%s2 + $0x30] sm:$0xf]
      %v4301 = vld [vmem:[%s2 + $0x34] sm:$0xf]
      %v4302 = vld [vmem:[%s2 + $0x38] sm:$0xf]
      %v4303 = vld [vmem:[%s2 + $0x3c] sm:$0xf]
      %v4352 = vunpack.c.l.b16 %v4240
      %v4353 = vunpack.c.l.b16 %v4241
      %v4354 = vunpack.c.l.b16 %v4242
      %v4355 = vunpack.c.l.b16 %v4243
      %v4356 = vunpack.c.l.b16 %v4244
      %v4357 = vunpack.c.l.b16 %v4245
      %v4358 = vunpack.c.l.b16 %v4246
      %v4359 = vunpack.c.l.b16 %v4247
      %v4360 = vunpack.c.l.b16 %v4248
      %v4361 = vunpack.c.l.b16 %v4249
      %v4362 = vunpack.c.l.b16 %v4250
      %v4363 = vunpack.c.l.b16 %v4251
      %v4364 = vunpack.c.l.b16 %v4252
      %v4365 = vunpack.c.l.b16 %v4253
      %v4366 = vunpack.c.l.b16 %v4254
      %v4367 = vunpack.c.l.b16 %v4255
      %v4368 = vunpack.c.l.b16 %v4256
      %v4369 = vunpack.c.l.b16 %v4257
      %v4370 = vunpack.c.l.b16 %v4258
      %v4371 = vunpack.c.l.b16 %v4259
      %v4372 = vunpack.c.l.b16 %v4260
      %v4373 = vunpack.c.l.b16 %v4261
      %v4374 = vunpack.c.l.b16 %v4262
      %v4375 = vunpack.c.l.b16 %v4263
      %v4376 = vunpack.c.l.b16 %v4264
      %v4377 = vunpack.c.l.b16 %v4265
      %v4378 = vunpack.c.l.b16 %v4266
      %v4379 = vunpack.c.l.b16 %v4267
      %v4380 = vunpack.c.l.b16 %v4268
      %v4381 = vunpack.c.l.b16 %v4269
      %v4382 = vunpack.c.l.b16 %v4270
      %v4383 = vunpack.c.l.b16 %v4271
      %v4384 = vunpack.c.l.b16 %v4272
      %v4385 = vunpack.c.l.b16 %v4273
      %v4386 = vunpack.c.l.b16 %v4274
      %v4387 = vunpack.c.l.b16 %v4275
      %v4388 = vunpack.c.l.b16 %v4276
      %v4389 = vunpack.c.l.b16 %v4277
      %v4390 = vunpack.c.l.b16 %v4278
      %v4391 = vunpack.c.l.b16 %v4279
      %v4392 = vunpack.c.l.b16 %v4280
      %v4393 = vunpack.c.l.b16 %v4281
      %v4394 = vunpack.c.l.b16 %v4282
      %v4395 = vunpack.c.l.b16 %v4283
      %v4396 = vunpack.c.l.b16 %v4284
      %v4397 = vunpack.c.l.b16 %v4285
      %v4398 = vunpack.c.l.b16 %v4286
      %v4399 = vunpack.c.l.b16 %v4287
      %v4400 = vpack.c.b16 %v4353, %v4352
      %v4401 = vpack.c.b16 %v4355, %v4354
      %v4402 = vpack.c.b16 %v4357, %v4356
      %v4403 = vpack.c.b16 %v4359, %v4358
      %v4404 = vpack.c.b16 %v4361, %v4360
      %v4405 = vpack.c.b16 %v4363, %v4362
      %v4406 = vpack.c.b16 %v4365, %v4364
      %v4407 = vpack.c.b16 %v4367, %v4366
      %v4408 = vpack.c.b16 %v4369, %v4368
      %v4409 = vpack.c.b16 %v4371, %v4370
      %v4410 = vpack.c.b16 %v4373, %v4372
      %v4411 = vpack.c.b16 %v4375, %v4374
      %v4412 = vpack.c.b16 %v4377, %v4376
      %v4413 = vpack.c.b16 %v4379, %v4378
      %v4414 = vpack.c.b16 %v4381, %v4380
      %v4415 = vpack.c.b16 %v4383, %v4382
      %v4416 = vpack.c.b16 %v4385, %v4384
      %v4417 = vpack.c.b16 %v4387, %v4386
      %v4418 = vpack.c.b16 %v4389, %v4388
      %v4419 = vpack.c.b16 %v4391, %v4390
      %v4420 = vpack.c.b16 %v4393, %v4392
      %v4421 = vpack.c.b16 %v4395, %v4394
      %v4422 = vpack.c.b16 %v4397, %v4396
      %v4423 = vpack.c.b16 %v4399, %v4398
      %v4464 = vunpack.c.l.b16 %v4288
      %v4465 = vunpack.c.l.b16 %v4289
      %v4466 = vunpack.c.l.b16 %v4290
      %v4467 = vunpack.c.l.b16 %v4291
      %v4468 = vunpack.c.l.b16 %v4292
      %v4469 = vunpack.c.l.b16 %v4293
      %v4470 = vunpack.c.l.b16 %v4294
      %v4471 = vunpack.c.l.b16 %v4295
      %v4472 = vunpack.c.l.b16 %v4296
      %v4473 = vunpack.c.l.b16 %v4297
      %v4474 = vunpack.c.l.b16 %v4298
      %v4475 = vunpack.c.l.b16 %v4299
      %v4476 = vunpack.c.l.b16 %v4300
      %v4477 = vunpack.c.l.b16 %v4301
      %v4478 = vunpack.c.l.b16 %v4302
      %v4479 = vunpack.c.l.b16 %v4303
      %v4480 = vpack.c.b16 %v4465, %v4464
      %v4481 = vpack.c.b16 %v4467, %v4466
      %v4482 = vpack.c.b16 %v4469, %v4468
      %v4483 = vpack.c.b16 %v4471, %v4470
      %v4484 = vpack.c.b16 %v4473, %v4472
      %v4485 = vpack.c.b16 %v4475, %v4474
      %v4486 = vpack.c.b16 %v4477, %v4476
      %v4487 = vpack.c.b16 %v4479, %v4478
      %4496 = vmatprep.subr.bf16.mxu0 0
      %4497 = vmatpush1.bf16.msra.mxu0 %v4487
      %4498 = vmatprep.subr.bf16.mxu0 0
      %4499 = vmatpush1.bf16.msra.mxu0 %v4486
      %4500 = vmatprep.subr.bf16.mxu0 0
      %4501 = vmatpush1.bf16.msra.mxu0 %v4485
      %4502 = vmatprep.subr.bf16.mxu0 0
      %4503 = vmatpush1.bf16.msra.mxu0 %v4484
      %4504 = vmatprep.subr.bf16.mxu0 0
      %4505 = vmatpush1.bf16.msra.mxu0 %v4483
      %4506 = vmatprep.subr.bf16.mxu0 0
      %4507 = vmatpush1.bf16.msra.mxu0 %v4482
      %4508 = vmatprep.subr.bf16.mxu0 0
      %4509 = vmatpush1.bf16.msra.mxu0 %v4481
      %4510 = vmatprep.subr.bf16.mxu0 0
      %4511 = vmatpush1.bf16.msra.mxu0 %v4480
      %4512 = vmatprep.subr.bf16.mxu0 0
      %4513 = vmatpush2.bf16.msra.mxu0 0
      %4514 = vmatprep.subr.bf16.mxu0 0
      %4515 = vmatpush2.bf16.msra.mxu0 0
      %4516 = vmatprep.subr.bf16.mxu0 0
      %4517 = vmatpush2.bf16.msra.mxu0 0
      %4518 = vmatprep.subr.bf16.mxu0 0
      %4519 = vmatpush2.bf16.msra.mxu0 0
      %4520 = vmatprep.subr.bf16.mxu0 0
      %4521 = vmatpush2.bf16.msra.mxu0 0
      %4522 = vmatprep.subr.bf16.mxu0 0
      %4523 = vmatpush2.bf16.msra.mxu0 0
      %4524 = vmatprep.subr.bf16.mxu0 0
      %4525 = vmatpush2.bf16.msra.mxu0 0
      %4526 = vmatprep.subr.bf16.mxu0 0
      %4527 = vmatpush2.bf16.msra.mxu0 0
      %4528 = vmatprep.mubr.bf16.mxu0 0
      %4529 = vmatmul.mubr.bf16.gmra.mxu0 %v4400
      %v4530 = vpop.f32.mrf.mxu0
      %v4531 = vadd.f32 0.0, %v4530
      %v4532 = vpop.f32.mrf.mxu0
      %v4533 = vpop.f32.mrf.mxu0
      %v4534 = vadd.f32 0.0, %v4533
      %v4535 = vpop.f32.mrf.mxu0
      %4536 = vmatprep.mubr.bf16.mxu0 0
      %4537 = vmatmul.mubr.bf16.gmra.mxu0 %v4401
      %v4538 = vpop.f32.mrf.mxu0
      %v4539 = vadd.f32 0.0, %v4538
      %v4540 = vpop.f32.mrf.mxu0
      %v4541 = vpop.f32.mrf.mxu0
      %v4542 = vadd.f32 0.0, %v4541
      %v4543 = vpop.f32.mrf.mxu0
      %4544 = vmatprep.mubr.bf16.mxu0 0
      %4545 = vmatmul.mubr.bf16.gmra.mxu0 %v4402
      %v4546 = vpop.f32.mrf.mxu0
      %v4547 = vadd.f32 0.0, %v4546
      %v4548 = vpop.f32.mrf.mxu0
      %v4549 = vpop.f32.mrf.mxu0
      %v4550 = vadd.f32 0.0, %v4549
      %v4551 = vpop.f32.mrf.mxu0
      %4552 = vmatprep.mubr.bf16.mxu0 0
      %4553 = vmatmul.mubr.bf16.gmra.mxu0 %v4403
      %v4554 = vpop.f32.mrf.mxu0
      %v4555 = vadd.f32 0.0, %v4554
      %v4556 = vpop.f32.mrf.mxu0
      %v4557 = vpop.f32.mrf.mxu0
      %v4558 = vadd.f32 0.0, %v4557
      %v4559 = vpop.f32.mrf.mxu0
      %4560 = vmatprep.mubr.bf16.mxu0 0
      %4561 = vmatmul.mubr.bf16.gmra.mxu0 %v4404
      %v4562 = vpop.f32.mrf.mxu0
      %v4563 = vadd.f32 0.0, %v4562
      %v4564 = vpop.f32.mrf.mxu0
      %v4565 = vpop.f32.mrf.mxu0
      %v4566 = vadd.f32 0.0, %v4565
      %v4567 = vpop.f32.mrf.mxu0
      %4568 = vmatprep.mubr.bf16.mxu0 0
      %4569 = vmatmul.mubr.bf16.gmra.mxu0 %v4405
      %v4570 = vpop.f32.mrf.mxu0
      %v4571 = vadd.f32 0.0, %v4570
      %v4572 = vpop.f32.mrf.mxu0
      %v4573 = vpop.f32.mrf.mxu0
      %v4574 = vadd.f32 0.0, %v4573
      %v4575 = vpop.f32.mrf.mxu0
      %4576 = vmatprep.mubr.bf16.mxu0 0
      %4577 = vmatmul.mubr.bf16.gmra.mxu0 %v4406
      %v4578 = vpop.f32.mrf.mxu0
      %v4579 = vadd.f32 0.0, %v4578
      %v4580 = vpop.f32.mrf.mxu0
      %v4581 = vpop.f32.mrf.mxu0
      %v4582 = vadd.f32 0.0, %v4581
      %v4583 = vpop.f32.mrf.mxu0
      %4584 = vmatprep.mubr.bf16.mxu0 0
      %4585 = vmatmul.mubr.bf16.gmra.mxu0 %v4407
      %v4586 = vpop.f32.mrf.mxu0
      %v4587 = vadd.f32 0.0, %v4586
      %v4588 = vpop.f32.mrf.mxu0
      %v4589 = vpop.f32.mrf.mxu0
      %v4590 = vadd.f32 0.0, %v4589
      %v4591 = vpop.f32.mrf.mxu0
      %4592 = vmatprep.mubr.bf16.mxu0 0
      %4593 = vmatmul.mubr.bf16.gmra.mxu0 %v4408
      %v4594 = vpop.f32.mrf.mxu0
      %v4595 = vadd.f32 0.0, %v4594
      %v4596 = vpop.f32.mrf.mxu0
      %v4597 = vpop.f32.mrf.mxu0
      %v4598 = vadd.f32 0.0, %v4597
      %v4599 = vpop.f32.mrf.mxu0
      %4600 = vmatprep.mubr.bf16.mxu0 0
      %4601 = vmatmul.mubr.bf16.gmra.mxu0 %v4409
      %v4602 = vpop.f32.mrf.mxu0
      %v4603 = vadd.f32 0.0, %v4602
      %v4604 = vpop.f32.mrf.mxu0
      %v4605 = vpop.f32.mrf.mxu0
      %v4606 = vadd.f32 0.0, %v4605
      %v4607 = vpop.f32.mrf.mxu0
      %4608 = vmatprep.mubr.bf16.mxu0 0
      %4609 = vmatmul.mubr.bf16.gmra.mxu0 %v4410
      %v4610 = vpop.f32.mrf.mxu0
      %v4611 = vadd.f32 0.0, %v4610
      %v4612 = vpop.f32.mrf.mxu0
      %v4613 = vpop.f32.mrf.mxu0
      %v4614 = vadd.f32 0.0, %v4613
      %v4615 = vpop.f32.mrf.mxu0
      %4616 = vmatprep.mubr.bf16.mxu0 0
      %4617 = vmatmul.mubr.bf16.gmra.mxu0 %v4411
      %v4618 = vpop.f32.mrf.mxu0
      %v4619 = vadd.f32 0.0, %v4618
      %v4620 = vpop.f32.mrf.mxu0
      %v4621 = vpop.f32.mrf.mxu0
      %v4622 = vadd.f32 0.0, %v4621
      %v4623 = vpop.f32.mrf.mxu0
      %4624 = vmatprep.mubr.bf16.mxu0 0
      %4625 = vmatmul.mubr.bf16.gmra.mxu0 %v4412
      %v4626 = vpop.f32.mrf.mxu0
      %v4627 = vadd.f32 0.0, %v4626
      %v4628 = vpop.f32.mrf.mxu0
      %v4629 = vpop.f32.mrf.mxu0
      %v4630 = vadd.f32 0.0, %v4629
      %v4631 = vpop.f32.mrf.mxu0
      %4632 = vmatprep.mubr.bf16.mxu0 0
      %4633 = vmatmul.mubr.bf16.gmra.mxu0 %v4413
      %v4634 = vpop.f32.mrf.mxu0
      %v4635 = vadd.f32 0.0, %v4634
      %v4636 = vpop.f32.mrf.mxu0
      %v4637 = vpop.f32.mrf.mxu0
      %v4638 = vadd.f32 0.0, %v4637
      %v4639 = vpop.f32.mrf.mxu0
      %4640 = vmatprep.mubr.bf16.mxu0 0
      %4641 = vmatmul.mubr.bf16.gmra.mxu0 %v4414
      %v4642 = vpop.f32.mrf.mxu0
      %v4643 = vadd.f32 0.0, %v4642
      %v4644 = vpop.f32.mrf.mxu0
      %v4645 = vpop.f32.mrf.mxu0
      %v4646 = vadd.f32 0.0, %v4645
      %v4647 = vpop.f32.mrf.mxu0
      %4648 = vmatprep.mubr.bf16.mxu0 0
      %4649 = vmatmul.mubr.bf16.gmra.mxu0 %v4415
      %v4650 = vpop.f32.mrf.mxu0
      %v4651 = vadd.f32 0.0, %v4650
      %v4652 = vpop.f32.mrf.mxu0
      %v4653 = vpop.f32.mrf.mxu0
      %v4654 = vadd.f32 0.0, %v4653
      %v4655 = vpop.f32.mrf.mxu0
      %4656 = vmatprep.mubr.bf16.mxu0 0
      %4657 = vmatmul.mubr.bf16.gmra.mxu0 %v4416
      %v4658 = vpop.f32.mrf.mxu0
      %v4659 = vadd.f32 0.0, %v4658
      %v4660 = vpop.f32.mrf.mxu0
      %v4661 = vpop.f32.mrf.mxu0
      %v4662 = vadd.f32 0.0, %v4661
      %v4663 = vpop.f32.mrf.mxu0
      %4664 = vmatprep.mubr.bf16.mxu0 0
      %4665 = vmatmul.mubr.bf16.gmra.mxu0 %v4417
      %v4666 = vpop.f32.mrf.mxu0
      %v4667 = vadd.f32 0.0, %v4666
      %v4668 = vpop.f32.mrf.mxu0
      %v4669 = vpop.f32.mrf.mxu0
      %v4670 = vadd.f32 0.0, %v4669
      %v4671 = vpop.f32.mrf.mxu0
      %4672 = vmatprep.mubr.bf16.mxu0 0
      %4673 = vmatmul.mubr.bf16.gmra.mxu0 %v4418
      %v4674 = vpop.f32.mrf.mxu0
      %v4675 = vadd.f32 0.0, %v4674
      %v4676 = vpop.f32.mrf.mxu0
      %v4677 = vpop.f32.mrf.mxu0
      %v4678 = vadd.f32 0.0, %v4677
      %v4679 = vpop.f32.mrf.mxu0
      %4680 = vmatprep.mubr.bf16.mxu0 0
      %4681 = vmatmul.mubr.bf16.gmra.mxu0 %v4419
      %v4682 = vpop.f32.mrf.mxu0
      %v4683 = vadd.f32 0.0, %v4682
      %v4684 = vpop.f32.mrf.mxu0
      %v4685 = vpop.f32.mrf.mxu0
      %v4686 = vadd.f32 0.0, %v4685
      %v4687 = vpop.f32.mrf.mxu0
      %4688 = vmatprep.mubr.bf16.mxu0 0
      %4689 = vmatmul.mubr.bf16.gmra.mxu0 %v4420
      %v4690 = vpop.f32.mrf.mxu0
      %v4691 = vadd.f32 0.0, %v4690
      %v4692 = vpop.f32.mrf.mxu0
      %v4693 = vpop.f32.mrf.mxu0
      %v4694 = vadd.f32 0.0, %v4693
      %v4695 = vpop.f32.mrf.mxu0
      %4696 = vmatprep.mubr.bf16.mxu0 0
      %4697 = vmatmul.mubr.bf16.gmra.mxu0 %v4421
      %v4698 = vpop.f32.mrf.mxu0
      %v4699 = vadd.f32 0.0, %v4698
      %v4700 = vpop.f32.mrf.mxu0
      %v4701 = vpop.f32.mrf.mxu0
      %v4702 = vadd.f32 0.0, %v4701
      %v4703 = vpop.f32.mrf.mxu0
      %4704 = vmatprep.mubr.bf16.mxu0 0
      %4705 = vmatmul.mubr.bf16.gmra.mxu0 %v4422
      %v4706 = vpop.f32.mrf.mxu0
      %v4707 = vadd.f32 0.0, %v4706
      %v4708 = vpop.f32.mrf.mxu0
      %v4709 = vpop.f32.mrf.mxu0
      %v4710 = vadd.f32 0.0, %v4709
      %v4711 = vpop.f32.mrf.mxu0
      %4712 = vmatprep.mubr.bf16.mxu0 0
      %4713 = vmatmul.mubr.bf16.gmra.mxu0 %v4423
      %v4714 = vpop.f32.mrf.mxu0
      %v4715 = vadd.f32 0.0, %v4714
      %v4716 = vpop.f32.mrf.mxu0
      %v4717 = vpop.f32.mrf.mxu0
      %v4718 = vadd.f32 0.0, %v4717
      %v4719 = vpop.f32.mrf.mxu0
      %4720 = vdwg.mxu0
      %v4769 = vrot.slane %v4531, 1
      %v4770 = vrot.slane %v4534, 1
      %v4771 = vsel %vm2715, %v4769, %v4770
      %v4772 = vrot.slane %v4539, 1
      %v4773 = vsel %vm2715, %v4770, %v4772
      %v4774 = vrot.slane %v4542, 1
      %v4775 = vrot.slane %v4547, 1
      %v4776 = vsel %vm2715, %v4774, %v4775
      %v4777 = vrot.slane %v4550, 1
      %v4778 = vsel %vm2715, %v4775, %v4777
      %v4779 = vrot.slane %v4555, 1
      %v4780 = vrot.slane %v4558, 1
      %v4781 = vsel %vm2715, %v4779, %v4780
      %v4782 = vrot.slane %v4563, 1
      %v4783 = vsel %vm2715, %v4780, %v4782
      %v4784 = vrot.slane %v4566, 1
      %v4785 = vrot.slane %v4571, 1
      %v4786 = vsel %vm2715, %v4784, %v4785
      %v4787 = vrot.slane %v4574, 1
      %v4788 = vsel %vm2715, %v4785, %v4787
      %v4789 = vrot.slane %v4579, 1
      %v4790 = vrot.slane %v4582, 1
      %v4791 = vsel %vm2715, %v4789, %v4790
      %v4792 = vrot.slane %v4587, 1
      %v4793 = vsel %vm2715, %v4790, %v4792
      %v4794 = vrot.slane %v4590, 1
      %v4795 = vrot.slane %v4595, 1
      %v4796 = vsel %vm2715, %v4794, %v4795
      %v4797 = vrot.slane %v4598, 1
      %v4798 = vsel %vm2715, %v4795, %v4797
      %v4799 = vrot.slane %v4603, 1
      %v4800 = vrot.slane %v4606, 1
      %v4801 = vsel %vm2715, %v4799, %v4800
      %v4802 = vrot.slane %v4611, 1
      %v4803 = vsel %vm2715, %v4800, %v4802
      %v4804 = vrot.slane %v4614, 1
      %v4805 = vrot.slane %v4619, 1
      %v4806 = vsel %vm2715, %v4804, %v4805
      %v4807 = vrot.slane %v4622, 1
      %v4808 = vsel %vm2715, %v4805, %v4807
      %v4809 = vrot.slane %v4627, 1
      %v4810 = vrot.slane %v4630, 1
      %v4811 = vsel %vm2715, %v4809, %v4810
      %v4812 = vrot.slane %v4635, 1
      %v4813 = vsel %vm2715, %v4810, %v4812
      %v4814 = vrot.slane %v4638, 1
      %v4815 = vrot.slane %v4643, 1
      %v4816 = vsel %vm2715, %v4814, %v4815
      %v4817 = vrot.slane %v4646, 1
      %v4818 = vsel %vm2715, %v4815, %v4817
      %v4819 = vrot.slane %v4651, 1
      %v4820 = vrot.slane %v4654, 1
      %v4821 = vsel %vm2715, %v4819, %v4820
      %v4822 = vrot.slane %v4659, 1
      %v4823 = vsel %vm2715, %v4820, %v4822
      %v4824 = vrot.slane %v4662, 1
      %v4825 = vrot.slane %v4667, 1
      %v4826 = vsel %vm2715, %v4824, %v4825
      %v4827 = vrot.slane %v4670, 1
      %v4828 = vsel %vm2715, %v4825, %v4827
      %v4829 = vrot.slane %v4675, 1
      %v4830 = vrot.slane %v4678, 1
      %v4831 = vsel %vm2715, %v4829, %v4830
      %v4832 = vrot.slane %v4683, 1
      %v4833 = vsel %vm2715, %v4830, %v4832
      %v4834 = vrot.slane %v4686, 1
      %v4835 = vrot.slane %v4691, 1
      %v4836 = vsel %vm2715, %v4834, %v4835
      %v4837 = vrot.slane %v4694, 1
      %v4838 = vsel %vm2715, %v4835, %v4837
      %v4839 = vrot.slane %v4699, 1
      %v4840 = vrot.slane %v4702, 1
      %v4841 = vsel %vm2715, %v4839, %v4840
      %v4842 = vrot.slane %v4707, 1
      %v4843 = vsel %vm2715, %v4840, %v4842
      %v4844 = vrot.slane %v4710, 1
      %v4845 = vrot.slane %v4715, 1
      %v4846 = vsel %vm2715, %v4844, %v4845
      %v4847 = vrot.slane %v4718, 1
      %v4848 = vsel %vm2715, %v4845, %v4847
      %v4881 = vpack.c.bf16 %v4773, %v4771
      %v4882 = vpack.c.bf16 %v4778, %v4776
      %v4883 = vpack.c.bf16 %v4783, %v4781
      %v4884 = vpack.c.bf16 %v4788, %v4786
      %v4885 = vpack.c.bf16 %v4793, %v4791
      %v4886 = vpack.c.bf16 %v4798, %v4796
      %v4887 = vpack.c.bf16 %v4803, %v4801
      %v4888 = vpack.c.bf16 %v4808, %v4806
      %v4889 = vpack.c.bf16 %v4813, %v4811
      %v4890 = vpack.c.bf16 %v4818, %v4816
      %v4891 = vpack.c.bf16 %v4823, %v4821
      %v4892 = vpack.c.bf16 %v4828, %v4826
      %v4893 = vpack.c.bf16 %v4833, %v4831
      %v4894 = vpack.c.bf16 %v4838, %v4836
      %v4895 = vpack.c.bf16 %v4843, %v4841
      %v4896 = vpack.c.bf16 %v4848, %v4846
      %v4913 = vunpack.c.l.b16 %v4881
      %v4914 = vunpack.c.h.b16 %v4881
      %v4915 = vunpack.c.l.b16 %v4882
      %v4916 = vunpack.c.h.b16 %v4882
      %v4917 = vunpack.c.l.b16 %v4883
      %v4918 = vunpack.c.h.b16 %v4883
      %v4919 = vunpack.c.l.b16 %v4884
      %v4920 = vunpack.c.h.b16 %v4884
      %v4921 = vunpack.c.l.b16 %v4885
      %v4922 = vunpack.c.h.b16 %v4885
      %v4923 = vunpack.c.l.b16 %v4886
      %v4924 = vunpack.c.h.b16 %v4886
      %v4925 = vunpack.c.l.b16 %v4887
      %v4926 = vunpack.c.h.b16 %v4887
      %v4927 = vunpack.c.l.b16 %v4888
      %v4928 = vunpack.c.h.b16 %v4888
      %v4929 = vunpack.c.l.b16 %v4889
      %v4930 = vunpack.c.h.b16 %v4889
      %v4931 = vunpack.c.l.b16 %v4890
      %v4932 = vunpack.c.h.b16 %v4890
      %v4933 = vunpack.c.l.b16 %v4891
      %v4934 = vunpack.c.h.b16 %v4891
      %v4935 = vunpack.c.l.b16 %v4892
      %v4936 = vunpack.c.h.b16 %v4892
      %v4937 = vunpack.c.l.b16 %v4893
      %v4938 = vunpack.c.h.b16 %v4893
      %v4939 = vunpack.c.l.b16 %v4894
      %v4940 = vunpack.c.h.b16 %v4894
      %v4941 = vunpack.c.l.b16 %v4895
      %v4942 = vunpack.c.h.b16 %v4895
      %v4943 = vunpack.c.l.b16 %v4896
      %v4944 = vunpack.c.h.b16 %v4896
      %v4945 = vpack.c.b16 %v4913, %v4913
      %v4946 = vpack.c.b16 %v4914, %v4914
      %v4947 = vpack.c.b16 %v4915, %v4915
      %v4948 = vpack.c.b16 %v4916, %v4916
      %v4949 = vpack.c.b16 %v4917, %v4917
      %v4950 = vpack.c.b16 %v4918, %v4918
      %v4951 = vpack.c.b16 %v4919, %v4919
      %v4952 = vpack.c.b16 %v4920, %v4920
      %v4953 = vpack.c.b16 %v4921, %v4921
      %v4954 = vpack.c.b16 %v4922, %v4922
      %v4955 = vpack.c.b16 %v4923, %v4923
      %v4956 = vpack.c.b16 %v4924, %v4924
      %v4957 = vpack.c.b16 %v4925, %v4925
      %v4958 = vpack.c.b16 %v4926, %v4926
      %v4959 = vpack.c.b16 %v4927, %v4927
      %v4960 = vpack.c.b16 %v4928, %v4928
      %v4961 = vpack.c.b16 %v4929, %v4929
      %v4962 = vpack.c.b16 %v4930, %v4930
      %v4963 = vpack.c.b16 %v4931, %v4931
      %v4964 = vpack.c.b16 %v4932, %v4932
      %v4965 = vpack.c.b16 %v4933, %v4933
      %v4966 = vpack.c.b16 %v4934, %v4934
      %v4967 = vpack.c.b16 %v4935, %v4935
      %v4968 = vpack.c.b16 %v4936, %v4936
      %v4969 = vpack.c.b16 %v4937, %v4937
      %v4970 = vpack.c.b16 %v4938, %v4938
      %v4971 = vpack.c.b16 %v4939, %v4939
      %v4972 = vpack.c.b16 %v4940, %v4940
      %v4973 = vpack.c.b16 %v4941, %v4941
      %v4974 = vpack.c.b16 %v4942, %v4942
      %v4975 = vpack.c.b16 %v4943, %v4943
      %v4976 = vpack.c.b16 %v4944, %v4944
      %5009 = vst [vmem:[%s276] sm:$0xf] %v4945
      %5010 = vst [vmem:[%s276 + $0x4] sm:$0xf] %v4946
      %5011 = vst [vmem:[%s276 + $0x8] sm:$0xf] %v4947
      %5012 = vst [vmem:[%s276 + $0xc] sm:$0xf] %v4948
      %5013 = vst [vmem:[%s276 + $0x10] sm:$0xf] %v4949
      %5014 = vst [vmem:[%s276 + $0x14] sm:$0xf] %v4950
      %5015 = vst [vmem:[%s276 + $0x18] sm:$0xf] %v4951
      %5016 = vst [vmem:[%s276 + $0x1c] sm:$0xf] %v4952
      %5017 = vst [vmem:[%s276 + $0x20] sm:$0xf] %v4953
      %5018 = vst [vmem:[%s276 + $0x24] sm:$0xf] %v4954
      %5019 = vst [vmem:[%s276 + $0x28] sm:$0xf] %v4955
      %5020 = vst [vmem:[%s276 + $0x2c] sm:$0xf] %v4956
      %5021 = vst [vmem:[%s276 + $0x30] sm:$0xf] %v4957
      %5022 = vst [vmem:[%s276 + $0x34] sm:$0xf] %v4958
      %5023 = vst [vmem:[%s276 + $0x38] sm:$0xf] %v4959
      %5024 = vst [vmem:[%s276 + $0x3c] sm:$0xf] %v4960
      %5025 = vst [vmem:[%s276 + $0x40] sm:$0xf] %v4961
      %5026 = vst [vmem:[%s276 + $0x44] sm:$0xf] %v4962
      %5027 = vst [vmem:[%s276 + $0x48] sm:$0xf] %v4963
      %5028 = vst [vmem:[%s276 + $0x4c] sm:$0xf] %v4964
      %5029 = vst [vmem:[%s276 + $0x50] sm:$0xf] %v4965
      %5030 = vst [vmem:[%s276 + $0x54] sm:$0xf] %v4966
      %5031 = vst [vmem:[%s276 + $0x58] sm:$0xf] %v4967
      %5032 = vst [vmem:[%s276 + $0x5c] sm:$0xf] %v4968
      %5033 = vst [vmem:[%s276 + $0x60] sm:$0xf] %v4969
      %5034 = vst [vmem:[%s276 + $0x64] sm:$0xf] %v4970
      %5035 = vst [vmem:[%s276 + $0x68] sm:$0xf] %v4971
      %5036 = vst [vmem:[%s276 + $0x6c] sm:$0xf] %v4972
      %5037 = vst [vmem:[%s276 + $0x70] sm:$0xf] %v4973
      %5038 = vst [vmem:[%s276 + $0x74] sm:$0xf] %v4974
      %5039 = vst [vmem:[%s276 + $0x78] sm:$0xf] %v4975
      %5040 = vst [vmem:[%s276 + $0x7c] sm:$0xf] %v4976
      %v5041 = vadd.f32 %v4771, %v4773
      %v5042 = vadd.f32 %v5041, %v4776
      %v5043 = vadd.f32 %v5042, %v4778
      %v5044 = vadd.f32 %v5043, %v4781
      %v5045 = vadd.f32 %v5044, %v4783
      %v5046 = vadd.f32 %v5045, %v4786
      %v5047 = vadd.f32 %v5046, %v4788
      %v5048 = vadd.f32 %v5047, %v4791
      %v5049 = vadd.f32 %v5048, %v4793
      %v5050 = vadd.f32 %v5049, %v4796
      %v5051 = vadd.f32 %v5050, %v4798
      %v5052 = vadd.f32 %v5051, %v4801
      %v5053 = vadd.f32 %v5052, %v4803
      %v5054 = vadd.f32 %v5053, %v4806
      %v5055 = vadd.f32 %v5054, %v4808
      %v5056 = vadd.f32 %v5055, %v4811
      %v5057 = vadd.f32 %v5056, %v4813
      %v5058 = vadd.f32 %v5057, %v4816
      %v5059 = vadd.f32 %v5058, %v4818
      %v5060 = vadd.f32 %v5059, %v4821
      %v5061 = vadd.f32 %v5060, %v4823
      %v5062 = vadd.f32 %v5061, %v4826
      %v5063 = vadd.f32 %v5062, %v4828
      %v5064 = vadd.f32 %v5063, %v4831
      %v5065 = vadd.f32 %v5064, %v4833
      %v5066 = vadd.f32 %v5065, %v4836
      %v5067 = vadd.f32 %v5066, %v4838
      %v5068 = vadd.f32 %v5067, %v4841
      %v5069 = vadd.f32 %v5068, %v4843
      %v5070 = vadd.f32 %v5069, %v4846
      %v5071 = vadd.f32 %v5070, %v4848
      %v5072 = vrot.slane %v5071, 4
      %v5073 = vadd.f32 %v5071, %v5072
      %v5074 = vrot.slane %v5073, 2
      %v5075 = vadd.f32 %v5073, %v5074
      %v5076 = vrot.slane %v5075, 1
      %v5077 = vadd.f32 %v5075, %v5076
      %v5078 = vmul.f32 %v4771, %v4771
      %v5079 = vmul.f32 %v4773, %v4773
      %v5080 = vmul.f32 %v4776, %v4776
      %v5081 = vmul.f32 %v4778, %v4778
      %v5082 = vmul.f32 %v4781, %v4781
      %v5083 = vmul.f32 %v4783, %v4783
      %v5084 = vmul.f32 %v4786, %v4786
      %v5085 = vmul.f32 %v4788, %v4788
      %v5086 = vmul.f32 %v4791, %v4791
      %v5087 = vmul.f32 %v4793, %v4793
      %v5088 = vmul.f32 %v4796, %v4796
      %v5089 = vmul.f32 %v4798, %v4798
      %v5090 = vmul.f32 %v4801, %v4801
      %v5091 = vmul.f32 %v4803, %v4803
      %v5092 = vmul.f32 %v4806, %v4806
      %v5093 = vmul.f32 %v4808, %v4808
      %v5094 = vmul.f32 %v4811, %v4811
      %v5095 = vmul.f32 %v4813, %v4813
      %v5096 = vmul.f32 %v4816, %v4816
      %v5097 = vmul.f32 %v4818, %v4818
      %v5098 = vmul.f32 %v4821, %v4821
      %v5099 = vmul.f32 %v4823, %v4823
      %v5100 = vmul.f32 %v4826, %v4826
      %v5101 = vmul.f32 %v4828, %v4828
      %v5102 = vmul.f32 %v4831, %v4831
      %v5103 = vmul.f32 %v4833, %v4833
      %v5104 = vmul.f32 %v4836, %v4836
      %v5105 = vmul.f32 %v4838, %v4838
      %v5106 = vmul.f32 %v4841, %v4841
      %v5107 = vmul.f32 %v4843, %v4843
      %v5108 = vmul.f32 %v4846, %v4846
      %v5109 = vmul.f32 %v4848, %v4848
      %v5110 = vadd.f32 %v5078, %v5079
      %v5111 = vadd.f32 %v5110, %v5080
      %v5112 = vadd.f32 %v5111, %v5081
      %v5113 = vadd.f32 %v5112, %v5082
      %v5114 = vadd.f32 %v5113, %v5083
      %v5115 = vadd.f32 %v5114, %v5084
      %v5116 = vadd.f32 %v5115, %v5085
      %v5117 = vadd.f32 %v5116, %v5086
      %v5118 = vadd.f32 %v5117, %v5087
      %v5119 = vadd.f32 %v5118, %v5088
      %v5120 = vadd.f32 %v5119, %v5089
      %v5121 = vadd.f32 %v5120, %v5090
      %v5122 = vadd.f32 %v5121, %v5091
      %v5123 = vadd.f32 %v5122, %v5092
      %v5124 = vadd.f32 %v5123, %v5093
      %v5125 = vadd.f32 %v5124, %v5094
      %v5126 = vadd.f32 %v5125, %v5095
      %v5127 = vadd.f32 %v5126, %v5096
      %v5128 = vadd.f32 %v5127, %v5097
      %v5129 = vadd.f32 %v5128, %v5098
      %v5130 = vadd.f32 %v5129, %v5099
      %v5131 = vadd.f32 %v5130, %v5100
      %v5132 = vadd.f32 %v5131, %v5101
      %v5133 = vadd.f32 %v5132, %v5102
      %v5134 = vadd.f32 %v5133, %v5103
      %v5135 = vadd.f32 %v5134, %v5104
      %v5136 = vadd.f32 %v5135, %v5105
      %v5137 = vadd.f32 %v5136, %v5106
      %v5138 = vadd.f32 %v5137, %v5107
      %v5139 = vadd.f32 %v5138, %v5108
      %v5140 = vadd.f32 %v5139, %v5109
      %v5141 = vrot.slane %v5140, 4
      %v5142 = vadd.f32 %v5140, %v5141
      %v5143 = vrot.slane %v5142, 2
      %v5144 = vadd.f32 %v5142, %v5143
      %v5145 = vrot.slane %v5144, 1
      %v5146 = vadd.f32 %v5144, %v5145
      %v5147 = vsel %vm4237, %v5077, %v5146
      %5148 = vst [vmem:[%s284] sm:$0x3] %v5147
      %p5149 = scmp.lt.s32.totalorder %s18, 1
      %s5150 = scalar_select %p5149, %s18, 1
      %s5151 = smul.addr %s5150, 32
      %s5152 = smul.addr %s5151, 4
      %s5153 = scalar_lea.vmem %s3, %s5152
      %p5154 = scmp.lt.s32.totalorder %s18, 1
      %s5155 = scalar_select %p5154, %s18, 1
      %s5156 = smul.addr %s5155, 32
      %s5157 = smul.addr %s5156, 4
      %s5158 = scalar_lea.vmem %s4, %s5157
      %p5159 = scmp.lt.s32.totalorder %s18, 1
      %s5160 = scalar_select %p5159, %s18, 1
      %s5161 = smul.addr %s5160, 2
      %s5162 = scalar_lea.vmem %s5, %s5161
      %p5163 = scmp.lt.s32.totalorder %s18, 1
      %s5164 = scalar_select %p5163, %s18, 1
      %s5165 = smul.addr %s5164, 2
      %s5166 = scalar_lea.vmem %s6, %s5165
      // Predicated region
      $region33: #{residual_block_forward.3} parent=31 // pred_check
        %p5167 = pneg %p104
      $region34: #{residual_block_forward.3} parent=31 // pred_check_branch
        %5169 = sbr.rel (%p5167) target = $region36
      $region35: #{residual_block_forward.3} parent=31 // pred_region
        _
      $region36: #{residual_block_forward.3} parent=31 // pred_fallthru
        _
      // Predicated region
      $region37: #{residual_block_forward.3} parent=31 // pred_check
        %p5170 = pneg %p130
      $region38: #{residual_block_forward.3} parent=31 // pred_check_branch
        %5172 = sbr.rel (%p5170) target = $region40
      $region39: #{residual_block_forward.3} parent=31 // pred_region
        _
      $region40: #{residual_block_forward.3} parent=31 // pred_fallthru
        _
      // Predicated region
      $region41: #{residual_block_forward.3} parent=31 // pred_check
        %p5173 = pneg %p156
      $region42: #{residual_block_forward.3} parent=31 // pred_check_branch
        %5175 = sbr.rel (%p5173) target = $region44
      $region43: #{residual_block_forward.3} parent=31 // pred_region
        _
      $region44: #{residual_block_forward.3} parent=31 // pred_fallthru
        _
      // Predicated region
      $region45: #{residual_block_forward.3} parent=31 // pred_check
        %p5176 = pneg %p182
      $region46: #{residual_block_forward.3} parent=31 // pred_check_branch
        %5178 = sbr.rel (%p5176) target = $region48
      $region47: #{residual_block_forward.3} parent=31 // pred_region
        _
      $region48: #{residual_block_forward.3} parent=31 // pred_fallthru
        _
    $region32: #{residual_block_forward.3} parent=5 // pred_fallthru
      _
    %p5179 = scmp.le.s32.totalorder 2, %s13
    // Predicated region
    $region49: #{residual_block_forward.3} parent=5 // pred_check
      %p5180 = pneg %p5179
    $region50: #{residual_block_forward.3} parent=5 // pred_check_branch
      %5182 = sbr.rel (%p5180) target = $region52
    $region51: #{residual_block_forward.3} parent=5 // pred_region
      %s5183 = ssub.s32 %s13, 2
      // Predicated region
      $region53: #{residual_block_forward.3} parent=51 // pred_check
        %p5184 = pneg %p110
      $region54: #{residual_block_forward.3} parent=51 // pred_check_branch
        %5186 = sbr.rel (%p5184) target = $region56
      $region55: #{residual_block_forward.3} parent=51 // pred_region
        %p5187 = scmp.lt.s32.totalorder %s19, 1
        %s5188 = scalar_select %p5187, %s19, 1
        %s5189 = smul.addr %s5188, 32
        %s5190 = smul.addr %s5189, 4
        %s5191 = scalar_lea.vmem %s3, %s5190
      $region56: #{residual_block_forward.3} parent=51 // pred_fallthru
        _
      // Predicated region
      $region57: #{residual_block_forward.3} parent=51 // pred_check
        %p5192 = pneg %p136
      $region58: #{residual_block_forward.3} parent=51 // pred_check_branch
        %5194 = sbr.rel (%p5192) target = $region60
      $region59: #{residual_block_forward.3} parent=51 // pred_region
        %p5195 = scmp.lt.s32.totalorder %s19, 1
        %s5196 = scalar_select %p5195, %s19, 1
        %s5197 = smul.addr %s5196, 32
        %s5198 = smul.addr %s5197, 4
        %s5199 = scalar_lea.vmem %s4, %s5198
      $region60: #{residual_block_forward.3} parent=51 // pred_fallthru
        _
      // Predicated region
      $region61: #{residual_block_forward.3} parent=51 // pred_check
        %p5200 = pneg %p162
      $region62: #{residual_block_forward.3} parent=51 // pred_check_branch
        %5202 = sbr.rel (%p5200) target = $region64
      $region63: #{residual_block_forward.3} parent=51 // pred_region
        %p5203 = scmp.lt.s32.totalorder %s19, 1
        %s5204 = scalar_select %p5203, %s19, 1
        %s5205 = smul.addr %s5204, 2
        %s5206 = scalar_lea.vmem %s5, %s5205
      $region64: #{residual_block_forward.3} parent=51 // pred_fallthru
        _
      // Predicated region
      $region65: #{residual_block_forward.3} parent=51 // pred_check
        %p5207 = pneg %p188
      $region66: #{residual_block_forward.3} parent=51 // pred_check_branch
        %5209 = sbr.rel (%p5207) target = $region68
      $region67: #{residual_block_forward.3} parent=51 // pred_region
        %p5210 = scmp.lt.s32.totalorder %s19, 1
        %s5211 = scalar_select %p5210, %s19, 1
        %s5212 = smul.addr %s5211, 2
        %s5213 = scalar_lea.vmem %s6, %s5212
      $region68: #{residual_block_forward.3} parent=51 // pred_fallthru
        _
    $region52: #{residual_block_forward.3} parent=5 // pred_fallthru
      _
  $region6: #{residual_block_forward.3} parent=0 // loop_footer
    %s17 = sadd.s32 1, %s13
  $region7: #{residual_block_forward.3} parent=0 // loop_footer_branch
    %12 = sbr.rel target = $region3
  $region8: #{residual_block_forward.3} parent=0 // loop_exit
    _

// kernel: residual_block_forward.4
$region0: #{residual_block_forward.4}
  #allocation0 [shape = 'u32[]', space=smem, size = 0x4, offset = 0x4, fixed_abs, tag = 'smem constant byte address 0x4 - core index']
  #allocation1 [shape = 'u32[144,128]{1,0:T(1,128)}', space=vmem, size = 0x12000, scoped, tag = 'internal scratch']
  #allocation2 [shape = 'bf16[18,24,128]{2,1,0:T(8,128)(2,1)}', space=vmem, size = 0x1b000, scoped, tag = 'scratch operand']
  %s0 = inlined_call_operand.vmem [shape: bf16[2,16,16,128], index: 0, kind: input, shape index: {}]
  %s1 = inlined_call_operand.vmem [shape: bf16[9,128,128], index: 1, kind: input, shape index: {}]
  %s2 = inlined_call_operand.vmem [shape: f32[1,128], index: 2, kind: input, shape index: {}]
  %s3 = inlined_call_operand.vmem [shape: f32[1,128], index: 3, kind: input, shape index: {}]
  %s4 = inlined_call_operand.vmem [shape: bf16[2,16,16,128], index: 4, kind: output, shape index: {0}]
  %s5 = inlined_call_operand.vmem [shape: f32[2,2,128], index: 5, kind: output, shape index: {1}]
  %6 = xla_tuple %s4, %s5
  %s7 = sld [smem:[#allocation0]]
  $region57: #{residual_block_forward.4} parent=0
    _
  %s9 = ssub.s32 1, %s7
  %s10 = scalar_select 0, %s9, %s7
  loop: start=0, step=1, limit=4
  $region2: #{residual_block_forward.4} parent=0 // loop_pre_header
    _
  $region3: #{residual_block_forward.4} parent=0 // loop_header
    %s12 = sphi 0, %s16
    %p13 = scmp.ge.s32.totalorder %s12, 4
    %s22 = sphi 0, %s24
    %s25 = sphi 0, %s22
    %s26 = sphi 0, %s25
    %s42 = sphi 0, %s26
    %s46 = sphi 0, %s46
    %s48 = sphi 0, %s46
    %s49 = sphi 0, %s48
    %s63 = sphi 0, %s49
    %s67 = sphi 0, %s67
    %s69 = sphi 0, %s67
    %s70 = sphi 0, %s69
    %s84 = sphi 0, %s70
    %s88 = sphi 0, %s88
    %s90 = sphi 0, %s88
    %s91 = sphi 0, %s90
    %s105 = sphi 0, %s91
    %s111 = sphi 0, %s113
    %s114 = sphi 0, %s111
    %s115 = sphi 0, %s114
    %s131 = sphi 0, %s115
    %s137 = sphi 0, %s139
    %s140 = sphi 0, %s137
    %s141 = sphi 0, %s140
    %s157 = sphi 0, %s141
  $region4: #{residual_block_forward.4} parent=0 // loop_header_branch
    %15 = sbr.rel (%p13) target = $region8
  $region5: #{residual_block_forward.4} parent=0 // loop_body
    %s17 = ssub.s32 %s12, 1
    %s18 = ssub.s32 %s12, 2
    %s19 = sadd.s32 %s12, 1
    %s20 = ssub.s32 %s12, %s19
    %p21 = scmp.eq.s32.totalorder %s20, 0
    %s23 = sadd.s32 %s22, 1
    %s24 = scalar_select %p21, %s22, %s23
    %p27 = pneg %p21
    %p28 = scmp.eq.s32.totalorder %s12, 1
    %p29 = por %p27, %p28
    %p30 = scmp.ne.s32.totalorder %s22, %s25
    %p31 = scmp.eq.s32.totalorder %s12, 0
    %p32 = por %p30, %p31
    %p33 = scmp.ne.s32.totalorder %s22, %s25
    %p34 = scmp.eq.s32.totalorder %s17, 1
    %p35 = por %p33, %p34
    %p36 = scmp.ne.s32.totalorder %s25, %s26
    %p37 = scmp.eq.s32.totalorder %s17, 0
    %p38 = por %p36, %p37
    %p39 = scmp.ne.s32.totalorder %s25, %s26
    %p40 = scmp.eq.s32.totalorder %s18, 1
    %p41 = por %p39, %p40
    %p43 = scmp.ne.s32.totalorder %s26, %s42
    %p44 = scmp.eq.s32.totalorder %s18, 0
    %p45 = por %p43, %p44
    %s47 = sadd.s32 %s46, 1
    %p50 = scmp.eq.s32.totalorder %s12, 1
    %p51 = scmp.ne.s32.totalorder %s46, %s48
    %p52 = scmp.eq.s32.totalorder %s12, 0
    %p53 = por %p51, %p52
    %p54 = scmp.ne.s32.totalorder %s46, %s48
    %p55 = scmp.eq.s32.totalorder %s17, 1
    %p56 = por %p54, %p55
    %p57 = scmp.ne.s32.totalorder %s48, %s49
    %p58 = scmp.eq.s32.totalorder %s17, 0
    %p59 = por %p57, %p58
    %p60 = scmp.ne.s32.totalorder %s48, %s49
    %p61 = scmp.eq.s32.totalorder %s18, 1
    %p62 = por %p60, %p61
    %p64 = scmp.ne.s32.totalorder %s49, %s63
    %p65 = scmp.eq.s32.totalorder %s18, 0
    %p66 = por %p64, %p65
    %s68 = sadd.s32 %s67, 1
    %p71 = scmp.eq.s32.totalorder %s12, 1
    %p72 = scmp.ne.s32.totalorder %s67, %s69
    %p73 = scmp.eq.s32.totalorder %s12, 0
    %p74 = por %p72, %p73
    %p75 = scmp.ne.s32.totalorder %s67, %s69
    %p76 = scmp.eq.s32.totalorder %s17, 1
    %p77 = por %p75, %p76
    %p78 = scmp.ne.s32.totalorder %s69, %s70
    %p79 = scmp.eq.s32.totalorder %s17, 0
    %p80 = por %p78, %p79
    %p81 = scmp.ne.s32.totalorder %s69, %s70
    %p82 = scmp.eq.s32.totalorder %s18, 1
    %p83 = por %p81, %p82
    %p85 = scmp.ne.s32.totalorder %s70, %s84
    %p86 = scmp.eq.s32.totalorder %s18, 0
    %p87 = por %p85, %p86
    %s89 = sadd.s32 %s88, 1
    %p92 = scmp.eq.s32.totalorder %s12, 1
    %p93 = scmp.ne.s32.totalorder %s88, %s90
    %p94 = scmp.eq.s32.totalorder %s12, 0
    %p95 = por %p93, %p94
    %p96 = scmp.ne.s32.totalorder %s88, %s90
    %p97 = scmp.eq.s32.totalorder %s17, 1
    %p98 = por %p96, %p97
    %p99 = scmp.ne.s32.totalorder %s90, %s91
    %p100 = scmp.eq.s32.totalorder %s17, 0
    %p101 = por %p99, %p100
    %p102 = scmp.ne.s32.totalorder %s90, %s91
    %p103 = scmp.eq.s32.totalorder %s18, 1
    %p104 = por %p102, %p103
    %p106 = scmp.ne.s32.totalorder %s91, %s105
    %p107 = scmp.eq.s32.totalorder %s18, 0
    %p108 = por %p106, %p107
    %s109 = ssub.s32 %s12, %s19
    %p110 = scmp.eq.s32.totalorder %s109, 0
    %s112 = sadd.s32 %s111, 1
    %s113 = scalar_select %p110, %s111, %s112
    %p116 = pneg %p110
    %p117 = scmp.eq.s32.totalorder %s12, 1
    %p118 = por %p116, %p117
    %p119 = scmp.ne.s32.totalorder %s111, %s114
    %p120 = scmp.eq.s32.totalorder %s12, 0
    %p121 = por %p119, %p120
    %p122 = scmp.ne.s32.totalorder %s111, %s114
    %p123 = scmp.eq.s32.totalorder %s17, 1
    %p124 = por %p122, %p123
    %p125 = scmp.ne.s32.totalorder %s114, %s115
    %p126 = scmp.eq.s32.totalorder %s17, 0
    %p127 = por %p125, %p126
    %p128 = scmp.ne.s32.totalorder %s114, %s115
    %p129 = scmp.eq.s32.totalorder %s18, 1
    %p130 = por %p128, %p129
    %p132 = scmp.ne.s32.totalorder %s115, %s131
    %p133 = scmp.eq.s32.totalorder %s18, 0
    %p134 = por %p132, %p133
    %s135 = ssub.s32 %s12, %s19
    %p136 = scmp.eq.s32.totalorder %s135, 0
    %s138 = sadd.s32 %s137, 1
    %s139 = scalar_select %p136, %s137, %s138
    %p142 = pneg %p136
    %p143 = scmp.eq.s32.totalorder %s12, 1
    %p144 = por %p142, %p143
    %p145 = scmp.ne.s32.totalorder %s137, %s140
    %p146 = scmp.eq.s32.totalorder %s12, 0
    %p147 = por %p145, %p146
    %p148 = scmp.ne.s32.totalorder %s137, %s140
    %p149 = scmp.eq.s32.totalorder %s17, 1
    %p150 = por %p148, %p149
    %p151 = scmp.ne.s32.totalorder %s140, %s141
    %p152 = scmp.eq.s32.totalorder %s17, 0
    %p153 = por %p151, %p152
    %p154 = scmp.ne.s32.totalorder %s140, %s141
    %p155 = scmp.eq.s32.totalorder %s18, 1
    %p156 = por %p154, %p155
    %p158 = scmp.ne.s32.totalorder %s141, %s157
    %p159 = scmp.eq.s32.totalorder %s18, 0
    %p160 = por %p158, %p159
    %p161 = scmp.le.s32.totalorder 1, %s12
    %p162 = scmp.lt.s32.totalorder %s12, 3
    %p163 = pnand %p161, %p162
    %p164 = pneg %p163
    // Predicated region
    $region9: #{residual_block_forward.4} parent=5 // pred_check
      _
    $region10: #{residual_block_forward.4} parent=5 // pred_check_branch
      %166 = sbr.rel (%p163) target = $region12
    $region11: #{residual_block_forward.4} parent=5 // pred_region
      %s167 = ssub.s32 %s12, 1
      // Predicated region
      $region13: #{residual_block_forward.4} parent=11 // pred_check
        %p168 = pneg %p59
      $region14: #{residual_block_forward.4} parent=11 // pred_check_branch
        %170 = sbr.rel (%p168) target = $region16
      $region15: #{residual_block_forward.4} parent=11 // pred_region
        _
      $region16: #{residual_block_forward.4} parent=11 // pred_fallthru
        _
      // Predicated region
      $region17: #{residual_block_forward.4} parent=11 // pred_check
        %p171 = pneg %p80
      $region18: #{residual_block_forward.4} parent=11 // pred_check_branch
        %173 = sbr.rel (%p171) target = $region20
      $region19: #{residual_block_forward.4} parent=11 // pred_region
        _
      $region20: #{residual_block_forward.4} parent=11 // pred_fallthru
        _
      // Predicated region
      $region21: #{residual_block_forward.4} parent=11 // pred_check
        %p174 = pneg %p101
      $region22: #{residual_block_forward.4} parent=11 // pred_check_branch
        %176 = sbr.rel (%p174) target = $region24
      $region23: #{residual_block_forward.4} parent=11 // pred_region
        _
      $region24: #{residual_block_forward.4} parent=11 // pred_fallthru
        _
    $region12: #{residual_block_forward.4} parent=5 // pred_fallthru
      _
    %p177 = scmp.lt.s32.totalorder %s12, 2
    // Predicated region
    $region25: #{residual_block_forward.4} parent=5 // pred_check
      %p178 = pneg %p177
    $region26: #{residual_block_forward.4} parent=5 // pred_check_branch
      %180 = sbr.rel (%p178) target = $region28
    $region27: #{residual_block_forward.4} parent=5 // pred_region
      // Predicated region
      $region29: #{residual_block_forward.4} parent=27 // pred_check
        %p181 = pneg %p32
      $region30: #{residual_block_forward.4} parent=27 // pred_check_branch
        %183 = sbr.rel (%p181) target = $region32
      $region31: #{residual_block_forward.4} parent=27 // pred_region
        %p184 = scmp.lt.s32.totalorder %s12, 1
        %s185 = scalar_select %p184, %s12, 1
        %s186 = smul.addr %s185, 32
        %s187 = smul.addr %s186, 4
        %s188 = scalar_lea.vmem %s0, %s187
      $region32: #{residual_block_forward.4} parent=27 // pred_fallthru
        _
    $region28: #{residual_block_forward.4} parent=5 // pred_fallthru
      _
    %p189 = scmp.le.s32.totalorder 1, %s12
    %p190 = scmp.lt.s32.totalorder %s12, 3
    %p191 = pnand %p189, %p190
    %p192 = pneg %p191
    // Predicated region
    $region33: #{residual_block_forward.4} parent=5 // pred_check
      _
    $region34: #{residual_block_forward.4} parent=5 // pred_check_branch
      %194 = sbr.rel (%p191) target = $region36
    $region35: #{residual_block_forward.4} parent=5 // pred_region
      %s195 = ssub.s32 %s12, 1
      %p196 = scmp.lt.s32.totalorder %s17, 1
      %s197 = scalar_select %p196, %s17, 1
      %s198 = smul.addr %s197, 32
      %s199 = smul.addr %s198, 4
      %s200 = scalar_lea.vmem %s0, %s199
      %p201 = pneg %p38
      %p202 = pneg %p35
      %p203 = pneg %p59
      %p204 = pneg %p56
      %p205 = pneg %p80
      %p206 = pneg %p77
      %p207 = pneg %p101
      %p208 = pneg %p98
      %p209 = pneg %p127
      %p210 = pneg %p124
      %p211 = scmp.lt.s32.totalorder %s17, 1
      %s212 = scalar_select %p211, %s17, 1
      %s213 = smul.addr %s212, 32
      %s214 = smul.addr %s213, 4
      %s215 = scalar_lea.vmem %s4, %s214
      %p216 = pneg %p153
      %p217 = pneg %p150
      %p218 = scmp.lt.s32.totalorder %s17, 1
      %s219 = scalar_select %p218, %s17, 1
      %s220 = smul.addr %s219, 2
      %s221 = scalar_lea.vmem %s5, %s220
      %p222 = scmp.lt.s32.totalorder %s17, 1
      %s223 = scalar_select %p222, %s17, 1
      %s224 = smul.addr %s223, 32
      %s225 = smul.addr %s224, 4
      %s226 = scalar_lea.vmem %s0, %s225
      %p227 = scmp.lt.s32.totalorder %s17, 1
      %s228 = scalar_select %p227, %s17, 1
      %s229 = smul.addr %s228, 32
      %s230 = smul.addr %s229, 4
      %s231 = scalar_lea.vmem %s4, %s230
      %p232 = scmp.lt.s32.totalorder %s17, 1
      %s233 = scalar_select %p232, %s17, 1
      %s234 = smul.addr %s233, 2
      %s235 = scalar_lea.vmem %s5, %s234
      %v237 = vld [vmem:[%s226] sm:$0xf]
      %v238 = vld [vmem:[%s226 + $0x4] sm:$0xf]
      %v239 = vld [vmem:[%s226 + $0x8] sm:$0xf]
      %v240 = vld [vmem:[%s226 + $0xc] sm:$0xf]
      %v241 = vld [vmem:[%s226 + $0x10] sm:$0xf]
      %v242 = vld [vmem:[%s226 + $0x14] sm:$0xf]
      %v243 = vld [vmem:[%s226 + $0x18] sm:$0xf]
      %v244 = vld [vmem:[%s226 + $0x1c] sm:$0xf]
      %v245 = vld [vmem:[%s226 + $0x20] sm:$0xf]
      %v246 = vld [vmem:[%s226 + $0x24] sm:$0xf]
      %v247 = vld [vmem:[%s226 + $0x28] sm:$0xf]
      %v248 = vld [vmem:[%s226 + $0x2c] sm:$0xf]
      %v249 = vld [vmem:[%s226 + $0x30] sm:$0xf]
      %v250 = vld [vmem:[%s226 + $0x34] sm:$0xf]
      %v251 = vld [vmem:[%s226 + $0x38] sm:$0xf]
      %v252 = vld [vmem:[%s226 + $0x3c] sm:$0xf]
      %v253 = vld [vmem:[%s226 + $0x40] sm:$0xf]
      %v254 = vld [vmem:[%s226 + $0x44] sm:$0xf]
      %v255 = vld [vmem:[%s226 + $0x48] sm:$0xf]
      %v256 = vld [vmem:[%s226 + $0x4c] sm:$0xf]
      %v257 = vld [vmem:[%s226 + $0x50] sm:$0xf]
      %v258 = vld [vmem:[%s226 + $0x54] sm:$0xf]
      %v259 = vld [vmem:[%s226 + $0x58] sm:$0xf]
      %v260 = vld [vmem:[%s226 + $0x5c] sm:$0xf]
      %v261 = vld [vmem:[%s226 + $0x60] sm:$0xf]
      %v262 = vld [vmem:[%s226 + $0x64] sm:$0xf]
      %v263 = vld [vmem:[%s226 + $0x68] sm:$0xf]
      %v264 = vld [vmem:[%s226 + $0x6c] sm:$0xf]
      %v265 = vld [vmem:[%s226 + $0x70] sm:$0xf]
      %v266 = vld [vmem:[%s226 + $0x74] sm:$0xf]
      %v267 = vld [vmem:[%s226 + $0x78] sm:$0xf]
      %v268 = vld [vmem:[%s226 + $0x7c] sm:$0xf]
      %v269 = vunpack.c.l.bf16 %v237
      %v270 = vunpack.c.l.bf16 %v238
      %v271 = vunpack.c.l.bf16 %v239
      %v272 = vunpack.c.l.bf16 %v240
      %v273 = vunpack.c.l.bf16 %v241
      %v274 = vunpack.c.l.bf16 %v242
      %v275 = vunpack.c.l.bf16 %v243
      %v276 = vunpack.c.l.bf16 %v244
      %v277 = vunpack.c.l.bf16 %v245
      %v278 = vunpack.c.l.bf16 %v246
      %v279 = vunpack.c.l.bf16 %v247
      %v280 = vunpack.c.l.bf16 %v248
      %v281 = vunpack.c.l.bf16 %v249
      %v282 = vunpack.c.l.bf16 %v250
      %v283 = vunpack.c.l.bf16 %v251
      %v284 = vunpack.c.l.bf16 %v252
      %v285 = vunpack.c.l.bf16 %v253
      %v286 = vunpack.c.l.bf16 %v254
      %v287 = vunpack.c.l.bf16 %v255
      %v288 = vunpack.c.l.bf16 %v256
      %v289 = vunpack.c.l.bf16 %v257
      %v290 = vunpack.c.l.bf16 %v258
      %v291 = vunpack.c.l.bf16 %v259
      %v292 = vunpack.c.l.bf16 %v260
      %v293 = vunpack.c.l.bf16 %v261
      %v294 = vunpack.c.l.bf16 %v262
      %v295 = vunpack.c.l.bf16 %v263
      %v296 = vunpack.c.l.bf16 %v264
      %v297 = vunpack.c.l.bf16 %v265
      %v298 = vunpack.c.l.bf16 %v266
      %v299 = vunpack.c.l.bf16 %v267
      %v300 = vunpack.c.l.bf16 %v268
      %v301 = vld [vmem:[%s2] sm:$0x1]
      %v303 = vlaneseq
      %v304 = vshrl.u32 %v303, 7
      %v305 = vsub.s32 0, %v304
      %v306 = vrot.slane %v301, %v305
      %v308 = vmul.f32 %v269, %v306
      %v309 = vmul.f32 %v270, %v306
      %v310 = vmul.f32 %v271, %v306
      %v311 = vmul.f32 %v272, %v306
      %v312 = vmul.f32 %v273, %v306
      %v313 = vmul.f32 %v274, %v306
      %v314 = vmul.f32 %v275, %v306
      %v315 = vmul.f32 %v276, %v306
      %v316 = vmul.f32 %v277, %v306
      %v317 = vmul.f32 %v278, %v306
      %v318 = vmul.f32 %v279, %v306
      %v319 = vmul.f32 %v280, %v306
      %v320 = vmul.f32 %v281, %v306
      %v321 = vmul.f32 %v282, %v306
      %v322 = vmul.f32 %v283, %v306
      %v323 = vmul.f32 %v284, %v306
      %v324 = vmul.f32 %v285, %v306
      %v325 = vmul.f32 %v286, %v306
      %v326 = vmul.f32 %v287, %v306
      %v327 = vmul.f32 %v288, %v306
      %v328 = vmul.f32 %v289, %v306
      %v329 = vmul.f32 %v290, %v306
      %v330 = vmul.f32 %v291, %v306
      %v331 = vmul.f32 %v292, %v306
      %v332 = vmul.f32 %v293, %v306
      %v333 = vmul.f32 %v294, %v306
      %v334 = vmul.f32 %v295, %v306
      %v335 = vmul.f32 %v296, %v306
      %v336 = vmul.f32 %v297, %v306
      %v337 = vmul.f32 %v298, %v306
      %v338 = vmul.f32 %v299, %v306
      %v339 = vmul.f32 %v300, %v306
      %v340 = vld [vmem:[%s3] sm:$0x1]
      %v342 = vlaneseq
      %v343 = vshrl.u32 %v342, 7
      %v344 = vsub.s32 0, %v343
      %v345 = vrot.slane %v340, %v344
      %v347 = vadd.f32 %v308, %v345
      %v348 = vadd.f32 %v309, %v345
      %v349 = vadd.f32 %v310, %v345
      %v350 = vadd.f32 %v311, %v345
      %v351 = vadd.f32 %v312, %v345
      %v352 = vadd.f32 %v313, %v345
      %v353 = vadd.f32 %v314, %v345
      %v354 = vadd.f32 %v315, %v345
      %v355 = vadd.f32 %v316, %v345
      %v356 = vadd.f32 %v317, %v345
      %v357 = vadd.f32 %v318, %v345
      %v358 = vadd.f32 %v319, %v345
      %v359 = vadd.f32 %v320, %v345
      %v360 = vadd.f32 %v321, %v345
      %v361 = vadd.f32 %v322, %v345
      %v362 = vadd.f32 %v323, %v345
      %v363 = vadd.f32 %v324, %v345
      %v364 = vadd.f32 %v325, %v345
      %v365 = vadd.f32 %v326, %v345
      %v366 = vadd.f32 %v327, %v345
      %v367 = vadd.f32 %v328, %v345
      %v368 = vadd.f32 %v329, %v345
      %v369 = vadd.f32 %v330, %v345
      %v370 = vadd.f32 %v331, %v345
      %v371 = vadd.f32 %v332, %v345
      %v372 = vadd.f32 %v333, %v345
      %v373 = vadd.f32 %v334, %v345
      %v374 = vadd.f32 %v335, %v345
      %v375 = vadd.f32 %v336, %v345
      %v376 = vadd.f32 %v337, %v345
      %v377 = vadd.f32 %v338, %v345
      %v378 = vadd.f32 %v339, %v345
      %v379 = vmax.f32 %v347, 0.0
      %v380 = vmax.f32 %v348, 0.0
      %v381 = vmax.f32 %v349, 0.0
      %v382 = vmax.f32 %v350, 0.0
      %v383 = vmax.f32 %v351, 0.0
      %v384 = vmax.f32 %v352, 0.0
      %v385 = vmax.f32 %v353, 0.0
      %v386 = vmax.f32 %v354, 0.0
      %v387 = vmax.f32 %v355, 0.0
      %v388 = vmax.f32 %v356, 0.0
      %v389 = vmax.f32 %v357, 0.0
      %v390 = vmax.f32 %v358, 0.0
      %v391 = vmax.f32 %v359, 0.0
      %v392 = vmax.f32 %v360, 0.0
      %v393 = vmax.f32 %v361, 0.0
      %v394 = vmax.f32 %v362, 0.0
      %v395 = vmax.f32 %v363, 0.0
      %v396 = vmax.f32 %v364, 0.0
      %v397 = vmax.f32 %v365, 0.0
      %v398 = vmax.f32 %v366, 0.0
      %v399 = vmax.f32 %v367, 0.0
      %v400 = vmax.f32 %v368, 0.0
      %v401 = vmax.f32 %v369, 0.0
      %v402 = vmax.f32 %v370, 0.0
      %v403 = vmax.f32 %v371, 0.0
      %v404 = vmax.f32 %v372, 0.0
      %v405 = vmax.f32 %v373, 0.0
      %v406 = vmax.f32 %v374, 0.0
      %v407 = vmax.f32 %v375, 0.0
      %v408 = vmax.f32 %v376, 0.0
      %v409 = vmax.f32 %v377, 0.0
      %v410 = vmax.f32 %v378, 0.0
      %411 = vst [vmem:[#allocation2] sm:$0xf] 0
      %412 = vst [vmem:[#allocation2 + $0x4] sm:$0xf] 0
      %413 = vst [vmem:[#allocation2 + $0x8] sm:$0xf] 0
      %s414 = scalar_lea.vmem [#allocation2], 204
      %415 = vst [vmem:[%s414] sm:$0xf] 0
      %416 = vst [vmem:[%s414 + $0x4] sm:$0xf] 0
      %417 = vst [vmem:[%s414 + $0x8] sm:$0xf] 0
      %s418 = scalar_lea.vmem [#allocation2], 12
      %419 = vst [vmem:[%s418 + $0x8] sm:$0xf] 0
      %420 = vst [vmem:[%s418 + $0x14] sm:$0xf] 0
      %421 = vst [vmem:[%s418 + $0x20] sm:$0xf] 0
      %422 = vst [vmem:[%s418 + $0x2c] sm:$0xf] 0
      %423 = vst [vmem:[%s418 + $0x38] sm:$0xf] 0
      %424 = vst [vmem:[%s418 + $0x44] sm:$0xf] 0
      %425 = vst [vmem:[%s418 + $0x50] sm:$0xf] 0
      %426 = vst [vmem:[%s418 + $0x5c] sm:$0xf] 0
      %427 = vst [vmem:[%s418 + $0x68] sm:$0xf] 0
      %428 = vst [vmem:[%s418 + $0x74] sm:$0xf] 0
      %429 = vst [vmem:[%s418 + $0x80] sm:$0xf] 0
      %430 = vst [vmem:[%s418 + $0x8c] sm:$0xf] 0
      %431 = vst [vmem:[%s418 + $0x98] sm:$0xf] 0
      %432 = vst [vmem:[%s418 + $0xa4] sm:$0xf] 0
      %433 = vst [vmem:[%s418 + $0xb0] sm:$0xf] 0
      %434 = vst [vmem:[%s418 + $0xbc] sm:$0xf] 0
      %v435 = vpack.c.bf16 %v380, %v379
      %v436 = vpack.c.bf16 %v382, %v381
      %v437 = vpack.c.bf16 %v384, %v383
      %v438 = vpack.c.bf16 %v386, %v385
      %v439 = vpack.c.bf16 %v388, %v387
      %v440 = vpack.c.bf16 %v390, %v389
      %v441 = vpack.c.bf16 %v392, %v391
      %v442 = vpack.c.bf16 %v394, %v393
      %v443 = vpack.c.bf16 %v396, %v395
      %v444 = vpack.c.bf16 %v398, %v397
      %v445 = vpack.c.bf16 %v400, %v399
      %v446 = vpack.c.bf16 %v402, %v401
      %v447 = vpack.c.bf16 %v404, %v403
      %v448 = vpack.c.bf16 %v406, %v405
      %v449 = vpack.c.bf16 %v408, %v407
      %v450 = vpack.c.bf16 %v410, %v409
      %v467 = vunpack.c.l.b16 %v435
      %v468 = vunpack.c.h.b16 %v435
      %v469 = vunpack.c.l.b16 %v436
      %v470 = vunpack.c.h.b16 %v436
      %v471 = vunpack.c.l.b16 %v437
      %v472 = vunpack.c.h.b16 %v437
      %v473 = vunpack.c.l.b16 %v438
      %v474 = vunpack.c.h.b16 %v438
      %v475 = vunpack.c.l.b16 %v439
      %v476 = vunpack.c.h.b16 %v439
      %v477 = vunpack.c.l.b16 %v440
      %v478 = vunpack.c.h.b16 %v440
      %v479 = vunpack.c.l.b16 %v441
      %v480 = vunpack.c.h.b16 %v441
      %v481 = vunpack.c.l.b16 %v442
      %v482 = vunpack.c.h.b16 %v442
      %v483 = vunpack.c.l.b16 %v443
      %v484 = vunpack.c.h.b16 %v443
      %v485 = vunpack.c.l.b16 %v444
      %v486 = vunpack.c.h.b16 %v444
      %v487 = vunpack.c.l.b16 %v445
      %v488 = vunpack.c.h.b16 %v445
      %v489 = vunpack.c.l.b16 %v446
      %v490 = vunpack.c.h.b16 %v446
      %v491 = vunpack.c.l.b16 %v447
      %v492 = vunpack.c.h.b16 %v447
      %v493 = vunpack.c.l.b16 %v448
      %v494 = vunpack.c.h.b16 %v448
      %v495 = vunpack.c.l.b16 %v449
      %v496 = vunpack.c.h.b16 %v449
      %v497 = vunpack.c.l.b16 %v450
      %v498 = vunpack.c.h.b16 %v450
      %v499 = vpack.c.b16 %v467, %v467
      %v500 = vpack.c.b16 %v468, %v468
      %v501 = vpack.c.b16 %v469, %v469
      %v502 = vpack.c.b16 %v470, %v470
      %v503 = vpack.c.b16 %v471, %v471
      %v504 = vpack.c.b16 %v472, %v472
      %v505 = vpack.c.b16 %v473, %v473
      %v506 = vpack.c.b16 %v474, %v474
      %v507 = vpack.c.b16 %v475, %v475
      %v508 = vpack.c.b16 %v476, %v476
      %v509 = vpack.c.b16 %v477, %v477
      %v510 = vpack.c.b16 %v478, %v478
      %v511 = vpack.c.b16 %v479, %v479
      %v512 = vpack.c.b16 %v480, %v480
      %v513 = vpack.c.b16 %v481, %v481
      %v514 = vpack.c.b16 %v482, %v482
      %v515 = vpack.c.b16 %v483, %v483
      %v516 = vpack.c.b16 %v484, %v484
      %v517 = vpack.c.b16 %v485, %v485
      %v518 = vpack.c.b16 %v486, %v486
      %v519 = vpack.c.b16 %v487, %v487
      %v520 = vpack.c.b16 %v488, %v488
      %v521 = vpack.c.b16 %v489, %v489
      %v522 = vpack.c.b16 %v490, %v490
      %v523 = vpack.c.b16 %v491, %v491
      %v524 = vpack.c.b16 %v492, %v492
      %v525 = vpack.c.b16 %v493, %v493
      %v526 = vpack.c.b16 %v494, %v494
      %v527 = vpack.c.b16 %v495, %v495
      %v528 = vpack.c.b16 %v496, %v496
      %v529 = vpack.c.b16 %v497, %v497
      %v530 = vpack.c.b16 %v498, %v498
      %563 = vst [vmem:[%s418] sm:$0xf] %v499
      %564 = vst [vmem:[%s418 + $0x4] sm:$0xf] %v500
      %565 = vst [vmem:[%s418 + $0xc] sm:$0xf] %v501
      %566 = vst [vmem:[%s418 + $0x10] sm:$0xf] %v502
      %567 = vst [vmem:[%s418 + $0x18] sm:$0xf] %v503
      %568 = vst [vmem:[%s418 + $0x1c] sm:$0xf] %v504
      %569 = vst [vmem:[%s418 + $0x24] sm:$0xf] %v505
      %570 = vst [vmem:[%s418 + $0x28] sm:$0xf] %v506
      %571 = vst [vmem:[%s418 + $0x30] sm:$0xf] %v507
      %572 = vst [vmem:[%s418 + $0x34] sm:$0xf] %v508
      %573 = vst [vmem:[%s418 + $0x3c] sm:$0xf] %v509
      %574 = vst [vmem:[%s418 + $0x40] sm:$0xf] %v510
      %575 = vst [vmem:[%s418 + $0x48] sm:$0xf] %v511
      %576 = vst [vmem:[%s418 + $0x4c] sm:$0xf] %v512
      %577 = vst [vmem:[%s418 + $0x54] sm:$0xf] %v513
      %578 = vst [vmem:[%s418 + $0x58] sm:$0xf] %v514
      %579 = vst [vmem:[%s418 + $0x60] sm:$0xf] %v515
      %580 = vst [vmem:[%s418 + $0x64] sm:$0xf] %v516
      %581 = vst [vmem:[%s418 + $0x6c] sm:$0xf] %v517
      %582 = vst [vmem:[%s418 + $0x70] sm:$0xf] %v518
      %583 = vst [vmem:[%s418 + $0x78] sm:$0xf] %v519
      %584 = vst [vmem:[%s418 + $0x7c] sm:$0xf] %v520
      %585 = vst [vmem:[%s418 + $0x84] sm:$0xf] %v521
      %586 = vst [vmem:[%s418 + $0x88] sm:$0xf] %v522
      %587 = vst [vmem:[%s418 + $0x90] sm:$0xf] %v523
      %588 = vst [vmem:[%s418 + $0x94] sm:$0xf] %v524
      %589 = vst [vmem:[%s418 + $0x9c] sm:$0xf] %v525
      %590 = vst [vmem:[%s418 + $0xa0] sm:$0xf] %v526
      %591 = vst [vmem:[%s418 + $0xa8] sm:$0xf] %v527
      %592 = vst [vmem:[%s418 + $0xac] sm:$0xf] %v528
      %593 = vst [vmem:[%s418 + $0xb4] sm:$0xf] %v529
      %594 = vst [vmem:[%s418 + $0xb8] sm:$0xf] %v530
      %v595 = vld [vmem:[#allocation2] sm:$0xf]
      %v596 = vld [vmem:[#allocation2 + $0x4] sm:$0xf]
      %v597 = vld [vmem:[#allocation2 + $0x8] sm:$0xf]
      %v598 = vld [vmem:[#allocation2 + $0xc] sm:$0xf]
      %v599 = vld [vmem:[#allocation2 + $0x10] sm:$0xf]
      %v600 = vld [vmem:[#allocation2 + $0x14] sm:$0xf]
      %v601 = vld [vmem:[#allocation2 + $0x18] sm:$0xf]
      %v602 = vld [vmem:[#allocation2 + $0x1c] sm:$0xf]
      %v603 = vld [vmem:[#allocation2 + $0x20] sm:$0xf]
      %v604 = vld [vmem:[#allocation2 + $0x24] sm:$0xf]
      %v605 = vld [vmem:[#allocation2 + $0x28] sm:$0xf]
      %v606 = vld [vmem:[#allocation2 + $0x2c] sm:$0xf]
      %v607 = vld [vmem:[#allocation2 + $0x30] sm:$0xf]
      %v608 = vld [vmem:[#allocation2 + $0x34] sm:$0xf]
      %v609 = vld [vmem:[#allocation2 + $0x38] sm:$0xf]
      %v610 = vld [vmem:[#allocation2 + $0x3c] sm:$0xf]
      %v611 = vld [vmem:[#allocation2 + $0x40] sm:$0xf]
      %v612 = vld [vmem:[#allocation2 + $0x44] sm:$0xf]
      %v613 = vld [vmem:[#allocation2 + $0x48] sm:$0xf]
      %v614 = vld [vmem:[#allocation2 + $0x4c] sm:$0xf]
      %v615 = vld [vmem:[#allocation2 + $0x50] sm:$0xf]
      %v616 = vld [vmem:[#allocation2 + $0x54] sm:$0xf]
      %v617 = vld [vmem:[#allocation2 + $0x58] sm:$0xf]
      %v618 = vld [vmem:[#allocation2 + $0x5c] sm:$0xf]
      %v619 = vld [vmem:[#allocation2 + $0x60] sm:$0xf]
      %v620 = vld [vmem:[#allocation2 + $0x64] sm:$0xf]
      %v621 = vld [vmem:[#allocation2 + $0x68] sm:$0xf]
      %v622 = vld [vmem:[#allocation2 + $0x6c] sm:$0xf]
      %v623 = vld [vmem:[#allocation2 + $0x70] sm:$0xf]
      %v624 = vld [vmem:[#allocation2 + $0x74] sm:$0xf]
      %v625 = vld [vmem:[#allocation2 + $0x78] sm:$0xf]
      %v626 = vld [vmem:[#allocation2 + $0x7c] sm:$0xf]
      %v627 = vld [vmem:[#allocation2 + $0x80] sm:$0xf]
      %v628 = vld [vmem:[#allocation2 + $0x84] sm:$0xf]
      %v629 = vld [vmem:[#allocation2 + $0x88] sm:$0xf]
      %v630 = vld [vmem:[#allocation2 + $0x8c] sm:$0xf]
      %v631 = vld [vmem:[#allocation2 + $0x90] sm:$0xf]
      %v632 = vld [vmem:[#allocation2 + $0x94] sm:$0xf]
      %v633 = vld [vmem:[#allocation2 + $0x98] sm:$0xf]
      %v634 = vld [vmem:[#allocation2 + $0x9c] sm:$0xf]
      %v635 = vld [vmem:[#allocation2 + $0xa0] sm:$0xf]
      %v636 = vld [vmem:[#allocation2 + $0xa4] sm:$0xf]
      %v637 = vld [vmem:[#allocation2 + $0xa8] sm:$0xf]
      %v638 = vld [vmem:[#allocation2 + $0xac] sm:$0xf]
      %v639 = vld [vmem:[#allocation2 + $0xb0] sm:$0xf]
      %v640 = vld [vmem:[#allocation2 + $0xb4] sm:$0xf]
      %v641 = vld [vmem:[#allocation2 + $0xb8] sm:$0xf]
      %v642 = vld [vmem:[#allocation2 + $0xbc] sm:$0xf]
      %v643 = vld [vmem:[%s418] sm:$0xf]
      %v644 = vld [vmem:[%s418 + $0x4] sm:$0xf]
      %v645 = vld [vmem:[%s418 + $0x8] sm:$0xf]
      %v646 = vld [vmem:[%s418 + $0xc] sm:$0xf]
      %v647 = vld [vmem:[%s418 + $0x10] sm:$0xf]
      %v648 = vld [vmem:[%s418 + $0x14] sm:$0xf]
      %v649 = vld [vmem:[%s418 + $0x18] sm:$0xf]
      %v650 = vld [vmem:[%s418 + $0x1c] sm:$0xf]
      %v651 = vld [vmem:[%s418 + $0x20] sm:$0xf]
      %v652 = vld [vmem:[%s418 + $0x24] sm:$0xf]
      %v653 = vld [vmem:[%s418 + $0x28] sm:$0xf]
      %v654 = vld [vmem:[%s418 + $0x2c] sm:$0xf]
      %v655 = vld [vmem:[%s418 + $0x30] sm:$0xf]
      %v656 = vld [vmem:[%s418 + $0x34] sm:$0xf]
      %v657 = vld [vmem:[%s418 + $0x38] sm:$0xf]
      %v658 = vld [vmem:[%s418 + $0x3c] sm:$0xf]
      %v659 = vld [vmem:[%s418 + $0x40] sm:$0xf]
      %v660 = vld [vmem:[%s418 + $0x44] sm:$0xf]
      %v661 = vld [vmem:[%s418 + $0x48] sm:$0xf]
      %v662 = vld [vmem:[%s418 + $0x4c] sm:$0xf]
      %v663 = vld [vmem:[%s418 + $0x50] sm:$0xf]
      %v664 = vld [vmem:[%s418 + $0x54] sm:$0xf]
      %v665 = vld [vmem:[%s418 + $0x58] sm:$0xf]
      %v666 = vld [vmem:[%s418 + $0x5c] sm:$0xf]
      %v667 = vld [vmem:[%s418 + $0x60] sm:$0xf]
      %v668 = vld [vmem:[%s418 + $0x64] sm:$0xf]
      %v669 = vld [vmem:[%s418 + $0x68] sm:$0xf]
      %v670 = vld [vmem:[%s418 + $0x6c] sm:$0xf]
      %v671 = vld [vmem:[%s418 + $0x70] sm:$0xf]
      %v672 = vld [vmem:[%s418 + $0x74] sm:$0xf]
      %v673 = vld [vmem:[%s418 + $0x78] sm:$0xf]
      %v674 = vld [vmem:[%s418 + $0x7c] sm:$0xf]
      %v675 = vld [vmem:[%s418 + $0x80] sm:$0xf]
      %v676 = vld [vmem:[%s418 + $0x84] sm:$0xf]
      %v677 = vld [vmem:[%s418 + $0x88] sm:$0xf]
      %v678 = vld [vmem:[%s418 + $0x8c] sm:$0xf]
      %v679 = vld [vmem:[%s418 + $0x90] sm:$0xf]
      %v680 = vld [vmem:[%s418 + $0x94] sm:$0xf]
      %v681 = vld [vmem:[%s418 + $0x98] sm:$0xf]
      %v682 = vld [vmem:[%s418 + $0x9c] sm:$0xf]
      %v683 = vld [vmem:[%s418 + $0xa0] sm:$0xf]
      %v684 = vld [vmem:[%s418 + $0xa4] sm:$0xf]
      %v685 = vld [vmem:[%s418 + $0xa8] sm:$0xf]
      %v686 = vld [vmem:[%s418 + $0xac] sm:$0xf]
      %v687 = vld [vmem:[%s418 + $0xb0] sm:$0xf]
      %v688 = vld [vmem:[%s418 + $0xb4] sm:$0xf]
      %v689 = vld [vmem:[%s418 + $0xb8] sm:$0xf]
      %v690 = vld [vmem:[%s418 + $0xbc] sm:$0xf]
      %s691 = scalar_lea.vmem [#allocation2], 24
      %v692 = vld [vmem:[%s691] sm:$0xf]
      %v693 = vld [vmem:[%s691 + $0x4] sm:$0xf]
      %v694 = vld [vmem:[%s691 + $0x8] sm:$0xf]
      %v695 = vld [vmem:[%s691 + $0xc] sm:$0xf]
      %v696 = vld [vmem:[%s691 + $0x10] sm:$0xf]
      %v697 = vld [vmem:[%s691 + $0x14] sm:$0xf]
      %v698 = vld [vmem:[%s691 + $0x18] sm:$0xf]
      %v699 = vld [vmem:[%s691 + $0x1c] sm:$0xf]
      %v700 = vld [vmem:[%s691 + $0x20] sm:$0xf]
      %v701 = vld [vmem:[%s691 + $0x24] sm:$0xf]
      %v702 = vld [vmem:[%s691 + $0x28] sm:$0xf]
      %v703 = vld [vmem:[%s691 + $0x2c] sm:$0xf]
      %v704 = vld [vmem:[%s691 + $0x30] sm:$0xf]
      %v705 = vld [vmem:[%s691 + $0x34] sm:$0xf]
      %v706 = vld [vmem:[%s691 + $0x38] sm:$0xf]
      %v707 = vld [vmem:[%s691 + $0x3c] sm:$0xf]
      %v708 = vld [vmem:[%s691 + $0x40] sm:$0xf]
      %v709 = vld [vmem:[%s691 + $0x44] sm:$0xf]
      %v710 = vld [vmem:[%s691 + $0x48] sm:$0xf]
      %v711 = vld [vmem:[%s691 + $0x4c] sm:$0xf]
      %v712 = vld [vmem:[%s691 + $0x50] sm:$0xf]
      %v713 = vld [vmem:[%s691 + $0x54] sm:$0xf]
      %v714 = vld [vmem:[%s691 + $0x58] sm:$0xf]
      %v715 = vld [vmem:[%s691 + $0x5c] sm:$0xf]
      %v716 = vld [vmem:[%s691 + $0x60] sm:$0xf]
      %v717 = vld [vmem:[%s691 + $0x64] sm:$0xf]
      %v718 = vld [vmem:[%s691 + $0x68] sm:$0xf]
      %v719 = vld [vmem:[%s691 + $0x6c] sm:$0xf]
      %v720 = vld [vmem:[%s691 + $0x70] sm:$0xf]
      %v721 = vld [vmem:[%s691 + $0x74] sm:$0xf]
      %v722 = vld [vmem:[%s691 + $0x78] sm:$0xf]
      %v723 = vld [vmem:[%s691 + $0x7c] sm:$0xf]
      %v724 = vld [vmem:[%s691 + $0x80] sm:$0xf]
      %v725 = vld [vmem:[%s691 + $0x84] sm:$0xf]
      %v726 = vld [vmem:[%s691 + $0x88] sm:$0xf]
      %v727 = vld [vmem:[%s691 + $0x8c] sm:$0xf]
      %v728 = vld [vmem:[%s691 + $0x90] sm:$0xf]
      %v729 = vld [vmem:[%s691 + $0x94] sm:$0xf]
      %v730 = vld [vmem:[%s691 + $0x98] sm:$0xf]
      %v731 = vld [vmem:[%s691 + $0x9c] sm:$0xf]
      %v732 = vld [vmem:[%s691 + $0xa0] sm:$0xf]
      %v733 = vld [vmem:[%s691 + $0xa4] sm:$0xf]
      %v734 = vld [vmem:[%s691 + $0xa8] sm:$0xf]
      %v735 = vld [vmem:[%s691 + $0xac] sm:$0xf]
      %v736 = vld [vmem:[%s691 + $0xb0] sm:$0xf]
      %v737 = vld [vmem:[%s691 + $0xb4] sm:$0xf]
      %v738 = vld [vmem:[%s691 + $0xb8] sm:$0xf]
      %v739 = vld [vmem:[%s691 + $0xbc] sm:$0xf]
      %v740 = vld [vmem:[%s1] sm:$0xf]
      %v741 = vld [vmem:[%s1 + $0x4] sm:$0xf]
      %v742 = vld [vmem:[%s1 + $0x8] sm:$0xf]
      %v743 = vld [vmem:[%s1 + $0xc] sm:$0xf]
      %v744 = vld [vmem:[%s1 + $0x10] sm:$0xf]
      %v745 = vld [vmem:[%s1 + $0x14] sm:$0xf]
      %v746 = vld [vmem:[%s1 + $0x18] sm:$0xf]
      %v747 = vld [vmem:[%s1 + $0x1c] sm:$0xf]
      %v748 = vld [vmem:[%s1 + $0x20] sm:$0xf]
      %v749 = vld [vmem:[%s1 + $0x24] sm:$0xf]
      %v750 = vld [vmem:[%s1 + $0x28] sm:$0xf]
      %v751 = vld [vmem:[%s1 + $0x2c] sm:$0xf]
      %v752 = vld [vmem:[%s1 + $0x30] sm:$0xf]
      %v753 = vld [vmem:[%s1 + $0x34] sm:$0xf]
      %v754 = vld [vmem:[%s1 + $0x38] sm:$0xf]
      %v755 = vld [vmem:[%s1 + $0x3c] sm:$0xf]
      %s756 = scalar_lea.vmem %s1, 192
      %v757 = vld [vmem:[%s756] sm:$0xf]
      %v758 = vld [vmem:[%s756 + $0x4] sm:$0xf]
      %v759 = vld [vmem:[%s756 + $0x8] sm:$0xf]
      %v760 = vld [vmem:[%s756 + $0xc] sm:$0xf]
      %v761 = vld [vmem:[%s756 + $0x10] sm:$0xf]
      %v762 = vld [vmem:[%s756 + $0x14] sm:$0xf]
      %v763 = vld [vmem:[%s756 + $0x18] sm:$0xf]
      %v764 = vld [vmem:[%s756 + $0x1c] sm:$0xf]
      %v765 = vld [vmem:[%s756 + $0x20] sm:$0xf]
      %v766 = vld [vmem:[%s756 + $0x24] sm:$0xf]
      %v767 = vld [vmem:[%s756 + $0x28] sm:$0xf]
      %v768 = vld [vmem:[%s756 + $0x2c] sm:$0xf]
      %v769 = vld [vmem:[%s756 + $0x30] sm:$0xf]
      %v770 = vld [vmem:[%s756 + $0x34] sm:$0xf]
      %v771 = vld [vmem:[%s756 + $0x38] sm:$0xf]
      %v772 = vld [vmem:[%s756 + $0x3c] sm:$0xf]
      %v821 = vunpack.c.l.b16 %v643
      %v822 = vunpack.c.l.b16 %v644
      %v823 = vunpack.c.l.b16 %v645
      %v824 = vunpack.c.l.b16 %v646
      %v825 = vunpack.c.l.b16 %v647
      %v826 = vunpack.c.l.b16 %v648
      %v827 = vunpack.c.l.b16 %v649
      %v828 = vunpack.c.l.b16 %v650
      %v829 = vunpack.c.l.b16 %v651
      %v830 = vunpack.c.l.b16 %v652
      %v831 = vunpack.c.l.b16 %v653
      %v832 = vunpack.c.l.b16 %v654
      %v833 = vunpack.c.l.b16 %v655
      %v834 = vunpack.c.l.b16 %v656
      %v835 = vunpack.c.l.b16 %v657
      %v836 = vunpack.c.l.b16 %v658
      %v837 = vunpack.c.l.b16 %v659
      %v838 = vunpack.c.l.b16 %v660
      %v839 = vunpack.c.l.b16 %v661
      %v840 = vunpack.c.l.b16 %v662
      %v841 = vunpack.c.l.b16 %v663
      %v842 = vunpack.c.l.b16 %v664
      %v843 = vunpack.c.l.b16 %v665
      %v844 = vunpack.c.l.b16 %v666
      %v845 = vunpack.c.l.b16 %v667
      %v846 = vunpack.c.l.b16 %v668
      %v847 = vunpack.c.l.b16 %v669
      %v848 = vunpack.c.l.b16 %v670
      %v849 = vunpack.c.l.b16 %v671
      %v850 = vunpack.c.l.b16 %v672
      %v851 = vunpack.c.l.b16 %v673
      %v852 = vunpack.c.l.b16 %v674
      %v853 = vunpack.c.l.b16 %v675
      %v854 = vunpack.c.l.b16 %v676
      %v855 = vunpack.c.l.b16 %v677
      %v856 = vunpack.c.l.b16 %v678
      %v857 = vunpack.c.l.b16 %v679
      %v858 = vunpack.c.l.b16 %v680
      %v859 = vunpack.c.l.b16 %v681
      %v860 = vunpack.c.l.b16 %v682
      %v861 = vunpack.c.l.b16 %v683
      %v862 = vunpack.c.l.b16 %v684
      %v863 = vunpack.c.l.b16 %v685
      %v864 = vunpack.c.l.b16 %v686
      %v865 = vunpack.c.l.b16 %v687
      %v866 = vunpack.c.l.b16 %v688
      %v867 = vunpack.c.l.b16 %v689
      %v868 = vunpack.c.l.b16 %v690
      %v869 = vpack.c.b16 %v822, %v821
      %v870 = vpack.c.b16 %v824, %v823
      %v871 = vpack.c.b16 %v826, %v825
      %v872 = vpack.c.b16 %v828, %v827
      %v873 = vpack.c.b16 %v830, %v829
      %v874 = vpack.c.b16 %v832, %v831
      %v875 = vpack.c.b16 %v834, %v833
      %v876 = vpack.c.b16 %v836, %v835
      %v877 = vpack.c.b16 %v838, %v837
      %v878 = vpack.c.b16 %v840, %v839
      %v879 = vpack.c.b16 %v842, %v841
      %v880 = vpack.c.b16 %v844, %v843
      %v881 = vpack.c.b16 %v846, %v845
      %v882 = vpack.c.b16 %v848, %v847
      %v883 = vpack.c.b16 %v850, %v849
      %v884 = vpack.c.b16 %v852, %v851
      %v885 = vpack.c.b16 %v854, %v853
      %v886 = vpack.c.b16 %v856, %v855
      %v887 = vpack.c.b16 %v858, %v857
      %v888 = vpack.c.b16 %v860, %v859
      %v889 = vpack.c.b16 %v862, %v861
      %v890 = vpack.c.b16 %v864, %v863
      %v891 = vpack.c.b16 %v866, %v865
      %v892 = vpack.c.b16 %v868, %v867
      %v933 = vunpack.c.l.b16 %v757
      %v934 = vunpack.c.l.b16 %v758
      %v935 = vunpack.c.l.b16 %v759
      %v936 = vunpack.c.l.b16 %v760
      %v937 = vunpack.c.l.b16 %v761
      %v938 = vunpack.c.l.b16 %v762
      %v939 = vunpack.c.l.b16 %v763
      %v940 = vunpack.c.l.b16 %v764
      %v941 = vunpack.c.l.b16 %v765
      %v942 = vunpack.c.l.b16 %v766
      %v943 = vunpack.c.l.b16 %v767
      %v944 = vunpack.c.l.b16 %v768
      %v945 = vunpack.c.l.b16 %v769
      %v946 = vunpack.c.l.b16 %v770
      %v947 = vunpack.c.l.b16 %v771
      %v948 = vunpack.c.l.b16 %v772
      %v949 = vpack.c.b16 %v934, %v933
      %v950 = vpack.c.b16 %v936, %v935
      %v951 = vpack.c.b16 %v938, %v937
      %v952 = vpack.c.b16 %v940, %v939
      %v953 = vpack.c.b16 %v942, %v941
      %v954 = vpack.c.b16 %v944, %v943
      %v955 = vpack.c.b16 %v946, %v945
      %v956 = vpack.c.b16 %v948, %v947
      %965 = vmatprep.subr.bf16.mxu0 0
      %966 = vmatpush1.bf16.msra.mxu0 %v956
      %967 = vmatprep.subr.bf16.mxu0 0
      %968 = vmatpush1.bf16.msra.mxu0 %v955
      %969 = vmatprep.subr.bf16.mxu0 0
      %970 = vmatpush1.bf16.msra.mxu0 %v954
      %971 = vmatprep.subr.bf16.mxu0 0
      %972 = vmatpush1.bf16.msra.mxu0 %v953
      %973 = vmatprep.subr.bf16.mxu0 0
      %974 = vmatpush1.bf16.msra.mxu0 %v952
      %975 = vmatprep.subr.bf16.mxu0 0
      %976 = vmatpush1.bf16.msra.mxu0 %v951
      %977 = vmatprep.subr.bf16.mxu0 0
      %978 = vmatpush1.bf16.msra.mxu0 %v950
      %979 = vmatprep.subr.bf16.mxu0 0
      %980 = vmatpush1.bf16.msra.mxu0 %v949
      %981 = vmatprep.subr.bf16.mxu0 0
      %982 = vmatpush2.bf16.msra.mxu0 0
      %983 = vmatprep.subr.bf16.mxu0 0
      %984 = vmatpush2.bf16.msra.mxu0 0
      %985 = vmatprep.subr.bf16.mxu0 0
      %986 = vmatpush2.bf16.msra.mxu0 0
      %987 = vmatprep.subr.bf16.mxu0 0
      %988 = vmatpush2.bf16.msra.mxu0 0
      %989 = vmatprep.subr.bf16.mxu0 0
      %990 = vmatpush2.bf16.msra.mxu0 0
      %991 = vmatprep.subr.bf16.mxu0 0
      %992 = vmatpush2.bf16.msra.mxu0 0
      %993 = vmatprep.subr.bf16.mxu0 0
      %994 = vmatpush2.bf16.msra.mxu0 0
      %995 = vmatprep.subr.bf16.mxu0 0
      %996 = vmatpush2.bf16.msra.mxu0 0
      %997 = vmatprep.mubr.bf16.mxu0 0
      %998 = vmatmul.mubr.bf16.gmra.mxu0 %v869
      %v999 = vpop.f32.mrf.mxu0
      %v1000 = vadd.f32 0.0, %v999
      %v1001 = vpop.f32.mrf.mxu0
      %v1002 = vpop.f32.mrf.mxu0
      %v1003 = vadd.f32 0.0, %v1002
      %v1004 = vpop.f32.mrf.mxu0
      %1005 = vmatprep.mubr.bf16.mxu0 0
      %1006 = vmatmul.mubr.bf16.gmra.mxu0 %v870
      %v1007 = vpop.f32.mrf.mxu0
      %v1008 = vadd.f32 0.0, %v1007
      %v1009 = vpop.f32.mrf.mxu0
      %v1010 = vpop.f32.mrf.mxu0
      %v1011 = vadd.f32 0.0, %v1010
      %v1012 = vpop.f32.mrf.mxu0
      %1013 = vmatprep.mubr.bf16.mxu0 0
      %1014 = vmatmul.mubr.bf16.gmra.mxu0 %v871
      %v1015 = vpop.f32.mrf.mxu0
      %v1016 = vadd.f32 0.0, %v1015
      %v1017 = vpop.f32.mrf.mxu0
      %v1018 = vpop.f32.mrf.mxu0
      %v1019 = vadd.f32 0.0, %v1018
      %v1020 = vpop.f32.mrf.mxu0
      %1021 = vmatprep.mubr.bf16.mxu0 0
      %1022 = vmatmul.mubr.bf16.gmra.mxu0 %v872
      %v1023 = vpop.f32.mrf.mxu0
      %v1024 = vadd.f32 0.0, %v1023
      %v1025 = vpop.f32.mrf.mxu0
      %v1026 = vpop.f32.mrf.mxu0
      %v1027 = vadd.f32 0.0, %v1026
      %v1028 = vpop.f32.mrf.mxu0
      %1029 = vmatprep.mubr.bf16.mxu0 0
      %1030 = vmatmul.mubr.bf16.gmra.mxu0 %v873
      %v1031 = vpop.f32.mrf.mxu0
      %v1032 = vadd.f32 0.0, %v1031
      %v1033 = vpop.f32.mrf.mxu0
      %v1034 = vpop.f32.mrf.mxu0
      %v1035 = vadd.f32 0.0, %v1034
      %v1036 = vpop.f32.mrf.mxu0
      %1037 = vmatprep.mubr.bf16.mxu0 0
      %1038 = vmatmul.mubr.bf16.gmra.mxu0 %v874
      %v1039 = vpop.f32.mrf.mxu0
      %v1040 = vadd.f32 0.0, %v1039
      %v1041 = vpop.f32.mrf.mxu0
      %v1042 = vpop.f32.mrf.mxu0
      %v1043 = vadd.f32 0.0, %v1042
      %v1044 = vpop.f32.mrf.mxu0
      %1045 = vmatprep.mubr.bf16.mxu0 0
      %1046 = vmatmul.mubr.bf16.gmra.mxu0 %v875
      %v1047 = vpop.f32.mrf.mxu0
      %v1048 = vadd.f32 0.0, %v1047
      %v1049 = vpop.f32.mrf.mxu0
      %v1050 = vpop.f32.mrf.mxu0
      %v1051 = vadd.f32 0.0, %v1050
      %v1052 = vpop.f32.mrf.mxu0
      %1053 = vmatprep.mubr.bf16.mxu0 0
      %1054 = vmatmul.mubr.bf16.gmra.mxu0 %v876
      %v1055 = vpop.f32.mrf.mxu0
      %v1056 = vadd.f32 0.0, %v1055
      %v1057 = vpop.f32.mrf.mxu0
      %v1058 = vpop.f32.mrf.mxu0
      %v1059 = vadd.f32 0.0, %v1058
      %v1060 = vpop.f32.mrf.mxu0
      %1061 = vmatprep.mubr.bf16.mxu0 0
      %1062 = vmatmul.mubr.bf16.gmra.mxu0 %v877
      %v1063 = vpop.f32.mrf.mxu0
      %v1064 = vadd.f32 0.0, %v1063
      %v1065 = vpop.f32.mrf.mxu0
      %v1066 = vpop.f32.mrf.mxu0
      %v1067 = vadd.f32 0.0, %v1066
      %v1068 = vpop.f32.mrf.mxu0
      %1069 = vmatprep.mubr.bf16.mxu0 0
      %1070 = vmatmul.mubr.bf16.gmra.mxu0 %v878
      %v1071 = vpop.f32.mrf.mxu0
      %v1072 = vadd.f32 0.0, %v1071
      %v1073 = vpop.f32.mrf.mxu0
      %v1074 = vpop.f32.mrf.mxu0
      %v1075 = vadd.f32 0.0, %v1074
      %v1076 = vpop.f32.mrf.mxu0
      %1077 = vmatprep.mubr.bf16.mxu0 0
      %1078 = vmatmul.mubr.bf16.gmra.mxu0 %v879
      %v1079 = vpop.f32.mrf.mxu0
      %v1080 = vadd.f32 0.0, %v1079
      %v1081 = vpop.f32.mrf.mxu0
      %v1082 = vpop.f32.mrf.mxu0
      %v1083 = vadd.f32 0.0, %v1082
      %v1084 = vpop.f32.mrf.mxu0
      %1085 = vmatprep.mubr.bf16.mxu0 0
      %1086 = vmatmul.mubr.bf16.gmra.mxu0 %v880
      %v1087 = vpop.f32.mrf.mxu0
      %v1088 = vadd.f32 0.0, %v1087
      %v1089 = vpop.f32.mrf.mxu0
      %v1090 = vpop.f32.mrf.mxu0
      %v1091 = vadd.f32 0.0, %v1090
      %v1092 = vpop.f32.mrf.mxu0
      %1093 = vmatprep.mubr.bf16.mxu0 0
      %1094 = vmatmul.mubr.bf16.gmra.mxu0 %v881
      %v1095 = vpop.f32.mrf.mxu0
      %v1096 = vadd.f32 0.0, %v1095
      %v1097 = vpop.f32.mrf.mxu0
      %v1098 = vpop.f32.mrf.mxu0
      %v1099 = vadd.f32 0.0, %v1098
      %v1100 = vpop.f32.mrf.mxu0
      %1101 = vmatprep.mubr.bf16.mxu0 0
      %1102 = vmatmul.mubr.bf16.gmra.mxu0 %v882
      %v1103 = vpop.f32.mrf.mxu0
      %v1104 = vadd.f32 0.0, %v1103
      %v1105 = vpop.f32.mrf.mxu0
      %v1106 = vpop.f32.mrf.mxu0
      %v1107 = vadd.f32 0.0, %v1106
      %v1108 = vpop.f32.mrf.mxu0
      %1109 = vmatprep.mubr.bf16.mxu0 0
      %1110 = vmatmul.mubr.bf16.gmra.mxu0 %v883
      %v1111 = vpop.f32.mrf.mxu0
      %v1112 = vadd.f32 0.0, %v1111
      %v1113 = vpop.f32.mrf.mxu0
      %v1114 = vpop.f32.mrf.mxu0
      %v1115 = vadd.f32 0.0, %v1114
      %v1116 = vpop.f32.mrf.mxu0
      %1117 = vmatprep.mubr.bf16.mxu0 0
      %1118 = vmatmul.mubr.bf16.gmra.mxu0 %v884
      %v1119 = vpop.f32.mrf.mxu0
      %v1120 = vadd.f32 0.0, %v1119
      %v1121 = vpop.f32.mrf.mxu0
      %v1122 = vpop.f32.mrf.mxu0
      %v1123 = vadd.f32 0.0, %v1122
      %v1124 = vpop.f32.mrf.mxu0
      %1125 = vmatprep.mubr.bf16.mxu0 0
      %1126 = vmatmul.mubr.bf16.gmra.mxu0 %v885
      %v1127 = vpop.f32.mrf.mxu0
      %v1128 = vadd.f32 0.0, %v1127
      %v1129 = vpop.f32.mrf.mxu0
      %v1130 = vpop.f32.mrf.mxu0
      %v1131 = vadd.f32 0.0, %v1130
      %v1132 = vpop.f32.mrf.mxu0
      %1133 = vmatprep.mubr.bf16.mxu0 0
      %1134 = vmatmul.mubr.bf16.gmra.mxu0 %v886
      %v1135 = vpop.f32.mrf.mxu0
      %v1136 = vadd.f32 0.0, %v1135
      %v1137 = vpop.f32.mrf.mxu0
      %v1138 = vpop.f32.mrf.mxu0
      %v1139 = vadd.f32 0.0, %v1138
      %v1140 = vpop.f32.mrf.mxu0
      %1141 = vmatprep.mubr.bf16.mxu0 0
      %1142 = vmatmul.mubr.bf16.gmra.mxu0 %v887
      %v1143 = vpop.f32.mrf.mxu0
      %v1144 = vadd.f32 0.0, %v1143
      %v1145 = vpop.f32.mrf.mxu0
      %v1146 = vpop.f32.mrf.mxu0
      %v1147 = vadd.f32 0.0, %v1146
      %v1148 = vpop.f32.mrf.mxu0
      %1149 = vmatprep.mubr.bf16.mxu0 0
      %1150 = vmatmul.mubr.bf16.gmra.mxu0 %v888
      %v1151 = vpop.f32.mrf.mxu0
      %v1152 = vadd.f32 0.0, %v1151
      %v1153 = vpop.f32.mrf.mxu0
      %v1154 = vpop.f32.mrf.mxu0
      %v1155 = vadd.f32 0.0, %v1154
      %v1156 = vpop.f32.mrf.mxu0
      %1157 = vmatprep.mubr.bf16.mxu0 0
      %1158 = vmatmul.mubr.bf16.gmra.mxu0 %v889
      %v1159 = vpop.f32.mrf.mxu0
      %v1160 = vadd.f32 0.0, %v1159
      %v1161 = vpop.f32.mrf.mxu0
      %v1162 = vpop.f32.mrf.mxu0
      %v1163 = vadd.f32 0.0, %v1162
      %v1164 = vpop.f32.mrf.mxu0
      %1165 = vmatprep.mubr.bf16.mxu0 0
      %1166 = vmatmul.mubr.bf16.gmra.mxu0 %v890
      %v1167 = vpop.f32.mrf.mxu0
      %v1168 = vadd.f32 0.0, %v1167
      %v1169 = vpop.f32.mrf.mxu0
      %v1170 = vpop.f32.mrf.mxu0
      %v1171 = vadd.f32 0.0, %v1170
      %v1172 = vpop.f32.mrf.mxu0
      %1173 = vmatprep.mubr.bf16.mxu0 0
      %1174 = vmatmul.mubr.bf16.gmra.mxu0 %v891
      %v1175 = vpop.f32.mrf.mxu0
      %v1176 = vadd.f32 0.0, %v1175
      %v1177 = vpop.f32.mrf.mxu0
      %v1178 = vpop.f32.mrf.mxu0
      %v1179 = vadd.f32 0.0, %v1178
      %v1180 = vpop.f32.mrf.mxu0
      %1181 = vmatprep.mubr.bf16.mxu0 0
      %1182 = vmatmul.mubr.bf16.gmra.mxu0 %v892
      %v1183 = vpop.f32.mrf.mxu0
      %v1184 = vadd.f32 0.0, %v1183
      %v1185 = vpop.f32.mrf.mxu0
      %v1186 = vpop.f32.mrf.mxu0
      %v1187 = vadd.f32 0.0, %v1186
      %v1188 = vpop.f32.mrf.mxu0
      %1189 = vdwg.mxu0
      %v1238 = vunpack.c.l.b16 %v595
      %v1239 = vunpack.c.l.b16 %v596
      %v1240 = vunpack.c.l.b16 %v597
      %v1241 = vunpack.c.l.b16 %v598
      %v1242 = vunpack.c.l.b16 %v599
      %v1243 = vunpack.c.l.b16 %v600
      %v1244 = vunpack.c.l.b16 %v601
      %v1245 = vunpack.c.l.b16 %v602
      %v1246 = vunpack.c.l.b16 %v603
      %v1247 = vunpack.c.l.b16 %v604
      %v1248 = vunpack.c.l.b16 %v605
      %v1249 = vunpack.c.l.b16 %v606
      %v1250 = vunpack.c.l.b16 %v607
      %v1251 = vunpack.c.l.b16 %v608
      %v1252 = vunpack.c.l.b16 %v609
      %v1253 = vunpack.c.l.b16 %v610
      %v1254 = vunpack.c.l.b16 %v611
      %v1255 = vunpack.c.l.b16 %v612
      %v1256 = vunpack.c.l.b16 %v613
      %v1257 = vunpack.c.l.b16 %v614
      %v1258 = vunpack.c.l.b16 %v615
      %v1259 = vunpack.c.l.b16 %v616
      %v1260 = vunpack.c.l.b16 %v617
      %v1261 = vunpack.c.l.b16 %v618
      %v1262 = vunpack.c.l.b16 %v619
      %v1263 = vunpack.c.l.b16 %v620
      %v1264 = vunpack.c.l.b16 %v621
      %v1265 = vunpack.c.l.b16 %v622
      %v1266 = vunpack.c.l.b16 %v623
      %v1267 = vunpack.c.l.b16 %v624
      %v1268 = vunpack.c.l.b16 %v625
      %v1269 = vunpack.c.l.b16 %v626
      %v1270 = vunpack.c.l.b16 %v627
      %v1271 = vunpack.c.l.b16 %v628
      %v1272 = vunpack.c.l.b16 %v629
      %v1273 = vunpack.c.l.b16 %v630
      %v1274 = vunpack.c.l.b16 %v631
      %v1275 = vunpack.c.l.b16 %v632
      %v1276 = vunpack.c.l.b16 %v633
      %v1277 = vunpack.c.l.b16 %v634
      %v1278 = vunpack.c.l.b16 %v635
      %v1279 = vunpack.c.l.b16 %v636
      %v1280 = vunpack.c.l.b16 %v637
      %v1281 = vunpack.c.l.b16 %v638
      %v1282 = vunpack.c.l.b16 %v639
      %v1283 = vunpack.c.l.b16 %v640
      %v1284 = vunpack.c.l.b16 %v641
      %v1285 = vunpack.c.l.b16 %v642
      %v1286 = vpack.c.b16 %v1239, %v1238
      %v1287 = vpack.c.b16 %v1241, %v1240
      %v1288 = vpack.c.b16 %v1243, %v1242
      %v1289 = vpack.c.b16 %v1245, %v1244
      %v1290 = vpack.c.b16 %v1247, %v1246
      %v1291 = vpack.c.b16 %v1249, %v1248
      %v1292 = vpack.c.b16 %v1251, %v1250
      %v1293 = vpack.c.b16 %v1253, %v1252
      %v1294 = vpack.c.b16 %v1255, %v1254
      %v1295 = vpack.c.b16 %v1257, %v1256
      %v1296 = vpack.c.b16 %v1259, %v1258
      %v1297 = vpack.c.b16 %v1261, %v1260
      %v1298 = vpack.c.b16 %v1263, %v1262
      %v1299 = vpack.c.b16 %v1265, %v1264
      %v1300 = vpack.c.b16 %v1267, %v1266
      %v1301 = vpack.c.b16 %v1269, %v1268
      %v1302 = vpack.c.b16 %v1271, %v1270
      %v1303 = vpack.c.b16 %v1273, %v1272
      %v1304 = vpack.c.b16 %v1275, %v1274
      %v1305 = vpack.c.b16 %v1277, %v1276
      %v1306 = vpack.c.b16 %v1279, %v1278
      %v1307 = vpack.c.b16 %v1281, %v1280
      %v1308 = vpack.c.b16 %v1283, %v1282
      %v1309 = vpack.c.b16 %v1285, %v1284
      %v1350 = vunpack.c.l.b16 %v740
      %v1351 = vunpack.c.l.b16 %v741
      %v1352 = vunpack.c.l.b16 %v742
      %v1353 = vunpack.c.l.b16 %v743
      %v1354 = vunpack.c.l.b16 %v744
      %v1355 = vunpack.c.l.b16 %v745
      %v1356 = vunpack.c.l.b16 %v746
      %v1357 = vunpack.c.l.b16 %v747
      %v1358 = vunpack.c.l.b16 %v748
      %v1359 = vunpack.c.l.b16 %v749
      %v1360 = vunpack.c.l.b16 %v750
      %v1361 = vunpack.c.l.b16 %v751
      %v1362 = vunpack.c.l.b16 %v752
      %v1363 = vunpack.c.l.b16 %v753
      %v1364 = vunpack.c.l.b16 %v754
      %v1365 = vunpack.c.l.b16 %v755
      %v1366 = vpack.c.b16 %v1351, %v1350
      %v1367 = vpack.c.b16 %v1353, %v1352
      %v1368 = vpack.c.b16 %v1355, %v1354
      %v1369 = vpack.c.b16 %v1357, %v1356
      %v1370 = vpack.c.b16 %v1359, %v1358
      %v1371 = vpack.c.b16 %v1361, %v1360
      %v1372 = vpack.c.b16 %v1363, %v1362
      %v1373 = vpack.c.b16 %v1365, %v1364
      %1382 = vmatprep.subr.bf16.mxu0 0
      %1383 = vmatpush1.bf16.msra.mxu0 %v1373
      %1384 = vmatprep.subr.bf16.mxu0 0
      %1385 = vmatpush1.bf16.msra.mxu0 %v1372
      %1386 = vmatprep.subr.bf16.mxu0 0
      %1387 = vmatpush1.bf16.msra.mxu0 %v1371
      %1388 = vmatprep.subr.bf16.mxu0 0
      %1389 = vmatpush1.bf16.msra.mxu0 %v1370
      %1390 = vmatprep.subr.bf16.mxu0 0
      %1391 = vmatpush1.bf16.msra.mxu0 %v1369
      %1392 = vmatprep.subr.bf16.mxu0 0
      %1393 = vmatpush1.bf16.msra.mxu0 %v1368
      %1394 = vmatprep.subr.bf16.mxu0 0
      %1395 = vmatpush1.bf16.msra.mxu0 %v1367
      %1396 = vmatprep.subr.bf16.mxu0 0
      %1397 = vmatpush1.bf16.msra.mxu0 %v1366
      %1398 = vmatprep.subr.bf16.mxu0 0
      %1399 = vmatpush2.bf16.msra.mxu0 0
      %1400 = vmatprep.subr.bf16.mxu0 0
      %1401 = vmatpush2.bf16.msra.mxu0 0
      %1402 = vmatprep.subr.bf16.mxu0 0
      %1403 = vmatpush2.bf16.msra.mxu0 0
      %1404 = vmatprep.subr.bf16.mxu0 0
      %1405 = vmatpush2.bf16.msra.mxu0 0
      %1406 = vmatprep.subr.bf16.mxu0 0
      %1407 = vmatpush2.bf16.msra.mxu0 0
      %1408 = vmatprep.subr.bf16.mxu0 0
      %1409 = vmatpush2.bf16.msra.mxu0 0
      %1410 = vmatprep.subr.bf16.mxu0 0
      %1411 = vmatpush2.bf16.msra.mxu0 0
      %1412 = vmatprep.subr.bf16.mxu0 0
      %1413 = vmatpush2.bf16.msra.mxu0 0
      %1414 = vmatprep.mubr.bf16.mxu0 0
      %1415 = vmatmul.mubr.bf16.gmra.mxu0 %v1286
      %v1416 = vpop.f32.mrf.mxu0
      %v1417 = vadd.f32 %v1000, %v1416
      %v1418 = vpop.f32.mrf.mxu0
      %v1419 = vpop.f32.mrf.mxu0
      %v1420 = vadd.f32 %v1003, %v1419
      %v1421 = vpop.f32.mrf.mxu0
      %1422 = vmatprep.mubr.bf16.mxu0 0
      %1423 = vmatmul.mubr.bf16.gmra.mxu0 %v1287
      %v1424 = vpop.f32.mrf.mxu0
      %v1425 = vadd.f32 %v1008, %v1424
      %v1426 = vpop.f32.mrf.mxu0
      %v1427 = vpop.f32.mrf.mxu0
      %v1428 = vadd.f32 %v1011, %v1427
      %v1429 = vpop.f32.mrf.mxu0
      %1430 = vmatprep.mubr.bf16.mxu0 0
      %1431 = vmatmul.mubr.bf16.gmra.mxu0 %v1288
      %v1432 = vpop.f32.mrf.mxu0
      %v1433 = vadd.f32 %v1016, %v1432
      %v1434 = vpop.f32.mrf.mxu0
      %v1435 = vpop.f32.mrf.mxu0
      %v1436 = vadd.f32 %v1019, %v1435
      %v1437 = vpop.f32.mrf.mxu0
      %1438 = vmatprep.mubr.bf16.mxu0 0
      %1439 = vmatmul.mubr.bf16.gmra.mxu0 %v1289
      %v1440 = vpop.f32.mrf.mxu0
      %v1441 = vadd.f32 %v1024, %v1440
      %v1442 = vpop.f32.mrf.mxu0
      %v1443 = vpop.f32.mrf.mxu0
      %v1444 = vadd.f32 %v1027, %v1443
      %v1445 = vpop.f32.mrf.mxu0
      %1446 = vmatprep.mubr.bf16.mxu0 0
      %1447 = vmatmul.mubr.bf16.gmra.mxu0 %v1290
      %v1448 = vpop.f32.mrf.mxu0
      %v1449 = vadd.f32 %v1032, %v1448
      %v1450 = vpop.f32.mrf.mxu0
      %v1451 = vpop.f32.mrf.mxu0
      %v1452 = vadd.f32 %v1035, %v1451
      %v1453 = vpop.f32.mrf.mxu0
      %1454 = vmatprep.mubr.bf16.mxu0 0
      %1455 = vmatmul.mubr.bf16.gmra.mxu0 %v1291
      %v1456 = vpop.f32.mrf.mxu0
      %v1457 = vadd.f32 %v1040, %v1456
      %v1458 = vpop.f32.mrf.mxu0
      %v1459 = vpop.f32.mrf.mxu0
      %v1460 = vadd.f32 %v1043, %v1459
      %v1461 = vpop.f32.mrf.mxu0
      %1462 = vmatprep.mubr.bf16.mxu0 0
      %1463 = vmatmul.mubr.bf16.gmra.mxu0 %v1292
      %v1464 = vpop.f32.mrf.mxu0
      %v1465 = vadd.f32 %v1048, %v1464
      %v1466 = vpop.f32.mrf.mxu0
      %v1467 = vpop.f32.mrf.mxu0
      %v1468 = vadd.f32 %v1051, %v1467
      %v1469 = vpop.f32.mrf.mxu0
      %1470 = vmatprep.mubr.bf16.mxu0 0
      %1471 = vmatmul.mubr.bf16.gmra.mxu0 %v1293
      %v1472 = vpop.f32.mrf.mxu0
      %v1473 = vadd.f32 %v1056, %v1472
      %v1474 = vpop.f32.mrf.mxu0
      %v1475 = vpop.f32.mrf.mxu0
      %v1476 = vadd.f32 %v1059, %v1475
      %v1477 = vpop.f32.mrf.mxu0
      %1478 = vmatprep.mubr.bf16.mxu0 0
      %1479 = vmatmul.mubr.bf16.gmra.mxu0 %v1294
      %v1480 = vpop.f32.mrf.mxu0
      %v1481 = vadd.f32 %v1064, %v1480
      %v1482 = vpop.f32.mrf.mxu0
      %v1483 = vpop.f32.mrf.mxu0
      %v1484 = vadd.f32 %v1067, %v1483
      %v1485 = vpop.f32.mrf.mxu0
      %1486 = vmatprep.mubr.bf16.mxu0 0
      %1487 = vmatmul.mubr.bf16.gmra.mxu0 %v1295
      %v1488 = vpop.f32.mrf.mxu0
      %v1489 = vadd.f32 %v1072, %v1488
      %v1490 = vpop.f32.mrf.mxu0
      %v1491 = vpop.f32.mrf.mxu0
      %v1492 = vadd.f32 %v1075, %v1491
      %v1493 = vpop.f32.mrf.mxu0
      %1494 = vmatprep.mubr.bf16.mxu0 0
      %1495 = vmatmul.mubr.bf16.gmra.mxu0 %v1296
      %v1496 = vpop.f32.mrf.mxu0
      %v1497 = vadd.f32 %v1080, %v1496
      %v1498 = vpop.f32.mrf.mxu0
      %v1499 = vpop.f32.mrf.mxu0
      %v1500 = vadd.f32 %v1083, %v1499
      %v1501 = vpop.f32.mrf.mxu0
      %1502 = vmatprep.mubr.bf16.mxu0 0
      %1503 = vmatmul.mubr.bf16.gmra.mxu0 %v1297
      %v1504 = vpop.f32.mrf.mxu0
      %v1505 = vadd.f32 %v1088, %v1504
      %v1506 = vpop.f32.mrf.mxu0
      %v1507 = vpop.f32.mrf.mxu0
      %v1508 = vadd.f32 %v1091, %v1507
      %v1509 = vpop.f32.mrf.mxu0
      %1510 = vmatprep.mubr.bf16.mxu0 0
      %1511 = vmatmul.mubr.bf16.gmra.mxu0 %v1298
      %v1512 = vpop.f32.mrf.mxu0
      %v1513 = vadd.f32 %v1096, %v1512
      %v1514 = vpop.f32.mrf.mxu0
      %v1515 = vpop.f32.mrf.mxu0
      %v1516 = vadd.f32 %v1099, %v1515
      %v1517 = vpop.f32.mrf.mxu0
      %1518 = vmatprep.mubr.bf16.mxu0 0
      %1519 = vmatmul.mubr.bf16.gmra.mxu0 %v1299
      %v1520 = vpop.f32.mrf.mxu0
      %v1521 = vadd.f32 %v1104, %v1520
      %v1522 = vpop.f32.mrf.mxu0
      %v1523 = vpop.f32.mrf.mxu0
      %v1524 = vadd.f32 %v1107, %v1523
      %v1525 = vpop.f32.mrf.mxu0
      %1526 = vmatprep.mubr.bf16.mxu0 0
      %1527 = vmatmul.mubr.bf16.gmra.mxu0 %v1300
      %v1528 = vpop.f32.mrf.mxu0
      %v1529 = vadd.f32 %v1112, %v1528
      %v1530 = vpop.f32.mrf.mxu0
      %v1531 = vpop.f32.mrf.mxu0
      %v1532 = vadd.f32 %v1115, %v1531
      %v1533 = vpop.f32.mrf.mxu0
      %1534 = vmatprep.mubr.bf16.mxu0 0
      %1535 = vmatmul.mubr.bf16.gmra.mxu0 %v1301
      %v1536 = vpop.f32.mrf.mxu0
      %v1537 = vadd.f32 %v1120, %v1536
      %v1538 = vpop.f32.mrf.mxu0
      %v1539 = vpop.f32.mrf.mxu0
      %v1540 = vadd.f32 %v1123, %v1539
      %v1541 = vpop.f32.mrf.mxu0
      %1542 = vmatprep.mubr.bf16.mxu0 0
      %1543 = vmatmul.mubr.bf16.gmra.mxu0 %v1302
      %v1544 = vpop.f32.mrf.mxu0
      %v1545 = vadd.f32 %v1128, %v1544
      %v1546 = vpop.f32.mrf.mxu0
      %v1547 = vpop.f32.mrf.mxu0
      %v1548 = vadd.f32 %v1131, %v1547
      %v1549 = vpop.f32.mrf.mxu0
      %1550 = vmatprep.mubr.bf16.mxu0 0
      %1551 = vmatmul.mubr.bf16.gmra.mxu0 %v1303
      %v1552 = vpop.f32.mrf.mxu0
      %v1553 = vadd.f32 %v1136, %v1552
      %v1554 = vpop.f32.mrf.mxu0
      %v1555 = vpop.f32.mrf.mxu0
      %v1556 = vadd.f32 %v1139, %v1555
      %v1557 = vpop.f32.mrf.mxu0
      %1558 = vmatprep.mubr.bf16.mxu0 0
      %1559 = vmatmul.mubr.bf16.gmra.mxu0 %v1304
      %v1560 = vpop.f32.mrf.mxu0
      %v1561 = vadd.f32 %v1144, %v1560
      %v1562 = vpop.f32.mrf.mxu0
      %v1563 = vpop.f32.mrf.mxu0
      %v1564 = vadd.f32 %v1147, %v1563
      %v1565 = vpop.f32.mrf.mxu0
      %1566 = vmatprep.mubr.bf16.mxu0 0
      %1567 = vmatmul.mubr.bf16.gmra.mxu0 %v1305
      %v1568 = vpop.f32.mrf.mxu0
      %v1569 = vadd.f32 %v1152, %v1568
      %v1570 = vpop.f32.mrf.mxu0
      %v1571 = vpop.f32.mrf.mxu0
      %v1572 = vadd.f32 %v1155, %v1571
      %v1573 = vpop.f32.mrf.mxu0
      %1574 = vmatprep.mubr.bf16.mxu0 0
      %1575 = vmatmul.mubr.bf16.gmra.mxu0 %v1306
      %v1576 = vpop.f32.mrf.mxu0
      %v1577 = vadd.f32 %v1160, %v1576
      %v1578 = vpop.f32.mrf.mxu0
      %v1579 = vpop.f32.mrf.mxu0
      %v1580 = vadd.f32 %v1163, %v1579
      %v1581 = vpop.f32.mrf.mxu0
      %1582 = vmatprep.mubr.bf16.mxu0 0
      %1583 = vmatmul.mubr.bf16.gmra.mxu0 %v1307
      %v1584 = vpop.f32.mrf.mxu0
      %v1585 = vadd.f32 %v1168, %v1584
      %v1586 = vpop.f32.mrf.mxu0
      %v1587 = vpop.f32.mrf.mxu0
      %v1588 = vadd.f32 %v1171, %v1587
      %v1589 = vpop.f32.mrf.mxu0
      %1590 = vmatprep.mubr.bf16.mxu0 0
      %1591 = vmatmul.mubr.bf16.gmra.mxu0 %v1308
      %v1592 = vpop.f32.mrf.mxu0
      %v1593 = vadd.f32 %v1176, %v1592
      %v1594 = vpop.f32.mrf.mxu0
      %v1595 = vpop.f32.mrf.mxu0
      %v1596 = vadd.f32 %v1179, %v1595
      %v1597 = vpop.f32.mrf.mxu0
      %1598 = vmatprep.mubr.bf16.mxu0 0
      %1599 = vmatmul.mubr.bf16.gmra.mxu0 %v1309
      %v1600 = vpop.f32.mrf.mxu0
      %v1601 = vadd.f32 %v1184, %v1600
      %v1602 = vpop.f32.mrf.mxu0
      %v1603 = vpop.f32.mrf.mxu0
      %v1604 = vadd.f32 %v1187, %v1603
      %v1605 = vpop.f32.mrf.mxu0
      %1606 = vdwg.mxu0
      %s1607 = scalar_lea.vmem %s1, 384
      %v1608 = vld [vmem:[%s1607] sm:$0xf]
      %v1609 = vld [vmem:[%s1607 + $0x4] sm:$0xf]
      %v1610 = vld [vmem:[%s1607 + $0x8] sm:$0xf]
      %v1611 = vld [vmem:[%s1607 + $0xc] sm:$0xf]
      %v1612 = vld [vmem:[%s1607 + $0x10] sm:$0xf]
      %v1613 = vld [vmem:[%s1607 + $0x14] sm:$0xf]
      %v1614 = vld [vmem:[%s1607 + $0x18] sm:$0xf]
      %v1615 = vld [vmem:[%s1607 + $0x1c] sm:$0xf]
      %v1616 = vld [vmem:[%s1607 + $0x20] sm:$0xf]
      %v1617 = vld [vmem:[%s1607 + $0x24] sm:$0xf]
      %v1618 = vld [vmem:[%s1607 + $0x28] sm:$0xf]
      %v1619 = vld [vmem:[%s1607 + $0x2c] sm:$0xf]
      %v1620 = vld [vmem:[%s1607 + $0x30] sm:$0xf]
      %v1621 = vld [vmem:[%s1607 + $0x34] sm:$0xf]
      %v1622 = vld [vmem:[%s1607 + $0x38] sm:$0xf]
      %v1623 = vld [vmem:[%s1607 + $0x3c] sm:$0xf]
      %v1672 = vunpack.c.l.b16 %v692
      %v1673 = vunpack.c.l.b16 %v693
      %v1674 = vunpack.c.l.b16 %v694
      %v1675 = vunpack.c.l.b16 %v695
      %v1676 = vunpack.c.l.b16 %v696
      %v1677 = vunpack.c.l.b16 %v697
      %v1678 = vunpack.c.l.b16 %v698
      %v1679 = vunpack.c.l.b16 %v699
      %v1680 = vunpack.c.l.b16 %v700
      %v1681 = vunpack.c.l.b16 %v701
      %v1682 = vunpack.c.l.b16 %v702
      %v1683 = vunpack.c.l.b16 %v703
      %v1684 = vunpack.c.l.b16 %v704
      %v1685 = vunpack.c.l.b16 %v705
      %v1686 = vunpack.c.l.b16 %v706
      %v1687 = vunpack.c.l.b16 %v707
      %v1688 = vunpack.c.l.b16 %v708
      %v1689 = vunpack.c.l.b16 %v709
      %v1690 = vunpack.c.l.b16 %v710
      %v1691 = vunpack.c.l.b16 %v711
      %v1692 = vunpack.c.l.b16 %v712
      %v1693 = vunpack.c.l.b16 %v713
      %v1694 = vunpack.c.l.b16 %v714
      %v1695 = vunpack.c.l.b16 %v715
      %v1696 = vunpack.c.l.b16 %v716
      %v1697 = vunpack.c.l.b16 %v717
      %v1698 = vunpack.c.l.b16 %v718
      %v1699 = vunpack.c.l.b16 %v719
      %v1700 = vunpack.c.l.b16 %v720
      %v1701 = vunpack.c.l.b16 %v721
      %v1702 = vunpack.c.l.b16 %v722
      %v1703 = vunpack.c.l.b16 %v723
      %v1704 = vunpack.c.l.b16 %v724
      %v1705 = vunpack.c.l.b16 %v725
      %v1706 = vunpack.c.l.b16 %v726
      %v1707 = vunpack.c.l.b16 %v727
      %v1708 = vunpack.c.l.b16 %v728
      %v1709 = vunpack.c.l.b16 %v729
      %v1710 = vunpack.c.l.b16 %v730
      %v1711 = vunpack.c.l.b16 %v731
      %v1712 = vunpack.c.l.b16 %v732
      %v1713 = vunpack.c.l.b16 %v733
      %v1714 = vunpack.c.l.b16 %v734
      %v1715 = vunpack.c.l.b16 %v735
      %v1716 = vunpack.c.l.b16 %v736
      %v1717 = vunpack.c.l.b16 %v737
      %v1718 = vunpack.c.l.b16 %v738
      %v1719 = vunpack.c.l.b16 %v739
      %v1720 = vpack.c.b16 %v1673, %v1672
      %v1721 = vpack.c.b16 %v1675, %v1674
      %v1722 = vpack.c.b16 %v1677, %v1676
      %v1723 = vpack.c.b16 %v1679, %v1678
      %v1724 = vpack.c.b16 %v1681, %v1680
      %v1725 = vpack.c.b16 %v1683, %v1682
      %v1726 = vpack.c.b16 %v1685, %v1684
      %v1727 = vpack.c.b16 %v1687, %v1686
      %v1728 = vpack.c.b16 %v1689, %v1688
      %v1729 = vpack.c.b16 %v1691, %v1690
      %v1730 = vpack.c.b16 %v1693, %v1692
      %v1731 = vpack.c.b16 %v1695, %v1694
      %v1732 = vpack.c.b16 %v1697, %v1696
      %v1733 = vpack.c.b16 %v1699, %v1698
      %v1734 = vpack.c.b16 %v1701, %v1700
      %v1735 = vpack.c.b16 %v1703, %v1702
      %v1736 = vpack.c.b16 %v1705, %v1704
      %v1737 = vpack.c.b16 %v1707, %v1706
      %v1738 = vpack.c.b16 %v1709, %v1708
      %v1739 = vpack.c.b16 %v1711, %v1710
      %v1740 = vpack.c.b16 %v1713, %v1712
      %v1741 = vpack.c.b16 %v1715, %v1714
      %v1742 = vpack.c.b16 %v1717, %v1716
      %v1743 = vpack.c.b16 %v1719, %v1718
      %v1784 = vunpack.c.l.b16 %v1608
      %v1785 = vunpack.c.l.b16 %v1609
      %v1786 = vunpack.c.l.b16 %v1610
      %v1787 = vunpack.c.l.b16 %v1611
      %v1788 = vunpack.c.l.b16 %v1612
      %v1789 = vunpack.c.l.b16 %v1613
      %v1790 = vunpack.c.l.b16 %v1614
      %v1791 = vunpack.c.l.b16 %v1615
      %v1792 = vunpack.c.l.b16 %v1616
      %v1793 = vunpack.c.l.b16 %v1617
      %v1794 = vunpack.c.l.b16 %v1618
      %v1795 = vunpack.c.l.b16 %v1619
      %v1796 = vunpack.c.l.b16 %v1620
      %v1797 = vunpack.c.l.b16 %v1621
      %v1798 = vunpack.c.l.b16 %v1622
      %v1799 = vunpack.c.l.b16 %v1623
      %v1800 = vpack.c.b16 %v1785, %v1784
      %v1801 = vpack.c.b16 %v1787, %v1786
      %v1802 = vpack.c.b16 %v1789, %v1788
      %v1803 = vpack.c.b16 %v1791, %v1790
      %v1804 = vpack.c.b16 %v1793, %v1792
      %v1805 = vpack.c.b16 %v1795, %v1794
      %v1806 = vpack.c.b16 %v1797, %v1796
      %v1807 = vpack.c.b16 %v1799, %v1798
      %1816 = vmatprep.subr.bf16.mxu0 0
      %1817 = vmatpush1.bf16.msra.mxu0 %v1807
      %1818 = vmatprep.subr.bf16.mxu0 0
      %1819 = vmatpush1.bf16.msra.mxu0 %v1806
      %1820 = vmatprep.subr.bf16.mxu0 0
      %1821 = vmatpush1.bf16.msra.mxu0 %v1805
      %1822 = vmatprep.subr.bf16.mxu0 0
      %1823 = vmatpush1.bf16.msra.mxu0 %v1804
      %1824 = vmatprep.subr.bf16.mxu0 0
      %1825 = vmatpush1.bf16.msra.mxu0 %v1803
      %1826 = vmatprep.subr.bf16.mxu0 0
      %1827 = vmatpush1.bf16.msra.mxu0 %v1802
      %1828 = vmatprep.subr.bf16.mxu0 0
      %1829 = vmatpush1.bf16.msra.mxu0 %v1801
      %1830 = vmatprep.subr.bf16.mxu0 0
      %1831 = vmatpush1.bf16.msra.mxu0 %v1800
      %1832 = vmatprep.subr.bf16.mxu0 0
      %1833 = vmatpush2.bf16.msra.mxu0 0
      %1834 = vmatprep.subr.bf16.mxu0 0
      %1835 = vmatpush2.bf16.msra.mxu0 0
      %1836 = vmatprep.subr.bf16.mxu0 0
      %1837 = vmatpush2.bf16.msra.mxu0 0
      %1838 = vmatprep.subr.bf16.mxu0 0
      %1839 = vmatpush2.bf16.msra.mxu0 0
      %1840 = vmatprep.subr.bf16.mxu0 0
      %1841 = vmatpush2.bf16.msra.mxu0 0
      %1842 = vmatprep.subr.bf16.mxu0 0
      %1843 = vmatpush2.bf16.msra.mxu0 0
      %1844 = vmatprep.subr.bf16.mxu0 0
      %1845 = vmatpush2.bf16.msra.mxu0 0
      %1846 = vmatprep.subr.bf16.mxu0 0
      %1847 = vmatpush2.bf16.msra.mxu0 0
      %1848 = vmatprep.mubr.bf16.mxu0 0
      %1849 = vmatmul.mubr.bf16.gmra.mxu0 %v1720
      %v1850 = vpop.f32.mrf.mxu0
      %v1851 = vadd.f32 0.0, %v1850
      %v1852 = vpop.f32.mrf.mxu0
      %v1853 = vpop.f32.mrf.mxu0
      %v1854 = vadd.f32 0.0, %v1853
      %v1855 = vpop.f32.mrf.mxu0
      %1856 = vmatprep.mubr.bf16.mxu0 0
      %1857 = vmatmul.mubr.bf16.gmra.mxu0 %v1721
      %v1858 = vpop.f32.mrf.mxu0
      %v1859 = vadd.f32 0.0, %v1858
      %v1860 = vpop.f32.mrf.mxu0
      %v1861 = vpop.f32.mrf.mxu0
      %v1862 = vadd.f32 0.0, %v1861
      %v1863 = vpop.f32.mrf.mxu0
      %1864 = vmatprep.mubr.bf16.mxu0 0
      %1865 = vmatmul.mubr.bf16.gmra.mxu0 %v1722
      %v1866 = vpop.f32.mrf.mxu0
      %v1867 = vadd.f32 0.0, %v1866
      %v1868 = vpop.f32.mrf.mxu0
      %v1869 = vpop.f32.mrf.mxu0
      %v1870 = vadd.f32 0.0, %v1869
      %v1871 = vpop.f32.mrf.mxu0
      %1872 = vmatprep.mubr.bf16.mxu0 0
      %1873 = vmatmul.mubr.bf16.gmra.mxu0 %v1723
      %v1874 = vpop.f32.mrf.mxu0
      %v1875 = vadd.f32 0.0, %v1874
      %v1876 = vpop.f32.mrf.mxu0
      %v1877 = vpop.f32.mrf.mxu0
      %v1878 = vadd.f32 0.0, %v1877
      %v1879 = vpop.f32.mrf.mxu0
      %1880 = vmatprep.mubr.bf16.mxu0 0
      %1881 = vmatmul.mubr.bf16.gmra.mxu0 %v1724
      %v1882 = vpop.f32.mrf.mxu0
      %v1883 = vadd.f32 0.0, %v1882
      %v1884 = vpop.f32.mrf.mxu0
      %v1885 = vpop.f32.mrf.mxu0
      %v1886 = vadd.f32 0.0, %v1885
      %v1887 = vpop.f32.mrf.mxu0
      %1888 = vmatprep.mubr.bf16.mxu0 0
      %1889 = vmatmul.mubr.bf16.gmra.mxu0 %v1725
      %v1890 = vpop.f32.mrf.mxu0
      %v1891 = vadd.f32 0.0, %v1890
      %v1892 = vpop.f32.mrf.mxu0
      %v1893 = vpop.f32.mrf.mxu0
      %v1894 = vadd.f32 0.0, %v1893
      %v1895 = vpop.f32.mrf.mxu0
      %1896 = vmatprep.mubr.bf16.mxu0 0
      %1897 = vmatmul.mubr.bf16.gmra.mxu0 %v1726
      %v1898 = vpop.f32.mrf.mxu0
      %v1899 = vadd.f32 0.0, %v1898
      %v1900 = vpop.f32.mrf.mxu0
      %v1901 = vpop.f32.mrf.mxu0
      %v1902 = vadd.f32 0.0, %v1901
      %v1903 = vpop.f32.mrf.mxu0
      %1904 = vmatprep.mubr.bf16.mxu0 0
      %1905 = vmatmul.mubr.bf16.gmra.mxu0 %v1727
      %v1906 = vpop.f32.mrf.mxu0
      %v1907 = vadd.f32 0.0, %v1906
      %v1908 = vpop.f32.mrf.mxu0
      %v1909 = vpop.f32.mrf.mxu0
      %v1910 = vadd.f32 0.0, %v1909
      %v1911 = vpop.f32.mrf.mxu0
      %1912 = vmatprep.mubr.bf16.mxu0 0
      %1913 = vmatmul.mubr.bf16.gmra.mxu0 %v1728
      %v1914 = vpop.f32.mrf.mxu0
      %v1915 = vadd.f32 0.0, %v1914
      %v1916 = vpop.f32.mrf.mxu0
      %v1917 = vpop.f32.mrf.mxu0
      %v1918 = vadd.f32 0.0, %v1917
      %v1919 = vpop.f32.mrf.mxu0
      %1920 = vmatprep.mubr.bf16.mxu0 0
      %1921 = vmatmul.mubr.bf16.gmra.mxu0 %v1729
      %v1922 = vpop.f32.mrf.mxu0
      %v1923 = vadd.f32 0.0, %v1922
      %v1924 = vpop.f32.mrf.mxu0
      %v1925 = vpop.f32.mrf.mxu0
      %v1926 = vadd.f32 0.0, %v1925
      %v1927 = vpop.f32.mrf.mxu0
      %1928 = vmatprep.mubr.bf16.mxu0 0
      %1929 = vmatmul.mubr.bf16.gmra.mxu0 %v1730
      %v1930 = vpop.f32.mrf.mxu0
      %v1931 = vadd.f32 0.0, %v1930
      %v1932 = vpop.f32.mrf.mxu0
      %v1933 = vpop.f32.mrf.mxu0
      %v1934 = vadd.f32 0.0, %v1933
      %v1935 = vpop.f32.mrf.mxu0
      %1936 = vmatprep.mubr.bf16.mxu0 0
      %1937 = vmatmul.mubr.bf16.gmra.mxu0 %v1731
      %v1938 = vpop.f32.mrf.mxu0
      %v1939 = vadd.f32 0.0, %v1938
      %v1940 = vpop.f32.mrf.mxu0
      %v1941 = vpop.f32.mrf.mxu0
      %v1942 = vadd.f32 0.0, %v1941
      %v1943 = vpop.f32.mrf.mxu0
      %1944 = vmatprep.mubr.bf16.mxu0 0
      %1945 = vmatmul.mubr.bf16.gmra.mxu0 %v1732
      %v1946 = vpop.f32.mrf.mxu0
      %v1947 = vadd.f32 0.0, %v1946
      %v1948 = vpop.f32.mrf.mxu0
      %v1949 = vpop.f32.mrf.mxu0
      %v1950 = vadd.f32 0.0, %v1949
      %v1951 = vpop.f32.mrf.mxu0
      %1952 = vmatprep.mubr.bf16.mxu0 0
      %1953 = vmatmul.mubr.bf16.gmra.mxu0 %v1733
      %v1954 = vpop.f32.mrf.mxu0
      %v1955 = vadd.f32 0.0, %v1954
      %v1956 = vpop.f32.mrf.mxu0
      %v1957 = vpop.f32.mrf.mxu0
      %v1958 = vadd.f32 0.0, %v1957
      %v1959 = vpop.f32.mrf.mxu0
      %1960 = vmatprep.mubr.bf16.mxu0 0
      %1961 = vmatmul.mubr.bf16.gmra.mxu0 %v1734
      %v1962 = vpop.f32.mrf.mxu0
      %v1963 = vadd.f32 0.0, %v1962
      %v1964 = vpop.f32.mrf.mxu0
      %v1965 = vpop.f32.mrf.mxu0
      %v1966 = vadd.f32 0.0, %v1965
      %v1967 = vpop.f32.mrf.mxu0
      %1968 = vmatprep.mubr.bf16.mxu0 0
      %1969 = vmatmul.mubr.bf16.gmra.mxu0 %v1735
      %v1970 = vpop.f32.mrf.mxu0
      %v1971 = vadd.f32 0.0, %v1970
      %v1972 = vpop.f32.mrf.mxu0
      %v1973 = vpop.f32.mrf.mxu0
      %v1974 = vadd.f32 0.0, %v1973
      %v1975 = vpop.f32.mrf.mxu0
      %1976 = vmatprep.mubr.bf16.mxu0 0
      %1977 = vmatmul.mubr.bf16.gmra.mxu0 %v1736
      %v1978 = vpop.f32.mrf.mxu0
      %v1979 = vadd.f32 0.0, %v1978
      %v1980 = vpop.f32.mrf.mxu0
      %v1981 = vpop.f32.mrf.mxu0
      %v1982 = vadd.f32 0.0, %v1981
      %v1983 = vpop.f32.mrf.mxu0
      %1984 = vmatprep.mubr.bf16.mxu0 0
      %1985 = vmatmul.mubr.bf16.gmra.mxu0 %v1737
      %v1986 = vpop.f32.mrf.mxu0
      %v1987 = vadd.f32 0.0, %v1986
      %v1988 = vpop.f32.mrf.mxu0
      %v1989 = vpop.f32.mrf.mxu0
      %v1990 = vadd.f32 0.0, %v1989
      %v1991 = vpop.f32.mrf.mxu0
      %1992 = vmatprep.mubr.bf16.mxu0 0
      %1993 = vmatmul.mubr.bf16.gmra.mxu0 %v1738
      %v1994 = vpop.f32.mrf.mxu0
      %v1995 = vadd.f32 0.0, %v1994
      %v1996 = vpop.f32.mrf.mxu0
      %v1997 = vpop.f32.mrf.mxu0
      %v1998 = vadd.f32 0.0, %v1997
      %v1999 = vpop.f32.mrf.mxu0
      %2000 = vmatprep.mubr.bf16.mxu0 0
      %2001 = vmatmul.mubr.bf16.gmra.mxu0 %v1739
      %v2002 = vpop.f32.mrf.mxu0
      %v2003 = vadd.f32 0.0, %v2002
      %v2004 = vpop.f32.mrf.mxu0
      %v2005 = vpop.f32.mrf.mxu0
      %v2006 = vadd.f32 0.0, %v2005
      %v2007 = vpop.f32.mrf.mxu0
      %2008 = vmatprep.mubr.bf16.mxu0 0
      %2009 = vmatmul.mubr.bf16.gmra.mxu0 %v1740
      %v2010 = vpop.f32.mrf.mxu0
      %v2011 = vadd.f32 0.0, %v2010
      %v2012 = vpop.f32.mrf.mxu0
      %v2013 = vpop.f32.mrf.mxu0
      %v2014 = vadd.f32 0.0, %v2013
      %v2015 = vpop.f32.mrf.mxu0
      %2016 = vmatprep.mubr.bf16.mxu0 0
      %2017 = vmatmul.mubr.bf16.gmra.mxu0 %v1741
      %v2018 = vpop.f32.mrf.mxu0
      %v2019 = vadd.f32 0.0, %v2018
      %v2020 = vpop.f32.mrf.mxu0
      %v2021 = vpop.f32.mrf.mxu0
      %v2022 = vadd.f32 0.0, %v2021
      %v2023 = vpop.f32.mrf.mxu0
      %2024 = vmatprep.mubr.bf16.mxu0 0
      %2025 = vmatmul.mubr.bf16.gmra.mxu0 %v1742
      %v2026 = vpop.f32.mrf.mxu0
      %v2027 = vadd.f32 0.0, %v2026
      %v2028 = vpop.f32.mrf.mxu0
      %v2029 = vpop.f32.mrf.mxu0
      %v2030 = vadd.f32 0.0, %v2029
      %v2031 = vpop.f32.mrf.mxu0
      %2032 = vmatprep.mubr.bf16.mxu0 0
      %2033 = vmatmul.mubr.bf16.gmra.mxu0 %v1743
      %v2034 = vpop.f32.mrf.mxu0
      %v2035 = vadd.f32 0.0, %v2034
      %v2036 = vpop.f32.mrf.mxu0
      %v2037 = vpop.f32.mrf.mxu0
      %v2038 = vadd.f32 0.0, %v2037
      %v2039 = vpop.f32.mrf.mxu0
      %2040 = vdwg.mxu0
      %v2041 = vadd.f32 %v1417, %v1851
      %v2042 = vadd.f32 %v1420, %v1854
      %v2043 = vadd.f32 %v1425, %v1859
      %v2044 = vadd.f32 %v1428, %v1862
      %v2045 = vadd.f32 %v1433, %v1867
      %v2046 = vadd.f32 %v1436, %v1870
      %v2047 = vadd.f32 %v1441, %v1875
      %v2048 = vadd.f32 %v1444, %v1878
      %v2049 = vadd.f32 %v1449, %v1883
      %v2050 = vadd.f32 %v1452, %v1886
      %v2051 = vadd.f32 %v1457, %v1891
      %v2052 = vadd.f32 %v1460, %v1894
      %v2053 = vadd.f32 %v1465, %v1899
      %v2054 = vadd.f32 %v1468, %v1902
      %v2055 = vadd.f32 %v1473, %v1907
      %v2056 = vadd.f32 %v1476, %v1910
      %v2057 = vadd.f32 %v1481, %v1915
      %v2058 = vadd.f32 %v1484, %v1918
      %v2059 = vadd.f32 %v1489, %v1923
      %v2060 = vadd.f32 %v1492, %v1926
      %v2061 = vadd.f32 %v1497, %v1931
      %v2062 = vadd.f32 %v1500, %v1934
      %v2063 = vadd.f32 %v1505, %v1939
      %v2064 = vadd.f32 %v1508, %v1942
      %v2065 = vadd.f32 %v1513, %v1947
      %v2066 = vadd.f32 %v1516, %v1950
      %v2067 = vadd.f32 %v1521, %v1955
      %v2068 = vadd.f32 %v1524, %v1958
      %v2069 = vadd.f32 %v1529, %v1963
      %v2070 = vadd.f32 %v1532, %v1966
      %v2071 = vadd.f32 %v1537, %v1971
      %v2072 = vadd.f32 %v1540, %v1974
      %v2073 = vadd.f32 %v1545, %v1979
      %v2074 = vadd.f32 %v1548, %v1982
      %v2075 = vadd.f32 %v1553, %v1987
      %v2076 = vadd.f32 %v1556, %v1990
      %v2077 = vadd.f32 %v1561, %v1995
      %v2078 = vadd.f32 %v1564, %v1998
      %v2079 = vadd.f32 %v1569, %v2003
      %v2080 = vadd.f32 %v1572, %v2006
      %v2081 = vadd.f32 %v1577, %v2011
      %v2082 = vadd.f32 %v1580, %v2014
      %v2083 = vadd.f32 %v1585, %v2019
      %v2084 = vadd.f32 %v1588, %v2022
      %v2085 = vadd.f32 %v1593, %v2027
      %v2086 = vadd.f32 %v1596, %v2030
      %v2087 = vadd.f32 %v1601, %v2035
      %v2088 = vadd.f32 %v1604, %v2038
      %v2090 = vrot.slane %v2088, 7
      %vm2139 = vcmask 1040384
      %v2140 = vrot.slane %v2041, 7
      %v2141 = vrot.slane %v2042, 7
      %v2142 = vsel %vm2139, %v2140, %v2141
      %v2143 = vrot.slane %v2043, 7
      %v2144 = vrot.slane %v2044, 7
      %v2145 = vsel %vm2139, %v2143, %v2144
      %v2146 = vrot.slane %v2045, 7
      %v2147 = vsel %vm2139, %v2144, %v2146
      %v2148 = vrot.slane %v2046, 7
      %v2149 = vrot.slane %v2047, 7
      %v2150 = vsel %vm2139, %v2148, %v2149
      %v2151 = vrot.slane %v2048, 7
      %v2152 = vsel %vm2139, %v2149, %v2151
      %v2153 = vrot.slane %v2049, 7
      %v2154 = vrot.slane %v2050, 7
      %v2155 = vsel %vm2139, %v2153, %v2154
      %v2156 = vrot.slane %v2051, 7
      %v2157 = vsel %vm2139, %v2154, %v2156
      %v2158 = vrot.slane %v2052, 7
      %v2159 = vrot.slane %v2053, 7
      %v2160 = vsel %vm2139, %v2158, %v2159
      %v2161 = vrot.slane %v2054, 7
      %v2162 = vsel %vm2139, %v2159, %v2161
      %v2163 = vrot.slane %v2055, 7
      %v2164 = vrot.slane %v2056, 7
      %v2165 = vsel %vm2139, %v2163, %v2164
      %v2166 = vrot.slane %v2057, 7
      %v2167 = vsel %vm2139, %v2164, %v2166
      %v2168 = vrot.slane %v2058, 7
      %v2169 = vrot.slane %v2059, 7
      %v2170 = vsel %vm2139, %v2168, %v2169
      %v2171 = vrot.slane %v2060, 7
      %v2172 = vsel %vm2139, %v2169, %v2171
      %v2173 = vrot.slane %v2061, 7
      %v2174 = vrot.slane %v2062, 7
      %v2175 = vsel %vm2139, %v2173, %v2174
      %v2176 = vrot.slane %v2063, 7
      %v2177 = vsel %vm2139, %v2174, %v2176
      %v2178 = vrot.slane %v2064, 7
      %v2179 = vrot.slane %v2065, 7
      %v2180 = vsel %vm2139, %v2178, %v2179
      %v2181 = vrot.slane %v2066, 7
      %v2182 = vsel %vm2139, %v2179, %v2181
      %v2183 = vrot.slane %v2067, 7
      %v2184 = vrot.slane %v2068, 7
      %v2185 = vsel %vm2139, %v2183, %v2184
      %v2186 = vrot.slane %v2069, 7
      %v2187 = vsel %vm2139, %v2184, %v2186
      %v2188 = vrot.slane %v2070, 7
      %v2189 = vrot.slane %v2071, 7
      %v2190 = vsel %vm2139, %v2188, %v2189
      %v2191 = vrot.slane %v2072, 7
      %v2192 = vsel %vm2139, %v2189, %v2191
      %v2193 = vrot.slane %v2073, 7
      %v2194 = vrot.slane %v2074, 7
      %v2195 = vsel %vm2139, %v2193, %v2194
      %v2196 = vrot.slane %v2075, 7
      %v2197 = vsel %vm2139, %v2194, %v2196
      %v2198 = vrot.slane %v2076, 7
      %v2199 = vrot.slane %v2077, 7
      %v2200 = vsel %vm2139, %v2198, %v2199
      %v2201 = vrot.slane %v2078, 7
      %v2202 = vsel %vm2139, %v2199, %v2201
      %v2203 = vrot.slane %v2079, 7
      %v2204 = vrot.slane %v2080, 7
      %v2205 = vsel %vm2139, %v2203, %v2204
      %v2206 = vrot.slane %v2081, 7
      %v2207 = vsel %vm2139, %v2204, %v2206
      %v2208 = vrot.slane %v2082, 7
      %v2209 = vrot.slane %v2083, 7
      %v2210 = vsel %vm2139, %v2208, %v2209
      %v2211 = vrot.slane %v2084, 7
      %v2212 = vsel %vm2139, %v2209, %v2211
      %v2213 = vrot.slane %v2085, 7
      %v2214 = vrot.slane %v2086, 7
      %v2215 = vsel %vm2139, %v2213, %v2214
      %v2216 = vrot.slane %v2087, 7
      %v2217 = vsel %vm2139, %v2214, %v2216
      %v2250 = vsel %vm2139, %v2090, %v2140
      %v2251 = vadd.f32 %v2250, 0.0
      %v2252 = vadd.f32 %v2142, 0.0
      %v2253 = vadd.f32 %v2145, 0.0
      %v2254 = vadd.f32 %v2147, 0.0
      %v2255 = vadd.f32 %v2150, 0.0
      %v2256 = vadd.f32 %v2152, 0.0
      %v2257 = vadd.f32 %v2155, 0.0
      %v2258 = vadd.f32 %v2157, 0.0
      %v2259 = vadd.f32 %v2160, 0.0
      %v2260 = vadd.f32 %v2162, 0.0
      %v2261 = vadd.f32 %v2165, 0.0
      %v2262 = vadd.f32 %v2167, 0.0
      %v2263 = vadd.f32 %v2170, 0.0
      %v2264 = vadd.f32 %v2172, 0.0
      %v2265 = vadd.f32 %v2175, 0.0
      %v2266 = vadd.f32 %v2177, 0.0
      %v2267 = vadd.f32 %v2180, 0.0
      %v2268 = vadd.f32 %v2182, 0.0
      %v2269 = vadd.f32 %v2185, 0.0
      %v2270 = vadd.f32 %v2187, 0.0
      %v2271 = vadd.f32 %v2190, 0.0
      %v2272 = vadd.f32 %v2192, 0.0
      %v2273 = vadd.f32 %v2195, 0.0
      %v2274 = vadd.f32 %v2197, 0.0
      %v2275 = vadd.f32 %v2200, 0.0
      %v2276 = vadd.f32 %v2202, 0.0
      %v2277 = vadd.f32 %v2205, 0.0
      %v2278 = vadd.f32 %v2207, 0.0
      %v2279 = vadd.f32 %v2210, 0.0
      %v2280 = vadd.f32 %v2212, 0.0
      %v2281 = vadd.f32 %v2215, 0.0
      %v2282 = vadd.f32 %v2217, 0.0
      %s2283 = scalar_lea.vmem %s1, 64
      %v2284 = vld [vmem:[%s2283] sm:$0xf]
      %v2285 = vld [vmem:[%s2283 + $0x4] sm:$0xf]
      %v2286 = vld [vmem:[%s2283 + $0x8] sm:$0xf]
      %v2287 = vld [vmem:[%s2283 + $0xc] sm:$0xf]
      %v2288 = vld [vmem:[%s2283 + $0x10] sm:$0xf]
      %v2289 = vld [vmem:[%s2283 + $0x14] sm:$0xf]
      %v2290 = vld [vmem:[%s2283 + $0x18] sm:$0xf]
      %v2291 = vld [vmem:[%s2283 + $0x1c] sm:$0xf]
      %v2292 = vld [vmem:[%s2283 + $0x20] sm:$0xf]
      %v2293 = vld [vmem:[%s2283 + $0x24] sm:$0xf]
      %v2294 = vld [vmem:[%s2283 + $0x28] sm:$0xf]
      %v2295 = vld [vmem:[%s2283 + $0x2c] sm:$0xf]
      %v2296 = vld [vmem:[%s2283 + $0x30] sm:$0xf]
      %v2297 = vld [vmem:[%s2283 + $0x34] sm:$0xf]
      %v2298 = vld [vmem:[%s2283 + $0x38] sm:$0xf]
      %v2299 = vld [vmem:[%s2283 + $0x3c] sm:$0xf]
      %s2300 = scalar_lea.vmem %s1, 256
      %v2301 = vld [vmem:[%s2300] sm:$0xf]
      %v2302 = vld [vmem:[%s2300 + $0x4] sm:$0xf]
      %v2303 = vld [vmem:[%s2300 + $0x8] sm:$0xf]
      %v2304 = vld [vmem:[%s2300 + $0xc] sm:$0xf]
      %v2305 = vld [vmem:[%s2300 + $0x10] sm:$0xf]
      %v2306 = vld [vmem:[%s2300 + $0x14] sm:$0xf]
      %v2307 = vld [vmem:[%s2300 + $0x18] sm:$0xf]
      %v2308 = vld [vmem:[%s2300 + $0x1c] sm:$0xf]
      %v2309 = vld [vmem:[%s2300 + $0x20] sm:$0xf]
      %v2310 = vld [vmem:[%s2300 + $0x24] sm:$0xf]
      %v2311 = vld [vmem:[%s2300 + $0x28] sm:$0xf]
      %v2312 = vld [vmem:[%s2300 + $0x2c] sm:$0xf]
      %v2313 = vld [vmem:[%s2300 + $0x30] sm:$0xf]
      %v2314 = vld [vmem:[%s2300 + $0x34] sm:$0xf]
      %v2315 = vld [vmem:[%s2300 + $0x38] sm:$0xf]
      %v2316 = vld [vmem:[%s2300 + $0x3c] sm:$0xf]
      %v2333 = vunpack.c.l.b16 %v2301
      %v2334 = vunpack.c.l.b16 %v2302
      %v2335 = vunpack.c.l.b16 %v2303
      %v2336 = vunpack.c.l.b16 %v2304
      %v2337 = vunpack.c.l.b16 %v2305
      %v2338 = vunpack.c.l.b16 %v2306
      %v2339 = vunpack.c.l.b16 %v2307
      %v2340 = vunpack.c.l.b16 %v2308
      %v2341 = vunpack.c.l.b16 %v2309
      %v2342 = vunpack.c.l.b16 %v2310
      %v2343 = vunpack.c.l.b16 %v2311
      %v2344 = vunpack.c.l.b16 %v2312
      %v2345 = vunpack.c.l.b16 %v2313
      %v2346 = vunpack.c.l.b16 %v2314
      %v2347 = vunpack.c.l.b16 %v2315
      %v2348 = vunpack.c.l.b16 %v2316
      %v2349 = vpack.c.b16 %v2334, %v2333
      %v2350 = vpack.c.b16 %v2336, %v2335
      %v2351 = vpack.c.b16 %v2338, %v2337
      %v2352 = vpack.c.b16 %v2340, %v2339
      %v2353 = vpack.c.b16 %v2342, %v2341
      %v2354 = vpack.c.b16 %v2344, %v2343
      %v2355 = vpack.c.b16 %v2346, %v2345
      %v2356 = vpack.c.b16 %v2348, %v2347
      %2365 = vmatprep.subr.bf16.mxu0 0
      %2366 = vmatpush1.bf16.msra.mxu0 %v2356
      %2367 = vmatprep.subr.bf16.mxu0 0
      %2368 = vmatpush1.bf16.msra.mxu0 %v2355
      %2369 = vmatprep.subr.bf16.mxu0 0
      %2370 = vmatpush1.bf16.msra.mxu0 %v2354
      %2371 = vmatprep.subr.bf16.mxu0 0
      %2372 = vmatpush1.bf16.msra.mxu0 %v2353
      %2373 = vmatprep.subr.bf16.mxu0 0
      %2374 = vmatpush1.bf16.msra.mxu0 %v2352
      %2375 = vmatprep.subr.bf16.mxu0 0
      %2376 = vmatpush1.bf16.msra.mxu0 %v2351
      %2377 = vmatprep.subr.bf16.mxu0 0
      %2378 = vmatpush1.bf16.msra.mxu0 %v2350
      %2379 = vmatprep.subr.bf16.mxu0 0
      %2380 = vmatpush1.bf16.msra.mxu0 %v2349
      %2381 = vmatprep.subr.bf16.mxu0 0
      %2382 = vmatpush2.bf16.msra.mxu0 0
      %2383 = vmatprep.subr.bf16.mxu0 0
      %2384 = vmatpush2.bf16.msra.mxu0 0
      %2385 = vmatprep.subr.bf16.mxu0 0
      %2386 = vmatpush2.bf16.msra.mxu0 0
      %2387 = vmatprep.subr.bf16.mxu0 0
      %2388 = vmatpush2.bf16.msra.mxu0 0
      %2389 = vmatprep.subr.bf16.mxu0 0
      %2390 = vmatpush2.bf16.msra.mxu0 0
      %2391 = vmatprep.subr.bf16.mxu0 0
      %2392 = vmatpush2.bf16.msra.mxu0 0
      %2393 = vmatprep.subr.bf16.mxu0 0
      %2394 = vmatpush2.bf16.msra.mxu0 0
      %2395 = vmatprep.subr.bf16.mxu0 0
      %2396 = vmatpush2.bf16.msra.mxu0 0
      %2397 = vmatprep.mubr.bf16.mxu0 0
      %2398 = vmatmul.mubr.bf16.gmra.mxu0 %v869
      %v2399 = vpop.f32.mrf.mxu0
      %v2400 = vadd.f32 0.0, %v2399
      %v2401 = vpop.f32.mrf.mxu0
      %v2402 = vpop.f32.mrf.mxu0
      %v2403 = vadd.f32 0.0, %v2402
      %v2404 = vpop.f32.mrf.mxu0
      %2405 = vmatprep.mubr.bf16.mxu0 0
      %2406 = vmatmul.mubr.bf16.gmra.mxu0 %v870
      %v2407 = vpop.f32.mrf.mxu0
      %v2408 = vpop.f32.mrf.mxu0
      %v2409 = vpop.f32.mrf.mxu0
      %v2410 = vadd.f32 0.0, %v2409
      %v2411 = vpop.f32.mrf.mxu0
      %2412 = vmatprep.mubr.bf16.mxu0 0
      %2413 = vmatmul.mubr.bf16.gmra.mxu0 %v871
      %v2414 = vpop.f32.mrf.mxu0
      %v2415 = vadd.f32 0.0, %v2414
      %v2416 = vpop.f32.mrf.mxu0
      %v2417 = vpop.f32.mrf.mxu0
      %v2418 = vpop.f32.mrf.mxu0
      %2419 = vmatprep.mubr.bf16.mxu0 0
      %2420 = vmatmul.mubr.bf16.gmra.mxu0 %v872
      %v2421 = vpop.f32.mrf.mxu0
      %v2422 = vadd.f32 0.0, %v2421
      %v2423 = vpop.f32.mrf.mxu0
      %v2424 = vpop.f32.mrf.mxu0
      %v2425 = vadd.f32 0.0, %v2424
      %v2426 = vpop.f32.mrf.mxu0
      %2427 = vmatprep.mubr.bf16.mxu0 0
      %2428 = vmatmul.mubr.bf16.gmra.mxu0 %v873
      %v2429 = vpop.f32.mrf.mxu0
      %v2430 = vpop.f32.mrf.mxu0
      %v2431 = vpop.f32.mrf.mxu0
      %v2432 = vadd.f32 0.0, %v2431
      %v2433 = vpop.f32.mrf.mxu0
      %2434 = vmatprep.mubr.bf16.mxu0 0
      %2435 = vmatmul.mubr.bf16.gmra.mxu0 %v874
      %v2436 = vpop.f32.mrf.mxu0
      %v2437 = vadd.f32 0.0, %v2436
      %v2438 = vpop.f32.mrf.mxu0
      %v2439 = vpop.f32.mrf.mxu0
      %v2440 = vpop.f32.mrf.mxu0
      %2441 = vmatprep.mubr.bf16.mxu0 0
      %2442 = vmatmul.mubr.bf16.gmra.mxu0 %v875
      %v2443 = vpop.f32.mrf.mxu0
      %v2444 = vadd.f32 0.0, %v2443
      %v2445 = vpop.f32.mrf.mxu0
      %v2446 = vpop.f32.mrf.mxu0
      %v2447 = vadd.f32 0.0, %v2446
      %v2448 = vpop.f32.mrf.mxu0
      %2449 = vmatprep.mubr.bf16.mxu0 0
      %2450 = vmatmul.mubr.bf16.gmra.mxu0 %v876
      %v2451 = vpop.f32.mrf.mxu0
      %v2452 = vpop.f32.mrf.mxu0
      %v2453 = vpop.f32.mrf.mxu0
      %v2454 = vadd.f32 0.0, %v2453
      %v2455 = vpop.f32.mrf.mxu0
      %2456 = vmatprep.mubr.bf16.mxu0 0
      %2457 = vmatmul.mubr.bf16.gmra.mxu0 %v877
      %v2458 = vpop.f32.mrf.mxu0
      %v2459 = vadd.f32 0.0, %v2458
      %v2460 = vpop.f32.mrf.mxu0
      %v2461 = vpop.f32.mrf.mxu0
      %v2462 = vpop.f32.mrf.mxu0
      %2463 = vmatprep.mubr.bf16.mxu0 0
      %2464 = vmatmul.mubr.bf16.gmra.mxu0 %v878
      %v2465 = vpop.f32.mrf.mxu0
      %v2466 = vadd.f32 0.0, %v2465
      %v2467 = vpop.f32.mrf.mxu0
      %v2468 = vpop.f32.mrf.mxu0
      %v2469 = vadd.f32 0.0, %v2468
      %v2470 = vpop.f32.mrf.mxu0
      %2471 = vmatprep.mubr.bf16.mxu0 0
      %2472 = vmatmul.mubr.bf16.gmra.mxu0 %v879
      %v2473 = vpop.f32.mrf.mxu0
      %v2474 = vpop.f32.mrf.mxu0
      %v2475 = vpop.f32.mrf.mxu0
      %v2476 = vadd.f32 0.0, %v2475
      %v2477 = vpop.f32.mrf.mxu0
      %2478 = vmatprep.mubr.bf16.mxu0 0
      %2479 = vmatmul.mubr.bf16.gmra.mxu0 %v880
      %v2480 = vpop.f32.mrf.mxu0
      %v2481 = vadd.f32 0.0, %v2480
      %v2482 = vpop.f32.mrf.mxu0
      %v2483 = vpop.f32.mrf.mxu0
      %v2484 = vpop.f32.mrf.mxu0
      %2485 = vmatprep.mubr.bf16.mxu0 0
      %2486 = vmatmul.mubr.bf16.gmra.mxu0 %v881
      %v2487 = vpop.f32.mrf.mxu0
      %v2488 = vadd.f32 0.0, %v2487
      %v2489 = vpop.f32.mrf.mxu0
      %v2490 = vpop.f32.mrf.mxu0
      %v2491 = vadd.f32 0.0, %v2490
      %v2492 = vpop.f32.mrf.mxu0
      %2493 = vmatprep.mubr.bf16.mxu0 0
      %2494 = vmatmul.mubr.bf16.gmra.mxu0 %v882
      %v2495 = vpop.f32.mrf.mxu0
      %v2496 = vpop.f32.mrf.mxu0
      %v2497 = vpop.f32.mrf.mxu0
      %v2498 = vadd.f32 0.0, %v2497
      %v2499 = vpop.f32.mrf.mxu0
      %2500 = vmatprep.mubr.bf16.mxu0 0
      %2501 = vmatmul.mubr.bf16.gmra.mxu0 %v883
      %v2502 = vpop.f32.mrf.mxu0
      %v2503 = vadd.f32 0.0, %v2502
      %v2504 = vpop.f32.mrf.mxu0
      %v2505 = vpop.f32.mrf.mxu0
      %v2506 = vpop.f32.mrf.mxu0
      %2507 = vmatprep.mubr.bf16.mxu0 0
      %2508 = vmatmul.mubr.bf16.gmra.mxu0 %v884
      %v2509 = vpop.f32.mrf.mxu0
      %v2510 = vadd.f32 0.0, %v2509
      %v2511 = vpop.f32.mrf.mxu0
      %v2512 = vpop.f32.mrf.mxu0
      %v2513 = vadd.f32 0.0, %v2512
      %v2514 = vpop.f32.mrf.mxu0
      %2515 = vmatprep.mubr.bf16.mxu0 0
      %2516 = vmatmul.mubr.bf16.gmra.mxu0 %v885
      %v2517 = vpop.f32.mrf.mxu0
      %v2518 = vpop.f32.mrf.mxu0
      %v2519 = vpop.f32.mrf.mxu0
      %v2520 = vadd.f32 0.0, %v2519
      %v2521 = vpop.f32.mrf.mxu0
      %2522 = vmatprep.mubr.bf16.mxu0 0
      %2523 = vmatmul.mubr.bf16.gmra.mxu0 %v886
      %v2524 = vpop.f32.mrf.mxu0
      %v2525 = vadd.f32 0.0, %v2524
      %v2526 = vpop.f32.mrf.mxu0
      %v2527 = vpop.f32.mrf.mxu0
      %v2528 = vpop.f32.mrf.mxu0
      %2529 = vmatprep.mubr.bf16.mxu0 0
      %2530 = vmatmul.mubr.bf16.gmra.mxu0 %v887
      %v2531 = vpop.f32.mrf.mxu0
      %v2532 = vadd.f32 0.0, %v2531
      %v2533 = vpop.f32.mrf.mxu0
      %v2534 = vpop.f32.mrf.mxu0
      %v2535 = vadd.f32 0.0, %v2534
      %v2536 = vpop.f32.mrf.mxu0
      %2537 = vmatprep.mubr.bf16.mxu0 0
      %2538 = vmatmul.mubr.bf16.gmra.mxu0 %v888
      %v2539 = vpop.f32.mrf.mxu0
      %v2540 = vpop.f32.mrf.mxu0
      %v2541 = vpop.f32.mrf.mxu0
      %v2542 = vadd.f32 0.0, %v2541
      %v2543 = vpop.f32.mrf.mxu0
      %2544 = vmatprep.mubr.bf16.mxu0 0
      %2545 = vmatmul.mubr.bf16.gmra.mxu0 %v889
      %v2546 = vpop.f32.mrf.mxu0
      %v2547 = vadd.f32 0.0, %v2546
      %v2548 = vpop.f32.mrf.mxu0
      %v2549 = vpop.f32.mrf.mxu0
      %v2550 = vpop.f32.mrf.mxu0
      %2551 = vmatprep.mubr.bf16.mxu0 0
      %2552 = vmatmul.mubr.bf16.gmra.mxu0 %v890
      %v2553 = vpop.f32.mrf.mxu0
      %v2554 = vadd.f32 0.0, %v2553
      %v2555 = vpop.f32.mrf.mxu0
      %v2556 = vpop.f32.mrf.mxu0
      %v2557 = vadd.f32 0.0, %v2556
      %v2558 = vpop.f32.mrf.mxu0
      %2559 = vmatprep.mubr.bf16.mxu0 0
      %2560 = vmatmul.mubr.bf16.gmra.mxu0 %v891
      %v2561 = vpop.f32.mrf.mxu0
      %v2562 = vpop.f32.mrf.mxu0
      %v2563 = vpop.f32.mrf.mxu0
      %v2564 = vadd.f32 0.0, %v2563
      %v2565 = vpop.f32.mrf.mxu0
      %2566 = vmatprep.mubr.bf16.mxu0 0
      %2567 = vmatmul.mubr.bf16.gmra.mxu0 %v892
      %v2568 = vpop.f32.mrf.mxu0
      %v2569 = vadd.f32 0.0, %v2568
      %v2570 = vpop.f32.mrf.mxu0
      %v2571 = vpop.f32.mrf.mxu0
      %v2572 = vpop.f32.mrf.mxu0
      %2573 = vdwg.mxu0
      %v2590 = vunpack.c.l.b16 %v2284
      %v2591 = vunpack.c.l.b16 %v2285
      %v2592 = vunpack.c.l.b16 %v2286
      %v2593 = vunpack.c.l.b16 %v2287
      %v2594 = vunpack.c.l.b16 %v2288
      %v2595 = vunpack.c.l.b16 %v2289
      %v2596 = vunpack.c.l.b16 %v2290
      %v2597 = vunpack.c.l.b16 %v2291
      %v2598 = vunpack.c.l.b16 %v2292
      %v2599 = vunpack.c.l.b16 %v2293
      %v2600 = vunpack.c.l.b16 %v2294
      %v2601 = vunpack.c.l.b16 %v2295
      %v2602 = vunpack.c.l.b16 %v2296
      %v2603 = vunpack.c.l.b16 %v2297
      %v2604 = vunpack.c.l.b16 %v2298
      %v2605 = vunpack.c.l.b16 %v2299
      %v2606 = vpack.c.b16 %v2591, %v2590
      %v2607 = vpack.c.b16 %v2593, %v2592
      %v2608 = vpack.c.b16 %v2595, %v2594
      %v2609 = vpack.c.b16 %v2597, %v2596
      %v2610 = vpack.c.b16 %v2599, %v2598
      %v2611 = vpack.c.b16 %v2601, %v2600
      %v2612 = vpack.c.b16 %v2603, %v2602
      %v2613 = vpack.c.b16 %v2605, %v2604
      %2622 = vmatprep.subr.bf16.mxu0 0
      %2623 = vmatpush1.bf16.msra.mxu0 %v2613
      %2624 = vmatprep.subr.bf16.mxu0 0
      %2625 = vmatpush1.bf16.msra.mxu0 %v2612
      %2626 = vmatprep.subr.bf16.mxu0 0
      %2627 = vmatpush1.bf16.msra.mxu0 %v2611
      %2628 = vmatprep.subr.bf16.mxu0 0
      %2629 = vmatpush1.bf16.msra.mxu0 %v2610
      %2630 = vmatprep.subr.bf16.mxu0 0
      %2631 = vmatpush1.bf16.msra.mxu0 %v2609
      %2632 = vmatprep.subr.bf16.mxu0 0
      %2633 = vmatpush1.bf16.msra.mxu0 %v2608
      %2634 = vmatprep.subr.bf16.mxu0 0
      %2635 = vmatpush1.bf16.msra.mxu0 %v2607
      %2636 = vmatprep.subr.bf16.mxu0 0
      %2637 = vmatpush1.bf16.msra.mxu0 %v2606
      %2638 = vmatprep.subr.bf16.mxu0 0
      %2639 = vmatpush2.bf16.msra.mxu0 0
      %2640 = vmatprep.subr.bf16.mxu0 0
      %2641 = vmatpush2.bf16.msra.mxu0 0
      %2642 = vmatprep.subr.bf16.mxu0 0
      %2643 = vmatpush2.bf16.msra.mxu0 0
      %2644 = vmatprep.subr.bf16.mxu0 0
      %2645 = vmatpush2.bf16.msra.mxu0 0
      %2646 = vmatprep.subr.bf16.mxu0 0
      %2647 = vmatpush2.bf16.msra.mxu0 0
      %2648 = vmatprep.subr.bf16.mxu0 0
      %2649 = vmatpush2.bf16.msra.mxu0 0
      %2650 = vmatprep.subr.bf16.mxu0 0
      %2651 = vmatpush2.bf16.msra.mxu0 0
      %2652 = vmatprep.subr.bf16.mxu0 0
      %2653 = vmatpush2.bf16.msra.mxu0 0
      %2654 = vmatprep.mubr.bf16.mxu0 0
      %2655 = vmatmul.mubr.bf16.gmra.mxu0 %v1286
      %v2656 = vpop.f32.mrf.mxu0
      %v2657 = vadd.f32 %v2400, %v2656
      %v2658 = vpop.f32.mrf.mxu0
      %v2659 = vpop.f32.mrf.mxu0
      %v2660 = vadd.f32 %v2403, %v2659
      %v2661 = vpop.f32.mrf.mxu0
      %2662 = vmatprep.mubr.bf16.mxu0 0
      %2663 = vmatmul.mubr.bf16.gmra.mxu0 %v1287
      %v2664 = vpop.f32.mrf.mxu0
      %v2665 = vpop.f32.mrf.mxu0
      %v2666 = vpop.f32.mrf.mxu0
      %v2667 = vadd.f32 %v2410, %v2666
      %v2668 = vpop.f32.mrf.mxu0
      %2669 = vmatprep.mubr.bf16.mxu0 0
      %2670 = vmatmul.mubr.bf16.gmra.mxu0 %v1288
      %v2671 = vpop.f32.mrf.mxu0
      %v2672 = vadd.f32 %v2415, %v2671
      %v2673 = vpop.f32.mrf.mxu0
      %v2674 = vpop.f32.mrf.mxu0
      %v2675 = vpop.f32.mrf.mxu0
      %2676 = vmatprep.mubr.bf16.mxu0 0
      %2677 = vmatmul.mubr.bf16.gmra.mxu0 %v1289
      %v2678 = vpop.f32.mrf.mxu0
      %v2679 = vadd.f32 %v2422, %v2678
      %v2680 = vpop.f32.mrf.mxu0
      %v2681 = vpop.f32.mrf.mxu0
      %v2682 = vadd.f32 %v2425, %v2681
      %v2683 = vpop.f32.mrf.mxu0
      %2684 = vmatprep.mubr.bf16.mxu0 0
      %2685 = vmatmul.mubr.bf16.gmra.mxu0 %v1290
      %v2686 = vpop.f32.mrf.mxu0
      %v2687 = vpop.f32.mrf.mxu0
      %v2688 = vpop.f32.mrf.mxu0
      %v2689 = vadd.f32 %v2432, %v2688
      %v2690 = vpop.f32.mrf.mxu0
      %2691 = vmatprep.mubr.bf16.mxu0 0
      %2692 = vmatmul.mubr.bf16.gmra.mxu0 %v1291
      %v2693 = vpop.f32.mrf.mxu0
      %v2694 = vadd.f32 %v2437, %v2693
      %v2695 = vpop.f32.mrf.mxu0
      %v2696 = vpop.f32.mrf.mxu0
      %v2697 = vpop.f32.mrf.mxu0
      %2698 = vmatprep.mubr.bf16.mxu0 0
      %2699 = vmatmul.mubr.bf16.gmra.mxu0 %v1292
      %v2700 = vpop.f32.mrf.mxu0
      %v2701 = vadd.f32 %v2444, %v2700
      %v2702 = vpop.f32.mrf.mxu0
      %v2703 = vpop.f32.mrf.mxu0
      %v2704 = vadd.f32 %v2447, %v2703
      %v2705 = vpop.f32.mrf.mxu0
      %2706 = vmatprep.mubr.bf16.mxu0 0
      %2707 = vmatmul.mubr.bf16.gmra.mxu0 %v1293
      %v2708 = vpop.f32.mrf.mxu0
      %v2709 = vpop.f32.mrf.mxu0
      %v2710 = vpop.f32.mrf.mxu0
      %v2711 = vadd.f32 %v2454, %v2710
      %v2712 = vpop.f32.mrf.mxu0
      %2713 = vmatprep.mubr.bf16.mxu0 0
      %2714 = vmatmul.mubr.bf16.gmra.mxu0 %v1294
      %v2715 = vpop.f32.mrf.mxu0
      %v2716 = vadd.f32 %v2459, %v2715
      %v2717 = vpop.f32.mrf.mxu0
      %v2718 = vpop.f32.mrf.mxu0
      %v2719 = vpop.f32.mrf.mxu0
      %2720 = vmatprep.mubr.bf16.mxu0 0
      %2721 = vmatmul.mubr.bf16.gmra.mxu0 %v1295
      %v2722 = vpop.f32.mrf.mxu0
      %v2723 = vadd.f32 %v2466, %v2722
      %v2724 = vpop.f32.mrf.mxu0
      %v2725 = vpop.f32.mrf.mxu0
      %v2726 = vadd.f32 %v2469, %v2725
      %v2727 = vpop.f32.mrf.mxu0
      %2728 = vmatprep.mubr.bf16.mxu0 0
      %2729 = vmatmul.mubr.bf16.gmra.mxu0 %v1296
      %v2730 = vpop.f32.mrf.mxu0
      %v2731 = vpop.f32.mrf.mxu0
      %v2732 = vpop.f32.mrf.mxu0
      %v2733 = vadd.f32 %v2476, %v2732
      %v2734 = vpop.f32.mrf.mxu0
      %2735 = vmatprep.mubr.bf16.mxu0 0
      %2736 = vmatmul.mubr.bf16.gmra.mxu0 %v1297
      %v2737 = vpop.f32.mrf.mxu0
      %v2738 = vadd.f32 %v2481, %v2737
      %v2739 = vpop.f32.mrf.mxu0
      %v2740 = vpop.f32.mrf.mxu0
      %v2741 = vpop.f32.mrf.mxu0
      %2742 = vmatprep.mubr.bf16.mxu0 0
      %2743 = vmatmul.mubr.bf16.gmra.mxu0 %v1298
      %v2744 = vpop.f32.mrf.mxu0
      %v2745 = vadd.f32 %v2488, %v2744
      %v2746 = vpop.f32.mrf.mxu0
      %v2747 = vpop.f32.mrf.mxu0
      %v2748 = vadd.f32 %v2491, %v2747
      %v2749 = vpop.f32.mrf.mxu0
      %2750 = vmatprep.mubr.bf16.mxu0 0
      %2751 = vmatmul.mubr.bf16.gmra.mxu0 %v1299
      %v2752 = vpop.f32.mrf.mxu0
      %v2753 = vpop.f32.mrf.mxu0
      %v2754 = vpop.f32.mrf.mxu0
      %v2755 = vadd.f32 %v2498, %v2754
      %v2756 = vpop.f32.mrf.mxu0
      %2757 = vmatprep.mubr.bf16.mxu0 0
      %2758 = vmatmul.mubr.bf16.gmra.mxu0 %v1300
      %v2759 = vpop.f32.mrf.mxu0
      %v2760 = vadd.f32 %v2503, %v2759
      %v2761 = vpop.f32.mrf.mxu0
      %v2762 = vpop.f32.mrf.mxu0
      %v2763 = vpop.f32.mrf.mxu0
      %2764 = vmatprep.mubr.bf16.mxu0 0
      %2765 = vmatmul.mubr.bf16.gmra.mxu0 %v1301
      %v2766 = vpop.f32.mrf.mxu0
      %v2767 = vadd.f32 %v2510, %v2766
      %v2768 = vpop.f32.mrf.mxu0
      %v2769 = vpop.f32.mrf.mxu0
      %v2770 = vadd.f32 %v2513, %v2769
      %v2771 = vpop.f32.mrf.mxu0
      %2772 = vmatprep.mubr.bf16.mxu0 0
      %2773 = vmatmul.mubr.bf16.gmra.mxu0 %v1302
      %v2774 = vpop.f32.mrf.mxu0
      %v2775 = vpop.f32.mrf.mxu0
      %v2776 = vpop.f32.mrf.mxu0
      %v2777 = vadd.f32 %v2520, %v2776
      %v2778 = vpop.f32.mrf.mxu0
      %2779 = vmatprep.mubr.bf16.mxu0 0
      %2780 = vmatmul.mubr.bf16.gmra.mxu0 %v1303
      %v2781 = vpop.f32.mrf.mxu0
      %v2782 = vadd.f32 %v2525, %v2781
      %v2783 = vpop.f32.mrf.mxu0
      %v2784 = vpop.f32.mrf.mxu0
      %v2785 = vpop.f32.mrf.mxu0
      %2786 = vmatprep.mubr.bf16.mxu0 0
      %2787 = vmatmul.mubr.bf16.gmra.mxu0 %v1304
      %v2788 = vpop.f32.mrf.mxu0
      %v2789 = vadd.f32 %v2532, %v2788
      %v2790 = vpop.f32.mrf.mxu0
      %v2791 = vpop.f32.mrf.mxu0
      %v2792 = vadd.f32 %v2535, %v2791
      %v2793 = vpop.f32.mrf.mxu0
      %2794 = vmatprep.mubr.bf16.mxu0 0
      %2795 = vmatmul.mubr.bf16.gmra.mxu0 %v1305
      %v2796 = vpop.f32.mrf.mxu0
      %v2797 = vpop.f32.mrf.mxu0
      %v2798 = vpop.f32.mrf.mxu0
      %v2799 = vadd.f32 %v2542, %v2798
      %v2800 = vpop.f32.mrf.mxu0
      %2801 = vmatprep.mubr.bf16.mxu0 0
      %2802 = vmatmul.mubr.bf16.gmra.mxu0 %v1306
      %v2803 = vpop.f32.mrf.mxu0
      %v2804 = vadd.f32 %v2547, %v2803
      %v2805 = vpop.f32.mrf.mxu0
      %v2806 = vpop.f32.mrf.mxu0
      %v2807 = vpop.f32.mrf.mxu0
      %2808 = vmatprep.mubr.bf16.mxu0 0
      %2809 = vmatmul.mubr.bf16.gmra.mxu0 %v1307
      %v2810 = vpop.f32.mrf.mxu0
      %v2811 = vadd.f32 %v2554, %v2810
      %v2812 = vpop.f32.mrf.mxu0
      %v2813 = vpop.f32.mrf.mxu0
      %v2814 = vadd.f32 %v2557, %v2813
      %v2815 = vpop.f32.mrf.mxu0
      %2816 = vmatprep.mubr.bf16.mxu0 0
      %2817 = vmatmul.mubr.bf16.gmra.mxu0 %v1308
      %v2818 = vpop.f32.mrf.mxu0
      %v2819 = vpop.f32.mrf.mxu0
      %v2820 = vpop.f32.mrf.mxu0
      %v2821 = vadd.f32 %v2564, %v2820
      %v2822 = vpop.f32.mrf.mxu0
      %2823 = vmatprep.mubr.bf16.mxu0 0
      %2824 = vmatmul.mubr.bf16.gmra.mxu0 %v1309
      %v2825 = vpop.f32.mrf.mxu0
      %v2826 = vadd.f32 %v2569, %v2825
      %v2827 = vpop.f32.mrf.mxu0
      %v2828 = vpop.f32.mrf.mxu0
      %v2829 = vpop.f32.mrf.mxu0
      %2830 = vdwg.mxu0
      %s2831 = scalar_lea.vmem %s1, 448
      %v2832 = vld [vmem:[%s2831] sm:$0xf]
      %v2833 = vld [vmem:[%s2831 + $0x4] sm:$0xf]
      %v2834 = vld [vmem:[%s2831 + $0x8] sm:$0xf]
      %v2835 = vld [vmem:[%s2831 + $0xc] sm:$0xf]
      %v2836 = vld [vmem:[%s2831 + $0x10] sm:$0xf]
      %v2837 = vld [vmem:[%s2831 + $0x14] sm:$0xf]
      %v2838 = vld [vmem:[%s2831 + $0x18] sm:$0xf]
      %v2839 = vld [vmem:[%s2831 + $0x1c] sm:$0xf]
      %v2840 = vld [vmem:[%s2831 + $0x20] sm:$0xf]
      %v2841 = vld [vmem:[%s2831 + $0x24] sm:$0xf]
      %v2842 = vld [vmem:[%s2831 + $0x28] sm:$0xf]
      %v2843 = vld [vmem:[%s2831 + $0x2c] sm:$0xf]
      %v2844 = vld [vmem:[%s2831 + $0x30] sm:$0xf]
      %v2845 = vld [vmem:[%s2831 + $0x34] sm:$0xf]
      %v2846 = vld [vmem:[%s2831 + $0x38] sm:$0xf]
      %v2847 = vld [vmem:[%s2831 + $0x3c] sm:$0xf]
      %v2864 = vunpack.c.l.b16 %v2832
      %v2865 = vunpack.c.l.b16 %v2833
      %v2866 = vunpack.c.l.b16 %v2834
      %v2867 = vunpack.c.l.b16 %v2835
      %v2868 = vunpack.c.l.b16 %v2836
      %v2869 = vunpack.c.l.b16 %v2837
      %v2870 = vunpack.c.l.b16 %v2838
      %v2871 = vunpack.c.l.b16 %v2839
      %v2872 = vunpack.c.l.b16 %v2840
      %v2873 = vunpack.c.l.b16 %v2841
      %v2874 = vunpack.c.l.b16 %v2842
      %v2875 = vunpack.c.l.b16 %v2843
      %v2876 = vunpack.c.l.b16 %v2844
      %v2877 = vunpack.c.l.b16 %v2845
      %v2878 = vunpack.c.l.b16 %v2846
      %v2879 = vunpack.c.l.b16 %v2847
      %v2880 = vpack.c.b16 %v2865, %v2864
      %v2881 = vpack.c.b16 %v2867, %v2866
      %v2882 = vpack.c.b16 %v2869, %v2868
      %v2883 = vpack.c.b16 %v2871, %v2870
      %v2884 = vpack.c.b16 %v2873, %v2872
      %v2885 = vpack.c.b16 %v2875, %v2874
      %v2886 = vpack.c.b16 %v2877, %v2876
      %v2887 = vpack.c.b16 %v2879, %v2878
      %2896 = vmatprep.subr.bf16.mxu0 0
      %2897 = vmatpush1.bf16.msra.mxu0 %v2887
      %2898 = vmatprep.subr.bf16.mxu0 0
      %2899 = vmatpush1.bf16.msra.mxu0 %v2886
      %2900 = vmatprep.subr.bf16.mxu0 0
      %2901 = vmatpush1.bf16.msra.mxu0 %v2885
      %2902 = vmatprep.subr.bf16.mxu0 0
      %2903 = vmatpush1.bf16.msra.mxu0 %v2884
      %2904 = vmatprep.subr.bf16.mxu0 0
      %2905 = vmatpush1.bf16.msra.mxu0 %v2883
      %2906 = vmatprep.subr.bf16.mxu0 0
      %2907 = vmatpush1.bf16.msra.mxu0 %v2882
      %2908 = vmatprep.subr.bf16.mxu0 0
      %2909 = vmatpush1.bf16.msra.mxu0 %v2881
      %2910 = vmatprep.subr.bf16.mxu0 0
      %2911 = vmatpush1.bf16.msra.mxu0 %v2880
      %2912 = vmatprep.subr.bf16.mxu0 0
      %2913 = vmatpush2.bf16.msra.mxu0 0
      %2914 = vmatprep.subr.bf16.mxu0 0
      %2915 = vmatpush2.bf16.msra.mxu0 0
      %2916 = vmatprep.subr.bf16.mxu0 0
      %2917 = vmatpush2.bf16.msra.mxu0 0
      %2918 = vmatprep.subr.bf16.mxu0 0
      %2919 = vmatpush2.bf16.msra.mxu0 0
      %2920 = vmatprep.subr.bf16.mxu0 0
      %2921 = vmatpush2.bf16.msra.mxu0 0
      %2922 = vmatprep.subr.bf16.mxu0 0
      %2923 = vmatpush2.bf16.msra.mxu0 0
      %2924 = vmatprep.subr.bf16.mxu0 0
      %2925 = vmatpush2.bf16.msra.mxu0 0
      %2926 = vmatprep.subr.bf16.mxu0 0
      %2927 = vmatpush2.bf16.msra.mxu0 0
      %2928 = vmatprep.mubr.bf16.mxu0 0
      %2929 = vmatmul.mubr.bf16.gmra.mxu0 %v1720
      %v2930 = vpop.f32.mrf.mxu0
      %v2931 = vadd.f32 0.0, %v2930
      %v2932 = vpop.f32.mrf.mxu0
      %v2933 = vpop.f32.mrf.mxu0
      %v2934 = vadd.f32 0.0, %v2933
      %v2935 = vpop.f32.mrf.mxu0
      %2936 = vmatprep.mubr.bf16.mxu0 0
      %2937 = vmatmul.mubr.bf16.gmra.mxu0 %v1721
      %v2938 = vpop.f32.mrf.mxu0
      %v2939 = vpop.f32.mrf.mxu0
      %v2940 = vpop.f32.mrf.mxu0
      %v2941 = vadd.f32 0.0, %v2940
      %v2942 = vpop.f32.mrf.mxu0
      %2943 = vmatprep.mubr.bf16.mxu0 0
      %2944 = vmatmul.mubr.bf16.gmra.mxu0 %v1722
      %v2945 = vpop.f32.mrf.mxu0
      %v2946 = vadd.f32 0.0, %v2945
      %v2947 = vpop.f32.mrf.mxu0
      %v2948 = vpop.f32.mrf.mxu0
      %v2949 = vpop.f32.mrf.mxu0
      %2950 = vmatprep.mubr.bf16.mxu0 0
      %2951 = vmatmul.mubr.bf16.gmra.mxu0 %v1723
      %v2952 = vpop.f32.mrf.mxu0
      %v2953 = vadd.f32 0.0, %v2952
      %v2954 = vpop.f32.mrf.mxu0
      %v2955 = vpop.f32.mrf.mxu0
      %v2956 = vadd.f32 0.0, %v2955
      %v2957 = vpop.f32.mrf.mxu0
      %2958 = vmatprep.mubr.bf16.mxu0 0
      %2959 = vmatmul.mubr.bf16.gmra.mxu0 %v1724
      %v2960 = vpop.f32.mrf.mxu0
      %v2961 = vpop.f32.mrf.mxu0
      %v2962 = vpop.f32.mrf.mxu0
      %v2963 = vadd.f32 0.0, %v2962
      %v2964 = vpop.f32.mrf.mxu0
      %2965 = vmatprep.mubr.bf16.mxu0 0
      %2966 = vmatmul.mubr.bf16.gmra.mxu0 %v1725
      %v2967 = vpop.f32.mrf.mxu0
      %v2968 = vadd.f32 0.0, %v2967
      %v2969 = vpop.f32.mrf.mxu0
      %v2970 = vpop.f32.mrf.mxu0
      %v2971 = vpop.f32.mrf.mxu0
      %2972 = vmatprep.mubr.bf16.mxu0 0
      %2973 = vmatmul.mubr.bf16.gmra.mxu0 %v1726
      %v2974 = vpop.f32.mrf.mxu0
      %v2975 = vadd.f32 0.0, %v2974
      %v2976 = vpop.f32.mrf.mxu0
      %v2977 = vpop.f32.mrf.mxu0
      %v2978 = vadd.f32 0.0, %v2977
      %v2979 = vpop.f32.mrf.mxu0
      %2980 = vmatprep.mubr.bf16.mxu0 0
      %2981 = vmatmul.mubr.bf16.gmra.mxu0 %v1727
      %v2982 = vpop.f32.mrf.mxu0
      %v2983 = vpop.f32.mrf.mxu0
      %v2984 = vpop.f32.mrf.mxu0
      %v2985 = vadd.f32 0.0, %v2984
      %v2986 = vpop.f32.mrf.mxu0
      %2987 = vmatprep.mubr.bf16.mxu0 0
      %2988 = vmatmul.mubr.bf16.gmra.mxu0 %v1728
      %v2989 = vpop.f32.mrf.mxu0
      %v2990 = vadd.f32 0.0, %v2989
      %v2991 = vpop.f32.mrf.mxu0
      %v2992 = vpop.f32.mrf.mxu0
      %v2993 = vpop.f32.mrf.mxu0
      %2994 = vmatprep.mubr.bf16.mxu0 0
      %2995 = vmatmul.mubr.bf16.gmra.mxu0 %v1729
      %v2996 = vpop.f32.mrf.mxu0
      %v2997 = vadd.f32 0.0, %v2996
      %v2998 = vpop.f32.mrf.mxu0
      %v2999 = vpop.f32.mrf.mxu0
      %v3000 = vadd.f32 0.0, %v2999
      %v3001 = vpop.f32.mrf.mxu0
      %3002 = vmatprep.mubr.bf16.mxu0 0
      %3003 = vmatmul.mubr.bf16.gmra.mxu0 %v1730
      %v3004 = vpop.f32.mrf.mxu0
      %v3005 = vpop.f32.mrf.mxu0
      %v3006 = vpop.f32.mrf.mxu0
      %v3007 = vadd.f32 0.0, %v3006
      %v3008 = vpop.f32.mrf.mxu0
      %3009 = vmatprep.mubr.bf16.mxu0 0
      %3010 = vmatmul.mubr.bf16.gmra.mxu0 %v1731
      %v3011 = vpop.f32.mrf.mxu0
      %v3012 = vadd.f32 0.0, %v3011
      %v3013 = vpop.f32.mrf.mxu0
      %v3014 = vpop.f32.mrf.mxu0
      %v3015 = vpop.f32.mrf.mxu0
      %3016 = vmatprep.mubr.bf16.mxu0 0
      %3017 = vmatmul.mubr.bf16.gmra.mxu0 %v1732
      %v3018 = vpop.f32.mrf.mxu0
      %v3019 = vadd.f32 0.0, %v3018
      %v3020 = vpop.f32.mrf.mxu0
      %v3021 = vpop.f32.mrf.mxu0
      %v3022 = vadd.f32 0.0, %v3021
      %v3023 = vpop.f32.mrf.mxu0
      %3024 = vmatprep.mubr.bf16.mxu0 0
      %3025 = vmatmul.mubr.bf16.gmra.mxu0 %v1733
      %v3026 = vpop.f32.mrf.mxu0
      %v3027 = vpop.f32.mrf.mxu0
      %v3028 = vpop.f32.mrf.mxu0
      %v3029 = vadd.f32 0.0, %v3028
      %v3030 = vpop.f32.mrf.mxu0
      %3031 = vmatprep.mubr.bf16.mxu0 0
      %3032 = vmatmul.mubr.bf16.gmra.mxu0 %v1734
      %v3033 = vpop.f32.mrf.mxu0
      %v3034 = vadd.f32 0.0, %v3033
      %v3035 = vpop.f32.mrf.mxu0
      %v3036 = vpop.f32.mrf.mxu0
      %v3037 = vpop.f32.mrf.mxu0
      %3038 = vmatprep.mubr.bf16.mxu0 0
      %3039 = vmatmul.mubr.bf16.gmra.mxu0 %v1735
      %v3040 = vpop.f32.mrf.mxu0
      %v3041 = vadd.f32 0.0, %v3040
      %v3042 = vpop.f32.mrf.mxu0
      %v3043 = vpop.f32.mrf.mxu0
      %v3044 = vadd.f32 0.0, %v3043
      %v3045 = vpop.f32.mrf.mxu0
      %3046 = vmatprep.mubr.bf16.mxu0 0
      %3047 = vmatmul.mubr.bf16.gmra.mxu0 %v1736
      %v3048 = vpop.f32.mrf.mxu0
      %v3049 = vpop.f32.mrf.mxu0
      %v3050 = vpop.f32.mrf.mxu0
      %v3051 = vadd.f32 0.0, %v3050
      %v3052 = vpop.f32.mrf.mxu0
      %3053 = vmatprep.mubr.bf16.mxu0 0
      %3054 = vmatmul.mubr.bf16.gmra.mxu0 %v1737
      %v3055 = vpop.f32.mrf.mxu0
      %v3056 = vadd.f32 0.0, %v3055
      %v3057 = vpop.f32.mrf.mxu0
      %v3058 = vpop.f32.mrf.mxu0
      %v3059 = vpop.f32.mrf.mxu0
      %3060 = vmatprep.mubr.bf16.mxu0 0
      %3061 = vmatmul.mubr.bf16.gmra.mxu0 %v1738
      %v3062 = vpop.f32.mrf.mxu0
      %v3063 = vadd.f32 0.0, %v3062
      %v3064 = vpop.f32.mrf.mxu0
      %v3065 = vpop.f32.mrf.mxu0
      %v3066 = vadd.f32 0.0, %v3065
      %v3067 = vpop.f32.mrf.mxu0
      %3068 = vmatprep.mubr.bf16.mxu0 0
      %3069 = vmatmul.mubr.bf16.gmra.mxu0 %v1739
      %v3070 = vpop.f32.mrf.mxu0
      %v3071 = vpop.f32.mrf.mxu0
      %v3072 = vpop.f32.mrf.mxu0
      %v3073 = vadd.f32 0.0, %v3072
      %v3074 = vpop.f32.mrf.mxu0
      %3075 = vmatprep.mubr.bf16.mxu0 0
      %3076 = vmatmul.mubr.bf16.gmra.mxu0 %v1740
      %v3077 = vpop.f32.mrf.mxu0
      %v3078 = vadd.f32 0.0, %v3077
      %v3079 = vpop.f32.mrf.mxu0
      %v3080 = vpop.f32.mrf.mxu0
      %v3081 = vpop.f32.mrf.mxu0
      %3082 = vmatprep.mubr.bf16.mxu0 0
      %3083 = vmatmul.mubr.bf16.gmra.mxu0 %v1741
      %v3084 = vpop.f32.mrf.mxu0
      %v3085 = vadd.f32 0.0, %v3084
      %v3086 = vpop.f32.mrf.mxu0
      %v3087 = vpop.f32.mrf.mxu0
      %v3088 = vadd.f32 0.0, %v3087
      %v3089 = vpop.f32.mrf.mxu0
      %3090 = vmatprep.mubr.bf16.mxu0 0
      %3091 = vmatmul.mubr.bf16.gmra.mxu0 %v1742
      %v3092 = vpop.f32.mrf.mxu0
      %v3093 = vpop.f32.mrf.mxu0
      %v3094 = vpop.f32.mrf.mxu0
      %v3095 = vadd.f32 0.0, %v3094
      %v3096 = vpop.f32.mrf.mxu0
      %3097 = vmatprep.mubr.bf16.mxu0 0
      %3098 = vmatmul.mubr.bf16.gmra.mxu0 %v1743
      %v3099 = vpop.f32.mrf.mxu0
      %v3100 = vadd.f32 0.0, %v3099
      %v3101 = vpop.f32.mrf.mxu0
      %v3102 = vpop.f32.mrf.mxu0
      %v3103 = vpop.f32.mrf.mxu0
      %3104 = vdwg.mxu0
      %v3105 = vadd.f32 %v2657, %v2931
      %v3106 = vadd.f32 %v2660, %v2934
      %v3107 = vadd.f32 %v2667, %v2941
      %v3108 = vadd.f32 %v2672, %v2946
      %v3109 = vadd.f32 %v2679, %v2953
      %v3110 = vadd.f32 %v2682, %v2956
      %v3111 = vadd.f32 %v2689, %v2963
      %v3112 = vadd.f32 %v2694, %v2968
      %v3113 = vadd.f32 %v2701, %v2975
      %v3114 = vadd.f32 %v2704, %v2978
      %v3115 = vadd.f32 %v2711, %v2985
      %v3116 = vadd.f32 %v2716, %v2990
      %v3117 = vadd.f32 %v2723, %v2997
      %v3118 = vadd.f32 %v2726, %v3000
      %v3119 = vadd.f32 %v2733, %v3007
      %v3120 = vadd.f32 %v2738, %v3012
      %v3121 = vadd.f32 %v2745, %v3019
      %v3122 = vadd.f32 %v2748, %v3022
      %v3123 = vadd.f32 %v2755, %v3029
      %v3124 = vadd.f32 %v2760, %v3034
      %v3125 = vadd.f32 %v2767, %v3041
      %v3126 = vadd.f32 %v2770, %v3044
      %v3127 = vadd.f32 %v2777, %v3051
      %v3128 = vadd.f32 %v2782, %v3056
      %v3129 = vadd.f32 %v2789, %v3063
      %v3130 = vadd.f32 %v2792, %v3066
      %v3131 = vadd.f32 %v2799, %v3073
      %v3132 = vadd.f32 %v2804, %v3078
      %v3133 = vadd.f32 %v2811, %v3085
      %v3134 = vadd.f32 %v2814, %v3088
      %v3135 = vadd.f32 %v2821, %v3095
      %v3136 = vadd.f32 %v2826, %v3100
      %v3137 = vadd.f32 %v2251, %v3105
      %v3138 = vadd.f32 %v2252, %v3106
      %v3139 = vadd.f32 %v2253, %v3107
      %v3140 = vadd.f32 %v2254, %v3108
      %v3141 = vadd.f32 %v2255, %v3109
      %v3142 = vadd.f32 %v2256, %v3110
      %v3143 = vadd.f32 %v2257, %v3111
      %v3144 = vadd.f32 %v2258, %v3112
      %v3145 = vadd.f32 %v2259, %v3113
      %v3146 = vadd.f32 %v2260, %v3114
      %v3147 = vadd.f32 %v2261, %v3115
      %v3148 = vadd.f32 %v2262, %v3116
      %v3149 = vadd.f32 %v2263, %v3117
      %v3150 = vadd.f32 %v2264, %v3118
      %v3151 = vadd.f32 %v2265, %v3119
      %v3152 = vadd.f32 %v2266, %v3120
      %v3153 = vadd.f32 %v2267, %v3121
      %v3154 = vadd.f32 %v2268, %v3122
      %v3155 = vadd.f32 %v2269, %v3123
      %v3156 = vadd.f32 %v2270, %v3124
      %v3157 = vadd.f32 %v2271, %v3125
      %v3158 = vadd.f32 %v2272, %v3126
      %v3159 = vadd.f32 %v2273, %v3127
      %v3160 = vadd.f32 %v2274, %v3128
      %v3161 = vadd.f32 %v2275, %v3129
      %v3162 = vadd.f32 %v2276, %v3130
      %v3163 = vadd.f32 %v2277, %v3131
      %v3164 = vadd.f32 %v2278, %v3132
      %v3165 = vadd.f32 %v2279, %v3133
      %v3166 = vadd.f32 %v2280, %v3134
      %v3167 = vadd.f32 %v2281, %v3135
      %v3168 = vadd.f32 %v2282, %v3136
      %s3169 = scalar_lea.vmem %s1, 128
      %v3170 = vld [vmem:[%s3169] sm:$0xf]
      %v3171 = vld [vmem:[%s3169 + $0x4] sm:$0xf]
      %v3172 = vld [vmem:[%s3169 + $0x8] sm:$0xf]
      %v3173 = vld [vmem:[%s3169 + $0xc] sm:$0xf]
      %v3174 = vld [vmem:[%s3169 + $0x10] sm:$0xf]
      %v3175 = vld [vmem:[%s3169 + $0x14] sm:$0xf]
      %v3176 = vld [vmem:[%s3169 + $0x18] sm:$0xf]
      %v3177 = vld [vmem:[%s3169 + $0x1c] sm:$0xf]
      %v3178 = vld [vmem:[%s3169 + $0x20] sm:$0xf]
      %v3179 = vld [vmem:[%s3169 + $0x24] sm:$0xf]
      %v3180 = vld [vmem:[%s3169 + $0x28] sm:$0xf]
      %v3181 = vld [vmem:[%s3169 + $0x2c] sm:$0xf]
      %v3182 = vld [vmem:[%s3169 + $0x30] sm:$0xf]
      %v3183 = vld [vmem:[%s3169 + $0x34] sm:$0xf]
      %v3184 = vld [vmem:[%s3169 + $0x38] sm:$0xf]
      %v3185 = vld [vmem:[%s3169 + $0x3c] sm:$0xf]
      %s3186 = scalar_lea.vmem %s1, 320
      %v3187 = vld [vmem:[%s3186] sm:$0xf]
      %v3188 = vld [vmem:[%s3186 + $0x4] sm:$0xf]
      %v3189 = vld [vmem:[%s3186 + $0x8] sm:$0xf]
      %v3190 = vld [vmem:[%s3186 + $0xc] sm:$0xf]
      %v3191 = vld [vmem:[%s3186 + $0x10] sm:$0xf]
      %v3192 = vld [vmem:[%s3186 + $0x14] sm:$0xf]
      %v3193 = vld [vmem:[%s3186 + $0x18] sm:$0xf]
      %v3194 = vld [vmem:[%s3186 + $0x1c] sm:$0xf]
      %v3195 = vld [vmem:[%s3186 + $0x20] sm:$0xf]
      %v3196 = vld [vmem:[%s3186 + $0x24] sm:$0xf]
      %v3197 = vld [vmem:[%s3186 + $0x28] sm:$0xf]
      %v3198 = vld [vmem:[%s3186 + $0x2c] sm:$0xf]
      %v3199 = vld [vmem:[%s3186 + $0x30] sm:$0xf]
      %v3200 = vld [vmem:[%s3186 + $0x34] sm:$0xf]
      %v3201 = vld [vmem:[%s3186 + $0x38] sm:$0xf]
      %v3202 = vld [vmem:[%s3186 + $0x3c] sm:$0xf]
      %v3219 = vunpack.c.l.b16 %v3187
      %v3220 = vunpack.c.l.b16 %v3188
      %v3221 = vunpack.c.l.b16 %v3189
      %v3222 = vunpack.c.l.b16 %v3190
      %v3223 = vunpack.c.l.b16 %v3191
      %v3224 = vunpack.c.l.b16 %v3192
      %v3225 = vunpack.c.l.b16 %v3193
      %v3226 = vunpack.c.l.b16 %v3194
      %v3227 = vunpack.c.l.b16 %v3195
      %v3228 = vunpack.c.l.b16 %v3196
      %v3229 = vunpack.c.l.b16 %v3197
      %v3230 = vunpack.c.l.b16 %v3198
      %v3231 = vunpack.c.l.b16 %v3199
      %v3232 = vunpack.c.l.b16 %v3200
      %v3233 = vunpack.c.l.b16 %v3201
      %v3234 = vunpack.c.l.b16 %v3202
      %v3235 = vpack.c.b16 %v3220, %v3219
      %v3236 = vpack.c.b16 %v3222, %v3221
      %v3237 = vpack.c.b16 %v3224, %v3223
      %v3238 = vpack.c.b16 %v3226, %v3225
      %v3239 = vpack.c.b16 %v3228, %v3227
      %v3240 = vpack.c.b16 %v3230, %v3229
      %v3241 = vpack.c.b16 %v3232, %v3231
      %v3242 = vpack.c.b16 %v3234, %v3233
      %3251 = vmatprep.subr.bf16.mxu0 0
      %3252 = vmatpush1.bf16.msra.mxu0 %v3242
      %3253 = vmatprep.subr.bf16.mxu0 0
      %3254 = vmatpush1.bf16.msra.mxu0 %v3241
      %3255 = vmatprep.subr.bf16.mxu0 0
      %3256 = vmatpush1.bf16.msra.mxu0 %v3240
      %3257 = vmatprep.subr.bf16.mxu0 0
      %3258 = vmatpush1.bf16.msra.mxu0 %v3239
      %3259 = vmatprep.subr.bf16.mxu0 0
      %3260 = vmatpush1.bf16.msra.mxu0 %v3238
      %3261 = vmatprep.subr.bf16.mxu0 0
      %3262 = vmatpush1.bf16.msra.mxu0 %v3237
      %3263 = vmatprep.subr.bf16.mxu0 0
      %3264 = vmatpush1.bf16.msra.mxu0 %v3236
      %3265 = vmatprep.subr.bf16.mxu0 0
      %3266 = vmatpush1.bf16.msra.mxu0 %v3235
      %3267 = vmatprep.subr.bf16.mxu0 0
      %3268 = vmatpush2.bf16.msra.mxu0 0
      %3269 = vmatprep.subr.bf16.mxu0 0
      %3270 = vmatpush2.bf16.msra.mxu0 0
      %3271 = vmatprep.subr.bf16.mxu0 0
      %3272 = vmatpush2.bf16.msra.mxu0 0
      %3273 = vmatprep.subr.bf16.mxu0 0
      %3274 = vmatpush2.bf16.msra.mxu0 0
      %3275 = vmatprep.subr.bf16.mxu0 0
      %3276 = vmatpush2.bf16.msra.mxu0 0
      %3277 = vmatprep.subr.bf16.mxu0 0
      %3278 = vmatpush2.bf16.msra.mxu0 0
      %3279 = vmatprep.subr.bf16.mxu0 0
      %3280 = vmatpush2.bf16.msra.mxu0 0
      %3281 = vmatprep.subr.bf16.mxu0 0
      %3282 = vmatpush2.bf16.msra.mxu0 0
      %3283 = vmatprep.mubr.bf16.mxu0 0
      %3284 = vmatmul.mubr.bf16.gmra.mxu0 %v869
      %v3285 = vpop.f32.mrf.mxu0
      %v3286 = vadd.f32 0.0, %v3285
      %v3287 = vpop.f32.mrf.mxu0
      %v3288 = vpop.f32.mrf.mxu0
      %v3289 = vadd.f32 0.0, %v3288
      %v3290 = vpop.f32.mrf.mxu0
      %3291 = vmatprep.mubr.bf16.mxu0 0
      %3292 = vmatmul.mubr.bf16.gmra.mxu0 %v870
      %v3293 = vpop.f32.mrf.mxu0
      %v3294 = vadd.f32 0.0, %v3293
      %v3295 = vpop.f32.mrf.mxu0
      %v3296 = vpop.f32.mrf.mxu0
      %v3297 = vadd.f32 0.0, %v3296
      %v3298 = vpop.f32.mrf.mxu0
      %3299 = vmatprep.mubr.bf16.mxu0 0
      %3300 = vmatmul.mubr.bf16.gmra.mxu0 %v871
      %v3301 = vpop.f32.mrf.mxu0
      %v3302 = vadd.f32 0.0, %v3301
      %v3303 = vpop.f32.mrf.mxu0
      %v3304 = vpop.f32.mrf.mxu0
      %v3305 = vadd.f32 0.0, %v3304
      %v3306 = vpop.f32.mrf.mxu0
      %3307 = vmatprep.mubr.bf16.mxu0 0
      %3308 = vmatmul.mubr.bf16.gmra.mxu0 %v872
      %v3309 = vpop.f32.mrf.mxu0
      %v3310 = vadd.f32 0.0, %v3309
      %v3311 = vpop.f32.mrf.mxu0
      %v3312 = vpop.f32.mrf.mxu0
      %v3313 = vadd.f32 0.0, %v3312
      %v3314 = vpop.f32.mrf.mxu0
      %3315 = vmatprep.mubr.bf16.mxu0 0
      %3316 = vmatmul.mubr.bf16.gmra.mxu0 %v873
      %v3317 = vpop.f32.mrf.mxu0
      %v3318 = vadd.f32 0.0, %v3317
      %v3319 = vpop.f32.mrf.mxu0
      %v3320 = vpop.f32.mrf.mxu0
      %v3321 = vadd.f32 0.0, %v3320
      %v3322 = vpop.f32.mrf.mxu0
      %3323 = vmatprep.mubr.bf16.mxu0 0
      %3324 = vmatmul.mubr.bf16.gmra.mxu0 %v874
      %v3325 = vpop.f32.mrf.mxu0
      %v3326 = vadd.f32 0.0, %v3325
      %v3327 = vpop.f32.mrf.mxu0
      %v3328 = vpop.f32.mrf.mxu0
      %v3329 = vadd.f32 0.0, %v3328
      %v3330 = vpop.f32.mrf.mxu0
      %3331 = vmatprep.mubr.bf16.mxu0 0
      %3332 = vmatmul.mubr.bf16.gmra.mxu0 %v875
      %v3333 = vpop.f32.mrf.mxu0
      %v3334 = vadd.f32 0.0, %v3333
      %v3335 = vpop.f32.mrf.mxu0
      %v3336 = vpop.f32.mrf.mxu0
      %v3337 = vadd.f32 0.0, %v3336
      %v3338 = vpop.f32.mrf.mxu0
      %3339 = vmatprep.mubr.bf16.mxu0 0
      %3340 = vmatmul.mubr.bf16.gmra.mxu0 %v876
      %v3341 = vpop.f32.mrf.mxu0
      %v3342 = vadd.f32 0.0, %v3341
      %v3343 = vpop.f32.mrf.mxu0
      %v3344 = vpop.f32.mrf.mxu0
      %v3345 = vadd.f32 0.0, %v3344
      %v3346 = vpop.f32.mrf.mxu0
      %3347 = vmatprep.mubr.bf16.mxu0 0
      %3348 = vmatmul.mubr.bf16.gmra.mxu0 %v877
      %v3349 = vpop.f32.mrf.mxu0
      %v3350 = vadd.f32 0.0, %v3349
      %v3351 = vpop.f32.mrf.mxu0
      %v3352 = vpop.f32.mrf.mxu0
      %v3353 = vadd.f32 0.0, %v3352
      %v3354 = vpop.f32.mrf.mxu0
      %3355 = vmatprep.mubr.bf16.mxu0 0
      %3356 = vmatmul.mubr.bf16.gmra.mxu0 %v878
      %v3357 = vpop.f32.mrf.mxu0
      %v3358 = vadd.f32 0.0, %v3357
      %v3359 = vpop.f32.mrf.mxu0
      %v3360 = vpop.f32.mrf.mxu0
      %v3361 = vadd.f32 0.0, %v3360
      %v3362 = vpop.f32.mrf.mxu0
      %3363 = vmatprep.mubr.bf16.mxu0 0
      %3364 = vmatmul.mubr.bf16.gmra.mxu0 %v879
      %v3365 = vpop.f32.mrf.mxu0
      %v3366 = vadd.f32 0.0, %v3365
      %v3367 = vpop.f32.mrf.mxu0
      %v3368 = vpop.f32.mrf.mxu0
      %v3369 = vadd.f32 0.0, %v3368
      %v3370 = vpop.f32.mrf.mxu0
      %3371 = vmatprep.mubr.bf16.mxu0 0
      %3372 = vmatmul.mubr.bf16.gmra.mxu0 %v880
      %v3373 = vpop.f32.mrf.mxu0
      %v3374 = vadd.f32 0.0, %v3373
      %v3375 = vpop.f32.mrf.mxu0
      %v3376 = vpop.f32.mrf.mxu0
      %v3377 = vadd.f32 0.0, %v3376
      %v3378 = vpop.f32.mrf.mxu0
      %3379 = vmatprep.mubr.bf16.mxu0 0
      %3380 = vmatmul.mubr.bf16.gmra.mxu0 %v881
      %v3381 = vpop.f32.mrf.mxu0
      %v3382 = vadd.f32 0.0, %v3381
      %v3383 = vpop.f32.mrf.mxu0
      %v3384 = vpop.f32.mrf.mxu0
      %v3385 = vadd.f32 0.0, %v3384
      %v3386 = vpop.f32.mrf.mxu0
      %3387 = vmatprep.mubr.bf16.mxu0 0
      %3388 = vmatmul.mubr.bf16.gmra.mxu0 %v882
      %v3389 = vpop.f32.mrf.mxu0
      %v3390 = vadd.f32 0.0, %v3389
      %v3391 = vpop.f32.mrf.mxu0
      %v3392 = vpop.f32.mrf.mxu0
      %v3393 = vadd.f32 0.0, %v3392
      %v3394 = vpop.f32.mrf.mxu0
      %3395 = vmatprep.mubr.bf16.mxu0 0
      %3396 = vmatmul.mubr.bf16.gmra.mxu0 %v883
      %v3397 = vpop.f32.mrf.mxu0
      %v3398 = vadd.f32 0.0, %v3397
      %v3399 = vpop.f32.mrf.mxu0
      %v3400 = vpop.f32.mrf.mxu0
      %v3401 = vadd.f32 0.0, %v3400
      %v3402 = vpop.f32.mrf.mxu0
      %3403 = vmatprep.mubr.bf16.mxu0 0
      %3404 = vmatmul.mubr.bf16.gmra.mxu0 %v884
      %v3405 = vpop.f32.mrf.mxu0
      %v3406 = vadd.f32 0.0, %v3405
      %v3407 = vpop.f32.mrf.mxu0
      %v3408 = vpop.f32.mrf.mxu0
      %v3409 = vadd.f32 0.0, %v3408
      %v3410 = vpop.f32.mrf.mxu0
      %3411 = vmatprep.mubr.bf16.mxu0 0
      %3412 = vmatmul.mubr.bf16.gmra.mxu0 %v885
      %v3413 = vpop.f32.mrf.mxu0
      %v3414 = vadd.f32 0.0, %v3413
      %v3415 = vpop.f32.mrf.mxu0
      %v3416 = vpop.f32.mrf.mxu0
      %v3417 = vadd.f32 0.0, %v3416
      %v3418 = vpop.f32.mrf.mxu0
      %3419 = vmatprep.mubr.bf16.mxu0 0
      %3420 = vmatmul.mubr.bf16.gmra.mxu0 %v886
      %v3421 = vpop.f32.mrf.mxu0
      %v3422 = vadd.f32 0.0, %v3421
      %v3423 = vpop.f32.mrf.mxu0
      %v3424 = vpop.f32.mrf.mxu0
      %v3425 = vadd.f32 0.0, %v3424
      %v3426 = vpop.f32.mrf.mxu0
      %3427 = vmatprep.mubr.bf16.mxu0 0
      %3428 = vmatmul.mubr.bf16.gmra.mxu0 %v887
      %v3429 = vpop.f32.mrf.mxu0
      %v3430 = vadd.f32 0.0, %v3429
      %v3431 = vpop.f32.mrf.mxu0
      %v3432 = vpop.f32.mrf.mxu0
      %v3433 = vadd.f32 0.0, %v3432
      %v3434 = vpop.f32.mrf.mxu0
      %3435 = vmatprep.mubr.bf16.mxu0 0
      %3436 = vmatmul.mubr.bf16.gmra.mxu0 %v888
      %v3437 = vpop.f32.mrf.mxu0
      %v3438 = vadd.f32 0.0, %v3437
      %v3439 = vpop.f32.mrf.mxu0
      %v3440 = vpop.f32.mrf.mxu0
      %v3441 = vadd.f32 0.0, %v3440
      %v3442 = vpop.f32.mrf.mxu0
      %3443 = vmatprep.mubr.bf16.mxu0 0
      %3444 = vmatmul.mubr.bf16.gmra.mxu0 %v889
      %v3445 = vpop.f32.mrf.mxu0
      %v3446 = vadd.f32 0.0, %v3445
      %v3447 = vpop.f32.mrf.mxu0
      %v3448 = vpop.f32.mrf.mxu0
      %v3449 = vadd.f32 0.0, %v3448
      %v3450 = vpop.f32.mrf.mxu0
      %3451 = vmatprep.mubr.bf16.mxu0 0
      %3452 = vmatmul.mubr.bf16.gmra.mxu0 %v890
      %v3453 = vpop.f32.mrf.mxu0
      %v3454 = vadd.f32 0.0, %v3453
      %v3455 = vpop.f32.mrf.mxu0
      %v3456 = vpop.f32.mrf.mxu0
      %v3457 = vadd.f32 0.0, %v3456
      %v3458 = vpop.f32.mrf.mxu0
      %3459 = vmatprep.mubr.bf16.mxu0 0
      %3460 = vmatmul.mubr.bf16.gmra.mxu0 %v891
      %v3461 = vpop.f32.mrf.mxu0
      %v3462 = vadd.f32 0.0, %v3461
      %v3463 = vpop.f32.mrf.mxu0
      %v3464 = vpop.f32.mrf.mxu0
      %v3465 = vadd.f32 0.0, %v3464
      %v3466 = vpop.f32.mrf.mxu0
      %3467 = vmatprep.mubr.bf16.mxu0 0
      %3468 = vmatmul.mubr.bf16.gmra.mxu0 %v892
      %v3469 = vpop.f32.mrf.mxu0
      %v3470 = vadd.f32 0.0, %v3469
      %v3471 = vpop.f32.mrf.mxu0
      %v3472 = vpop.f32.mrf.mxu0
      %v3473 = vadd.f32 0.0, %v3472
      %v3474 = vpop.f32.mrf.mxu0
      %3475 = vdwg.mxu0
      %v3492 = vunpack.c.l.b16 %v3170
      %v3493 = vunpack.c.l.b16 %v3171
      %v3494 = vunpack.c.l.b16 %v3172
      %v3495 = vunpack.c.l.b16 %v3173
      %v3496 = vunpack.c.l.b16 %v3174
      %v3497 = vunpack.c.l.b16 %v3175
      %v3498 = vunpack.c.l.b16 %v3176
      %v3499 = vunpack.c.l.b16 %v3177
      %v3500 = vunpack.c.l.b16 %v3178
      %v3501 = vunpack.c.l.b16 %v3179
      %v3502 = vunpack.c.l.b16 %v3180
      %v3503 = vunpack.c.l.b16 %v3181
      %v3504 = vunpack.c.l.b16 %v3182
      %v3505 = vunpack.c.l.b16 %v3183
      %v3506 = vunpack.c.l.b16 %v3184
      %v3507 = vunpack.c.l.b16 %v3185
      %v3508 = vpack.c.b16 %v3493, %v3492
      %v3509 = vpack.c.b16 %v3495, %v3494
      %v3510 = vpack.c.b16 %v3497, %v3496
      %v3511 = vpack.c.b16 %v3499, %v3498
      %v3512 = vpack.c.b16 %v3501, %v3500
      %v3513 = vpack.c.b16 %v3503, %v3502
      %v3514 = vpack.c.b16 %v3505, %v3504
      %v3515 = vpack.c.b16 %v3507, %v3506
      %3524 = vmatprep.subr.bf16.mxu0 0
      %3525 = vmatpush1.bf16.msra.mxu0 %v3515
      %3526 = vmatprep.subr.bf16.mxu0 0
      %3527 = vmatpush1.bf16.msra.mxu0 %v3514
      %3528 = vmatprep.subr.bf16.mxu0 0
      %3529 = vmatpush1.bf16.msra.mxu0 %v3513
      %3530 = vmatprep.subr.bf16.mxu0 0
      %3531 = vmatpush1.bf16.msra.mxu0 %v3512
      %3532 = vmatprep.subr.bf16.mxu0 0
      %3533 = vmatpush1.bf16.msra.mxu0 %v3511
      %3534 = vmatprep.subr.bf16.mxu0 0
      %3535 = vmatpush1.bf16.msra.mxu0 %v3510
      %3536 = vmatprep.subr.bf16.mxu0 0
      %3537 = vmatpush1.bf16.msra.mxu0 %v3509
      %3538 = vmatprep.subr.bf16.mxu0 0
      %3539 = vmatpush1.bf16.msra.mxu0 %v3508
      %3540 = vmatprep.subr.bf16.mxu0 0
      %3541 = vmatpush2.bf16.msra.mxu0 0
      %3542 = vmatprep.subr.bf16.mxu0 0
      %3543 = vmatpush2.bf16.msra.mxu0 0
      %3544 = vmatprep.subr.bf16.mxu0 0
      %3545 = vmatpush2.bf16.msra.mxu0 0
      %3546 = vmatprep.subr.bf16.mxu0 0
      %3547 = vmatpush2.bf16.msra.mxu0 0
      %3548 = vmatprep.subr.bf16.mxu0 0
      %3549 = vmatpush2.bf16.msra.mxu0 0
      %3550 = vmatprep.subr.bf16.mxu0 0
      %3551 = vmatpush2.bf16.msra.mxu0 0
      %3552 = vmatprep.subr.bf16.mxu0 0
      %3553 = vmatpush2.bf16.msra.mxu0 0
      %3554 = vmatprep.subr.bf16.mxu0 0
      %3555 = vmatpush2.bf16.msra.mxu0 0
      %3556 = vmatprep.mubr.bf16.mxu0 0
      %3557 = vmatmul.mubr.bf16.gmra.mxu0 %v1286
      %v3558 = vpop.f32.mrf.mxu0
      %v3559 = vadd.f32 %v3286, %v3558
      %v3560 = vpop.f32.mrf.mxu0
      %v3561 = vpop.f32.mrf.mxu0
      %v3562 = vadd.f32 %v3289, %v3561
      %v3563 = vpop.f32.mrf.mxu0
      %3564 = vmatprep.mubr.bf16.mxu0 0
      %3565 = vmatmul.mubr.bf16.gmra.mxu0 %v1287
      %v3566 = vpop.f32.mrf.mxu0
      %v3567 = vadd.f32 %v3294, %v3566
      %v3568 = vpop.f32.mrf.mxu0
      %v3569 = vpop.f32.mrf.mxu0
      %v3570 = vadd.f32 %v3297, %v3569
      %v3571 = vpop.f32.mrf.mxu0
      %3572 = vmatprep.mubr.bf16.mxu0 0
      %3573 = vmatmul.mubr.bf16.gmra.mxu0 %v1288
      %v3574 = vpop.f32.mrf.mxu0
      %v3575 = vadd.f32 %v3302, %v3574
      %v3576 = vpop.f32.mrf.mxu0
      %v3577 = vpop.f32.mrf.mxu0
      %v3578 = vadd.f32 %v3305, %v3577
      %v3579 = vpop.f32.mrf.mxu0
      %3580 = vmatprep.mubr.bf16.mxu0 0
      %3581 = vmatmul.mubr.bf16.gmra.mxu0 %v1289
      %v3582 = vpop.f32.mrf.mxu0
      %v3583 = vadd.f32 %v3310, %v3582
      %v3584 = vpop.f32.mrf.mxu0
      %v3585 = vpop.f32.mrf.mxu0
      %v3586 = vadd.f32 %v3313, %v3585
      %v3587 = vpop.f32.mrf.mxu0
      %3588 = vmatprep.mubr.bf16.mxu0 0
      %3589 = vmatmul.mubr.bf16.gmra.mxu0 %v1290
      %v3590 = vpop.f32.mrf.mxu0
      %v3591 = vadd.f32 %v3318, %v3590
      %v3592 = vpop.f32.mrf.mxu0
      %v3593 = vpop.f32.mrf.mxu0
      %v3594 = vadd.f32 %v3321, %v3593
      %v3595 = vpop.f32.mrf.mxu0
      %3596 = vmatprep.mubr.bf16.mxu0 0
      %3597 = vmatmul.mubr.bf16.gmra.mxu0 %v1291
      %v3598 = vpop.f32.mrf.mxu0
      %v3599 = vadd.f32 %v3326, %v3598
      %v3600 = vpop.f32.mrf.mxu0
      %v3601 = vpop.f32.mrf.mxu0
      %v3602 = vadd.f32 %v3329, %v3601
      %v3603 = vpop.f32.mrf.mxu0
      %3604 = vmatprep.mubr.bf16.mxu0 0
      %3605 = vmatmul.mubr.bf16.gmra.mxu0 %v1292
      %v3606 = vpop.f32.mrf.mxu0
      %v3607 = vadd.f32 %v3334, %v3606
      %v3608 = vpop.f32.mrf.mxu0
      %v3609 = vpop.f32.mrf.mxu0
      %v3610 = vadd.f32 %v3337, %v3609
      %v3611 = vpop.f32.mrf.mxu0
      %3612 = vmatprep.mubr.bf16.mxu0 0
      %3613 = vmatmul.mubr.bf16.gmra.mxu0 %v1293
      %v3614 = vpop.f32.mrf.mxu0
      %v3615 = vadd.f32 %v3342, %v3614
      %v3616 = vpop.f32.mrf.mxu0
      %v3617 = vpop.f32.mrf.mxu0
      %v3618 = vadd.f32 %v3345, %v3617
      %v3619 = vpop.f32.mrf.mxu0
      %3620 = vmatprep.mubr.bf16.mxu0 0
      %3621 = vmatmul.mubr.bf16.gmra.mxu0 %v1294
      %v3622 = vpop.f32.mrf.mxu0
      %v3623 = vadd.f32 %v3350, %v3622
      %v3624 = vpop.f32.mrf.mxu0
      %v3625 = vpop.f32.mrf.mxu0
      %v3626 = vadd.f32 %v3353, %v3625
      %v3627 = vpop.f32.mrf.mxu0
      %3628 = vmatprep.mubr.bf16.mxu0 0
      %3629 = vmatmul.mubr.bf16.gmra.mxu0 %v1295
      %v3630 = vpop.f32.mrf.mxu0
      %v3631 = vadd.f32 %v3358, %v3630
      %v3632 = vpop.f32.mrf.mxu0
      %v3633 = vpop.f32.mrf.mxu0
      %v3634 = vadd.f32 %v3361, %v3633
      %v3635 = vpop.f32.mrf.mxu0
      %3636 = vmatprep.mubr.bf16.mxu0 0
      %3637 = vmatmul.mubr.bf16.gmra.mxu0 %v1296
      %v3638 = vpop.f32.mrf.mxu0
      %v3639 = vadd.f32 %v3366, %v3638
      %v3640 = vpop.f32.mrf.mxu0
      %v3641 = vpop.f32.mrf.mxu0
      %v3642 = vadd.f32 %v3369, %v3641
      %v3643 = vpop.f32.mrf.mxu0
      %3644 = vmatprep.mubr.bf16.mxu0 0
      %3645 = vmatmul.mubr.bf16.gmra.mxu0 %v1297
      %v3646 = vpop.f32.mrf.mxu0
      %v3647 = vadd.f32 %v3374, %v3646
      %v3648 = vpop.f32.mrf.mxu0
      %v3649 = vpop.f32.mrf.mxu0
      %v3650 = vadd.f32 %v3377, %v3649
      %v3651 = vpop.f32.mrf.mxu0
      %3652 = vmatprep.mubr.bf16.mxu0 0
      %3653 = vmatmul.mubr.bf16.gmra.mxu0 %v1298
      %v3654 = vpop.f32.mrf.mxu0
      %v3655 = vadd.f32 %v3382, %v3654
      %v3656 = vpop.f32.mrf.mxu0
      %v3657 = vpop.f32.mrf.mxu0
      %v3658 = vadd.f32 %v3385, %v3657
      %v3659 = vpop.f32.mrf.mxu0
      %3660 = vmatprep.mubr.bf16.mxu0 0
      %3661 = vmatmul.mubr.bf16.gmra.mxu0 %v1299
      %v3662 = vpop.f32.mrf.mxu0
      %v3663 = vadd.f32 %v3390, %v3662
      %v3664 = vpop.f32.mrf.mxu0
      %v3665 = vpop.f32.mrf.mxu0
      %v3666 = vadd.f32 %v3393, %v3665
      %v3667 = vpop.f32.mrf.mxu0
      %3668 = vmatprep.mubr.bf16.mxu0 0
      %3669 = vmatmul.mubr.bf16.gmra.mxu0 %v1300
      %v3670 = vpop.f32.mrf.mxu0
      %v3671 = vadd.f32 %v3398, %v3670
      %v3672 = vpop.f32.mrf.mxu0
      %v3673 = vpop.f32.mrf.mxu0
      %v3674 = vadd.f32 %v3401, %v3673
      %v3675 = vpop.f32.mrf.mxu0
      %3676 = vmatprep.mubr.bf16.mxu0 0
      %3677 = vmatmul.mubr.bf16.gmra.mxu0 %v1301
      %v3678 = vpop.f32.mrf.mxu0
      %v3679 = vadd.f32 %v3406, %v3678
      %v3680 = vpop.f32.mrf.mxu0
      %v3681 = vpop.f32.mrf.mxu0
      %v3682 = vadd.f32 %v3409, %v3681
      %v3683 = vpop.f32.mrf.mxu0
      %3684 = vmatprep.mubr.bf16.mxu0 0
      %3685 = vmatmul.mubr.bf16.gmra.mxu0 %v1302
      %v3686 = vpop.f32.mrf.mxu0
      %v3687 = vadd.f32 %v3414, %v3686
      %v3688 = vpop.f32.mrf.mxu0
      %v3689 = vpop.f32.mrf.mxu0
      %v3690 = vadd.f32 %v3417, %v3689
      %v3691 = vpop.f32.mrf.mxu0
      %3692 = vmatprep.mubr.bf16.mxu0 0
      %3693 = vmatmul.mubr.bf16.gmra.mxu0 %v1303
      %v3694 = vpop.f32.mrf.mxu0
      %v3695 = vadd.f32 %v3422, %v3694
      %v3696 = vpop.f32.mrf.mxu0
      %v3697 = vpop.f32.mrf.mxu0
      %v3698 = vadd.f32 %v3425, %v3697
      %v3699 = vpop.f32.mrf.mxu0
      %3700 = vmatprep.mubr.bf16.mxu0 0
      %3701 = vmatmul.mubr.bf16.gmra.mxu0 %v1304
      %v3702 = vpop.f32.mrf.mxu0
      %v3703 = vadd.f32 %v3430, %v3702
      %v3704 = vpop.f32.mrf.mxu0
      %v3705 = vpop.f32.mrf.mxu0
      %v3706 = vadd.f32 %v3433, %v3705
      %v3707 = vpop.f32.mrf.mxu0
      %3708 = vmatprep.mubr.bf16.mxu0 0
      %3709 = vmatmul.mubr.bf16.gmra.mxu0 %v1305
      %v3710 = vpop.f32.mrf.mxu0
      %v3711 = vadd.f32 %v3438, %v3710
      %v3712 = vpop.f32.mrf.mxu0
      %v3713 = vpop.f32.mrf.mxu0
      %v3714 = vadd.f32 %v3441, %v3713
      %v3715 = vpop.f32.mrf.mxu0
      %3716 = vmatprep.mubr.bf16.mxu0 0
      %3717 = vmatmul.mubr.bf16.gmra.mxu0 %v1306
      %v3718 = vpop.f32.mrf.mxu0
      %v3719 = vadd.f32 %v3446, %v3718
      %v3720 = vpop.f32.mrf.mxu0
      %v3721 = vpop.f32.mrf.mxu0
      %v3722 = vadd.f32 %v3449, %v3721
      %v3723 = vpop.f32.mrf.mxu0
      %3724 = vmatprep.mubr.bf16.mxu0 0
      %3725 = vmatmul.mubr.bf16.gmra.mxu0 %v1307
      %v3726 = vpop.f32.mrf.mxu0
      %v3727 = vadd.f32 %v3454, %v3726
      %v3728 = vpop.f32.mrf.mxu0
      %v3729 = vpop.f32.mrf.mxu0
      %v3730 = vadd.f32 %v3457, %v3729
      %v3731 = vpop.f32.mrf.mxu0
      %3732 = vmatprep.mubr.bf16.mxu0 0
      %3733 = vmatmul.mubr.bf16.gmra.mxu0 %v1308
      %v3734 = vpop.f32.mrf.mxu0
      %v3735 = vadd.f32 %v3462, %v3734
      %v3736 = vpop.f32.mrf.mxu0
      %v3737 = vpop.f32.mrf.mxu0
      %v3738 = vadd.f32 %v3465, %v3737
      %v3739 = vpop.f32.mrf.mxu0
      %3740 = vmatprep.mubr.bf16.mxu0 0
      %3741 = vmatmul.mubr.bf16.gmra.mxu0 %v1309
      %v3742 = vpop.f32.mrf.mxu0
      %v3743 = vadd.f32 %v3470, %v3742
      %v3744 = vpop.f32.mrf.mxu0
      %v3745 = vpop.f32.mrf.mxu0
      %v3746 = vadd.f32 %v3473, %v3745
      %v3747 = vpop.f32.mrf.mxu0
      %3748 = vdwg.mxu0
      %s3749 = scalar_lea.vmem %s1, 512
      %v3750 = vld [vmem:[%s3749] sm:$0xf]
      %v3751 = vld [vmem:[%s3749 + $0x4] sm:$0xf]
      %v3752 = vld [vmem:[%s3749 + $0x8] sm:$0xf]
      %v3753 = vld [vmem:[%s3749 + $0xc] sm:$0xf]
      %v3754 = vld [vmem:[%s3749 + $0x10] sm:$0xf]
      %v3755 = vld [vmem:[%s3749 + $0x14] sm:$0xf]
      %v3756 = vld [vmem:[%s3749 + $0x18] sm:$0xf]
      %v3757 = vld [vmem:[%s3749 + $0x1c] sm:$0xf]
      %v3758 = vld [vmem:[%s3749 + $0x20] sm:$0xf]
      %v3759 = vld [vmem:[%s3749 + $0x24] sm:$0xf]
      %v3760 = vld [vmem:[%s3749 + $0x28] sm:$0xf]
      %v3761 = vld [vmem:[%s3749 + $0x2c] sm:$0xf]
      %v3762 = vld [vmem:[%s3749 + $0x30] sm:$0xf]
      %v3763 = vld [vmem:[%s3749 + $0x34] sm:$0xf]
      %v3764 = vld [vmem:[%s3749 + $0x38] sm:$0xf]
      %v3765 = vld [vmem:[%s3749 + $0x3c] sm:$0xf]
      %v3782 = vunpack.c.l.b16 %v3750
      %v3783 = vunpack.c.l.b16 %v3751
      %v3784 = vunpack.c.l.b16 %v3752
      %v3785 = vunpack.c.l.b16 %v3753
      %v3786 = vunpack.c.l.b16 %v3754
      %v3787 = vunpack.c.l.b16 %v3755
      %v3788 = vunpack.c.l.b16 %v3756
      %v3789 = vunpack.c.l.b16 %v3757
      %v3790 = vunpack.c.l.b16 %v3758
      %v3791 = vunpack.c.l.b16 %v3759
      %v3792 = vunpack.c.l.b16 %v3760
      %v3793 = vunpack.c.l.b16 %v3761
      %v3794 = vunpack.c.l.b16 %v3762
      %v3795 = vunpack.c.l.b16 %v3763
      %v3796 = vunpack.c.l.b16 %v3764
      %v3797 = vunpack.c.l.b16 %v3765
      %v3798 = vpack.c.b16 %v3783, %v3782
      %v3799 = vpack.c.b16 %v3785, %v3784
      %v3800 = vpack.c.b16 %v3787, %v3786
      %v3801 = vpack.c.b16 %v3789, %v3788
      %v3802 = vpack.c.b16 %v3791, %v3790
      %v3803 = vpack.c.b16 %v3793, %v3792
      %v3804 = vpack.c.b16 %v3795, %v3794
      %v3805 = vpack.c.b16 %v3797, %v3796
      %3814 = vmatprep.subr.bf16.mxu0 0
      %3815 = vmatpush1.bf16.msra.mxu0 %v3805
      %3816 = vmatprep.subr.bf16.mxu0 0
      %3817 = vmatpush1.bf16.msra.mxu0 %v3804
      %3818 = vmatprep.subr.bf16.mxu0 0
      %3819 = vmatpush1.bf16.msra.mxu0 %v3803
      %3820 = vmatprep.subr.bf16.mxu0 0
      %3821 = vmatpush1.bf16.msra.mxu0 %v3802
      %3822 = vmatprep.subr.bf16.mxu0 0
      %3823 = vmatpush1.bf16.msra.mxu0 %v3801
      %3824 = vmatprep.subr.bf16.mxu0 0
      %3825 = vmatpush1.bf16.msra.mxu0 %v3800
      %3826 = vmatprep.subr.bf16.mxu0 0
      %3827 = vmatpush1.bf16.msra.mxu0 %v3799
      %3828 = vmatprep.subr.bf16.mxu0 0
      %3829 = vmatpush1.bf16.msra.mxu0 %v3798
      %3830 = vmatprep.subr.bf16.mxu0 0
      %3831 = vmatpush2.bf16.msra.mxu0 0
      %3832 = vmatprep.subr.bf16.mxu0 0
      %3833 = vmatpush2.bf16.msra.mxu0 0
      %3834 = vmatprep.subr.bf16.mxu0 0
      %3835 = vmatpush2.bf16.msra.mxu0 0
      %3836 = vmatprep.subr.bf16.mxu0 0
      %3837 = vmatpush2.bf16.msra.mxu0 0
      %3838 = vmatprep.subr.bf16.mxu0 0
      %3839 = vmatpush2.bf16.msra.mxu0 0
      %3840 = vmatprep.subr.bf16.mxu0 0
      %3841 = vmatpush2.bf16.msra.mxu0 0
      %3842 = vmatprep.subr.bf16.mxu0 0
      %3843 = vmatpush2.bf16.msra.mxu0 0
      %3844 = vmatprep.subr.bf16.mxu0 0
      %3845 = vmatpush2.bf16.msra.mxu0 0
      %3846 = vmatprep.mubr.bf16.mxu0 0
      %3847 = vmatmul.mubr.bf16.gmra.mxu0 %v1720
      %v3848 = vpop.f32.mrf.mxu0
      %v3849 = vadd.f32 0.0, %v3848
      %v3850 = vpop.f32.mrf.mxu0
      %v3851 = vpop.f32.mrf.mxu0
      %v3852 = vadd.f32 0.0, %v3851
      %v3853 = vpop.f32.mrf.mxu0
      %3854 = vmatprep.mubr.bf16.mxu0 0
      %3855 = vmatmul.mubr.bf16.gmra.mxu0 %v1721
      %v3856 = vpop.f32.mrf.mxu0
      %v3857 = vadd.f32 0.0, %v3856
      %v3858 = vpop.f32.mrf.mxu0
      %v3859 = vpop.f32.mrf.mxu0
      %v3860 = vadd.f32 0.0, %v3859
      %v3861 = vpop.f32.mrf.mxu0
      %3862 = vmatprep.mubr.bf16.mxu0 0
      %3863 = vmatmul.mubr.bf16.gmra.mxu0 %v1722
      %v3864 = vpop.f32.mrf.mxu0
      %v3865 = vadd.f32 0.0, %v3864
      %v3866 = vpop.f32.mrf.mxu0
      %v3867 = vpop.f32.mrf.mxu0
      %v3868 = vadd.f32 0.0, %v3867
      %v3869 = vpop.f32.mrf.mxu0
      %3870 = vmatprep.mubr.bf16.mxu0 0
      %3871 = vmatmul.mubr.bf16.gmra.mxu0 %v1723
      %v3872 = vpop.f32.mrf.mxu0
      %v3873 = vadd.f32 0.0, %v3872
      %v3874 = vpop.f32.mrf.mxu0
      %v3875 = vpop.f32.mrf.mxu0
      %v3876 = vadd.f32 0.0, %v3875
      %v3877 = vpop.f32.mrf.mxu0
      %3878 = vmatprep.mubr.bf16.mxu0 0
      %3879 = vmatmul.mubr.bf16.gmra.mxu0 %v1724
      %v3880 = vpop.f32.mrf.mxu0
      %v3881 = vadd.f32 0.0, %v3880
      %v3882 = vpop.f32.mrf.mxu0
      %v3883 = vpop.f32.mrf.mxu0
      %v3884 = vadd.f32 0.0, %v3883
      %v3885 = vpop.f32.mrf.mxu0
      %3886 = vmatprep.mubr.bf16.mxu0 0
      %3887 = vmatmul.mubr.bf16.gmra.mxu0 %v1725
      %v3888 = vpop.f32.mrf.mxu0
      %v3889 = vadd.f32 0.0, %v3888
      %v3890 = vpop.f32.mrf.mxu0
      %v3891 = vpop.f32.mrf.mxu0
      %v3892 = vadd.f32 0.0, %v3891
      %v3893 = vpop.f32.mrf.mxu0
      %3894 = vmatprep.mubr.bf16.mxu0 0
      %3895 = vmatmul.mubr.bf16.gmra.mxu0 %v1726
      %v3896 = vpop.f32.mrf.mxu0
      %v3897 = vadd.f32 0.0, %v3896
      %v3898 = vpop.f32.mrf.mxu0
      %v3899 = vpop.f32.mrf.mxu0
      %v3900 = vadd.f32 0.0, %v3899
      %v3901 = vpop.f32.mrf.mxu0
      %3902 = vmatprep.mubr.bf16.mxu0 0
      %3903 = vmatmul.mubr.bf16.gmra.mxu0 %v1727
      %v3904 = vpop.f32.mrf.mxu0
      %v3905 = vadd.f32 0.0, %v3904
      %v3906 = vpop.f32.mrf.mxu0
      %v3907 = vpop.f32.mrf.mxu0
      %v3908 = vadd.f32 0.0, %v3907
      %v3909 = vpop.f32.mrf.mxu0
      %3910 = vmatprep.mubr.bf16.mxu0 0
      %3911 = vmatmul.mubr.bf16.gmra.mxu0 %v1728
      %v3912 = vpop.f32.mrf.mxu0
      %v3913 = vadd.f32 0.0, %v3912
      %v3914 = vpop.f32.mrf.mxu0
      %v3915 = vpop.f32.mrf.mxu0
      %v3916 = vadd.f32 0.0, %v3915
      %v3917 = vpop.f32.mrf.mxu0
      %3918 = vmatprep.mubr.bf16.mxu0 0
      %3919 = vmatmul.mubr.bf16.gmra.mxu0 %v1729
      %v3920 = vpop.f32.mrf.mxu0
      %v3921 = vadd.f32 0.0, %v3920
      %v3922 = vpop.f32.mrf.mxu0
      %v3923 = vpop.f32.mrf.mxu0
      %v3924 = vadd.f32 0.0, %v3923
      %v3925 = vpop.f32.mrf.mxu0
      %3926 = vmatprep.mubr.bf16.mxu0 0
      %3927 = vmatmul.mubr.bf16.gmra.mxu0 %v1730
      %v3928 = vpop.f32.mrf.mxu0
      %v3929 = vadd.f32 0.0, %v3928
      %v3930 = vpop.f32.mrf.mxu0
      %v3931 = vpop.f32.mrf.mxu0
      %v3932 = vadd.f32 0.0, %v3931
      %v3933 = vpop.f32.mrf.mxu0
      %3934 = vmatprep.mubr.bf16.mxu0 0
      %3935 = vmatmul.mubr.bf16.gmra.mxu0 %v1731
      %v3936 = vpop.f32.mrf.mxu0
      %v3937 = vadd.f32 0.0, %v3936
      %v3938 = vpop.f32.mrf.mxu0
      %v3939 = vpop.f32.mrf.mxu0
      %v3940 = vadd.f32 0.0, %v3939
      %v3941 = vpop.f32.mrf.mxu0
      %3942 = vmatprep.mubr.bf16.mxu0 0
      %3943 = vmatmul.mubr.bf16.gmra.mxu0 %v1732
      %v3944 = vpop.f32.mrf.mxu0
      %v3945 = vadd.f32 0.0, %v3944
      %v3946 = vpop.f32.mrf.mxu0
      %v3947 = vpop.f32.mrf.mxu0
      %v3948 = vadd.f32 0.0, %v3947
      %v3949 = vpop.f32.mrf.mxu0
      %3950 = vmatprep.mubr.bf16.mxu0 0
      %3951 = vmatmul.mubr.bf16.gmra.mxu0 %v1733
      %v3952 = vpop.f32.mrf.mxu0
      %v3953 = vadd.f32 0.0, %v3952
      %v3954 = vpop.f32.mrf.mxu0
      %v3955 = vpop.f32.mrf.mxu0
      %v3956 = vadd.f32 0.0, %v3955
      %v3957 = vpop.f32.mrf.mxu0
      %3958 = vmatprep.mubr.bf16.mxu0 0
      %3959 = vmatmul.mubr.bf16.gmra.mxu0 %v1734
      %v3960 = vpop.f32.mrf.mxu0
      %v3961 = vadd.f32 0.0, %v3960
      %v3962 = vpop.f32.mrf.mxu0
      %v3963 = vpop.f32.mrf.mxu0
      %v3964 = vadd.f32 0.0, %v3963
      %v3965 = vpop.f32.mrf.mxu0
      %3966 = vmatprep.mubr.bf16.mxu0 0
      %3967 = vmatmul.mubr.bf16.gmra.mxu0 %v1735
      %v3968 = vpop.f32.mrf.mxu0
      %v3969 = vadd.f32 0.0, %v3968
      %v3970 = vpop.f32.mrf.mxu0
      %v3971 = vpop.f32.mrf.mxu0
      %v3972 = vadd.f32 0.0, %v3971
      %v3973 = vpop.f32.mrf.mxu0
      %3974 = vmatprep.mubr.bf16.mxu0 0
      %3975 = vmatmul.mubr.bf16.gmra.mxu0 %v1736
      %v3976 = vpop.f32.mrf.mxu0
      %v3977 = vadd.f32 0.0, %v3976
      %v3978 = vpop.f32.mrf.mxu0
      %v3979 = vpop.f32.mrf.mxu0
      %v3980 = vadd.f32 0.0, %v3979
      %v3981 = vpop.f32.mrf.mxu0
      %3982 = vmatprep.mubr.bf16.mxu0 0
      %3983 = vmatmul.mubr.bf16.gmra.mxu0 %v1737
      %v3984 = vpop.f32.mrf.mxu0
      %v3985 = vadd.f32 0.0, %v3984
      %v3986 = vpop.f32.mrf.mxu0
      %v3987 = vpop.f32.mrf.mxu0
      %v3988 = vadd.f32 0.0, %v3987
      %v3989 = vpop.f32.mrf.mxu0
      %3990 = vmatprep.mubr.bf16.mxu0 0
      %3991 = vmatmul.mubr.bf16.gmra.mxu0 %v1738
      %v3992 = vpop.f32.mrf.mxu0
      %v3993 = vadd.f32 0.0, %v3992
      %v3994 = vpop.f32.mrf.mxu0
      %v3995 = vpop.f32.mrf.mxu0
      %v3996 = vadd.f32 0.0, %v3995
      %v3997 = vpop.f32.mrf.mxu0
      %3998 = vmatprep.mubr.bf16.mxu0 0
      %3999 = vmatmul.mubr.bf16.gmra.mxu0 %v1739
      %v4000 = vpop.f32.mrf.mxu0
      %v4001 = vadd.f32 0.0, %v4000
      %v4002 = vpop.f32.mrf.mxu0
      %v4003 = vpop.f32.mrf.mxu0
      %v4004 = vadd.f32 0.0, %v4003
      %v4005 = vpop.f32.mrf.mxu0
      %4006 = vmatprep.mubr.bf16.mxu0 0
      %4007 = vmatmul.mubr.bf16.gmra.mxu0 %v1740
      %v4008 = vpop.f32.mrf.mxu0
      %v4009 = vadd.f32 0.0, %v4008
      %v4010 = vpop.f32.mrf.mxu0
      %v4011 = vpop.f32.mrf.mxu0
      %v4012 = vadd.f32 0.0, %v4011
      %v4013 = vpop.f32.mrf.mxu0
      %4014 = vmatprep.mubr.bf16.mxu0 0
      %4015 = vmatmul.mubr.bf16.gmra.mxu0 %v1741
      %v4016 = vpop.f32.mrf.mxu0
      %v4017 = vadd.f32 0.0, %v4016
      %v4018 = vpop.f32.mrf.mxu0
      %v4019 = vpop.f32.mrf.mxu0
      %v4020 = vadd.f32 0.0, %v4019
      %v4021 = vpop.f32.mrf.mxu0
      %4022 = vmatprep.mubr.bf16.mxu0 0
      %4023 = vmatmul.mubr.bf16.gmra.mxu0 %v1742
      %v4024 = vpop.f32.mrf.mxu0
      %v4025 = vadd.f32 0.0, %v4024
      %v4026 = vpop.f32.mrf.mxu0
      %v4027 = vpop.f32.mrf.mxu0
      %v4028 = vadd.f32 0.0, %v4027
      %v4029 = vpop.f32.mrf.mxu0
      %4030 = vmatprep.mubr.bf16.mxu0 0
      %4031 = vmatmul.mubr.bf16.gmra.mxu0 %v1743
      %v4032 = vpop.f32.mrf.mxu0
      %v4033 = vadd.f32 0.0, %v4032
      %v4034 = vpop.f32.mrf.mxu0
      %v4035 = vpop.f32.mrf.mxu0
      %v4036 = vadd.f32 0.0, %v4035
      %v4037 = vpop.f32.mrf.mxu0
      %4038 = vdwg.mxu0
      %v4039 = vadd.f32 %v3559, %v3849
      %v4040 = vadd.f32 %v3562, %v3852
      %v4041 = vadd.f32 %v3567, %v3857
      %v4042 = vadd.f32 %v3570, %v3860
      %v4043 = vadd.f32 %v3575, %v3865
      %v4044 = vadd.f32 %v3578, %v3868
      %v4045 = vadd.f32 %v3583, %v3873
      %v4046 = vadd.f32 %v3586, %v3876
      %v4047 = vadd.f32 %v3591, %v3881
      %v4048 = vadd.f32 %v3594, %v3884
      %v4049 = vadd.f32 %v3599, %v3889
      %v4050 = vadd.f32 %v3602, %v3892
      %v4051 = vadd.f32 %v3607, %v3897
      %v4052 = vadd.f32 %v3610, %v3900
      %v4053 = vadd.f32 %v3615, %v3905
      %v4054 = vadd.f32 %v3618, %v3908
      %v4055 = vadd.f32 %v3623, %v3913
      %v4056 = vadd.f32 %v3626, %v3916
      %v4057 = vadd.f32 %v3631, %v3921
      %v4058 = vadd.f32 %v3634, %v3924
      %v4059 = vadd.f32 %v3639, %v3929
      %v4060 = vadd.f32 %v3642, %v3932
      %v4061 = vadd.f32 %v3647, %v3937
      %v4062 = vadd.f32 %v3650, %v3940
      %v4063 = vadd.f32 %v3655, %v3945
      %v4064 = vadd.f32 %v3658, %v3948
      %v4065 = vadd.f32 %v3663, %v3953
      %v4066 = vadd.f32 %v3666, %v3956
      %v4067 = vadd.f32 %v3671, %v3961
      %v4068 = vadd.f32 %v3674, %v3964
      %v4069 = vadd.f32 %v3679, %v3969
      %v4070 = vadd.f32 %v3682, %v3972
      %v4071 = vadd.f32 %v3687, %v3977
      %v4072 = vadd.f32 %v3690, %v3980
      %v4073 = vadd.f32 %v3695, %v3985
      %v4074 = vadd.f32 %v3698, %v3988
      %v4075 = vadd.f32 %v3703, %v3993
      %v4076 = vadd.f32 %v3706, %v3996
      %v4077 = vadd.f32 %v3711, %v4001
      %v4078 = vadd.f32 %v3714, %v4004
      %v4079 = vadd.f32 %v3719, %v4009
      %v4080 = vadd.f32 %v3722, %v4012
      %v4081 = vadd.f32 %v3727, %v4017
      %v4082 = vadd.f32 %v3730, %v4020
      %v4083 = vadd.f32 %v3735, %v4025
      %v4084 = vadd.f32 %v3738, %v4028
      %v4085 = vadd.f32 %v3743, %v4033
      %v4086 = vadd.f32 %v3746, %v4036
      %vm4135 = vcmask 1046528
      %v4136 = vrot.slane %v4039, 1
      %v4137 = vrot.slane %v4040, 1
      %v4138 = vsel %vm4135, %v4136, %v4137
      %v4139 = vrot.slane %v4041, 1
      %v4140 = vsel %vm4135, %v4137, %v4139
      %v4141 = vrot.slane %v4042, 1
      %v4142 = vrot.slane %v4043, 1
      %v4143 = vsel %vm4135, %v4141, %v4142
      %v4144 = vrot.slane %v4044, 1
      %v4145 = vsel %vm4135, %v4142, %v4144
      %v4146 = vrot.slane %v4045, 1
      %v4147 = vrot.slane %v4046, 1
      %v4148 = vsel %vm4135, %v4146, %v4147
      %v4149 = vrot.slane %v4047, 1
      %v4150 = vsel %vm4135, %v4147, %v4149
      %v4151 = vrot.slane %v4048, 1
      %v4152 = vrot.slane %v4049, 1
      %v4153 = vsel %vm4135, %v4151, %v4152
      %v4154 = vrot.slane %v4050, 1
      %v4155 = vsel %vm4135, %v4152, %v4154
      %v4156 = vrot.slane %v4051, 1
      %v4157 = vrot.slane %v4052, 1
      %v4158 = vsel %vm4135, %v4156, %v4157
      %v4159 = vrot.slane %v4053, 1
      %v4160 = vsel %vm4135, %v4157, %v4159
      %v4161 = vrot.slane %v4054, 1
      %v4162 = vrot.slane %v4055, 1
      %v4163 = vsel %vm4135, %v4161, %v4162
      %v4164 = vrot.slane %v4056, 1
      %v4165 = vsel %vm4135, %v4162, %v4164
      %v4166 = vrot.slane %v4057, 1
      %v4167 = vrot.slane %v4058, 1
      %v4168 = vsel %vm4135, %v4166, %v4167
      %v4169 = vrot.slane %v4059, 1
      %v4170 = vsel %vm4135, %v4167, %v4169
      %v4171 = vrot.slane %v4060, 1
      %v4172 = vrot.slane %v4061, 1
      %v4173 = vsel %vm4135, %v4171, %v4172
      %v4174 = vrot.slane %v4062, 1
      %v4175 = vsel %vm4135, %v4172, %v4174
      %v4176 = vrot.slane %v4063, 1
      %v4177 = vrot.slane %v4064, 1
      %v4178 = vsel %vm4135, %v4176, %v4177
      %v4179 = vrot.slane %v4065, 1
      %v4180 = vsel %vm4135, %v4177, %v4179
      %v4181 = vrot.slane %v4066, 1
      %v4182 = vrot.slane %v4067, 1
      %v4183 = vsel %vm4135, %v4181, %v4182
      %v4184 = vrot.slane %v4068, 1
      %v4185 = vsel %vm4135, %v4182, %v4184
      %v4186 = vrot.slane %v4069, 1
      %v4187 = vrot.slane %v4070, 1
      %v4188 = vsel %vm4135, %v4186, %v4187
      %v4189 = vrot.slane %v4071, 1
      %v4190 = vsel %vm4135, %v4187, %v4189
      %v4191 = vrot.slane %v4072, 1
      %v4192 = vrot.slane %v4073, 1
      %v4193 = vsel %vm4135, %v4191, %v4192
      %v4194 = vrot.slane %v4074, 1
      %v4195 = vsel %vm4135, %v4192, %v4194
      %v4196 = vrot.slane %v4075, 1
      %v4197 = vrot.slane %v4076, 1
      %v4198 = vsel %vm4135, %v4196, %v4197
      %v4199 = vrot.slane %v4077, 1
      %v4200 = vsel %vm4135, %v4197, %v4199
      %v4201 = vrot.slane %v4078, 1
      %v4202 = vrot.slane %v4079, 1
      %v4203 = vsel %vm4135, %v4201, %v4202
      %v4204 = vrot.slane %v4080, 1
      %v4205 = vsel %vm4135, %v4202, %v4204
      %v4206 = vrot.slane %v4081, 1
      %v4207 = vrot.slane %v4082, 1
      %v4208 = vsel %vm4135, %v4206, %v4207
      %v4209 = vrot.slane %v4083, 1
      %v4210 = vsel %vm4135, %v4207, %v4209
      %v4211 = vrot.slane %v4084, 1
      %v4212 = vrot.slane %v4085, 1
      %v4213 = vsel %vm4135, %v4211, %v4212
      %v4214 = vrot.slane %v4086, 1
      %v4215 = vsel %vm4135, %v4212, %v4214
      %v4248 = vadd.f32 %v3137, %v4138
      %v4249 = vadd.f32 %v3138, %v4140
      %v4250 = vadd.f32 %v3139, %v4143
      %v4251 = vadd.f32 %v3140, %v4145
      %v4252 = vadd.f32 %v3141, %v4148
      %v4253 = vadd.f32 %v3142, %v4150
      %v4254 = vadd.f32 %v3143, %v4153
      %v4255 = vadd.f32 %v3144, %v4155
      %v4256 = vadd.f32 %v3145, %v4158
      %v4257 = vadd.f32 %v3146, %v4160
      %v4258 = vadd.f32 %v3147, %v4163
      %v4259 = vadd.f32 %v3148, %v4165
      %v4260 = vadd.f32 %v3149, %v4168
      %v4261 = vadd.f32 %v3150, %v4170
      %v4262 = vadd.f32 %v3151, %v4173
      %v4263 = vadd.f32 %v3152, %v4175
      %v4264 = vadd.f32 %v3153, %v4178
      %v4265 = vadd.f32 %v3154, %v4180
      %v4266 = vadd.f32 %v3155, %v4183
      %v4267 = vadd.f32 %v3156, %v4185
      %v4268 = vadd.f32 %v3157, %v4188
      %v4269 = vadd.f32 %v3158, %v4190
      %v4270 = vadd.f32 %v3159, %v4193
      %v4271 = vadd.f32 %v3160, %v4195
      %v4272 = vadd.f32 %v3161, %v4198
      %v4273 = vadd.f32 %v3162, %v4200
      %v4274 = vadd.f32 %v3163, %v4203
      %v4275 = vadd.f32 %v3164, %v4205
      %v4276 = vadd.f32 %v3165, %v4208
      %v4277 = vadd.f32 %v3166, %v4210
      %v4278 = vadd.f32 %v3167, %v4213
      %v4279 = vadd.f32 %v3168, %v4215
      %v4280 = vpack.c.bf16 %v4249, %v4248
      %v4281 = vpack.c.bf16 %v4251, %v4250
      %v4282 = vpack.c.bf16 %v4253, %v4252
      %v4283 = vpack.c.bf16 %v4255, %v4254
      %v4284 = vpack.c.bf16 %v4257, %v4256
      %v4285 = vpack.c.bf16 %v4259, %v4258
      %v4286 = vpack.c.bf16 %v4261, %v4260
      %v4287 = vpack.c.bf16 %v4263, %v4262
      %v4288 = vpack.c.bf16 %v4265, %v4264
      %v4289 = vpack.c.bf16 %v4267, %v4266
      %v4290 = vpack.c.bf16 %v4269, %v4268
      %v4291 = vpack.c.bf16 %v4271, %v4270
      %v4292 = vpack.c.bf16 %v4273, %v4272
      %v4293 = vpack.c.bf16 %v4275, %v4274
      %v4294 = vpack.c.bf16 %v4277, %v4276
      %v4295 = vpack.c.bf16 %v4279, %v4278
      %v4312 = vunpack.c.l.b16 %v4280
      %v4313 = vunpack.c.h.b16 %v4280
      %v4314 = vunpack.c.l.b16 %v4281
      %v4315 = vunpack.c.h.b16 %v4281
      %v4316 = vunpack.c.l.b16 %v4282
      %v4317 = vunpack.c.h.b16 %v4282
      %v4318 = vunpack.c.l.b16 %v4283
      %v4319 = vunpack.c.h.b16 %v4283
      %v4320 = vunpack.c.l.b16 %v4284
      %v4321 = vunpack.c.h.b16 %v4284
      %v4322 = vunpack.c.l.b16 %v4285
      %v4323 = vunpack.c.h.b16 %v4285
      %v4324 = vunpack.c.l.b16 %v4286
      %v4325 = vunpack.c.h.b16 %v4286
      %v4326 = vunpack.c.l.b16 %v4287
      %v4327 = vunpack.c.h.b16 %v4287
      %v4328 = vunpack.c.l.b16 %v4288
      %v4329 = vunpack.c.h.b16 %v4288
      %v4330 = vunpack.c.l.b16 %v4289
      %v4331 = vunpack.c.h.b16 %v4289
      %v4332 = vunpack.c.l.b16 %v4290
      %v4333 = vunpack.c.h.b16 %v4290
      %v4334 = vunpack.c.l.b16 %v4291
      %v4335 = vunpack.c.h.b16 %v4291
      %v4336 = vunpack.c.l.b16 %v4292
      %v4337 = vunpack.c.h.b16 %v4292
      %v4338 = vunpack.c.l.b16 %v4293
      %v4339 = vunpack.c.h.b16 %v4293
      %v4340 = vunpack.c.l.b16 %v4294
      %v4341 = vunpack.c.h.b16 %v4294
      %v4342 = vunpack.c.l.b16 %v4295
      %v4343 = vunpack.c.h.b16 %v4295
      %v4344 = vpack.c.b16 %v4312, %v4312
      %v4345 = vpack.c.b16 %v4313, %v4313
      %v4346 = vpack.c.b16 %v4314, %v4314
      %v4347 = vpack.c.b16 %v4315, %v4315
      %v4348 = vpack.c.b16 %v4316, %v4316
      %v4349 = vpack.c.b16 %v4317, %v4317
      %v4350 = vpack.c.b16 %v4318, %v4318
      %v4351 = vpack.c.b16 %v4319, %v4319
      %v4352 = vpack.c.b16 %v4320, %v4320
      %v4353 = vpack.c.b16 %v4321, %v4321
      %v4354 = vpack.c.b16 %v4322, %v4322
      %v4355 = vpack.c.b16 %v4323, %v4323
      %v4356 = vpack.c.b16 %v4324, %v4324
      %v4357 = vpack.c.b16 %v4325, %v4325
      %v4358 = vpack.c.b16 %v4326, %v4326
      %v4359 = vpack.c.b16 %v4327, %v4327
      %v4360 = vpack.c.b16 %v4328, %v4328
      %v4361 = vpack.c.b16 %v4329, %v4329
      %v4362 = vpack.c.b16 %v4330, %v4330
      %v4363 = vpack.c.b16 %v4331, %v4331
      %v4364 = vpack.c.b16 %v4332, %v4332
      %v4365 = vpack.c.b16 %v4333, %v4333
      %v4366 = vpack.c.b16 %v4334, %v4334
      %v4367 = vpack.c.b16 %v4335, %v4335
      %v4368 = vpack.c.b16 %v4336, %v4336
      %v4369 = vpack.c.b16 %v4337, %v4337
      %v4370 = vpack.c.b16 %v4338, %v4338
      %v4371 = vpack.c.b16 %v4339, %v4339
      %v4372 = vpack.c.b16 %v4340, %v4340
      %v4373 = vpack.c.b16 %v4341, %v4341
      %v4374 = vpack.c.b16 %v4342, %v4342
      %v4375 = vpack.c.b16 %v4343, %v4343
      %4408 = vst [vmem:[%s231] sm:$0xf] %v4344
      %4409 = vst [vmem:[%s231 + $0x4] sm:$0xf] %v4345
      %4410 = vst [vmem:[%s231 + $0x8] sm:$0xf] %v4346
      %4411 = vst [vmem:[%s231 + $0xc] sm:$0xf] %v4347
      %4412 = vst [vmem:[%s231 + $0x10] sm:$0xf] %v4348
      %4413 = vst [vmem:[%s231 + $0x14] sm:$0xf] %v4349
      %4414 = vst [vmem:[%s231 + $0x18] sm:$0xf] %v4350
      %4415 = vst [vmem:[%s231 + $0x1c] sm:$0xf] %v4351
      %4416 = vst [vmem:[%s231 + $0x20] sm:$0xf] %v4352
      %4417 = vst [vmem:[%s231 + $0x24] sm:$0xf] %v4353
      %4418 = vst [vmem:[%s231 + $0x28] sm:$0xf] %v4354
      %4419 = vst [vmem:[%s231 + $0x2c] sm:$0xf] %v4355
      %4420 = vst [vmem:[%s231 + $0x30] sm:$0xf] %v4356
      %4421 = vst [vmem:[%s231 + $0x34] sm:$0xf] %v4357
      %4422 = vst [vmem:[%s231 + $0x38] sm:$0xf] %v4358
      %4423 = vst [vmem:[%s231 + $0x3c] sm:$0xf] %v4359
      %4424 = vst [vmem:[%s231 + $0x40] sm:$0xf] %v4360
      %4425 = vst [vmem:[%s231 + $0x44] sm:$0xf] %v4361
      %4426 = vst [vmem:[%s231 + $0x48] sm:$0xf] %v4362
      %4427 = vst [vmem:[%s231 + $0x4c] sm:$0xf] %v4363
      %4428 = vst [vmem:[%s231 + $0x50] sm:$0xf] %v4364
      %4429 = vst [vmem:[%s231 + $0x54] sm:$0xf] %v4365
      %4430 = vst [vmem:[%s231 + $0x58] sm:$0xf] %v4366
      %4431 = vst [vmem:[%s231 + $0x5c] sm:$0xf] %v4367
      %4432 = vst [vmem:[%s231 + $0x60] sm:$0xf] %v4368
      %4433 = vst [vmem:[%s231 + $0x64] sm:$0xf] %v4369
      %4434 = vst [vmem:[%s231 + $0x68] sm:$0xf] %v4370
      %4435 = vst [vmem:[%s231 + $0x6c] sm:$0xf] %v4371
      %4436 = vst [vmem:[%s231 + $0x70] sm:$0xf] %v4372
      %4437 = vst [vmem:[%s231 + $0x74] sm:$0xf] %v4373
      %4438 = vst [vmem:[%s231 + $0x78] sm:$0xf] %v4374
      %4439 = vst [vmem:[%s231 + $0x7c] sm:$0xf] %v4375
      %v4440 = vadd.f32 %v4248, %v4249
      %v4441 = vadd.f32 %v4440, %v4250
      %v4442 = vadd.f32 %v4441, %v4251
      %v4443 = vadd.f32 %v4442, %v4252
      %v4444 = vadd.f32 %v4443, %v4253
      %v4445 = vadd.f32 %v4444, %v4254
      %v4446 = vadd.f32 %v4445, %v4255
      %v4447 = vadd.f32 %v4446, %v4256
      %v4448 = vadd.f32 %v4447, %v4257
      %v4449 = vadd.f32 %v4448, %v4258
      %v4450 = vadd.f32 %v4449, %v4259
      %v4451 = vadd.f32 %v4450, %v4260
      %v4452 = vadd.f32 %v4451, %v4261
      %v4453 = vadd.f32 %v4452, %v4262
      %v4454 = vadd.f32 %v4453, %v4263
      %v4455 = vadd.f32 %v4454, %v4264
      %v4456 = vadd.f32 %v4455, %v4265
      %v4457 = vadd.f32 %v4456, %v4266
      %v4458 = vadd.f32 %v4457, %v4267
      %v4459 = vadd.f32 %v4458, %v4268
      %v4460 = vadd.f32 %v4459, %v4269
      %v4461 = vadd.f32 %v4460, %v4270
      %v4462 = vadd.f32 %v4461, %v4271
      %v4463 = vadd.f32 %v4462, %v4272
      %v4464 = vadd.f32 %v4463, %v4273
      %v4465 = vadd.f32 %v4464, %v4274
      %v4466 = vadd.f32 %v4465, %v4275
      %v4467 = vadd.f32 %v4466, %v4276
      %v4468 = vadd.f32 %v4467, %v4277
      %v4469 = vadd.f32 %v4468, %v4278
      %v4470 = vadd.f32 %v4469, %v4279
      %v4471 = vrot.slane %v4470, 4
      %v4472 = vadd.f32 %v4470, %v4471
      %v4473 = vrot.slane %v4472, 2
      %v4474 = vadd.f32 %v4472, %v4473
      %v4475 = vrot.slane %v4474, 1
      %v4476 = vadd.f32 %v4474, %v4475
      %v4477 = vmul.f32 %v4248, %v4248
      %v4478 = vmul.f32 %v4249, %v4249
      %v4479 = vmul.f32 %v4250, %v4250
      %v4480 = vmul.f32 %v4251, %v4251
      %v4481 = vmul.f32 %v4252, %v4252
      %v4482 = vmul.f32 %v4253, %v4253
      %v4483 = vmul.f32 %v4254, %v4254
      %v4484 = vmul.f32 %v4255, %v4255
      %v4485 = vmul.f32 %v4256, %v4256
      %v4486 = vmul.f32 %v4257, %v4257
      %v4487 = vmul.f32 %v4258, %v4258
      %v4488 = vmul.f32 %v4259, %v4259
      %v4489 = vmul.f32 %v4260, %v4260
      %v4490 = vmul.f32 %v4261, %v4261
      %v4491 = vmul.f32 %v4262, %v4262
      %v4492 = vmul.f32 %v4263, %v4263
      %v4493 = vmul.f32 %v4264, %v4264
      %v4494 = vmul.f32 %v4265, %v4265
      %v4495 = vmul.f32 %v4266, %v4266
      %v4496 = vmul.f32 %v4267, %v4267
      %v4497 = vmul.f32 %v4268, %v4268
      %v4498 = vmul.f32 %v4269, %v4269
      %v4499 = vmul.f32 %v4270, %v4270
      %v4500 = vmul.f32 %v4271, %v4271
      %v4501 = vmul.f32 %v4272, %v4272
      %v4502 = vmul.f32 %v4273, %v4273
      %v4503 = vmul.f32 %v4274, %v4274
      %v4504 = vmul.f32 %v4275, %v4275
      %v4505 = vmul.f32 %v4276, %v4276
      %v4506 = vmul.f32 %v4277, %v4277
      %v4507 = vmul.f32 %v4278, %v4278
      %v4508 = vmul.f32 %v4279, %v4279
      %v4509 = vadd.f32 %v4477, %v4478
      %v4510 = vadd.f32 %v4509, %v4479
      %v4511 = vadd.f32 %v4510, %v4480
      %v4512 = vadd.f32 %v4511, %v4481
      %v4513 = vadd.f32 %v4512, %v4482
      %v4514 = vadd.f32 %v4513, %v4483
      %v4515 = vadd.f32 %v4514, %v4484
      %v4516 = vadd.f32 %v4515, %v4485
      %v4517 = vadd.f32 %v4516, %v4486
      %v4518 = vadd.f32 %v4517, %v4487
      %v4519 = vadd.f32 %v4518, %v4488
      %v4520 = vadd.f32 %v4519, %v4489
      %v4521 = vadd.f32 %v4520, %v4490
      %v4522 = vadd.f32 %v4521, %v4491
      %v4523 = vadd.f32 %v4522, %v4492
      %v4524 = vadd.f32 %v4523, %v4493
      %v4525 = vadd.f32 %v4524, %v4494
      %v4526 = vadd.f32 %v4525, %v4495
      %v4527 = vadd.f32 %v4526, %v4496
      %v4528 = vadd.f32 %v4527, %v4497
      %v4529 = vadd.f32 %v4528, %v4498
      %v4530 = vadd.f32 %v4529, %v4499
      %v4531 = vadd.f32 %v4530, %v4500
      %v4532 = vadd.f32 %v4531, %v4501
      %v4533 = vadd.f32 %v4532, %v4502
      %v4534 = vadd.f32 %v4533, %v4503
      %v4535 = vadd.f32 %v4534, %v4504
      %v4536 = vadd.f32 %v4535, %v4505
      %v4537 = vadd.f32 %v4536, %v4506
      %v4538 = vadd.f32 %v4537, %v4507
      %v4539 = vadd.f32 %v4538, %v4508
      %v4540 = vrot.slane %v4539, 4
      %v4541 = vadd.f32 %v4539, %v4540
      %v4542 = vrot.slane %v4541, 2
      %v4543 = vadd.f32 %v4541, %v4542
      %v4544 = vrot.slane %v4543, 1
      %v4545 = vadd.f32 %v4543, %v4544
      %v4546 = vsel %vm2139, %v4476, %v4545
      %4547 = vst [vmem:[%s235] sm:$0x3] %v4546
      %p4548 = scmp.lt.s32.totalorder %s17, 1
      %s4549 = scalar_select %p4548, %s17, 1
      %s4550 = smul.addr %s4549, 32
      %s4551 = smul.addr %s4550, 4
      %s4552 = scalar_lea.vmem %s4, %s4551
      %p4553 = scmp.lt.s32.totalorder %s17, 1
      %s4554 = scalar_select %p4553, %s17, 1
      %s4555 = smul.addr %s4554, 2
      %s4556 = scalar_lea.vmem %s5, %s4555
      // Predicated region
      $region37: #{residual_block_forward.4} parent=35 // pred_check
        %p4557 = pneg %p124
      $region38: #{residual_block_forward.4} parent=35 // pred_check_branch
        %4559 = sbr.rel (%p4557) target = $region40
      $region39: #{residual_block_forward.4} parent=35 // pred_region
        _
      $region40: #{residual_block_forward.4} parent=35 // pred_fallthru
        _
      // Predicated region
      $region41: #{residual_block_forward.4} parent=35 // pred_check
        %p4560 = pneg %p150
      $region42: #{residual_block_forward.4} parent=35 // pred_check_branch
        %4562 = sbr.rel (%p4560) target = $region44
      $region43: #{residual_block_forward.4} parent=35 // pred_region
        _
      $region44: #{residual_block_forward.4} parent=35 // pred_fallthru
        _
    $region36: #{residual_block_forward.4} parent=5 // pred_fallthru
      _
    %p4563 = scmp.le.s32.totalorder 2, %s12
    // Predicated region
    $region45: #{residual_block_forward.4} parent=5 // pred_check
      %p4564 = pneg %p4563
    $region46: #{residual_block_forward.4} parent=5 // pred_check_branch
      %4566 = sbr.rel (%p4564) target = $region48
    $region47: #{residual_block_forward.4} parent=5 // pred_region
      %s4567 = ssub.s32 %s12, 2
      // Predicated region
      $region49: #{residual_block_forward.4} parent=47 // pred_check
        %p4568 = pneg %p130
      $region50: #{residual_block_forward.4} parent=47 // pred_check_branch
        %4570 = sbr.rel (%p4568) target = $region52
      $region51: #{residual_block_forward.4} parent=47 // pred_region
        %p4571 = scmp.lt.s32.totalorder %s18, 1
        %s4572 = scalar_select %p4571, %s18, 1
        %s4573 = smul.addr %s4572, 32
        %s4574 = smul.addr %s4573, 4
        %s4575 = scalar_lea.vmem %s4, %s4574
      $region52: #{residual_block_forward.4} parent=47 // pred_fallthru
        _
      // Predicated region
      $region53: #{residual_block_forward.4} parent=47 // pred_check
        %p4576 = pneg %p156
      $region54: #{residual_block_forward.4} parent=47 // pred_check_branch
        %4578 = sbr.rel (%p4576) target = $region56
      $region55: #{residual_block_forward.4} parent=47 // pred_region
        %p4579 = scmp.lt.s32.totalorder %s18, 1
        %s4580 = scalar_select %p4579, %s18, 1
        %s4581 = smul.addr %s4580, 2
        %s4582 = scalar_lea.vmem %s5, %s4581
      $region56: #{residual_block_forward.4} parent=47 // pred_fallthru
        _
    $region48: #{residual_block_forward.4} parent=5 // pred_fallthru
      _
  $region6: #{residual_block_forward.4} parent=0 // loop_footer
    %s16 = sadd.s32 1, %s12
  $region7: #{residual_block_forward.4} parent=0 // loop_footer_branch
    %11 = sbr.rel target = $region3
  $region8: #{residual_block_forward.4} parent=0 // loop_exit
    _

</llo_original>
